<compile_context>
chip_gen: v7x
topology: tpu7x:2x2x1
jax: 0.10.0
libtpu: 0.0.40
codegen_flags: <defaults>
</compile_context>

<pallas_src>
import functools

import jax
import jax.numpy as jnp
from jax.experimental import pallas as pl
from jax.experimental.pallas import tpu as pltpu

_BN_EPS = 1e-5
# Conservative budgets valid on v5e/v6e (128 MiB VMEM) and v7x (64 MiB physical).
_VMEM_BUDGET_BYTES = 16 * 1024 * 1024   # used to size row tiles
_VMEM_LIMIT_BYTES = 32 * 1024 * 1024    # scoped VMEM limit handed to Mosaic


def _compiler_params(num_grid_axes):
    return pltpu.CompilerParams(
        dimension_semantics=("parallel",) * num_grid_axes,  # shards across 2 TCs on v7x
        vmem_limit_bytes=_VMEM_LIMIT_BYTES,
    )


def _pick_tile(total, preferred, align):
    """Largest divisor of `total` that is <= `preferred` and a multiple of
    `align`; falls back to `total` (a full-extent block is always layout-legal)."""
    if total <= preferred:
        return total
    for d in range(min(preferred, total), 0, -1):
        if total % d == 0 and d % align == 0:
            return d
    return total


def _conv_row_tile(h_out, w_out, cin_total, cout, cap=None):
    """Output-row tile for the 3x3 conv, sized from the VMEM budget
    (double-buffered bf16 input strip rows + fp32 output rows)."""
    bytes_per_row = (w_out + 2) * cin_total * 2 + w_out * cout * 4
    pref = max(8, _VMEM_BUDGET_BYTES // (4 * max(bytes_per_row, 1)))
    if cap is not None:
        pref = min(pref, cap)
    return _pick_tile(h_out, int(pref), 8)


# ---------------------------------------------------------------------------
# Kernel 1: ConvTranspose2d(kernel=2, stride=2) = per-pixel matmul + bias.
# Grid axis `kh` selects the output-row parity; the 2x2 pixel interleave is
# expressed purely through the output array shape (N, H, 2, W, 2*Cout) and the
# output index_map, so no transpose is needed anywhere.  Because the input
# block index does not depend on kh, Pallas keeps the input tile VMEM-resident
# across both parity steps (no duplicated input DMA).
# ---------------------------------------------------------------------------
def _up_kernel(x_ref, w_ref, b_ref, o_ref):
    th, wd, cin = x_ref.shape
    x = x_ref[...].reshape(th * wd, cin).astype(jnp.bfloat16)
    y = jnp.dot(x, w_ref[...], preferred_element_type=jnp.float32) + b_ref[...]
    o_ref[...] = y.reshape(th, wd, y.shape[-1]).astype(o_ref.dtype)


def conv_transpose2x2_stride2(x_nhwc, w, b, *, row_tile, out_dtype=jnp.float32):
    """ConvTranspose2d(k=2, s=2).  w: (Cin, Cout, 2, 2) (PyTorch layout)."""
    n, h, wd, cin = x_nhwc.shape
    cout = w.shape[1]
    assert h % row_tile == 0
    t = h // row_tile
    # One bf16 weight slab per output-row parity kh: (2, Cin, 2*Cout), col = kw*Cout + co.
    w_slab = jnp.transpose(w, (2, 0, 3, 1)).reshape(2, cin, 2 * cout).astype(jnp.bfloat16)
    b_row = jnp.tile(b, 2).reshape(1, 2 * cout).astype(jnp.float32)

    out = pl.pallas_call(
        _up_kernel,
        grid=(n, t, 2),
        in_specs=[
            pl.BlockSpec((None, row_tile, wd, cin), lambda ni, ti, kh: (ni, ti, 0, 0)),
            pl.BlockSpec((None, cin, 2 * cout), lambda ni, ti, kh: (kh, 0, 0)),
            pl.BlockSpec((1, 2 * cout), lambda ni, ti, kh: (0, 0)),
        ],
        out_specs=pl.BlockSpec((None, row_tile, None, wd, 2 * cout),
                               lambda ni, ti, kh: (ni, ti, kh, 0, 0)),
        out_shape=jax.ShapeDtypeStruct((n, h, 2, wd, 2 * cout), out_dtype),
        compiler_params=_compiler_params(3),
    )(x_nhwc, w_slab, b_row)
    # (N, H, 2, W, 2*Cout) is bit-identical (row-major) to (N, 2H, 2W, Cout).
    return out.reshape(n, 2 * h, 2 * wd, cout)


# ---------------------------------------------------------------------------
# Kernel 2 (pass A): Conv2d(3x3, pad=1) + bias as 9 shifted MXU matmuls over a
# halo'd bf16 row strip, accumulating in fp32.  Accepts several input tensors
# (the channel concat fused via split-K).  Also emits per-tile channel
# sum / sum-of-squares for the two-pass BatchNorm.
# ---------------------------------------------------------------------------
def _make_conv3x3_kernel(num_in, th, w_out, cout):
    def kernel(*refs):
        x_refs = refs[:num_in]
        w_refs = refs[num_in:2 * num_in]
        b_ref = refs[2 * num_in]
        y_ref, s_ref, ss_ref = refs[2 * num_in + 1:]

        acc = jnp.zeros((th * w_out, cout), jnp.float32)
        for x_ref, w_ref in zip(x_refs, w_refs):
            for dy in range(3):
                for dx in range(3):
                    patch = x_ref[dy:dy + th, dx:dx + w_out, :]       # (th, w, cin) bf16
                    lhs = patch.reshape(th * w_out, patch.shape[-1])
                    acc = acc + jnp.dot(lhs, w_ref[dy, dx],
                                        preferred_element_type=jnp.float32)
        acc = acc + b_ref[...]                                        # conv bias (fp32)
        # Per-tile BatchNorm partials; summed on the host (safe for "parallel" grid).
        s_ref[...] = jnp.sum(acc, axis=0, keepdims=True)
        ss_ref[...] = jnp.sum(acc * acc, axis=0, keepdims=True)
        y_ref[...] = acc.reshape(th, w_out, cout)
    return kernel


def _row_strips(x_nhwc, th):
    """(N, H, W, C) -> overlapping zero-padded row strips
    (N, H//th, th+2, W+2, C), cast to bf16 for the MXU (halves HBM traffic)."""
    n, h, w, c = x_nhwc.shape
    t = h // th
    xp = jnp.pad(x_nhwc, ((0, 0), (1, 1), (1, 1), (0, 0)))
    idx = jnp.arange(t)[:, None] * th + jnp.arange(th + 2)[None, :]
    # TODO(synk): a manual-DMA halo load (memory_space=pl.ANY) would avoid even
    # this ~(th+2)/th row duplication; kept as an XLA gather for robustness.
    return xp[:, idx].astype(jnp.bfloat16)


def _conv3x3_pass_a(strip_list, w_list, bias, th, h_out, w_out):
    n, t = strip_list[0].shape[:2]
    cout = w_list[0].shape[-1]
    num_in = len(strip_list)

    in_specs = []
    for s in strip_list:
        cin_i = s.shape[-1]
        in_specs.append(pl.BlockSpec((None, None, th + 2, w_out + 2, cin_i),
                                     lambda ni, ti: (ni, ti, 0, 0, 0)))
    for w in w_list:
        cin_i = w.shape[2]
        in_specs.append(pl.BlockSpec((3, 3, cin_i, cout),
                                     lambda ni, ti: (0, 0, 0, 0)))
    in_specs.append(pl.BlockSpec((1, cout), lambda ni, ti: (0, 0)))

    out_shape = (jax.ShapeDtypeStruct((n, h_out, w_out, cout), jnp.float32),
                 jax.ShapeDtypeStruct((n, t, 1, cout), jnp.float32),
                 jax.ShapeDtypeStruct((n, t, 1, cout), jnp.float32))
    out_specs = (pl.BlockSpec((None, th, w_out, cout), lambda ni, ti: (ni, ti, 0, 0)),
                 pl.BlockSpec((None, None, 1, cout), lambda ni, ti: (ni, ti, 0, 0)),
                 pl.BlockSpec((None, None, 1, cout), lambda ni, ti: (ni, ti, 0, 0)))

    kernel = _make_conv3x3_kernel(num_in, th, w_out, cout)
    y, s, ss = pl.pallas_call(
        kernel,
        grid=(n, t),
        in_specs=in_specs,
        out_specs=out_specs,
        out_shape=out_shape,
        compiler_params=_compiler_params(2),
    )(*strip_list, *w_list, bias.reshape(1, cout).astype(jnp.float32))
    return y, s, ss


# ---------------------------------------------------------------------------
# Kernel 3 (pass B): lane-dense elementwise  y = relu(x * scale + shift)
# on a (N*H, W*C) view, with the BN affine pre-folded into scale/shift.
# Output dtype is bf16 when it only feeds the next conv (which casts to bf16
# anyway), fp32 for the final block output.
# ---------------------------------------------------------------------------
def _scale_shift_relu_kernel(x_ref, s_ref, t_ref, o_ref):
    y = jnp.maximum(x_ref[...] * s_ref[...] + t_ref[...], 0.0)
    o_ref[...] = y.astype(o_ref.dtype)


def _bn_fold(sums, ssums, count, gamma, beta):
    mean = jnp.sum(sums, axis=(0, 1, 2)) / count
    var = jnp.sum(ssums, axis=(0, 1, 2)) / count - mean * mean   # biased var
    # TODO(synk): E[x^2]-E[x]^2 is slightly less stable than the centered
    # formula; fine here since all partials are accumulated in fp32.
    scale = gamma * jax.lax.rsqrt(var + _BN_EPS)
    shift = beta - mean * scale
    return scale, shift


def _bn_relu_pass_b(y_raw, scale, shift, out_dtype):
    n, h, w, c = y_raw.shape
    rows, lanes = n * h, w * c
    y2d = y_raw.reshape(rows, lanes)                      # free row-major merge
    srow = jnp.tile(scale, w).reshape(1, lanes).astype(jnp.float32)
    trow = jnp.tile(shift, w).reshape(1, lanes).astype(jnp.float32)
    tm = _pick_tile(rows, 512, 8)
    out = pl.pallas_call(
        _scale_shift_relu_kernel,
        grid=(rows // tm,),
        in_specs=[pl.BlockSpec((tm, lanes), lambda i: (i, 0)),
                  pl.BlockSpec((1, lanes), lambda i: (0, 0)),
                  pl.BlockSpec((1, lanes), lambda i: (0, 0))],
        out_specs=pl.BlockSpec((tm, lanes), lambda i: (i, 0)),
        out_shape=jax.ShapeDtypeStruct((rows, lanes), out_dtype),
        compiler_params=_compiler_params(1),
    )(y2d, srow, trow)
    return out.reshape(n, h, w, c)


def conv3x3_bn_relu(inputs_nhwc, w_torch, bias, gamma, beta, *, row_tile,
                    out_dtype=jnp.float32):
    """Conv2d(3x3, pad=1, bias) + BatchNorm2d(batch stats) + ReLU.
    `inputs_nhwc` is a list whose channel concatenation is the conv input
    (torch.cat(dim=1) fused into the kernel via a K-split of the weight).
    w_torch: (Cout, sum(Cin_i), 3, 3)."""
    n, h, w_sp, _ = inputs_nhwc[0].shape
    assert h % row_tile == 0
    strips, weights = [], []
    off = 0
    for x in inputs_nhwc:
        cin_i = x.shape[-1]
        strips.append(_row_strips(x, row_tile))
        w_i = w_torch[:, off:off + cin_i]                       # (cout, cin_i, 3, 3)
        weights.append(jnp.transpose(w_i, (2, 3, 1, 0)).astype(jnp.bfloat16))
        off += cin_i
    assert off == w_torch.shape[1]

    y_raw, s, ss = _conv3x3_pass_a(strips, weights, bias, row_tile, h, w_sp)
    scale, shift = _bn_fold(s, ss, n * h * w_sp, gamma, beta)
    return _bn_relu_pass_b(y_raw, scale, shift, out_dtype)


# ---------------------------------------------------------------------------
# DecoderBlock
# ---------------------------------------------------------------------------
def init_decoder_params(key, in_channels, out_channels,
                        up_in_channel=None, up_out_channel=None):
    if up_in_channel is None:
        up_in_channel = in_channels
    if up_out_channel is None:
        up_out_channel = out_channels
    ks = jax.random.split(key, 10)
    s = 0.1
    return {
        # ConvTranspose2d(up_in, up_out, 2, 2)
        "w_up": s * jax.random.normal(ks[0], (up_in_channel, up_out_channel, 2, 2), jnp.float32),
        "b_up": s * jax.random.normal(ks[1], (up_out_channel,), jnp.float32),
        # DoubleConvBlock(in_channels, out_channels): [Conv3x3+BN+ReLU] x 2
        "w1": s * jax.random.normal(ks[2], (out_channels, in_channels, 3, 3), jnp.float32),
        "b1": s * jax.random.normal(ks[3], (out_channels,), jnp.float32),
        "g1": 1.0 + s * jax.random.normal(ks[4], (out_channels,), jnp.float32),
        "bt1": s * jax.random.normal(ks[5], (out_channels,), jnp.float32),
        "w2": s * jax.random.normal(ks[6], (out_channels, out_channels, 3, 3), jnp.float32),
        "b2": s * jax.random.normal(ks[7], (out_channels,), jnp.float32),
        "g2": 1.0 + s * jax.random.normal(ks[8], (out_channels,), jnp.float32),
        "bt2": s * jax.random.normal(ks[9], (out_channels,), jnp.float32),
    }


def decoder_block_forward(params, x1_nchw, x2_nchw, *, max_row_tile=None):
    """x1: (N, up_in, H, W) NCHW; x2: (N, in - up_out, 2H, 2W) NCHW.
    Returns (N, out_channels, 2H, 2W) NCHW, matching the PyTorch module."""
    x1 = jnp.transpose(x1_nchw, (0, 2, 3, 1))   # -> NHWC (channels on lanes)
    x2 = jnp.transpose(x2_nchw, (0, 2, 3, 1))
    n, h, w, _ = x1.shape
    assert x2.shape[1] == 2 * h and x2.shape[2] == 2 * w
    h2, w2 = 2 * h, 2 * w
    cout = params["w1"].shape[0]
    cin_total = params["w1"].shape[1]

    conv_th = _conv_row_tile(h2, w2, cin_total, cout, cap=max_row_tile)
    up_th = _pick_tile(h, max(1, conv_th // 2), 1)

    # `up` only feeds the first conv (MXU, bf16 inputs) -> emit bf16 directly.
    up = conv_transpose2x2_stride2(x1, params["w_up"], params["b_up"],
                                   row_tile=up_th, out_dtype=jnp.bfloat16)
    # torch.cat([up, x2], dim=1) is fused into the first conv (split-K).
    # First BN+ReLU output only feeds the second conv -> emit bf16 directly
    # (identical values to "store fp32 then cast on load", half the HBM traffic).
    y = conv3x3_bn_relu([up, x2], params["w1"], params["b1"],
                        params["g1"], params["bt1"], row_tile=conv_th,
                        out_dtype=jnp.bfloat16)
    y = conv3x3_bn_relu([y], params["w2"], params["b2"],
                        params["g2"], params["bt2"], row_tile=conv_th,
                        out_dtype=jnp.float32)
    # TODO(synk): final NHWC->NCHW stays in XLA (folding it into the out_spec
    # would need an in-kernel cross-lane transpose; not worth it here).
    return jnp.transpose(y, (0, 3, 1, 2))


if __name__ == "__main__":
    key = jax.random.PRNGKey(0)
    k1, k2, kp = jax.random.split(key, 3)

    in_channels, out_channels = 8, 4            # up: 8 -> 4; skip has 4 channels
    x1 = jax.random.normal(k1, (2, 8, 8, 8), jnp.float32)     # NCHW (N, up_in, H, W)
    x2 = jax.random.normal(k2, (2, 4, 16, 16), jnp.float32)   # NCHW (N, in-up_out, 2H, 2W)
    params = init_decoder_params(kp, in_channels, out_channels)

    # max_row_tile=8 forces multi-tile grids even at these toy sizes so the
    # tiled / two-pass-BN paths are exercised; production sizes derive the tile
    # from the VMEM budget automatically.
    fwd = jax.jit(functools.partial(decoder_block_forward, params, max_row_tile=8))
    out = jax.block_until_ready(fwd(x1, x2))
    assert out.shape == (2, 4, 16, 16), out.shape
    assert out.dtype == jnp.float32
    assert bool(jnp.all(jnp.isfinite(out)))
    print("KERNEL_OK")
</pallas_src>

<mosaic_0001>
module attributes {stable_mosaic.version = 11 : i64} {
  func.func @_up_kernel(%arg0: i32, %arg1: i32, %arg2: i32, %arg3: memref<1x4x8x8xf32, #tpu.memory_space<vmem>>, %arg4: memref<1x8x8xbf16, #tpu.memory_space<vmem>>, %arg5: memref<1x8xf32, #tpu.memory_space<vmem>>, %arg6: memref<1x4x1x8x8xbf16, #tpu.memory_space<vmem>>) attributes {dimension_semantics = [#tpu.dimension_semantics<parallel>, #tpu.dimension_semantics<parallel>, #tpu.dimension_semantics<parallel>], iteration_bounds = array<i64: 2, 2, 2>, scalar_prefetch = 0 : i64, scratch_operands = 0 : i64, tpu.core_type = #tpu.core_type<tc>, window_params = [{transform_indices = @transform_0, window_bounds = array<i64: 1, 4, 8, 8>}, {transform_indices = @transform_1, window_bounds = array<i64: 1, 8, 8>}, {pipeline_mode = #tpu.pipeline_mode<synchronous>, transform_indices = @transform_2, window_bounds = array<i64: 1, 8>}, {transform_indices = @transform_3, window_bounds = array<i64: 1, 4, 1, 8, 8>}]} {
    %c0 = arith.constant 0 : index
    %c0_0 = arith.constant 0 : index
    %c0_1 = arith.constant 0 : index
    %c0_2 = arith.constant 0 : index
    %0 = vector.load %arg3[%c0, %c0_0, %c0_1, %c0_2] : memref<1x4x8x8xf32, #tpu.memory_space<vmem>>, vector<1x4x8x8xf32>
    %1 = vector.shape_cast %0 : vector<1x4x8x8xf32> to vector<4x8x8xf32>
    %2 = vector.shape_cast %1 : vector<4x8x8xf32> to vector<32x8xf32>
    %3 = arith.truncf %2 : vector<32x8xf32> to vector<32x8xbf16>
    %c0_3 = arith.constant 0 : index
    %c0_4 = arith.constant 0 : index
    %c0_5 = arith.constant 0 : index
    %4 = vector.load %arg4[%c0_3, %c0_4, %c0_5] : memref<1x8x8xbf16, #tpu.memory_space<vmem>>, vector<1x8x8xbf16>
    %5 = vector.shape_cast %4 : vector<1x8x8xbf16> to vector<8x8xbf16>
    %cst = arith.constant dense<0.000000e+00> : vector<32x8xf32>
    %6 = tpu.matmul %3, %5, %cst {dimension_numbers = #tpu.dot_dimension_numbers<[1], [0], [0], [1], [0, 0, 1, 1], [], []>} : vector<32x8xbf16>, vector<8x8xbf16>, vector<32x8xf32> -> vector<32x8xf32>
    %c0_6 = arith.constant 0 : index
    %c0_7 = arith.constant 0 : index
    %7 = vector.load %arg5[%c0_6, %c0_7] : memref<1x8xf32, #tpu.memory_space<vmem>>, vector<1x8xf32>
    %8 = vector.broadcast %7 : vector<1x8xf32> to vector<32x8xf32>
    %9 = arith.addf %6, %8 : vector<32x8xf32>
    %10 = vector.shape_cast %9 : vector<32x8xf32> to vector<4x8x8xf32>
    %11 = arith.truncf %10 : vector<4x8x8xf32> to vector<4x8x8xbf16>
    %c0_8 = arith.constant 0 : index
    %c0_9 = arith.constant 0 : index
    %c0_10 = arith.constant 0 : index
    %c0_11 = arith.constant 0 : index
    %c0_12 = arith.constant 0 : index
    %12 = vector.load %arg6[%c0_8, %c0_9, %c0_10, %c0_11, %c0_12] : memref<1x4x1x8x8xbf16, #tpu.memory_space<vmem>>, vector<1x4x1x8x8xbf16>
    %13 = vector.shape_cast %12 : vector<1x4x1x8x8xbf16> to vector<4x8x8xbf16>
    %14 = vector.shape_cast %11 : vector<4x8x8xbf16> to vector<1x4x1x8x8xbf16>
    tpu.vector_store %arg6[%c0_8, %c0_9, %c0_10, %c0_11, %c0_12], %14 {strides = array<i32>} : memref<1x4x1x8x8xbf16, #tpu.memory_space<vmem>>, vector<1x4x1x8x8xbf16>,
    return
  }
  func.func @transform_0(%arg0: i32, %arg1: i32, %arg2: i32) -> (i32, i32, i32, i32) {
    %c0_i32 = arith.constant 0 : i32
    %c0_i32_0 = arith.constant 0 : i32
    %c0_i32_1 = arith.constant 0 : i32
    return %arg0, %arg1, %c0_i32, %c0_i32_0 : i32, i32, i32, i32
  }
  func.func @transform_1(%arg0: i32, %arg1: i32, %arg2: i32) -> (i32, i32, i32) {
    %c0_i32 = arith.constant 0 : i32
    %c0_i32_0 = arith.constant 0 : i32
    %c0_i32_1 = arith.constant 0 : i32
    return %arg2, %c0_i32, %c0_i32_0 : i32, i32, i32
  }
  func.func @transform_2(%arg0: i32, %arg1: i32, %arg2: i32) -> (i32, i32) {
    %c0_i32 = arith.constant 0 : i32
    %c0_i32_0 = arith.constant 0 : i32
    %c0_i32_1 = arith.constant 0 : i32
    return %c0_i32, %c0_i32_0 : i32, i32
  }
  func.func @transform_3(%arg0: i32, %arg1: i32, %arg2: i32) -> (i32, i32, i32, i32, i32) {
    %c0_i32 = arith.constant 0 : i32
    %c0_i32_0 = arith.constant 0 : i32
    %c0_i32_1 = arith.constant 0 : i32
    return %arg0, %arg1, %arg2, %c0_i32, %c0_i32_0 : i32, i32, i32, i32, i32
  }
}

module attributes {stable_mosaic.version = 11 : i64} {
  func.func @kernel(%arg0: i32, %arg1: i32, %arg2: memref<1x1x10x18x4xbf16, #tpu.memory_space<vmem>>, %arg3: memref<1x1x10x18x4xbf16, #tpu.memory_space<vmem>>, %arg4: memref<3x3x4x4xbf16, #tpu.memory_space<vmem>>, %arg5: memref<3x3x4x4xbf16, #tpu.memory_space<vmem>>, %arg6: memref<1x4xf32, #tpu.memory_space<vmem>>, %arg7: memref<1x8x16x4xf32, #tpu.memory_space<vmem>>, %arg8: memref<1x1x1x4xf32, #tpu.memory_space<vmem>>, %arg9: memref<1x1x1x4xf32, #tpu.memory_space<vmem>>) attributes {dimension_semantics = [#tpu.dimension_semantics<parallel>, #tpu.dimension_semantics<parallel>], iteration_bounds = array<i64: 2, 2>, scalar_prefetch = 0 : i64, scratch_operands = 0 : i64, tpu.core_type = #tpu.core_type<tc>, window_params = [{transform_indices = @transform_0, window_bounds = array<i64: 1, 1, 10, 18, 4>}, {transform_indices = @transform_1, window_bounds = array<i64: 1, 1, 10, 18, 4>}, {pipeline_mode = #tpu.pipeline_mode<synchronous>, transform_indices = @transform_2, window_bounds = array<i64: 3, 3, 4, 4>}, {pipeline_mode = #tpu.pipeline_mode<synchronous>, transform_indices = @transform_3, window_bounds = array<i64: 3, 3, 4, 4>}, {pipeline_mode = #tpu.pipeline_mode<synchronous>, transform_indices = @transform_4, window_bounds = array<i64: 1, 4>}, {transform_indices = @transform_5, window_bounds = array<i64: 1, 8, 16, 4>}, {transform_indices = @transform_6, window_bounds = array<i64: 1, 1, 1, 4>}, {transform_indices = @transform_7, window_bounds = array<i64: 1, 1, 1, 4>}]} {
    %cst = arith.constant 0.000000e+00 : f32
    %0 = vector.broadcast %cst : f32 to vector<128x4xf32>
    %c0 = arith.constant 0 : index
    %c0_0 = arith.constant 0 : index
    %c0_1 = arith.constant 0 : index
    %c0_2 = arith.constant 0 : index
    %c0_3 = arith.constant 0 : index
    %1 = vector.load %arg2[%c0, %c0_0, %c0_1, %c0_2, %c0_3] : memref<1x1x10x18x4xbf16, #tpu.memory_space<vmem>>, vector<1x1x8x16x4xbf16>
    %2 = vector.shape_cast %1 : vector<1x1x8x16x4xbf16> to vector<8x16x4xbf16>
    %3 = vector.shape_cast %2 : vector<8x16x4xbf16> to vector<128x4xbf16>
    %c0_4 = arith.constant 0 : index
    %c0_5 = arith.constant 0 : index
    %c0_6 = arith.constant 0 : index
    %c0_7 = arith.constant 0 : index
    %4 = vector.load %arg4[%c0_4, %c0_5, %c0_6, %c0_7] : memref<3x3x4x4xbf16, #tpu.memory_space<vmem>>, vector<1x1x4x4xbf16>
    %5 = vector.shape_cast %4 : vector<1x1x4x4xbf16> to vector<4x4xbf16>
    %cst_8 = arith.constant dense<0.000000e+00> : vector<128x4xf32>
    %6 = tpu.matmul %3, %5, %cst_8 {dimension_numbers = #tpu.dot_dimension_numbers<[1], [0], [0], [1], [0, 0, 1, 1], [], []>} : vector<128x4xbf16>, vector<4x4xbf16>, vector<128x4xf32> -> vector<128x4xf32>
    %7 = arith.addf %0, %6 : vector<128x4xf32>
    %c0_9 = arith.constant 0 : index
    %c0_10 = arith.constant 0 : index
    %c0_11 = arith.constant 0 : index
    %c1 = arith.constant 1 : index
    %c0_12 = arith.constant 0 : index
    %8 = vector.load %arg2[%c0_9, %c0_10, %c0_11, %c1, %c0_12] : memref<1x1x10x18x4xbf16, #tpu.memory_space<vmem>>, vector<1x1x8x16x4xbf16>
    %9 = vector.shape_cast %8 : vector<1x1x8x16x4xbf16> to vector<8x16x4xbf16>
    %10 = vector.shape_cast %9 : vector<8x16x4xbf16> to vector<128x4xbf16>
    %c0_13 = arith.constant 0 : index
    %c1_14 = arith.constant 1 : index
    %c0_15 = arith.constant 0 : index
    %c0_16 = arith.constant 0 : index
    %11 = vector.load %arg4[%c0_13, %c1_14, %c0_15, %c0_16] : memref<3x3x4x4xbf16, #tpu.memory_space<vmem>>, vector<1x1x4x4xbf16>
    %12 = vector.shape_cast %11 : vector<1x1x4x4xbf16> to vector<4x4xbf16>
    %cst_17 = arith.constant dense<0.000000e+00> : vector<128x4xf32>
    %13 = tpu.matmul %10, %12, %cst_17 {dimension_numbers = #tpu.dot_dimension_numbers<[1], [0], [0], [1], [0, 0, 1, 1], [], []>} : vector<128x4xbf16>, vector<4x4xbf16>, vector<128x4xf32> -> vector<128x4xf32>
    %14 = arith.addf %7, %13 : vector<128x4xf32>
    %c0_18 = arith.constant 0 : index
    %c0_19 = arith.constant 0 : index
    %c0_20 = arith.constant 0 : index
    %c2 = arith.constant 2 : index
    %c0_21 = arith.constant 0 : index
    %15 = vector.load %arg2[%c0_18, %c0_19, %c0_20, %c2, %c0_21] : memref<1x1x10x18x4xbf16, #tpu.memory_space<vmem>>, vector<1x1x8x16x4xbf16>
    %16 = vector.shape_cast %15 : vector<1x1x8x16x4xbf16> to vector<8x16x4xbf16>
    %17 = vector.shape_cast %16 : vector<8x16x4xbf16> to vector<128x4xbf16>
    %c0_22 = arith.constant 0 : index
    %c2_23 = arith.constant 2 : index
    %c0_24 = arith.constant 0 : index
    %c0_25 = arith.constant 0 : index
    %18 = vector.load %arg4[%c0_22, %c2_23, %c0_24, %c0_25] : memref<3x3x4x4xbf16, #tpu.memory_space<vmem>>, vector<1x1x4x4xbf16>
    %19 = vector.shape_cast %18 : vector<1x1x4x4xbf16> to vector<4x4xbf16>
    %cst_26 = arith.constant dense<0.000000e+00> : vector<128x4xf32>
    %20 = tpu.matmul %17, %19, %cst_26 {dimension_numbers = #tpu.dot_dimension_numbers<[1], [0], [0], [1], [0, 0, 1, 1], [], []>} : vector<128x4xbf16>, vector<4x4xbf16>, vector<128x4xf32> -> vector<128x4xf32>
    %21 = arith.addf %14, %20 : vector<128x4xf32>
    %c0_27 = arith.constant 0 : index
    %c0_28 = arith.constant 0 : index
    %c1_29 = arith.constant 1 : index
    %c0_30 = arith.constant 0 : index
    %c0_31 = arith.constant 0 : index
    %22 = vector.load %arg2[%c0_27, %c0_28, %c1_29, %c0_30, %c0_31] : memref<1x1x10x18x4xbf16, #tpu.memory_space<vmem>>, vector<1x1x8x16x4xbf16>
    %23 = vector.shape_cast %22 : vector<1x1x8x16x4xbf16> to vector<8x16x4xbf16>
    %24 = vector.shape_cast %23 : vector<8x16x4xbf16> to vector<128x4xbf16>
    %c1_32 = arith.constant 1 : index
    %c0_33 = arith.constant 0 : index
    %c0_34 = arith.constant 0 : index
    %c0_35 = arith.constant 0 : index
    %25 = vector.load %arg4[%c1_32, %c0_33, %c0_34, %c0_35] : memref<3x3x4x4xbf16, #tpu.memory_space<vmem>>, vector<1x1x4x4xbf16>
    %26 = vector.shape_cast %25 : vector<1x1x4x4xbf16> to vector<4x4xbf16>
    %cst_36 = arith.constant dense<0.000000e+00> : vector<128x4xf32>
    %27 = tpu.matmul %24, %26, %cst_36 {dimension_numbers = #tpu.dot_dimension_numbers<[1], [0], [0], [1], [0, 0, 1, 1], [], []>} : vector<128x4xbf16>, vector<4x4xbf16>, vector<128x4xf32> -> vector<128x4xf32>
    %28 = arith.addf %21, %27 : vector<128x4xf32>
    %c0_37 = arith.constant 0 : index
    %c0_38 = arith.constant 0 : index
    %c1_39 = arith.constant 1 : index
    %c1_40 = arith.constant 1 : index
    %c0_41 = arith.constant 0 : index
    %29 = vector.load %arg2[%c0_37, %c0_38, %c1_39, %c1_40, %c0_41] : memref<1x1x10x18x4xbf16, #tpu.memory_space<vmem>>, vector<1x1x8x16x4xbf16>
    %30 = vector.shape_cast %29 : vector<1x1x8x16x4xbf16> to vector<8x16x4xbf16>
    %31 = vector.shape_cast %30 : vector<8x16x4xbf16> to vector<128x4xbf16>
    %c1_42 = arith.constant 1 : index
    %c1_43 = arith.constant 1 : index
    %c0_44 = arith.constant 0 : index
    %c0_45 = arith.constant 0 : index
    %32 = vector.load %arg4[%c1_42, %c1_43, %c0_44, %c0_45] : memref<3x3x4x4xbf16, #tpu.memory_space<vmem>>, vector<1x1x4x4xbf16>
    %33 = vector.shape_cast %32 : vector<1x1x4x4xbf16> to vector<4x4xbf16>
    %cst_46 = arith.constant dense<0.000000e+00> : vector<128x4xf32>
    %34 = tpu.matmul %31, %33, %cst_46 {dimension_numbers = #tpu.dot_dimension_numbers<[1], [0], [0], [1], [0, 0, 1, 1], [], []>} : vector<128x4xbf16>, vector<4x4xbf16>, vector<128x4xf32> -> vector<128x4xf32>
    %35 = arith.addf %28, %34 : vector<128x4xf32>
    %c0_47 = arith.constant 0 : index
    %c0_48 = arith.constant 0 : index
    %c1_49 = arith.constant 1 : index
    %c2_50 = arith.constant 2 : index
    %c0_51 = arith.constant 0 : index
    %36 = vector.load %arg2[%c0_47, %c0_48, %c1_49, %c2_50, %c0_51] : memref<1x1x10x18x4xbf16, #tpu.memory_space<vmem>>, vector<1x1x8x16x4xbf16>
    %37 = vector.shape_cast %36 : vector<1x1x8x16x4xbf16> to vector<8x16x4xbf16>
    %38 = vector.shape_cast %37 : vector<8x16x4xbf16> to vector<128x4xbf16>
    %c1_52 = arith.constant 1 : index
    %c2_53 = arith.constant 2 : index
    %c0_54 = arith.constant 0 : index
    %c0_55 = arith.constant 0 : index
    %39 = vector.load %arg4[%c1_52, %c2_53, %c0_54, %c0_55] : memref<3x3x4x4xbf16, #tpu.memory_space<vmem>>, vector<1x1x4x4xbf16>
    %40 = vector.shape_cast %39 : vector<1x1x4x4xbf16> to vector<4x4xbf16>
    %cst_56 = arith.constant dense<0.000000e+00> : vector<128x4xf32>
    %41 = tpu.matmul %38, %40, %cst_56 {dimension_numbers = #tpu.dot_dimension_numbers<[1], [0], [0], [1], [0, 0, 1, 1], [], []>} : vector<128x4xbf16>, vector<4x4xbf16>, vector<128x4xf32> -> vector<128x4xf32>
    %42 = arith.addf %35, %41 : vector<128x4xf32>
    %c0_57 = arith.constant 0 : index
    %c0_58 = arith.constant 0 : index
    %c2_59 = arith.constant 2 : index
    %c0_60 = arith.constant 0 : index
    %c0_61 = arith.constant 0 : index
    %43 = vector.load %arg2[%c0_57, %c0_58, %c2_59, %c0_60, %c0_61] : memref<1x1x10x18x4xbf16, #tpu.memory_space<vmem>>, vector<1x1x8x16x4xbf16>
    %44 = vector.shape_cast %43 : vector<1x1x8x16x4xbf16> to vector<8x16x4xbf16>
    %45 = vector.shape_cast %44 : vector<8x16x4xbf16> to vector<128x4xbf16>
    %c2_62 = arith.constant 2 : index
    %c0_63 = arith.constant 0 : index
    %c0_64 = arith.constant 0 : index
    %c0_65 = arith.constant 0 : index
    %46 = vector.load %arg4[%c2_62, %c0_63, %c0_64, %c0_65] : memref<3x3x4x4xbf16, #tpu.memory_space<vmem>>, vector<1x1x4x4xbf16>
    %47 = vector.shape_cast %46 : vector<1x1x4x4xbf16> to vector<4x4xbf16>
    %cst_66 = arith.constant dense<0.000000e+00> : vector<128x4xf32>
    %48 = tpu.matmul %45, %47, %cst_66 {dimension_numbers = #tpu.dot_dimension_numbers<[1], [0], [0], [1], [0, 0, 1, 1], [], []>} : vector<128x4xbf16>, vector<4x4xbf16>, vector<128x4xf32> -> vector<128x4xf32>
    %49 = arith.addf %42, %48 : vector<128x4xf32>
    %c0_67 = arith.constant 0 : index
    %c0_68 = arith.constant 0 : index
    %c2_69 = arith.constant 2 : index
    %c1_70 = arith.constant 1 : index
    %c0_71 = arith.constant 0 : index
    %50 = vector.load %arg2[%c0_67, %c0_68, %c2_69, %c1_70, %c0_71] : memref<1x1x10x18x4xbf16, #tpu.memory_space<vmem>>, vector<1x1x8x16x4xbf16>
    %51 = vector.shape_cast %50 : vector<1x1x8x16x4xbf16> to vector<8x16x4xbf16>
    %52 = vector.shape_cast %51 : vector<8x16x4xbf16> to vector<128x4xbf16>
    %c2_72 = arith.constant 2 : index
    %c1_73 = arith.constant 1 : index
    %c0_74 = arith.constant 0 : index
    %c0_75 = arith.constant 0 : index
    %53 = vector.load %arg4[%c2_72, %c1_73, %c0_74, %c0_75] : memref<3x3x4x4xbf16, #tpu.memory_space<vmem>>, vector<1x1x4x4xbf16>
    %54 = vector.shape_cast %53 : vector<1x1x4x4xbf16> to vector<4x4xbf16>
    %cst_76 = arith.constant dense<0.000000e+00> : vector<128x4xf32>
    %55 = tpu.matmul %52, %54, %cst_76 {dimension_numbers = #tpu.dot_dimension_numbers<[1], [0], [0], [1], [0, 0, 1, 1], [], []>} : vector<128x4xbf16>, vector<4x4xbf16>, vector<128x4xf32> -> vector<128x4xf32>
    %56 = arith.addf %49, %55 : vector<128x4xf32>
    %c0_77 = arith.constant 0 : index
    %c0_78 = arith.constant 0 : index
    %c2_79 = arith.constant 2 : index
    %c2_80 = arith.constant 2 : index
    %c0_81 = arith.constant 0 : index
    %57 = vector.load %arg2[%c0_77, %c0_78, %c2_79, %c2_80, %c0_81] : memref<1x1x10x18x4xbf16, #tpu.memory_space<vmem>>, vector<1x1x8x16x4xbf16>
    %58 = vector.shape_cast %57 : vector<1x1x8x16x4xbf16> to vector<8x16x4xbf16>
    %59 = vector.shape_cast %58 : vector<8x16x4xbf16> to vector<128x4xbf16>
    %c2_82 = arith.constant 2 : index
    %c2_83 = arith.constant 2 : index
    %c0_84 = arith.constant 0 : index
    %c0_85 = arith.constant 0 : index
    %60 = vector.load %arg4[%c2_82, %c2_83, %c0_84, %c0_85] : memref<3x3x4x4xbf16, #tpu.memory_space<vmem>>, vector<1x1x4x4xbf16>
    %61 = vector.shape_cast %60 : vector<1x1x4x4xbf16> to vector<4x4xbf16>
    %cst_86 = arith.constant dense<0.000000e+00> : vector<128x4xf32>
    %62 = tpu.matmul %59, %61, %cst_86 {dimension_numbers = #tpu.dot_dimension_numbers<[1], [0], [0], [1], [0, 0, 1, 1], [], []>} : vector<128x4xbf16>, vector<4x4xbf16>, vector<128x4xf32> -> vector<128x4xf32>
    %63 = arith.addf %56, %62 : vector<128x4xf32>
    %c0_87 = arith.constant 0 : index
    %c0_88 = arith.constant 0 : index
    %c0_89 = arith.constant 0 : index
    %c0_90 = arith.constant 0 : index
    %c0_91 = arith.constant 0 : index
    %64 = vector.load %arg3[%c0_87, %c0_88, %c0_89, %c0_90, %c0_91] : memref<1x1x10x18x4xbf16, #tpu.memory_space<vmem>>, vector<1x1x8x16x4xbf16>
    %65 = vector.shape_cast %64 : vector<1x1x8x16x4xbf16> to vector<8x16x4xbf16>
    %66 = vector.shape_cast %65 : vector<8x16x4xbf16> to vector<128x4xbf16>
    %c0_92 = arith.constant 0 : index
    %c0_93 = arith.constant 0 : index
    %c0_94 = arith.constant 0 : index
    %c0_95 = arith.constant 0 : index
    %67 = vector.load %arg5[%c0_92, %c0_93, %c0_94, %c0_95] : memref<3x3x4x4xbf16, #tpu.memory_space<vmem>>, vector<1x1x4x4xbf16>
    %68 = vector.shape_cast %67 : vector<1x1x4x4xbf16> to vector<4x4xbf16>
    %cst_96 = arith.constant dense<0.000000e+00> : vector<128x4xf32>
    %69 = tpu.matmul %66, %68, %cst_96 {dimension_numbers = #tpu.dot_dimension_numbers<[1], [0], [0], [1], [0, 0, 1, 1], [], []>} : vector<128x4xbf16>, vector<4x4xbf16>, vector<128x4xf32> -> vector<128x4xf32>
    %70 = arith.addf %63, %69 : vector<128x4xf32>
    %c0_97 = arith.constant 0 : index
    %c0_98 = arith.constant 0 : index
    %c0_99 = arith.constant 0 : index
    %c1_100 = arith.constant 1 : index
    %c0_101 = arith.constant 0 : index
    %71 = vector.load %arg3[%c0_97, %c0_98, %c0_99, %c1_100, %c0_101] : memref<1x1x10x18x4xbf16, #tpu.memory_space<vmem>>, vector<1x1x8x16x4xbf16>
    %72 = vector.shape_cast %71 : vector<1x1x8x16x4xbf16> to vector<8x16x4xbf16>
    %73 = vector.shape_cast %72 : vector<8x16x4xbf16> to vector<128x4xbf16>
    %c0_102 = arith.constant 0 : index
    %c1_103 = arith.constant 1 : index
    %c0_104 = arith.constant 0 : index
    %c0_105 = arith.constant 0 : index
    %74 = vector.load %arg5[%c0_102, %c1_103, %c0_104, %c0_105] : memref<3x3x4x4xbf16, #tpu.memory_space<vmem>>, vector<1x1x4x4xbf16>
    %75 = vector.shape_cast %74 : vector<1x1x4x4xbf16> to vector<4x4xbf16>
    %cst_106 = arith.constant dense<0.000000e+00> : vector<128x4xf32>
    %76 = tpu.matmul %73, %75, %cst_106 {dimension_numbers = #tpu.dot_dimension_numbers<[1], [0], [0], [1], [0, 0, 1, 1], [], []>} : vector<128x4xbf16>, vector<4x4xbf16>, vector<128x4xf32> -> vector<128x4xf32>
    %77 = arith.addf %70, %76 : vector<128x4xf32>
    %c0_107 = arith.constant 0 : index
    %c0_108 = arith.constant 0 : index
    %c0_109 = arith.constant 0 : index
    %c2_110 = arith.constant 2 : index
    %c0_111 = arith.constant 0 : index
    %78 = vector.load %arg3[%c0_107, %c0_108, %c0_109, %c2_110, %c0_111] : memref<1x1x10x18x4xbf16, #tpu.memory_space<vmem>>, vector<1x1x8x16x4xbf16>
    %79 = vector.shape_cast %78 : vector<1x1x8x16x4xbf16> to vector<8x16x4xbf16>
    %80 = vector.shape_cast %79 : vector<8x16x4xbf16> to vector<128x4xbf16>
    %c0_112 = arith.constant 0 : index
    %c2_113 = arith.constant 2 : index
    %c0_114 = arith.constant 0 : index
    %c0_115 = arith.constant 0 : index
    %81 = vector.load %arg5[%c0_112, %c2_113, %c0_114, %c0_115] : memref<3x3x4x4xbf16, #tpu.memory_space<vmem>>, vector<1x1x4x4xbf16>
    %82 = vector.shape_cast %81 : vector<1x1x4x4xbf16> to vector<4x4xbf16>
    %cst_116 = arith.constant dense<0.000000e+00> : vector<128x4xf32>
    %83 = tpu.matmul %80, %82, %cst_116 {dimension_numbers = #tpu.dot_dimension_numbers<[1], [0], [0], [1], [0, 0, 1, 1], [], []>} : vector<128x4xbf16>, vector<4x4xbf16>, vector<128x4xf32> -> vector<128x4xf32>
    %84 = arith.addf %77, %83 : vector<128x4xf32>
    %c0_117 = arith.constant 0 : index
    %c0_118 = arith.constant 0 : index
    %c1_119 = arith.constant 1 : index
    %c0_120 = arith.constant 0 : index
    %c0_121 = arith.constant 0 : index
    %85 = vector.load %arg3[%c0_117, %c0_118, %c1_119, %c0_120, %c0_121] : memref<1x1x10x18x4xbf16, #tpu.memory_space<vmem>>, vector<1x1x8x16x4xbf16>
    %86 = vector.shape_cast %85 : vector<1x1x8x16x4xbf16> to vector<8x16x4xbf16>
    %87 = vector.shape_cast %86 : vector<8x16x4xbf16> to vector<128x4xbf16>
    %c1_122 = arith.constant 1 : index
    %c0_123 = arith.constant 0 : index
    %c0_124 = arith.constant 0 : index
    %c0_125 = arith.constant 0 : index
    %88 = vector.load %arg5[%c1_122, %c0_123, %c0_124, %c0_125] : memref<3x3x4x4xbf16, #tpu.memory_space<vmem>>, vector<1x1x4x4xbf16>
    %89 = vector.shape_cast %88 : vector<1x1x4x4xbf16> to vector<4x4xbf16>
    %cst_126 = arith.constant dense<0.000000e+00> : vector<128x4xf32>
    %90 = tpu.matmul %87, %89, %cst_126 {dimension_numbers = #tpu.dot_dimension_numbers<[1], [0], [0], [1], [0, 0, 1, 1], [], []>} : vector<128x4xbf16>, vector<4x4xbf16>, vector<128x4xf32> -> vector<128x4xf32>
    %91 = arith.addf %84, %90 : vector<128x4xf32>
    %c0_127 = arith.constant 0 : index
    %c0_128 = arith.constant 0 : index
    %c1_129 = arith.constant 1 : index
    %c1_130 = arith.constant 1 : index
    %c0_131 = arith.constant 0 : index
    %92 = vector.load %arg3[%c0_127, %c0_128, %c1_129, %c1_130, %c0_131] : memref<1x1x10x18x4xbf16, #tpu.memory_space<vmem>>, vector<1x1x8x16x4xbf16>
    %93 = vector.shape_cast %92 : vector<1x1x8x16x4xbf16> to vector<8x16x4xbf16>
    %94 = vector.shape_cast %93 : vector<8x16x4xbf16> to vector<128x4xbf16>
    %c1_132 = arith.constant 1 : index
    %c1_133 = arith.constant 1 : index
    %c0_134 = arith.constant 0 : index
    %c0_135 = arith.constant 0 : index
    %95 = vector.load %arg5[%c1_132, %c1_133, %c0_134, %c0_135] : memref<3x3x4x4xbf16, #tpu.memory_space<vmem>>, vector<1x1x4x4xbf16>
    %96 = vector.shape_cast %95 : vector<1x1x4x4xbf16> to vector<4x4xbf16>
    %cst_136 = arith.constant dense<0.000000e+00> : vector<128x4xf32>
    %97 = tpu.matmul %94, %96, %cst_136 {dimension_numbers = #tpu.dot_dimension_numbers<[1], [0], [0], [1], [0, 0, 1, 1], [], []>} : vector<128x4xbf16>, vector<4x4xbf16>, vector<128x4xf32> -> vector<128x4xf32>
    %98 = arith.addf %91, %97 : vector<128x4xf32>
    %c0_137 = arith.constant 0 : index
    %c0_138 = arith.constant 0 : index
    %c1_139 = arith.constant 1 : index
    %c2_140 = arith.constant 2 : index
    %c0_141 = arith.constant 0 : index
    %99 = vector.load %arg3[%c0_137, %c0_138, %c1_139, %c2_140, %c0_141] : memref<1x1x10x18x4xbf16, #tpu.memory_space<vmem>>, vector<1x1x8x16x4xbf16>
    %100 = vector.shape_cast %99 : vector<1x1x8x16x4xbf16> to vector<8x16x4xbf16>
    %101 = vector.shape_cast %100 : vector<8x16x4xbf16> to vector<128x4xbf16>
    %c1_142 = arith.constant 1 : index
    %c2_143 = arith.constant 2 : index
    %c0_144 = arith.constant 0 : index
    %c0_145 = arith.constant 0 : index
    %102 = vector.load %arg5[%c1_142, %c2_143, %c0_144, %c0_145] : memref<3x3x4x4xbf16, #tpu.memory_space<vmem>>, vector<1x1x4x4xbf16>
    %103 = vector.shape_cast %102 : vector<1x1x4x4xbf16> to vector<4x4xbf16>
    %cst_146 = arith.constant dense<0.000000e+00> : vector<128x4xf32>
    %104 = tpu.matmul %101, %103, %cst_146 {dimension_numbers = #tpu.dot_dimension_numbers<[1], [0], [0], [1], [0, 0, 1, 1], [], []>} : vector<128x4xbf16>, vector<4x4xbf16>, vector<128x4xf32> -> vector<128x4xf32>
    %105 = arith.addf %98, %104 : vector<128x4xf32>
    %c0_147 = arith.constant 0 : index
    %c0_148 = arith.constant 0 : index
    %c2_149 = arith.constant 2 : index
    %c0_150 = arith.constant 0 : index
    %c0_151 = arith.constant 0 : index
    %106 = vector.load %arg3[%c0_147, %c0_148, %c2_149, %c0_150, %c0_151] : memref<1x1x10x18x4xbf16, #tpu.memory_space<vmem>>, vector<1x1x8x16x4xbf16>
    %107 = vector.shape_cast %106 : vector<1x1x8x16x4xbf16> to vector<8x16x4xbf16>
    %108 = vector.shape_cast %107 : vector<8x16x4xbf16> to vector<128x4xbf16>
    %c2_152 = arith.constant 2 : index
    %c0_153 = arith.constant 0 : index
    %c0_154 = arith.constant 0 : index
    %c0_155 = arith.constant 0 : index
    %109 = vector.load %arg5[%c2_152, %c0_153, %c0_154, %c0_155] : memref<3x3x4x4xbf16, #tpu.memory_space<vmem>>, vector<1x1x4x4xbf16>
    %110 = vector.shape_cast %109 : vector<1x1x4x4xbf16> to vector<4x4xbf16>
    %cst_156 = arith.constant dense<0.000000e+00> : vector<128x4xf32>
    %111 = tpu.matmul %108, %110, %cst_156 {dimension_numbers = #tpu.dot_dimension_numbers<[1], [0], [0], [1], [0, 0, 1, 1], [], []>} : vector<128x4xbf16>, vector<4x4xbf16>, vector<128x4xf32> -> vector<128x4xf32>
    %112 = arith.addf %105, %111 : vector<128x4xf32>
    %c0_157 = arith.constant 0 : index
    %c0_158 = arith.constant 0 : index
    %c2_159 = arith.constant 2 : index
    %c1_160 = arith.constant 1 : index
    %c0_161 = arith.constant 0 : index
    %113 = vector.load %arg3[%c0_157, %c0_158, %c2_159, %c1_160, %c0_161] : memref<1x1x10x18x4xbf16, #tpu.memory_space<vmem>>, vector<1x1x8x16x4xbf16>
    %114 = vector.shape_cast %113 : vector<1x1x8x16x4xbf16> to vector<8x16x4xbf16>
    %115 = vector.shape_cast %114 : vector<8x16x4xbf16> to vector<128x4xbf16>
    %c2_162 = arith.constant 2 : index
    %c1_163 = arith.constant 1 : index
    %c0_164 = arith.constant 0 : index
    %c0_165 = arith.constant 0 : index
    %116 = vector.load %arg5[%c2_162, %c1_163, %c0_164, %c0_165] : memref<3x3x4x4xbf16, #tpu.memory_space<vmem>>, vector<1x1x4x4xbf16>
    %117 = vector.shape_cast %116 : vector<1x1x4x4xbf16> to vector<4x4xbf16>
    %cst_166 = arith.constant dense<0.000000e+00> : vector<128x4xf32>
    %118 = tpu.matmul %115, %117, %cst_166 {dimension_numbers = #tpu.dot_dimension_numbers<[1], [0], [0], [1], [0, 0, 1, 1], [], []>} : vector<128x4xbf16>, vector<4x4xbf16>, vector<128x4xf32> -> vector<128x4xf32>
    %119 = arith.addf %112, %118 : vector<128x4xf32>
    %c0_167 = arith.constant 0 : index
    %c0_168 = arith.constant 0 : index
    %c2_169 = arith.constant 2 : index
    %c2_170 = arith.constant 2 : index
    %c0_171 = arith.constant 0 : index
    %120 = vector.load %arg3[%c0_167, %c0_168, %c2_169, %c2_170, %c0_171] : memref<1x1x10x18x4xbf16, #tpu.memory_space<vmem>>, vector<1x1x8x16x4xbf16>
    %121 = vector.shape_cast %120 : vector<1x1x8x16x4xbf16> to vector<8x16x4xbf16>
    %122 = vector.shape_cast %121 : vector<8x16x4xbf16> to vector<128x4xbf16>
    %c2_172 = arith.constant 2 : index
    %c2_173 = arith.constant 2 : index
    %c0_174 = arith.constant 0 : index
    %c0_175 = arith.constant 0 : index
    %123 = vector.load %arg5[%c2_172, %c2_173, %c0_174, %c0_175] : memref<3x3x4x4xbf16, #tpu.memory_space<vmem>>, vector<1x1x4x4xbf16>
    %124 = vector.shape_cast %123 : vector<1x1x4x4xbf16> to vector<4x4xbf16>
    %cst_176 = arith.constant dense<0.000000e+00> : vector<128x4xf32>
    %125 = tpu.matmul %122, %124, %cst_176 {dimension_numbers = #tpu.dot_dimension_numbers<[1], [0], [0], [1], [0, 0, 1, 1], [], []>} : vector<128x4xbf16>, vector<4x4xbf16>, vector<128x4xf32> -> vector<128x4xf32>
    %126 = arith.addf %119, %125 : vector<128x4xf32>
    %c0_177 = arith.constant 0 : index
    %c0_178 = arith.constant 0 : index
    %127 = vector.load %arg6[%c0_177, %c0_178] : memref<1x4xf32, #tpu.memory_space<vmem>>, vector<1x4xf32>
    %128 = vector.broadcast %127 : vector<1x4xf32> to vector<128x4xf32>
    %129 = arith.addf %126, %128 : vector<128x4xf32>
    %cst_179 = arith.constant dense<0.000000e+00> : vector<4xf32>
    %130 = vector.multi_reduction <add>, %129, %cst_179 [0] : vector<128x4xf32> to vector<4xf32>
    %131 = vector.shape_cast %130 : vector<4xf32> to vector<1x4xf32>
    %c0_180 = arith.constant 0 : index
    %c0_181 = arith.constant 0 : index
    %c0_182 = arith.constant 0 : index
    %c0_183 = arith.constant 0 : index
    %132 = vector.load %arg8[%c0_180, %c0_181, %c0_182, %c0_183] : memref<1x1x1x4xf32, #tpu.memory_space<vmem>>, vector<1x1x1x4xf32>
    %133 = vector.shape_cast %132 : vector<1x1x1x4xf32> to vector<1x4xf32>
    %134 = vector.shape_cast %131 : vector<1x4xf32> to vector<1x1x1x4xf32>
    tpu.vector_store %arg8[%c0_180, %c0_181, %c0_182, %c0_183], %134 {strides = array<i32>} : memref<1x1x1x4xf32, #tpu.memory_space<vmem>>, vector<1x1x1x4xf32>,
    %135 = arith.mulf %129, %129 : vector<128x4xf32>
    %cst_184 = arith.constant dense<0.000000e+00> : vector<4xf32>
    %136 = vector.multi_reduction <add>, %135, %cst_184 [0] : vector<128x4xf32> to vector<4xf32>
    %137 = vector.shape_cast %136 : vector<4xf32> to vector<1x4xf32>
    %c0_185 = arith.constant 0 : index
    %c0_186 = arith.constant 0 : index
    %c0_187 = arith.constant 0 : index
    %c0_188 = arith.constant 0 : index
    %138 = vector.load %arg9[%c0_185, %c0_186, %c0_187, %c0_188] : memref<1x1x1x4xf32, #tpu.memory_space<vmem>>, vector<1x1x1x4xf32>
    %139 = vector.shape_cast %138 : vector<1x1x1x4xf32> to vector<1x4xf32>
    %140 = vector.shape_cast %137 : vector<1x4xf32> to vector<1x1x1x4xf32>
    tpu.vector_store %arg9[%c0_185, %c0_186, %c0_187, %c0_188], %140 {strides = array<i32>} : memref<1x1x1x4xf32, #tpu.memory_space<vmem>>, vector<1x1x1x4xf32>,
    %141 = vector.shape_cast %129 : vector<128x4xf32> to vector<8x16x4xf32>
    %c0_189 = arith.constant 0 : index
    %c0_190 = arith.constant 0 : index
    %c0_191 = arith.constant 0 : index
    %c0_192 = arith.constant 0 : index
    %142 = vector.load %arg7[%c0_189, %c0_190, %c0_191, %c0_192] : memref<1x8x16x4xf32, #tpu.memory_space<vmem>>, vector<1x8x16x4xf32>
    %143 = vector.shape_cast %142 : vector<1x8x16x4xf32> to vector<8x16x4xf32>
    %144 = vector.shape_cast %141 : vector<8x16x4xf32> to vector<1x8x16x4xf32>
    tpu.vector_store %arg7[%c0_189, %c0_190, %c0_191, %c0_192], %144 {strides = array<i32>} : memref<1x8x16x4xf32, #tpu.memory_space<vmem>>, vector<1x8x16x4xf32>,
    return
  }
  func.func @transform_0(%arg0: i32, %arg1: i32) -> (i32, i32, i32, i32, i32) {
    %c0_i32 = arith.constant 0 : i32
    %c0_i32_0 = arith.constant 0 : i32
    %c0_i32_1 = arith.constant 0 : i32
    %c0_i32_2 = arith.constant 0 : i32
    return %arg0, %arg1, %c0_i32, %c0_i32_0, %c0_i32_1 : i32, i32, i32, i32, i32
  }
  func.func @transform_1(%arg0: i32, %arg1: i32) -> (i32, i32, i32, i32, i32) {
    %c0_i32 = arith.constant 0 : i32
    %c0_i32_0 = arith.constant 0 : i32
    %c0_i32_1 = arith.constant 0 : i32
    %c0_i32_2 = arith.constant 0 : i32
    return %arg0, %arg1, %c0_i32, %c0_i32_0, %c0_i32_1 : i32, i32, i32, i32, i32
  }
  func.func @transform_2(%arg0: i32, %arg1: i32) -> (i32, i32, i32, i32) {
    %c0_i32 = arith.constant 0 : i32
    %c0_i32_0 = arith.constant 0 : i32
    %c0_i32_1 = arith.constant 0 : i32
    %c0_i32_2 = arith.constant 0 : i32
    %c0_i32_3 = arith.constant 0 : i32
    return %c0_i32, %c0_i32_0, %c0_i32_1, %c0_i32_2 : i32, i32, i32, i32
  }
  func.func @transform_3(%arg0: i32, %arg1: i32) -> (i32, i32, i32, i32) {
    %c0_i32 = arith.constant 0 : i32
    %c0_i32_0 = arith.constant 0 : i32
    %c0_i32_1 = arith.constant 0 : i32
    %c0_i32_2 = arith.constant 0 : i32
    %c0_i32_3 = arith.constant 0 : i32
    return %c0_i32, %c0_i32_0, %c0_i32_1, %c0_i32_2 : i32, i32, i32, i32
  }
  func.func @transform_4(%arg0: i32, %arg1: i32) -> (i32, i32) {
    %c0_i32 = arith.constant 0 : i32
    %c0_i32_0 = arith.constant 0 : i32
    %c0_i32_1 = arith.constant 0 : i32
    return %c0_i32, %c0_i32_0 : i32, i32
  }
  func.func @transform_5(%arg0: i32, %arg1: i32) -> (i32, i32, i32, i32) {
    %c0_i32 = arith.constant 0 : i32
    %c0_i32_0 = arith.constant 0 : i32
    %c0_i32_1 = arith.constant 0 : i32
    return %arg0, %arg1, %c0_i32, %c0_i32_0 : i32, i32, i32, i32
  }
  func.func @transform_6(%arg0: i32, %arg1: i32) -> (i32, i32, i32, i32) {
    %c0_i32 = arith.constant 0 : i32
    %c0_i32_0 = arith.constant 0 : i32
    %c0_i32_1 = arith.constant 0 : i32
    return %arg0, %arg1, %c0_i32, %c0_i32_0 : i32, i32, i32, i32
  }
  func.func @transform_7(%arg0: i32, %arg1: i32) -> (i32, i32, i32, i32) {
    %c0_i32 = arith.constant 0 : i32
    %c0_i32_0 = arith.constant 0 : i32
    %c0_i32_1 = arith.constant 0 : i32
    return %arg0, %arg1, %c0_i32, %c0_i32_0 : i32, i32, i32, i32
  }
}

module attributes {stable_mosaic.version = 11 : i64} {
  func.func @_scale_shift_relu_kernel(%arg0: i32, %arg1: memref<32x64xf32, #tpu.memory_space<vmem>>, %arg2: memref<1x64xf32, #tpu.memory_space<vmem>>, %arg3: memref<1x64xf32, #tpu.memory_space<vmem>>, %arg4: memref<32x64xbf16, #tpu.memory_space<vmem>>) attributes {dimension_semantics = [#tpu.dimension_semantics<parallel>], iteration_bounds = array<i64: 1>, scalar_prefetch = 0 : i64, scratch_operands = 0 : i64, tpu.core_type = #tpu.core_type<tc>, window_params = [{transform_indices = @transform_0, window_bounds = array<i64: 32, 64>}, {pipeline_mode = #tpu.pipeline_mode<synchronous>, transform_indices = @transform_1, window_bounds = array<i64: 1, 64>}, {pipeline_mode = #tpu.pipeline_mode<synchronous>, transform_indices = @transform_2, window_bounds = array<i64: 1, 64>}, {transform_indices = @transform_3, window_bounds = array<i64: 32, 64>}]} {
    %c0 = arith.constant 0 : index
    %c0_0 = arith.constant 0 : index
    %0 = vector.load %arg1[%c0, %c0_0] : memref<32x64xf32, #tpu.memory_space<vmem>>, vector<32x64xf32>
    %c0_1 = arith.constant 0 : index
    %c0_2 = arith.constant 0 : index
    %1 = vector.load %arg2[%c0_1, %c0_2] : memref<1x64xf32, #tpu.memory_space<vmem>>, vector<1x64xf32>
    %2 = vector.broadcast %1 : vector<1x64xf32> to vector<32x64xf32>
    %3 = arith.mulf %0, %2 : vector<32x64xf32>
    %c0_3 = arith.constant 0 : index
    %c0_4 = arith.constant 0 : index
    %4 = vector.load %arg3[%c0_3, %c0_4] : memref<1x64xf32, #tpu.memory_space<vmem>>, vector<1x64xf32>
    %5 = vector.broadcast %4 : vector<1x64xf32> to vector<32x64xf32>
    %6 = arith.addf %3, %5 : vector<32x64xf32>
    %cst = arith.constant 0.000000e+00 : f32
    %7 = vector.broadcast %cst : f32 to vector<32x64xf32>
    %8 = arith.maximumf %6, %7 : vector<32x64xf32>
    %9 = arith.truncf %8 : vector<32x64xf32> to vector<32x64xbf16>
    %c0_5 = arith.constant 0 : index
    %c0_6 = arith.constant 0 : index
    %10 = vector.load %arg4[%c0_5, %c0_6] : memref<32x64xbf16, #tpu.memory_space<vmem>>, vector<32x64xbf16>
    tpu.vector_store %arg4[%c0_5, %c0_6], %9 {strides = array<i32>} : memref<32x64xbf16, #tpu.memory_space<vmem>>, vector<32x64xbf16>,
    return
  }
  func.func @transform_0(%arg0: i32) -> (i32, i32) {
    %c0_i32 = arith.constant 0 : i32
    %c0_i32_0 = arith.constant 0 : i32
    return %arg0, %c0_i32 : i32, i32
  }
  func.func @transform_1(%arg0: i32) -> (i32, i32) {
    %c0_i32 = arith.constant 0 : i32
    %c0_i32_0 = arith.constant 0 : i32
    %c0_i32_1 = arith.constant 0 : i32
    return %c0_i32, %c0_i32_0 : i32, i32
  }
  func.func @transform_2(%arg0: i32) -> (i32, i32) {
    %c0_i32 = arith.constant 0 : i32
    %c0_i32_0 = arith.constant 0 : i32
    %c0_i32_1 = arith.constant 0 : i32
    return %c0_i32, %c0_i32_0 : i32, i32
  }
  func.func @transform_3(%arg0: i32) -> (i32, i32) {
    %c0_i32 = arith.constant 0 : i32
    %c0_i32_0 = arith.constant 0 : i32
    return %arg0, %c0_i32 : i32, i32
  }
}

module attributes {stable_mosaic.version = 11 : i64} {
  func.func @kernel(%arg0: i32, %arg1: i32, %arg2: memref<1x1x10x18x4xbf16, #tpu.memory_space<vmem>>, %arg3: memref<3x3x4x4xbf16, #tpu.memory_space<vmem>>, %arg4: memref<1x4xf32, #tpu.memory_space<vmem>>, %arg5: memref<1x8x16x4xf32, #tpu.memory_space<vmem>>, %arg6: memref<1x1x1x4xf32, #tpu.memory_space<vmem>>, %arg7: memref<1x1x1x4xf32, #tpu.memory_space<vmem>>) attributes {dimension_semantics = [#tpu.dimension_semantics<parallel>, #tpu.dimension_semantics<parallel>], iteration_bounds = array<i64: 2, 2>, scalar_prefetch = 0 : i64, scratch_operands = 0 : i64, tpu.core_type = #tpu.core_type<tc>, window_params = [{transform_indices = @transform_0, window_bounds = array<i64: 1, 1, 10, 18, 4>}, {pipeline_mode = #tpu.pipeline_mode<synchronous>, transform_indices = @transform_1, window_bounds = array<i64: 3, 3, 4, 4>}, {pipeline_mode = #tpu.pipeline_mode<synchronous>, transform_indices = @transform_2, window_bounds = array<i64: 1, 4>}, {transform_indices = @transform_3, window_bounds = array<i64: 1, 8, 16, 4>}, {transform_indices = @transform_4, window_bounds = array<i64: 1, 1, 1, 4>}, {transform_indices = @transform_5, window_bounds = array<i64: 1, 1, 1, 4>}]} {
    %cst = arith.constant 0.000000e+00 : f32
    %0 = vector.broadcast %cst : f32 to vector<128x4xf32>
    %c0 = arith.constant 0 : index
    %c0_0 = arith.constant 0 : index
    %c0_1 = arith.constant 0 : index
    %c0_2 = arith.constant 0 : index
    %c0_3 = arith.constant 0 : index
    %1 = vector.load %arg2[%c0, %c0_0, %c0_1, %c0_2, %c0_3] : memref<1x1x10x18x4xbf16, #tpu.memory_space<vmem>>, vector<1x1x8x16x4xbf16>
    %2 = vector.shape_cast %1 : vector<1x1x8x16x4xbf16> to vector<8x16x4xbf16>
    %3 = vector.shape_cast %2 : vector<8x16x4xbf16> to vector<128x4xbf16>
    %c0_4 = arith.constant 0 : index
    %c0_5 = arith.constant 0 : index
    %c0_6 = arith.constant 0 : index
    %c0_7 = arith.constant 0 : index
    %4 = vector.load %arg3[%c0_4, %c0_5, %c0_6, %c0_7] : memref<3x3x4x4xbf16, #tpu.memory_space<vmem>>, vector<1x1x4x4xbf16>
    %5 = vector.shape_cast %4 : vector<1x1x4x4xbf16> to vector<4x4xbf16>
    %cst_8 = arith.constant dense<0.000000e+00> : vector<128x4xf32>
    %6 = tpu.matmul %3, %5, %cst_8 {dimension_numbers = #tpu.dot_dimension_numbers<[1], [0], [0], [1], [0, 0, 1, 1], [], []>} : vector<128x4xbf16>, vector<4x4xbf16>, vector<128x4xf32> -> vector<128x4xf32>
    %7 = arith.addf %0, %6 : vector<128x4xf32>
    %c0_9 = arith.constant 0 : index
    %c0_10 = arith.constant 0 : index
    %c0_11 = arith.constant 0 : index
    %c1 = arith.constant 1 : index
    %c0_12 = arith.constant 0 : index
    %8 = vector.load %arg2[%c0_9, %c0_10, %c0_11, %c1, %c0_12] : memref<1x1x10x18x4xbf16, #tpu.memory_space<vmem>>, vector<1x1x8x16x4xbf16>
    %9 = vector.shape_cast %8 : vector<1x1x8x16x4xbf16> to vector<8x16x4xbf16>
    %10 = vector.shape_cast %9 : vector<8x16x4xbf16> to vector<128x4xbf16>
    %c0_13 = arith.constant 0 : index
    %c1_14 = arith.constant 1 : index
    %c0_15 = arith.constant 0 : index
    %c0_16 = arith.constant 0 : index
    %11 = vector.load %arg3[%c0_13, %c1_14, %c0_15, %c0_16] : memref<3x3x4x4xbf16, #tpu.memory_space<vmem>>, vector<1x1x4x4xbf16>
    %12 = vector.shape_cast %11 : vector<1x1x4x4xbf16> to vector<4x4xbf16>
    %cst_17 = arith.constant dense<0.000000e+00> : vector<128x4xf32>
    %13 = tpu.matmul %10, %12, %cst_17 {dimension_numbers = #tpu.dot_dimension_numbers<[1], [0], [0], [1], [0, 0, 1, 1], [], []>} : vector<128x4xbf16>, vector<4x4xbf16>, vector<128x4xf32> -> vector<128x4xf32>
    %14 = arith.addf %7, %13 : vector<128x4xf32>
    %c0_18 = arith.constant 0 : index
    %c0_19 = arith.constant 0 : index
    %c0_20 = arith.constant 0 : index
    %c2 = arith.constant 2 : index
    %c0_21 = arith.constant 0 : index
    %15 = vector.load %arg2[%c0_18, %c0_19, %c0_20, %c2, %c0_21] : memref<1x1x10x18x4xbf16, #tpu.memory_space<vmem>>, vector<1x1x8x16x4xbf16>
    %16 = vector.shape_cast %15 : vector<1x1x8x16x4xbf16> to vector<8x16x4xbf16>
    %17 = vector.shape_cast %16 : vector<8x16x4xbf16> to vector<128x4xbf16>
    %c0_22 = arith.constant 0 : index
    %c2_23 = arith.constant 2 : index
    %c0_24 = arith.constant 0 : index
    %c0_25 = arith.constant 0 : index
    %18 = vector.load %arg3[%c0_22, %c2_23, %c0_24, %c0_25] : memref<3x3x4x4xbf16, #tpu.memory_space<vmem>>, vector<1x1x4x4xbf16>
    %19 = vector.shape_cast %18 : vector<1x1x4x4xbf16> to vector<4x4xbf16>
    %cst_26 = arith.constant dense<0.000000e+00> : vector<128x4xf32>
    %20 = tpu.matmul %17, %19, %cst_26 {dimension_numbers = #tpu.dot_dimension_numbers<[1], [0], [0], [1], [0, 0, 1, 1], [], []>} : vector<128x4xbf16>, vector<4x4xbf16>, vector<128x4xf32> -> vector<128x4xf32>
    %21 = arith.addf %14, %20 : vector<128x4xf32>
    %c0_27 = arith.constant 0 : index
    %c0_28 = arith.constant 0 : index
    %c1_29 = arith.constant 1 : index
    %c0_30 = arith.constant 0 : index
    %c0_31 = arith.constant 0 : index
    %22 = vector.load %arg2[%c0_27, %c0_28, %c1_29, %c0_30, %c0_31] : memref<1x1x10x18x4xbf16, #tpu.memory_space<vmem>>, vector<1x1x8x16x4xbf16>
    %23 = vector.shape_cast %22 : vector<1x1x8x16x4xbf16> to vector<8x16x4xbf16>
    %24 = vector.shape_cast %23 : vector<8x16x4xbf16> to vector<128x4xbf16>
    %c1_32 = arith.constant 1 : index
    %c0_33 = arith.constant 0 : index
    %c0_34 = arith.constant 0 : index
    %c0_35 = arith.constant 0 : index
    %25 = vector.load %arg3[%c1_32, %c0_33, %c0_34, %c0_35] : memref<3x3x4x4xbf16, #tpu.memory_space<vmem>>, vector<1x1x4x4xbf16>
    %26 = vector.shape_cast %25 : vector<1x1x4x4xbf16> to vector<4x4xbf16>
    %cst_36 = arith.constant dense<0.000000e+00> : vector<128x4xf32>
    %27 = tpu.matmul %24, %26, %cst_36 {dimension_numbers = #tpu.dot_dimension_numbers<[1], [0], [0], [1], [0, 0, 1, 1], [], []>} : vector<128x4xbf16>, vector<4x4xbf16>, vector<128x4xf32> -> vector<128x4xf32>
    %28 = arith.addf %21, %27 : vector<128x4xf32>
    %c0_37 = arith.constant 0 : index
    %c0_38 = arith.constant 0 : index
    %c1_39 = arith.constant 1 : index
    %c1_40 = arith.constant 1 : index
    %c0_41 = arith.constant 0 : index
    %29 = vector.load %arg2[%c0_37, %c0_38, %c1_39, %c1_40, %c0_41] : memref<1x1x10x18x4xbf16, #tpu.memory_space<vmem>>, vector<1x1x8x16x4xbf16>
    %30 = vector.shape_cast %29 : vector<1x1x8x16x4xbf16> to vector<8x16x4xbf16>
    %31 = vector.shape_cast %30 : vector<8x16x4xbf16> to vector<128x4xbf16>
    %c1_42 = arith.constant 1 : index
    %c1_43 = arith.constant 1 : index
    %c0_44 = arith.constant 0 : index
    %c0_45 = arith.constant 0 : index
    %32 = vector.load %arg3[%c1_42, %c1_43, %c0_44, %c0_45] : memref<3x3x4x4xbf16, #tpu.memory_space<vmem>>, vector<1x1x4x4xbf16>
    %33 = vector.shape_cast %32 : vector<1x1x4x4xbf16> to vector<4x4xbf16>
    %cst_46 = arith.constant dense<0.000000e+00> : vector<128x4xf32>
    %34 = tpu.matmul %31, %33, %cst_46 {dimension_numbers = #tpu.dot_dimension_numbers<[1], [0], [0], [1], [0, 0, 1, 1], [], []>} : vector<128x4xbf16>, vector<4x4xbf16>, vector<128x4xf32> -> vector<128x4xf32>
    %35 = arith.addf %28, %34 : vector<128x4xf32>
    %c0_47 = arith.constant 0 : index
    %c0_48 = arith.constant 0 : index
    %c1_49 = arith.constant 1 : index
    %c2_50 = arith.constant 2 : index
    %c0_51 = arith.constant 0 : index
    %36 = vector.load %arg2[%c0_47, %c0_48, %c1_49, %c2_50, %c0_51] : memref<1x1x10x18x4xbf16, #tpu.memory_space<vmem>>, vector<1x1x8x16x4xbf16>
    %37 = vector.shape_cast %36 : vector<1x1x8x16x4xbf16> to vector<8x16x4xbf16>
    %38 = vector.shape_cast %37 : vector<8x16x4xbf16> to vector<128x4xbf16>
    %c1_52 = arith.constant 1 : index
    %c2_53 = arith.constant 2 : index
    %c0_54 = arith.constant 0 : index
    %c0_55 = arith.constant 0 : index
    %39 = vector.load %arg3[%c1_52, %c2_53, %c0_54, %c0_55] : memref<3x3x4x4xbf16, #tpu.memory_space<vmem>>, vector<1x1x4x4xbf16>
    %40 = vector.shape_cast %39 : vector<1x1x4x4xbf16> to vector<4x4xbf16>
    %cst_56 = arith.constant dense<0.000000e+00> : vector<128x4xf32>
    %41 = tpu.matmul %38, %40, %cst_56 {dimension_numbers = #tpu.dot_dimension_numbers<[1], [0], [0], [1], [0, 0, 1, 1], [], []>} : vector<128x4xbf16>, vector<4x4xbf16>, vector<128x4xf32> -> vector<128x4xf32>
    %42 = arith.addf %35, %41 : vector<128x4xf32>
    %c0_57 = arith.constant 0 : index
    %c0_58 = arith.constant 0 : index
    %c2_59 = arith.constant 2 : index
    %c0_60 = arith.constant 0 : index
    %c0_61 = arith.constant 0 : index
    %43 = vector.load %arg2[%c0_57, %c0_58, %c2_59, %c0_60, %c0_61] : memref<1x1x10x18x4xbf16, #tpu.memory_space<vmem>>, vector<1x1x8x16x4xbf16>
    %44 = vector.shape_cast %43 : vector<1x1x8x16x4xbf16> to vector<8x16x4xbf16>
    %45 = vector.shape_cast %44 : vector<8x16x4xbf16> to vector<128x4xbf16>
    %c2_62 = arith.constant 2 : index
    %c0_63 = arith.constant 0 : index
    %c0_64 = arith.constant 0 : index
    %c0_65 = arith.constant 0 : index
    %46 = vector.load %arg3[%c2_62, %c0_63, %c0_64, %c0_65] : memref<3x3x4x4xbf16, #tpu.memory_space<vmem>>, vector<1x1x4x4xbf16>
    %47 = vector.shape_cast %46 : vector<1x1x4x4xbf16> to vector<4x4xbf16>
    %cst_66 = arith.constant dense<0.000000e+00> : vector<128x4xf32>
    %48 = tpu.matmul %45, %47, %cst_66 {dimension_numbers = #tpu.dot_dimension_numbers<[1], [0], [0], [1], [0, 0, 1, 1], [], []>} : vector<128x4xbf16>, vector<4x4xbf16>, vector<128x4xf32> -> vector<128x4xf32>
    %49 = arith.addf %42, %48 : vector<128x4xf32>
    %c0_67 = arith.constant 0 : index
    %c0_68 = arith.constant 0 : index
    %c2_69 = arith.constant 2 : index
    %c1_70 = arith.constant 1 : index
    %c0_71 = arith.constant 0 : index
    %50 = vector.load %arg2[%c0_67, %c0_68, %c2_69, %c1_70, %c0_71] : memref<1x1x10x18x4xbf16, #tpu.memory_space<vmem>>, vector<1x1x8x16x4xbf16>
    %51 = vector.shape_cast %50 : vector<1x1x8x16x4xbf16> to vector<8x16x4xbf16>
    %52 = vector.shape_cast %51 : vector<8x16x4xbf16> to vector<128x4xbf16>
    %c2_72 = arith.constant 2 : index
    %c1_73 = arith.constant 1 : index
    %c0_74 = arith.constant 0 : index
    %c0_75 = arith.constant 0 : index
    %53 = vector.load %arg3[%c2_72, %c1_73, %c0_74, %c0_75] : memref<3x3x4x4xbf16, #tpu.memory_space<vmem>>, vector<1x1x4x4xbf16>
    %54 = vector.shape_cast %53 : vector<1x1x4x4xbf16> to vector<4x4xbf16>
    %cst_76 = arith.constant dense<0.000000e+00> : vector<128x4xf32>
    %55 = tpu.matmul %52, %54, %cst_76 {dimension_numbers = #tpu.dot_dimension_numbers<[1], [0], [0], [1], [0, 0, 1, 1], [], []>} : vector<128x4xbf16>, vector<4x4xbf16>, vector<128x4xf32> -> vector<128x4xf32>
    %56 = arith.addf %49, %55 : vector<128x4xf32>
    %c0_77 = arith.constant 0 : index
    %c0_78 = arith.constant 0 : index
    %c2_79 = arith.constant 2 : index
    %c2_80 = arith.constant 2 : index
    %c0_81 = arith.constant 0 : index
    %57 = vector.load %arg2[%c0_77, %c0_78, %c2_79, %c2_80, %c0_81] : memref<1x1x10x18x4xbf16, #tpu.memory_space<vmem>>, vector<1x1x8x16x4xbf16>
    %58 = vector.shape_cast %57 : vector<1x1x8x16x4xbf16> to vector<8x16x4xbf16>
    %59 = vector.shape_cast %58 : vector<8x16x4xbf16> to vector<128x4xbf16>
    %c2_82 = arith.constant 2 : index
    %c2_83 = arith.constant 2 : index
    %c0_84 = arith.constant 0 : index
    %c0_85 = arith.constant 0 : index
    %60 = vector.load %arg3[%c2_82, %c2_83, %c0_84, %c0_85] : memref<3x3x4x4xbf16, #tpu.memory_space<vmem>>, vector<1x1x4x4xbf16>
    %61 = vector.shape_cast %60 : vector<1x1x4x4xbf16> to vector<4x4xbf16>
    %cst_86 = arith.constant dense<0.000000e+00> : vector<128x4xf32>
    %62 = tpu.matmul %59, %61, %cst_86 {dimension_numbers = #tpu.dot_dimension_numbers<[1], [0], [0], [1], [0, 0, 1, 1], [], []>} : vector<128x4xbf16>, vector<4x4xbf16>, vector<128x4xf32> -> vector<128x4xf32>
    %63 = arith.addf %56, %62 : vector<128x4xf32>
    %c0_87 = arith.constant 0 : index
    %c0_88 = arith.constant 0 : index
    %64 = vector.load %arg4[%c0_87, %c0_88] : memref<1x4xf32, #tpu.memory_space<vmem>>, vector<1x4xf32>
    %65 = vector.broadcast %64 : vector<1x4xf32> to vector<128x4xf32>
    %66 = arith.addf %63, %65 : vector<128x4xf32>
    %cst_89 = arith.constant dense<0.000000e+00> : vector<4xf32>
    %67 = vector.multi_reduction <add>, %66, %cst_89 [0] : vector<128x4xf32> to vector<4xf32>
    %68 = vector.shape_cast %67 : vector<4xf32> to vector<1x4xf32>
    %c0_90 = arith.constant 0 : index
    %c0_91 = arith.constant 0 : index
    %c0_92 = arith.constant 0 : index
    %c0_93 = arith.constant 0 : index
    %69 = vector.load %arg6[%c0_90, %c0_91, %c0_92, %c0_93] : memref<1x1x1x4xf32, #tpu.memory_space<vmem>>, vector<1x1x1x4xf32>
    %70 = vector.shape_cast %69 : vector<1x1x1x4xf32> to vector<1x4xf32>
    %71 = vector.shape_cast %68 : vector<1x4xf32> to vector<1x1x1x4xf32>
    tpu.vector_store %arg6[%c0_90, %c0_91, %c0_92, %c0_93], %71 {strides = array<i32>} : memref<1x1x1x4xf32, #tpu.memory_space<vmem>>, vector<1x1x1x4xf32>,
    %72 = arith.mulf %66, %66 : vector<128x4xf32>
    %cst_94 = arith.constant dense<0.000000e+00> : vector<4xf32>
    %73 = vector.multi_reduction <add>, %72, %cst_94 [0] : vector<128x4xf32> to vector<4xf32>
    %74 = vector.shape_cast %73 : vector<4xf32> to vector<1x4xf32>
    %c0_95 = arith.constant 0 : index
    %c0_96 = arith.constant 0 : index
    %c0_97 = arith.constant 0 : index
    %c0_98 = arith.constant 0 : index
    %75 = vector.load %arg7[%c0_95, %c0_96, %c0_97, %c0_98] : memref<1x1x1x4xf32, #tpu.memory_space<vmem>>, vector<1x1x1x4xf32>
    %76 = vector.shape_cast %75 : vector<1x1x1x4xf32> to vector<1x4xf32>
    %77 = vector.shape_cast %74 : vector<1x4xf32> to vector<1x1x1x4xf32>
    tpu.vector_store %arg7[%c0_95, %c0_96, %c0_97, %c0_98], %77 {strides = array<i32>} : memref<1x1x1x4xf32, #tpu.memory_space<vmem>>, vector<1x1x1x4xf32>,
    %78 = vector.shape_cast %66 : vector<128x4xf32> to vector<8x16x4xf32>
    %c0_99 = arith.constant 0 : index
    %c0_100 = arith.constant 0 : index
    %c0_101 = arith.constant 0 : index
    %c0_102 = arith.constant 0 : index
    %79 = vector.load %arg5[%c0_99, %c0_100, %c0_101, %c0_102] : memref<1x8x16x4xf32, #tpu.memory_space<vmem>>, vector<1x8x16x4xf32>
    %80 = vector.shape_cast %79 : vector<1x8x16x4xf32> to vector<8x16x4xf32>
    %81 = vector.shape_cast %78 : vector<8x16x4xf32> to vector<1x8x16x4xf32>
    tpu.vector_store %arg5[%c0_99, %c0_100, %c0_101, %c0_102], %81 {strides = array<i32>} : memref<1x8x16x4xf32, #tpu.memory_space<vmem>>, vector<1x8x16x4xf32>,
    return
  }
  func.func @transform_0(%arg0: i32, %arg1: i32) -> (i32, i32, i32, i32, i32) {
    %c0_i32 = arith.constant 0 : i32
    %c0_i32_0 = arith.constant 0 : i32
    %c0_i32_1 = arith.constant 0 : i32
    %c0_i32_2 = arith.constant 0 : i32
    return %arg0, %arg1, %c0_i32, %c0_i32_0, %c0_i32_1 : i32, i32, i32, i32, i32
  }
  func.func @transform_1(%arg0: i32, %arg1: i32) -> (i32, i32, i32, i32) {
    %c0_i32 = arith.constant 0 : i32
    %c0_i32_0 = arith.constant 0 : i32
    %c0_i32_1 = arith.constant 0 : i32
    %c0_i32_2 = arith.constant 0 : i32
    %c0_i32_3 = arith.constant 0 : i32
    return %c0_i32, %c0_i32_0, %c0_i32_1, %c0_i32_2 : i32, i32, i32, i32
  }
  func.func @transform_2(%arg0: i32, %arg1: i32) -> (i32, i32) {
    %c0_i32 = arith.constant 0 : i32
    %c0_i32_0 = arith.constant 0 : i32
    %c0_i32_1 = arith.constant 0 : i32
    return %c0_i32, %c0_i32_0 : i32, i32
  }
  func.func @transform_3(%arg0: i32, %arg1: i32) -> (i32, i32, i32, i32) {
    %c0_i32 = arith.constant 0 : i32
    %c0_i32_0 = arith.constant 0 : i32
    %c0_i32_1 = arith.constant 0 : i32
    return %arg0, %arg1, %c0_i32, %c0_i32_0 : i32, i32, i32, i32
  }
  func.func @transform_4(%arg0: i32, %arg1: i32) -> (i32, i32, i32, i32) {
    %c0_i32 = arith.constant 0 : i32
    %c0_i32_0 = arith.constant 0 : i32
    %c0_i32_1 = arith.constant 0 : i32
    return %arg0, %arg1, %c0_i32, %c0_i32_0 : i32, i32, i32, i32
  }
  func.func @transform_5(%arg0: i32, %arg1: i32) -> (i32, i32, i32, i32) {
    %c0_i32 = arith.constant 0 : i32
    %c0_i32_0 = arith.constant 0 : i32
    %c0_i32_1 = arith.constant 0 : i32
    return %arg0, %arg1, %c0_i32, %c0_i32_0 : i32, i32, i32, i32
  }
}

module attributes {stable_mosaic.version = 11 : i64} {
  func.func @_scale_shift_relu_kernel(%arg0: i32, %arg1: memref<32x64xf32, #tpu.memory_space<vmem>>, %arg2: memref<1x64xf32, #tpu.memory_space<vmem>>, %arg3: memref<1x64xf32, #tpu.memory_space<vmem>>, %arg4: memref<32x64xf32, #tpu.memory_space<vmem>>) attributes {dimension_semantics = [#tpu.dimension_semantics<parallel>], iteration_bounds = array<i64: 1>, scalar_prefetch = 0 : i64, scratch_operands = 0 : i64, tpu.core_type = #tpu.core_type<tc>, window_params = [{transform_indices = @transform_0, window_bounds = array<i64: 32, 64>}, {pipeline_mode = #tpu.pipeline_mode<synchronous>, transform_indices = @transform_1, window_bounds = array<i64: 1, 64>}, {pipeline_mode = #tpu.pipeline_mode<synchronous>, transform_indices = @transform_2, window_bounds = array<i64: 1, 64>}, {transform_indices = @transform_3, window_bounds = array<i64: 32, 64>}]} {
    %c0 = arith.constant 0 : index
    %c0_0 = arith.constant 0 : index
    %0 = vector.load %arg1[%c0, %c0_0] : memref<32x64xf32, #tpu.memory_space<vmem>>, vector<32x64xf32>
    %c0_1 = arith.constant 0 : index
    %c0_2 = arith.constant 0 : index
    %1 = vector.load %arg2[%c0_1, %c0_2] : memref<1x64xf32, #tpu.memory_space<vmem>>, vector<1x64xf32>
    %2 = vector.broadcast %1 : vector<1x64xf32> to vector<32x64xf32>
    %3 = arith.mulf %0, %2 : vector<32x64xf32>
    %c0_3 = arith.constant 0 : index
    %c0_4 = arith.constant 0 : index
    %4 = vector.load %arg3[%c0_3, %c0_4] : memref<1x64xf32, #tpu.memory_space<vmem>>, vector<1x64xf32>
    %5 = vector.broadcast %4 : vector<1x64xf32> to vector<32x64xf32>
    %6 = arith.addf %3, %5 : vector<32x64xf32>
    %cst = arith.constant 0.000000e+00 : f32
    %7 = vector.broadcast %cst : f32 to vector<32x64xf32>
    %8 = arith.maximumf %6, %7 : vector<32x64xf32>
    %c0_5 = arith.constant 0 : index
    %c0_6 = arith.constant 0 : index
    %9 = vector.load %arg4[%c0_5, %c0_6] : memref<32x64xf32, #tpu.memory_space<vmem>>, vector<32x64xf32>
    tpu.vector_store %arg4[%c0_5, %c0_6], %8 {strides = array<i32>} : memref<32x64xf32, #tpu.memory_space<vmem>>, vector<32x64xf32>,
    return
  }
  func.func @transform_0(%arg0: i32) -> (i32, i32) {
    %c0_i32 = arith.constant 0 : i32
    %c0_i32_0 = arith.constant 0 : i32
    return %arg0, %c0_i32 : i32, i32
  }
  func.func @transform_1(%arg0: i32) -> (i32, i32) {
    %c0_i32 = arith.constant 0 : i32
    %c0_i32_0 = arith.constant 0 : i32
    %c0_i32_1 = arith.constant 0 : i32
    return %c0_i32, %c0_i32_0 : i32, i32
  }
  func.func @transform_2(%arg0: i32) -> (i32, i32) {
    %c0_i32 = arith.constant 0 : i32
    %c0_i32_0 = arith.constant 0 : i32
    %c0_i32_1 = arith.constant 0 : i32
    return %c0_i32, %c0_i32_0 : i32, i32
  }
  func.func @transform_3(%arg0: i32) -> (i32, i32) {
    %c0_i32 = arith.constant 0 : i32
    %c0_i32_0 = arith.constant 0 : i32
    return %arg0, %c0_i32 : i32, i32
  }
}

</mosaic_0001>

<llo_original>
// kernel: tile.26
$region0: #{tile.26}
  #allocation0 [shape = 's32[1]{0}', space=sflag, size = 0x4, scoped, tag = 'scoped memory for tile.26']
  %s0 = inlined_call_operand.vmem [shape: f32[4], index: 0, kind: input, shape index: {}]
  %s1 = inlined_call_operand.vmem [shape: f32[2,4], index: 1, kind: output, shape index: {}]
  // Predicated region
  $region2: #{tile.26} parent=0 // pred_check
    _
  $region3: #{tile.26} parent=0 // pred_check_branch
    %3 = sbr.rel (0) target = $region5
  $region4: #{tile.26} parent=0 // pred_region
    _
  $region5: #{tile.26} parent=0 // pred_fallthru
    _
  %v4 = vld [vmem:[%s0] ss:$0 sm:$0xff]
  %5 = vst [vmem:[%s1] sm:$0x3] %v4

// kernel: tile.27
$region0: #{tile.27}
  %s0 = inlined_call_operand.vmem [shape: f32[2,4], index: 0, kind: input, shape index: {}]
  %s1 = inlined_call_operand.vmem [shape: f32[1,8], index: 1, kind: output, shape index: {}]
  $region1: #{tile.27} parent=0
    #allocation0 [shape = 'u8[4096]{0}', space=vmem, size = 0x1000, scoped, tag = 'scoped mem for output reshape']
    #allocation1 [shape = 'u8[4096]{0}', space=vmem, size = 0x1000, scoped, tag = 'scoped mem for input reshape']
    %s3 = sshllo.u32 0, 2
    %v4 = vld [vmem:[%s0] sm:%s3]
    %5 = vst [vmem:[#allocation1] sm:%s3] %v4
    %v6 = vld [vmem:[#allocation1] sm:$0x1]
    %vm7 = vcmask 31744
    %8 = vst.msk [vmem:[#allocation0] sm:$0x1] %vm7, %v6
    %s9 = scalar_lea.vmem [#allocation1], 1
    %v10 = vld [vmem:[%s9] sm:$0x1]
    %11 = vrot.lane.b32.xlu0 %v10, 4
    %v12 = vpop.permute.xlu0 %11
    %vm13 = vcmask 64544
    %14 = vst.msk [vmem:[#allocation0] sm:$0x1] %vm13, %v12
    %s16 = sshllo.u32 0, 1
    %v18 = vld [vmem:[#allocation0] sm:%s16]
    %s19 = sshllo.u32 0, 1
    %20 = vst [vmem:[%s1] sm:%s19] %v18

// kernel: decoder_block_forward.5
$region0: #{decoder_block_forward.5}
  #allocation0 [shape = 'u32[]', space=smem, size = 0x4, offset = 0x4, fixed_abs, tag = 'smem constant byte address 0x4 - core index']
  #allocation1 [shape = 'u32[144,128]{1,0:T(1,128)}', space=vmem, size = 0x12000, scoped, tag = 'internal scratch']
  %s0 = inlined_call_operand.vmem [shape: f32[2,8,8,8], index: 0, kind: input, shape index: {}]
  %s1 = inlined_call_operand.vmem [shape: bf16[2,8,8], index: 1, kind: input, shape index: {}]
  %s2 = inlined_call_operand.vmem [shape: f32[1,8], index: 2, kind: input, shape index: {}]
  %s3 = inlined_call_operand.vmem [shape: bf16[2,8,2,8,8], index: 3, kind: output, shape index: {}]
  %s4 = sld [smem:[#allocation0]]
  $region82: #{decoder_block_forward.5} parent=0
    _
  %s6 = ssub.s32 1, %s4
  %s7 = scalar_select 0, %s6, %s4
  $region1: #{decoder_block_forward.5} parent=0
    #allocation2 [shape = 'u8[16384]{0}', space=vmem, size = 0x4000, scoped, tag = 'output window, operand 0']
    loop: start=0, step=1, limit=10
    $region2: #{decoder_block_forward.5} parent=1 // loop_pre_header
      _
    $region3: #{decoder_block_forward.5} parent=1 // loop_header
      %s9 = sphi 0, %s13
      %p10 = scmp.ge.s32.totalorder %s9, 10
      %s16 = sphi 0, %s35
      %s17 = sphi 0, %s31
      %s18 = sphi 0, %s27
      %s19 = sphi 0, %s16
      %s20 = sphi 0, %s17
      %s21 = sphi 0, %s18
      %s22 = sphi 0, %s19
      %s23 = sphi 0, %s20
      %s24 = sphi 0, %s21
      %s40 = sphi 0, %s42
      %s43 = sphi 0, %s40
      %s44 = sphi 0, %s43
      %s60 = sphi 0, %s44
      %s66 = sphi 0, %s68
      %s69 = sphi 0, %s66
      %s70 = sphi 0, %s69
      %s86 = sphi 0, %s70
      %s90 = sphi 0, %s90
      %s92 = sphi 0, %s90
      %s93 = sphi 0, %s92
      %s107 = sphi 0, %s93
      %s117 = sphi 0, %s119
      %s120 = sphi 0, %s117
      %s121 = sphi 0, %s120
      %s137 = sphi 0, %s121
    $region4: #{decoder_block_forward.5} parent=1 // loop_header_branch
      %12 = sbr.rel (%p10) target = $region8
    $region5: #{decoder_block_forward.5} parent=1 // loop_body
      %s14 = ssub.s32 %s9, 1
      %s15 = ssub.s32 %s9, 2
      %s25 = sadd.s32 1, %s18
      %p26 = scmp.ge.s32.totalorder %s25, 2
      %s27 = scalar_select %p26, 0, %s25
      %s28 = sadd.s32 1, %s17
      %s29 = scalar_select %p26, %s28, %s17
      %p30 = scmp.ge.s32.totalorder %s29, 2
      %s31 = scalar_select %p30, 0, %s29
      %s32 = sadd.s32 1, %s16
      %s33 = scalar_select %p30, %s32, %s16
      %p34 = scmp.ge.s32.totalorder %s33, 2
      %s35 = scalar_select %p34, 0, %s33
      %s36 = ssub.s32 %s16, %s35
      %s37 = ssub.s32 %s17, %s31
      %s38 = sor.u32 %s36, %s37
      %p39 = scmp.eq.s32.totalorder %s38, 0
      %s41 = sadd.s32 %s40, 1
      %s42 = scalar_select %p39, %s40, %s41
      %p45 = pneg %p39
      %p46 = scmp.eq.s32.totalorder %s9, 7
      %p47 = por %p45, %p46
      %p48 = scmp.ne.s32.totalorder %s40, %s43
      %p49 = scmp.eq.s32.totalorder %s9, 0
      %p50 = por %p48, %p49
      %p51 = scmp.ne.s32.totalorder %s40, %s43
      %p52 = scmp.eq.s32.totalorder %s14, 7
      %p53 = por %p51, %p52
      %p54 = scmp.ne.s32.totalorder %s43, %s44
      %p55 = scmp.eq.s32.totalorder %s14, 0
      %p56 = por %p54, %p55
      %p57 = scmp.ne.s32.totalorder %s43, %s44
      %p58 = scmp.eq.s32.totalorder %s15, 7
      %p59 = por %p57, %p58
      %p61 = scmp.ne.s32.totalorder %s44, %s60
      %p62 = scmp.eq.s32.totalorder %s15, 0
      %p63 = por %p61, %p62
      %s64 = ssub.s32 %s18, %s27
      %p65 = scmp.eq.s32.totalorder %s64, 0
      %s67 = sadd.s32 %s66, 1
      %s68 = scalar_select %p65, %s66, %s67
      %p71 = pneg %p65
      %p72 = scmp.eq.s32.totalorder %s9, 7
      %p73 = por %p71, %p72
      %p74 = scmp.ne.s32.totalorder %s66, %s69
      %p75 = scmp.eq.s32.totalorder %s9, 0
      %p76 = por %p74, %p75
      %p77 = scmp.ne.s32.totalorder %s66, %s69
      %p78 = scmp.eq.s32.totalorder %s14, 7
      %p79 = por %p77, %p78
      %p80 = scmp.ne.s32.totalorder %s69, %s70
      %p81 = scmp.eq.s32.totalorder %s14, 0
      %p82 = por %p80, %p81
      %p83 = scmp.ne.s32.totalorder %s69, %s70
      %p84 = scmp.eq.s32.totalorder %s15, 7
      %p85 = por %p83, %p84
      %p87 = scmp.ne.s32.totalorder %s70, %s86
      %p88 = scmp.eq.s32.totalorder %s15, 0
      %p89 = por %p87, %p88
      %s91 = sadd.s32 %s90, 1
      %p94 = scmp.eq.s32.totalorder %s9, 7
      %p95 = scmp.ne.s32.totalorder %s90, %s92
      %p96 = scmp.eq.s32.totalorder %s9, 0
      %p97 = por %p95, %p96
      %p98 = scmp.ne.s32.totalorder %s90, %s92
      %p99 = scmp.eq.s32.totalorder %s14, 7
      %p100 = por %p98, %p99
      %p101 = scmp.ne.s32.totalorder %s92, %s93
      %p102 = scmp.eq.s32.totalorder %s14, 0
      %p103 = por %p101, %p102
      %p104 = scmp.ne.s32.totalorder %s92, %s93
      %p105 = scmp.eq.s32.totalorder %s15, 7
      %p106 = por %p104, %p105
      %p108 = scmp.ne.s32.totalorder %s93, %s107
      %p109 = scmp.eq.s32.totalorder %s15, 0
      %p110 = por %p108, %p109
      %s111 = ssub.s32 %s16, %s35
      %s112 = ssub.s32 %s17, %s31
      %s113 = sor.u32 %s111, %s112
      %s114 = ssub.s32 %s18, %s27
      %s115 = sor.u32 %s113, %s114
      %p116 = scmp.eq.s32.totalorder %s115, 0
      %s118 = sadd.s32 %s117, 1
      %s119 = scalar_select %p116, %s117, %s118
      %p122 = pneg %p116
      %p123 = scmp.eq.s32.totalorder %s9, 7
      %p124 = por %p122, %p123
      %p125 = scmp.ne.s32.totalorder %s117, %s120
      %p126 = scmp.eq.s32.totalorder %s9, 0
      %p127 = por %p125, %p126
      %p128 = scmp.ne.s32.totalorder %s117, %s120
      %p129 = scmp.eq.s32.totalorder %s14, 7
      %p130 = por %p128, %p129
      %p131 = scmp.ne.s32.totalorder %s120, %s121
      %p132 = scmp.eq.s32.totalorder %s14, 0
      %p133 = por %p131, %p132
      %p134 = scmp.ne.s32.totalorder %s120, %s121
      %p135 = scmp.eq.s32.totalorder %s15, 7
      %p136 = por %p134, %p135
      %p138 = scmp.ne.s32.totalorder %s121, %s137
      %p139 = scmp.eq.s32.totalorder %s15, 0
      %p140 = por %p138, %p139
      %p141 = scmp.le.s32.totalorder 1, %s9
      %p142 = scmp.lt.s32.totalorder %s9, 9
      %p143 = pnand %p141, %p142
      %p144 = pneg %p143
      // Predicated region
      $region9: #{decoder_block_forward.5} parent=5 // pred_check
        _
      $region10: #{decoder_block_forward.5} parent=5 // pred_check_branch
        %146 = sbr.rel (%p143) target = $region12
      $region11: #{decoder_block_forward.5} parent=5 // pred_region
        %s147 = ssub.s32 %s9, 1
        // Predicated region
        $region13: #{decoder_block_forward.5} parent=11 // pred_check
          %p148 = pneg %p103
        $region14: #{decoder_block_forward.5} parent=11 // pred_check_branch
          %150 = sbr.rel (%p148) target = $region16
        $region15: #{decoder_block_forward.5} parent=11 // pred_region
          _
        $region16: #{decoder_block_forward.5} parent=11 // pred_fallthru
          _
      $region12: #{decoder_block_forward.5} parent=5 // pred_fallthru
        _
      %p151 = scmp.lt.s32.totalorder %s9, 8
      // Predicated region
      $region17: #{decoder_block_forward.5} parent=5 // pred_check
        %p152 = pneg %p151
      $region18: #{decoder_block_forward.5} parent=5 // pred_check_branch
        %154 = sbr.rel (%p152) target = $region20
      $region19: #{decoder_block_forward.5} parent=5 // pred_region
        // Predicated region
        $region21: #{decoder_block_forward.5} parent=19 // pred_check
          %p155 = pneg %p50
        $region22: #{decoder_block_forward.5} parent=19 // pred_check_branch
          %157 = sbr.rel (%p155) target = $region24
        $region23: #{decoder_block_forward.5} parent=19 // pred_region
          %s158 = smul.u32 4, %s17
          %p159 = scmp.lt.s32.totalorder %s16, 1
          %s160 = scalar_select %p159, %s16, 1
          %p161 = scmp.lt.s32.totalorder %s158, 7
          %s162 = scalar_select %p161, %s158, 7
          %s163 = smul.addr %s160, 8
          %s164 = sadd.s32 %s162, %s163
          %s165 = smul.addr %s164, 8
          %s166 = scalar_lea.vmem %s0, %s165
          %s167 = smul.u32 4, %s17
        $region24: #{decoder_block_forward.5} parent=19 // pred_fallthru
          _
        // Predicated region
        $region25: #{decoder_block_forward.5} parent=19 // pred_check
          %p168 = pneg %p76
        $region26: #{decoder_block_forward.5} parent=19 // pred_check_branch
          %170 = sbr.rel (%p168) target = $region28
        $region27: #{decoder_block_forward.5} parent=19 // pred_region
          %p171 = scmp.lt.s32.totalorder %s18, 1
          %s172 = scalar_select %p171, %s18, 1
          %s173 = smul.addr %s172, 4
          %s174 = scalar_lea.vmem %s1, %s173
        $region28: #{decoder_block_forward.5} parent=19 // pred_fallthru
          _
      $region20: #{decoder_block_forward.5} parent=5 // pred_fallthru
        _
      %p175 = scmp.le.s32.totalorder 1, %s9
      %p176 = scmp.lt.s32.totalorder %s9, 9
      %p177 = pnand %p175, %p176
      %p178 = pneg %p177
      // Predicated region
      $region29: #{decoder_block_forward.5} parent=5 // pred_check
        _
      $region30: #{decoder_block_forward.5} parent=5 // pred_check_branch
        %180 = sbr.rel (%p177) target = $region32
      $region31: #{decoder_block_forward.5} parent=5 // pred_region
        %s181 = ssub.s32 %s9, 1
        %s182 = smul.u32 4, %s20
        %p183 = scmp.lt.s32.totalorder %s19, 1
        %s184 = scalar_select %p183, %s19, 1
        %p185 = scmp.lt.s32.totalorder %s182, 7
        %s186 = scalar_select %p185, %s182, 7
        %s187 = smul.addr %s184, 8
        %s188 = sadd.s32 %s186, %s187
        %s189 = smul.addr %s188, 8
        %s190 = scalar_lea.vmem %s0, %s189
        %p191 = pneg %p56
        %p192 = pneg %p53
        %p193 = scmp.lt.s32.totalorder %s21, 1
        %s194 = scalar_select %p193, %s21, 1
        %s195 = smul.addr %s194, 4
        %s196 = scalar_lea.vmem %s1, %s195
        %p197 = pneg %p82
        %p198 = pneg %p79
        %p199 = pneg %p103
        %p200 = pneg %p100
        %p201 = pneg %p133
        %p202 = pneg %p130
        %s203 = sand.u32 %s120, 1
        %s204 = sand.u32 %s120, 1
        %s205 = smul.addr %s204, 16
        %s206 = scalar_lea.vmem [#allocation2], %s205
        %s207 = smul.u32 4, %s20
        %p208 = scmp.lt.s32.totalorder %s19, 1
        %s209 = scalar_select %p208, %s19, 1
        %p210 = scmp.lt.s32.totalorder %s207, 7
        %s211 = scalar_select %p210, %s207, 7
        %s212 = smul.addr %s209, 8
        %s213 = sadd.s32 %s211, %s212
        %s214 = smul.addr %s213, 8
        %s215 = scalar_lea.vmem %s0, %s214
        %s216 = smul.u32 4, %s20
        %p217 = scmp.lt.s32.totalorder %s21, 1
        %s218 = scalar_select %p217, %s21, 1
        %s219 = smul.addr %s218, 4
        %s220 = scalar_lea.vmem %s1, %s219
        %s221 = smul.u32 4, %s20
        %v223 = vld [vmem:[%s215] sm:$0xff]
        %v224 = vld [vmem:[%s215 + $0x8] sm:$0xff]
        %v225 = vld [vmem:[%s215 + $0x10] sm:$0xff]
        %v226 = vld [vmem:[%s215 + $0x18] sm:$0xff]
        %v227 = vpack.c.bf16 %v224, %v223
        %v228 = vpack.c.bf16 %v226, %v225
        %v229 = vld [vmem:[%s220] sm:$0xf]
        %v230 = vld [vmem:[%s2] sm:$0x1]
        %v232 = vlaneseq
        %v233 = vshrl.u32 %v232, 7
        %v234 = vsub.s32 0, %v233
        %v235 = vrot.slane %v230, %v234
        %vm237 = vcmask 64512
        %v239 = vsel %vm237, %v227, 0
        %v242 = vsel %vm237, %v228, 0
        %vm244 = vcmask 1043456
        %v246 = vsel %vm244, %v229, 0
        %248 = vmatprep.subr.bf16.mxu0 0
        %249 = vmatpush1.bf16.msra.mxu0 %v246
        %250 = vmatprep.subr.bf16.mxu0 0
        %251 = vmatpush1.bf16.msra.mxu0 0
        %252 = vmatprep.subr.bf16.mxu0 0
        %253 = vmatpush1.bf16.msra.mxu0 0
        %254 = vmatprep.subr.bf16.mxu0 0
        %255 = vmatpush1.bf16.msra.mxu0 0
        %256 = vmatprep.subr.bf16.mxu0 0
        %257 = vmatpush1.bf16.msra.mxu0 0
        %258 = vmatprep.subr.bf16.mxu0 0
        %259 = vmatpush1.bf16.msra.mxu0 0
        %260 = vmatprep.subr.bf16.mxu0 0
        %261 = vmatpush1.bf16.msra.mxu0 0
        %262 = vmatprep.subr.bf16.mxu0 0
        %263 = vmatpush1.bf16.msra.mxu0 0
        %264 = vmatprep.subr.bf16.mxu0 0
        %265 = vmatpush1.bf16.msra.mxu0 0
        %266 = vmatprep.subr.bf16.mxu0 0
        %267 = vmatpush1.bf16.msra.mxu0 0
        %268 = vmatprep.subr.bf16.mxu0 0
        %269 = vmatpush1.bf16.msra.mxu0 0
        %270 = vmatprep.subr.bf16.mxu0 0
        %271 = vmatpush1.bf16.msra.mxu0 0
        %272 = vmatprep.subr.bf16.mxu0 0
        %273 = vmatpush1.bf16.msra.mxu0 0
        %274 = vmatprep.subr.bf16.mxu0 0
        %275 = vmatpush1.bf16.msra.mxu0 0
        %276 = vmatprep.subr.bf16.mxu0 0
        %277 = vmatpush1.bf16.msra.mxu0 0
        %278 = vmatprep.subr.bf16.mxu0 0
        %279 = vmatpush1.bf16.msra.mxu0 0
        %280 = vmatprep.mubr.bf16.mxu0 0
        %281 = vmatmul.mubr.bf16.gmra.mrb[0].mxu0 %v239
        %v282 = vpop.f32.mrb[0].mxu0
        %v283 = vadd.f32 %v235, %v282
        %v284 = vpop.f32.mrb[0].mxu0
        %v285 = vpop.f32.mrb[0].mxu0
        %v286 = vadd.f32 %v235, %v285
        %v287 = vpop.f32.mrb[0].mxu0
        %288 = vmatprep.mubr.bf16.mxu0 0
        %289 = vmatmul.mubr.bf16.gmra.mrb[0].mxu0 %v242
        %v290 = vpop.f32.mrb[0].mxu0
        %v291 = vadd.f32 %v235, %v290
        %v292 = vpop.f32.mrb[0].mxu0
        %v293 = vpop.f32.mrb[0].mxu0
        %v294 = vadd.f32 %v235, %v293
        %v295 = vpop.f32.mrb[0].mxu0
        %296 = vdwg.mxu0
        %v297 = vpack.c.bf16 %v283, %v283
        %v298 = vpack.c.bf16 %v286, %v286
        %v299 = vpack.c.bf16 %v291, %v291
        %v300 = vpack.c.bf16 %v294, %v294
        %vm301 = vcmask 60416
        %302 = vst.msk [vmem:[%s206] sm:$0xf] %vm301, %v297
        %303 = vst.msk [vmem:[%s206 + $0x4] sm:$0xf] %vm301, %v298
        %304 = vst.msk [vmem:[%s206 + $0x8] sm:$0xf] %vm301, %v299
        %305 = vst.msk [vmem:[%s206 + $0xc] sm:$0xf] %vm301, %v300
        %s306 = sand.u32 %s120, 1
        %s307 = sand.u32 %s120, 1
        %s308 = smul.addr %s307, 16
        %s309 = scalar_lea.vmem [#allocation2], %s308
        // Predicated region
        $region33: #{decoder_block_forward.5} parent=31 // pred_check
          %p310 = pneg %p130
        $region34: #{decoder_block_forward.5} parent=31 // pred_check_branch
          %312 = sbr.rel (%p310) target = $region36
        $region35: #{decoder_block_forward.5} parent=31 // pred_region
          %s313 = smul.u32 4, %s20
          %s314 = smul.addr %s313, 2
          %s315 = sadd.s32 %s21, %s314
          %s316 = smul.addr %s19, 16
          %s317 = sadd.s32 %s315, %s316
          %s318 = smul.addr %s317, 4
          %s319 = scalar_lea.vmem %s3, %s318
          // Predicated region
          $region37: #{decoder_block_forward.5} parent=35 // pred_check
            _
          $region38: #{decoder_block_forward.5} parent=35 // pred_check_branch
            %321 = sbr.rel (0) target = $region40
          $region39: #{decoder_block_forward.5} parent=35 // pred_region
            // Predicated region
            $region41: #{decoder_block_forward.5} parent=39 // pred_check
              _
            $region42: #{decoder_block_forward.5} parent=39 // pred_check_branch
              %323 = sbr.rel target = $region44
            $region43: #{decoder_block_forward.5} parent=39 // pred_region
              // Predicated region
              $region56: #{decoder_block_forward.5} parent=43 // pred_check
                _
              $region57: #{decoder_block_forward.5} parent=43 // pred_check_branch
                %344 = sbr.rel (0) target = $region59
              $region58: #{decoder_block_forward.5} parent=43 // pred_region
                loop: start=0, step=1, limit=1
                $region60: #{decoder_block_forward.5} parent=58 // loop_pre_header
                  _
                $region61: #{decoder_block_forward.5} parent=58 // loop_header
                  %s346 = sphi 0, %s350
                  %p347 = scmp.ge.s32.totalorder %s346, 1
                  %s351 = sphi %s309, %s309
                  %s352 = sphi %s319, %s319
                $region62: #{decoder_block_forward.5} parent=58 // loop_header_branch
                  %349 = sbr.rel (%p347) target = $region66
                $region63: #{decoder_block_forward.5} parent=58 // loop_body
                  _
                $region64: #{decoder_block_forward.5} parent=58 // loop_footer
                  %s350 = sadd.s32 1, %s346
                $region65: #{decoder_block_forward.5} parent=58 // loop_footer_branch
                  %345 = sbr.rel target = $region61
                $region66: #{decoder_block_forward.5} parent=58 // loop_exit
                  _
                loop: start=0, step=1, limit=1
                $region67: #{decoder_block_forward.5} parent=58 // loop_pre_header
                  _
                $region68: #{decoder_block_forward.5} parent=58 // loop_header
                  %s355 = sphi 0, %s359
                  %p356 = scmp.ge.s32.totalorder %s355, 1
                  %s360 = sphi %s309, %s309
                  %s361 = sphi %s319, %s319
                $region69: #{decoder_block_forward.5} parent=58 // loop_header_branch
                  %358 = sbr.rel (%p356) target = $region73
                $region70: #{decoder_block_forward.5} parent=58 // loop_body
                  %v362 = vld [vmem:[%s360] sm:$0xf]
                  %363 = vst [vmem:[%s361] sm:$0xf] %v362
                  %v364 = vld [vmem:[%s360 + $0x4] sm:$0xf]
                  %365 = vst [vmem:[%s361 + $0x8] sm:$0xf] %v364
                  %v366 = vld [vmem:[%s360 + $0x8] sm:$0xf]
                  %367 = vst [vmem:[%s361 + $0x10] sm:$0xf] %v366
                  %v368 = vld [vmem:[%s360 + $0xc] sm:$0xf]
                  %369 = vst [vmem:[%s361 + $0x18] sm:$0xf] %v368
                $region71: #{decoder_block_forward.5} parent=58 // loop_footer
                  %s359 = sadd.s32 1, %s355
                $region72: #{decoder_block_forward.5} parent=58 // loop_footer_branch
                  %354 = sbr.rel target = $region68
                $region73: #{decoder_block_forward.5} parent=58 // loop_exit
                  _
              $region59: #{decoder_block_forward.5} parent=43 // pred_fallthru
                _
            $region44: #{decoder_block_forward.5} parent=39 // pred_fallthru
              _
            // Predicated region
            $region45: #{decoder_block_forward.5} parent=39 // pred_check
              _
            $region46: #{decoder_block_forward.5} parent=39 // pred_check_branch
              %325 = sbr.rel (0) target = $region48
            $region47: #{decoder_block_forward.5} parent=39 // pred_region
              loop: start=0, step=1, limit=1
              $region49: #{decoder_block_forward.5} parent=47 // loop_pre_header
                _
              $region50: #{decoder_block_forward.5} parent=47 // loop_header
                %s328 = sphi 0, %s332
                %p329 = scmp.ge.s32.totalorder %s328, 1
                %s333 = sphi %s309, %s309
                %s334 = sphi %s319, %s319
              $region51: #{decoder_block_forward.5} parent=47 // loop_header_branch
                %331 = sbr.rel (%p329) target = $region55
              $region52: #{decoder_block_forward.5} parent=47 // loop_body
                %v335 = vld [vmem:[%s333] sm:$0xf]
                %336 = vst [vmem:[%s334] sm:$0xf] %v335
                %v337 = vld [vmem:[%s333 + $0x4] sm:$0xf]
                %338 = vst [vmem:[%s334 + $0x8] sm:$0xf] %v337
                %v339 = vld [vmem:[%s333 + $0x8] sm:$0xf]
                %340 = vst [vmem:[%s334 + $0x10] sm:$0xf] %v339
                %v341 = vld [vmem:[%s333 + $0xc] sm:$0xf]
                %342 = vst [vmem:[%s334 + $0x18] sm:$0xf] %v341
              $region53: #{decoder_block_forward.5} parent=47 // loop_footer
                %s332 = sadd.s32 1, %s328
              $region54: #{decoder_block_forward.5} parent=47 // loop_footer_branch
                %327 = sbr.rel target = $region50
              $region55: #{decoder_block_forward.5} parent=47 // loop_exit
                _
            $region48: #{decoder_block_forward.5} parent=39 // pred_fallthru
              _
          $region40: #{decoder_block_forward.5} parent=35 // pred_fallthru
            _
          %370 = vnop
        $region36: #{decoder_block_forward.5} parent=31 // pred_fallthru
          _
      $region32: #{decoder_block_forward.5} parent=5 // pred_fallthru
        _
      %p371 = scmp.le.s32.totalorder 2, %s9
      // Predicated region
      $region74: #{decoder_block_forward.5} parent=5 // pred_check
        %p372 = pneg %p371
      $region75: #{decoder_block_forward.5} parent=5 // pred_check_branch
        %374 = sbr.rel (%p372) target = $region77
      $region76: #{decoder_block_forward.5} parent=5 // pred_region
        %s375 = ssub.s32 %s9, 2
        // Predicated region
        $region78: #{decoder_block_forward.5} parent=76 // pred_check
          %p376 = pneg %p136
        $region79: #{decoder_block_forward.5} parent=76 // pred_check_branch
          %378 = sbr.rel (%p376) target = $region81
        $region80: #{decoder_block_forward.5} parent=76 // pred_region
          %s379 = sand.u32 %s121, 1
          %s380 = sand.u32 %s121, 1
          %s381 = smul.addr %s380, 16
          %s382 = scalar_lea.vmem [#allocation2], %s381
        $region81: #{decoder_block_forward.5} parent=76 // pred_fallthru
          _
      $region77: #{decoder_block_forward.5} parent=5 // pred_fallthru
        _
    $region6: #{decoder_block_forward.5} parent=1 // loop_footer
      %s13 = sadd.s32 1, %s9
    $region7: #{decoder_block_forward.5} parent=1 // loop_footer_branch
      %8 = sbr.rel target = $region3
    $region8: #{decoder_block_forward.5} parent=1 // loop_exit
      _

// kernel: tile.36
$region0: #{tile.36}
  #allocation0 [shape = 's32[1]{0}', space=sflag, size = 0x4, scoped, tag = 'scoped memory for tile.36']
  %s0 = inlined_call_operand.vmem [shape: f32[4], index: 0, kind: input, shape index: {}]
  %s1 = inlined_call_operand.vmem [shape: f32[16,4], index: 1, kind: output, shape index: {}]
  // Predicated region
  $region2: #{tile.36} parent=0 // pred_check
    _
  $region3: #{tile.36} parent=0 // pred_check_branch
    %3 = sbr.rel (0) target = $region5
  $region4: #{tile.36} parent=0 // pred_region
    _
  $region5: #{tile.36} parent=0 // pred_fallthru
    _
  %v4 = vld [vmem:[%s0] ss:$0 sm:$0xff]
  %5 = vst [vmem:[%s1] sm:$0xff] %v4
  %s6 = scalar_lea.vmem %s1, 8
  %7 = vst [vmem:[%s6] sm:$0xff] %v4

// kernel: tile.37
$region0: #{tile.37}
  %s0 = inlined_call_operand.vmem [shape: f32[16,4], index: 0, kind: input, shape index: {}]
  %s1 = inlined_call_operand.vmem [shape: f32[1,64], index: 1, kind: output, shape index: {}]
  $region1: #{tile.37} parent=0
    #allocation0 [shape = 'u8[4096]{0}', space=vmem, size = 0x1000, scoped, tag = 'scoped mem for output reshape']
    %v2 = vld [vmem:[%s0] sm:$0x1]
    %vm3 = vcmask 31744
    %4 = vst.msk [vmem:[#allocation0] sm:$0x1] %vm3, %v2
    %s5 = scalar_lea.vmem %s0, 15
    %v6 = vld [vmem:[%s5] sm:$0x1]
    %7 = vrot.lane.b32.xlu0 %v6, 60
    %v8 = vpop.permute.xlu0 %7
    %vm9 = vcmask 523744
    %10 = vst.msk [vmem:[#allocation0] sm:$0x1] %vm9, %v8
    %s11 = scalar_lea.vmem %s0, 14
    %v12 = vld [vmem:[%s11] sm:$0x1]
    %13 = vrot.lane.b32.xlu0 %v12, 56
    %v14 = vpop.permute.xlu0 %13
    %vm15 = vcmask 490944
    %16 = vst.msk [vmem:[#allocation0] sm:$0x1] %vm15, %v14
    %s17 = scalar_lea.vmem %s0, 13
    %v18 = vld [vmem:[%s17] sm:$0x1]
    %19 = vrot.lane.b32.xlu0 %v18, 52
    %v20 = vpop.permute.xlu0 %19
    %vm21 = vcmask 458144
    %22 = vst.msk [vmem:[#allocation0] sm:$0x1] %vm21, %v20
    %s23 = scalar_lea.vmem %s0, 12
    %v24 = vld [vmem:[%s23] sm:$0x1]
    %25 = vrot.lane.b32.xlu0 %v24, 48
    %v26 = vpop.permute.xlu0 %25
    %vm27 = vcmask 425344
    %28 = vst.msk [vmem:[#allocation0] sm:$0x1] %vm27, %v26
    %s29 = scalar_lea.vmem %s0, 11
    %v30 = vld [vmem:[%s29] sm:$0x1]
    %31 = vrot.lane.b32.xlu0 %v30, 44
    %v32 = vpop.permute.xlu0 %31
    %vm33 = vcmask 392544
    %34 = vst.msk [vmem:[#allocation0] sm:$0x1] %vm33, %v32
    %s35 = scalar_lea.vmem %s0, 10
    %v36 = vld [vmem:[%s35] sm:$0x1]
    %37 = vrot.lane.b32.xlu0 %v36, 40
    %v38 = vpop.permute.xlu0 %37
    %vm39 = vcmask 359744
    %40 = vst.msk [vmem:[#allocation0] sm:$0x1] %vm39, %v38
    %s41 = scalar_lea.vmem %s0, 9
    %v42 = vld [vmem:[%s41] sm:$0x1]
    %43 = vrot.lane.b32.xlu0 %v42, 36
    %v44 = vpop.permute.xlu0 %43
    %vm45 = vcmask 326944
    %46 = vst.msk [vmem:[#allocation0] sm:$0x1] %vm45, %v44
    %s47 = scalar_lea.vmem %s0, 8
    %v48 = vld [vmem:[%s47] sm:$0x1]
    %49 = vrot.lane.b32.xlu0 %v48, 32
    %v50 = vpop.permute.xlu0 %49
    %vm51 = vcmask 294144
    %52 = vst.msk [vmem:[#allocation0] sm:$0x1] %vm51, %v50
    %s53 = scalar_lea.vmem %s0, 7
    %v54 = vld [vmem:[%s53] sm:$0x1]
    %55 = vrot.lane.b32.xlu0 %v54, 28
    %v56 = vpop.permute.xlu0 %55
    %vm57 = vcmask 261344
    %58 = vst.msk [vmem:[#allocation0] sm:$0x1] %vm57, %v56
    %s59 = scalar_lea.vmem %s0, 6
    %v60 = vld [vmem:[%s59] sm:$0x1]
    %61 = vrot.lane.b32.xlu0 %v60, 24
    %v62 = vpop.permute.xlu0 %61
    %vm63 = vcmask 228544
    %64 = vst.msk [vmem:[#allocation0] sm:$0x1] %vm63, %v62
    %s65 = scalar_lea.vmem %s0, 5
    %v66 = vld [vmem:[%s65] sm:$0x1]
    %67 = vrot.lane.b32.xlu0 %v66, 20
    %v68 = vpop.permute.xlu0 %67
    %vm69 = vcmask 195744
    %70 = vst.msk [vmem:[#allocation0] sm:$0x1] %vm69, %v68
    %s71 = scalar_lea.vmem %s0, 4
    %v72 = vld [vmem:[%s71] sm:$0x1]
    %73 = vrot.lane.b32.xlu0 %v72, 16
    %v74 = vpop.permute.xlu0 %73
    %vm75 = vcmask 162944
    %76 = vst.msk [vmem:[#allocation0] sm:$0x1] %vm75, %v74
    %s77 = scalar_lea.vmem %s0, 3
    %v78 = vld [vmem:[%s77] sm:$0x1]
    %79 = vrot.lane.b32.xlu0 %v78, 12
    %v80 = vpop.permute.xlu0 %79
    %vm81 = vcmask 130144
    %82 = vst.msk [vmem:[#allocation0] sm:$0x1] %vm81, %v80
    %s83 = scalar_lea.vmem %s0, 2
    %v84 = vld [vmem:[%s83] sm:$0x1]
    %85 = vrot.lane.b32.xlu0 %v84, 8
    %v86 = vpop.permute.xlu0 %85
    %vm87 = vcmask 97344
    %88 = vst.msk [vmem:[#allocation0] sm:$0x1] %vm87, %v86
    %s89 = scalar_lea.vmem %s0, 1
    %v90 = vld [vmem:[%s89] sm:$0x1]
    %91 = vrot.lane.b32.xlu0 %v90, 4
    %v92 = vpop.permute.xlu0 %91
    %vm93 = vcmask 64544
    %94 = vst.msk [vmem:[#allocation0] sm:$0x1] %vm93, %v92
    %s96 = sshllo.u32 0, 1
    %v98 = vld [vmem:[#allocation0] sm:%s96]
    %s99 = sshllo.u32 0, 1
    %100 = vst [vmem:[%s1] sm:%s99] %v98

// kernel: decoder_block_forward.7
$region0: #{decoder_block_forward.7}
  #allocation0 [shape = 'u32[]', space=smem, size = 0x4, offset = 0x4, fixed_abs, tag = 'smem constant byte address 0x4 - core index']
  #allocation1 [shape = 'u32[144,128]{1,0:T(1,128)}', space=vmem, size = 0x12000, scoped, tag = 'internal scratch']
  %s0 = inlined_call_operand.vmem [shape: f32[32,64], index: 0, kind: input, shape index: {}]
  %s1 = inlined_call_operand.vmem [shape: f32[1,64], index: 1, kind: input, shape index: {}]
  %s2 = inlined_call_operand.vmem [shape: f32[1,64], index: 2, kind: input, shape index: {}]
  %s3 = inlined_call_operand.vmem [shape: bf16[32,64], index: 3, kind: output, shape index: {}]
  %s4 = sld [smem:[#allocation0]]
  $region22: #{decoder_block_forward.7} parent=0
    _
  %s6 = ssub.s32 1, %s4
  %s7 = scalar_select 0, %s6, %s4
  // Predicated region
  $region2: #{decoder_block_forward.7} parent=0 // pred_check
    _
  $region3: #{decoder_block_forward.7} parent=0 // pred_check_branch
    %9 = sbr.rel (0) target = $region5
  $region4: #{decoder_block_forward.7} parent=0 // pred_region
    _
  $region5: #{decoder_block_forward.7} parent=0 // pred_fallthru
    _
  // Predicated region
  $region6: #{decoder_block_forward.7} parent=0 // pred_check
    _
  $region7: #{decoder_block_forward.7} parent=0 // pred_check_branch
    %11 = sbr.rel (0) target = $region9
  $region8: #{decoder_block_forward.7} parent=0 // pred_region
    _
  $region9: #{decoder_block_forward.7} parent=0 // pred_fallthru
    _
  // Predicated region
  $region10: #{decoder_block_forward.7} parent=0 // pred_check
    _
  $region11: #{decoder_block_forward.7} parent=0 // pred_check_branch
    %13 = sbr.rel (0) target = $region13
  $region12: #{decoder_block_forward.7} parent=0 // pred_region
    _
  $region13: #{decoder_block_forward.7} parent=0 // pred_fallthru
    _
  %v14 = vld [vmem:[%s0] sm:$0xff]
  %v15 = vld [vmem:[%s0 + $0x8] sm:$0xff]
  %v16 = vld [vmem:[%s0 + $0x10] sm:$0xff]
  %v17 = vld [vmem:[%s0 + $0x18] sm:$0xff]
  %v18 = vld [vmem:[%s1] sm:$0x1]
  %v20 = vlaneseq
  %v21 = vshrl.u32 %v20, 7
  %v22 = vsub.s32 0, %v21
  %v23 = vrot.slane %v18, %v22
  %v25 = vmul.f32 %v14, %v23
  %v26 = vmul.f32 %v15, %v23
  %v27 = vmul.f32 %v16, %v23
  %v28 = vmul.f32 %v17, %v23
  %v29 = vld [vmem:[%s2] sm:$0x1]
  %v31 = vlaneseq
  %v32 = vshrl.u32 %v31, 7
  %v33 = vsub.s32 0, %v32
  %v34 = vrot.slane %v29, %v33
  %v36 = vadd.f32 %v25, %v34
  %v37 = vadd.f32 %v26, %v34
  %v38 = vadd.f32 %v27, %v34
  %v39 = vadd.f32 %v28, %v34
  %v40 = vmax.f32 %v36, 0.0
  %v41 = vmax.f32 %v37, 0.0
  %v42 = vmax.f32 %v38, 0.0
  %v43 = vmax.f32 %v39, 0.0
  %v44 = vpack.c.bf16 %v41, %v40
  %v45 = vpack.c.bf16 %v43, %v42
  %v48 = vunpack.c.l.b16 %v44
  %v49 = vunpack.c.h.b16 %v44
  %v50 = vunpack.c.l.b16 %v45
  %v51 = vunpack.c.h.b16 %v45
  %v52 = vpack.c.b16 %v48, %v48
  %v53 = vpack.c.b16 %v49, %v49
  %v54 = vpack.c.b16 %v50, %v50
  %v55 = vpack.c.b16 %v51, %v51
  %vm60 = vcmask 519168
  %61 = vst.msk [vmem:[%s3] sm:$0xf] %vm60, %v52
  %62 = vst.msk [vmem:[%s3 + $0x4] sm:$0xf] %vm60, %v53
  %63 = vst.msk [vmem:[%s3 + $0x8] sm:$0xf] %vm60, %v54
  %64 = vst.msk [vmem:[%s3 + $0xc] sm:$0xf] %vm60, %v55
  // Predicated region
  $region14: #{decoder_block_forward.7} parent=0 // pred_check
    _
  $region15: #{decoder_block_forward.7} parent=0 // pred_check_branch
    %66 = sbr.rel (0) target = $region17
  $region16: #{decoder_block_forward.7} parent=0 // pred_region
    _
  $region17: #{decoder_block_forward.7} parent=0 // pred_fallthru
    _
  // Predicated region
  $region18: #{decoder_block_forward.7} parent=0 // pred_check
    _
  $region19: #{decoder_block_forward.7} parent=0 // pred_check_branch
    %68 = sbr.rel (0) target = $region21
  $region20: #{decoder_block_forward.7} parent=0 // pred_region
    _
  $region21: #{decoder_block_forward.7} parent=0 // pred_fallthru
    _

// kernel: decoder_block_forward.9
$region0: #{decoder_block_forward.9}
  #allocation0 [shape = 'u32[]', space=smem, size = 0x4, offset = 0x4, fixed_abs, tag = 'smem constant byte address 0x4 - core index']
  #allocation1 [shape = 'u32[144,128]{1,0:T(1,128)}', space=vmem, size = 0x12000, scoped, tag = 'internal scratch']
  %s0 = inlined_call_operand.vmem [shape: f32[32,64], index: 0, kind: input, shape index: {}]
  %s1 = inlined_call_operand.vmem [shape: f32[1,64], index: 1, kind: input, shape index: {}]
  %s2 = inlined_call_operand.vmem [shape: f32[1,64], index: 2, kind: input, shape index: {}]
  %s3 = inlined_call_operand.vmem [shape: f32[32,64], index: 3, kind: output, shape index: {}]
  %s4 = sld [smem:[#allocation0]]
  $region22: #{decoder_block_forward.9} parent=0
    _
  %s6 = ssub.s32 1, %s4
  %s7 = scalar_select 0, %s6, %s4
  // Predicated region
  $region2: #{decoder_block_forward.9} parent=0 // pred_check
    _
  $region3: #{decoder_block_forward.9} parent=0 // pred_check_branch
    %9 = sbr.rel (0) target = $region5
  $region4: #{decoder_block_forward.9} parent=0 // pred_region
    _
  $region5: #{decoder_block_forward.9} parent=0 // pred_fallthru
    _
  // Predicated region
  $region6: #{decoder_block_forward.9} parent=0 // pred_check
    _
  $region7: #{decoder_block_forward.9} parent=0 // pred_check_branch
    %11 = sbr.rel (0) target = $region9
  $region8: #{decoder_block_forward.9} parent=0 // pred_region
    _
  $region9: #{decoder_block_forward.9} parent=0 // pred_fallthru
    _
  // Predicated region
  $region10: #{decoder_block_forward.9} parent=0 // pred_check
    _
  $region11: #{decoder_block_forward.9} parent=0 // pred_check_branch
    %13 = sbr.rel (0) target = $region13
  $region12: #{decoder_block_forward.9} parent=0 // pred_region
    _
  $region13: #{decoder_block_forward.9} parent=0 // pred_fallthru
    _
  %v14 = vld [vmem:[%s0] sm:$0xff]
  %v15 = vld [vmem:[%s0 + $0x8] sm:$0xff]
  %v16 = vld [vmem:[%s0 + $0x10] sm:$0xff]
  %v17 = vld [vmem:[%s0 + $0x18] sm:$0xff]
  %v18 = vld [vmem:[%s1] sm:$0x1]
  %v20 = vlaneseq
  %v21 = vshrl.u32 %v20, 7
  %v22 = vsub.s32 0, %v21
  %v23 = vrot.slane %v18, %v22
  %v25 = vmul.f32 %v14, %v23
  %v26 = vmul.f32 %v15, %v23
  %v27 = vmul.f32 %v16, %v23
  %v28 = vmul.f32 %v17, %v23
  %v29 = vld [vmem:[%s2] sm:$0x1]
  %v31 = vlaneseq
  %v32 = vshrl.u32 %v31, 7
  %v33 = vsub.s32 0, %v32
  %v34 = vrot.slane %v29, %v33
  %v36 = vadd.f32 %v25, %v34
  %v37 = vadd.f32 %v26, %v34
  %v38 = vadd.f32 %v27, %v34
  %v39 = vadd.f32 %v28, %v34
  %v40 = vmax.f32 %v36, 0.0
  %v41 = vmax.f32 %v37, 0.0
  %v42 = vmax.f32 %v38, 0.0
  %v43 = vmax.f32 %v39, 0.0
  %vm44 = vcmask 523264
  %45 = vst.msk [vmem:[%s3] sm:$0xff] %vm44, %v40
  %46 = vst.msk [vmem:[%s3 + $0x8] sm:$0xff] %vm44, %v41
  %47 = vst.msk [vmem:[%s3 + $0x10] sm:$0xff] %vm44, %v42
  %48 = vst.msk [vmem:[%s3 + $0x18] sm:$0xff] %vm44, %v43
  // Predicated region
  $region14: #{decoder_block_forward.9} parent=0 // pred_check
    _
  $region15: #{decoder_block_forward.9} parent=0 // pred_check_branch
    %50 = sbr.rel (0) target = $region17
  $region16: #{decoder_block_forward.9} parent=0 // pred_region
    _
  $region17: #{decoder_block_forward.9} parent=0 // pred_fallthru
    _
  // Predicated region
  $region18: #{decoder_block_forward.9} parent=0 // pred_check
    _
  $region19: #{decoder_block_forward.9} parent=0 // pred_check_branch
    %52 = sbr.rel (0) target = $region21
  $region20: #{decoder_block_forward.9} parent=0 // pred_region
    _
  $region21: #{decoder_block_forward.9} parent=0 // pred_fallthru
    _

// kernel: decoder_block_forward.8
$region0: #{decoder_block_forward.8}
  #allocation0 [shape = 'u32[]', space=smem, size = 0x4, offset = 0x4, fixed_abs, tag = 'smem constant byte address 0x4 - core index']
  #allocation1 [shape = 'u32[144,128]{1,0:T(1,128)}', space=vmem, size = 0x12000, scoped, tag = 'internal scratch']
  %s0 = inlined_call_operand.vmem [shape: bf16[2,2,10,18,4], index: 0, kind: input, shape index: {}]
  %s1 = inlined_call_operand.vmem [shape: bf16[3,3,4,4], index: 1, kind: input, shape index: {}]
  %s2 = inlined_call_operand.vmem [shape: f32[1,4], index: 2, kind: input, shape index: {}]
  %s3 = inlined_call_operand.vmem [shape: f32[2,16,16,4], index: 3, kind: output, shape index: {0}]
  %s4 = inlined_call_operand.vmem [shape: f32[2,2,1,4], index: 4, kind: output, shape index: {1}]
  %s5 = inlined_call_operand.vmem [shape: f32[2,2,1,4], index: 5, kind: output, shape index: {2}]
  %6 = xla_tuple %s3, %s4, %s5
  %s7 = sld [smem:[#allocation0]]
  $region61: #{decoder_block_forward.8} parent=0
    _
  %s9 = ssub.s32 1, %s7
  %s10 = scalar_select 0, %s9, %s7
  loop: start=0, step=1, limit=6
  $region2: #{decoder_block_forward.8} parent=0 // loop_pre_header
    _
  $region3: #{decoder_block_forward.8} parent=0 // loop_header
    %s12 = sphi 0, %s16
    %p13 = scmp.ge.s32.totalorder %s12, 6
    %s19 = sphi 0, %s31
    %s20 = sphi 0, %s27
    %s21 = sphi 0, %s19
    %s22 = sphi 0, %s20
    %s23 = sphi 0, %s21
    %s24 = sphi 0, %s22
    %s36 = sphi 0, %s38
    %s39 = sphi 0, %s36
    %s40 = sphi 0, %s39
    %s56 = sphi 0, %s40
    %s60 = sphi 0, %s60
    %s62 = sphi 0, %s60
    %s63 = sphi 0, %s62
    %s77 = sphi 0, %s63
    %s81 = sphi 0, %s81
    %s83 = sphi 0, %s81
    %s84 = sphi 0, %s83
    %s98 = sphi 0, %s84
    %s106 = sphi 0, %s108
    %s109 = sphi 0, %s106
    %s110 = sphi 0, %s109
    %s126 = sphi 0, %s110
    %s134 = sphi 0, %s136
    %s137 = sphi 0, %s134
    %s138 = sphi 0, %s137
    %s154 = sphi 0, %s138
    %s162 = sphi 0, %s164
    %s165 = sphi 0, %s162
    %s166 = sphi 0, %s165
    %s182 = sphi 0, %s166
  $region4: #{decoder_block_forward.8} parent=0 // loop_header_branch
    %15 = sbr.rel (%p13) target = $region8
  $region5: #{decoder_block_forward.8} parent=0 // loop_body
    %s17 = ssub.s32 %s12, 1
    %s18 = ssub.s32 %s12, 2
    %s25 = sadd.s32 1, %s20
    %p26 = scmp.ge.s32.totalorder %s25, 2
    %s27 = scalar_select %p26, 0, %s25
    %s28 = sadd.s32 1, %s19
    %s29 = scalar_select %p26, %s28, %s19
    %p30 = scmp.ge.s32.totalorder %s29, 2
    %s31 = scalar_select %p30, 0, %s29
    %s32 = ssub.s32 %s19, %s31
    %s33 = ssub.s32 %s20, %s27
    %s34 = sor.u32 %s32, %s33
    %p35 = scmp.eq.s32.totalorder %s34, 0
    %s37 = sadd.s32 %s36, 1
    %s38 = scalar_select %p35, %s36, %s37
    %p41 = pneg %p35
    %p42 = scmp.eq.s32.totalorder %s12, 3
    %p43 = por %p41, %p42
    %p44 = scmp.ne.s32.totalorder %s36, %s39
    %p45 = scmp.eq.s32.totalorder %s12, 0
    %p46 = por %p44, %p45
    %p47 = scmp.ne.s32.totalorder %s36, %s39
    %p48 = scmp.eq.s32.totalorder %s17, 3
    %p49 = por %p47, %p48
    %p50 = scmp.ne.s32.totalorder %s39, %s40
    %p51 = scmp.eq.s32.totalorder %s17, 0
    %p52 = por %p50, %p51
    %p53 = scmp.ne.s32.totalorder %s39, %s40
    %p54 = scmp.eq.s32.totalorder %s18, 3
    %p55 = por %p53, %p54
    %p57 = scmp.ne.s32.totalorder %s40, %s56
    %p58 = scmp.eq.s32.totalorder %s18, 0
    %p59 = por %p57, %p58
    %s61 = sadd.s32 %s60, 1
    %p64 = scmp.eq.s32.totalorder %s12, 3
    %p65 = scmp.ne.s32.totalorder %s60, %s62
    %p66 = scmp.eq.s32.totalorder %s12, 0
    %p67 = por %p65, %p66
    %p68 = scmp.ne.s32.totalorder %s60, %s62
    %p69 = scmp.eq.s32.totalorder %s17, 3
    %p70 = por %p68, %p69
    %p71 = scmp.ne.s32.totalorder %s62, %s63
    %p72 = scmp.eq.s32.totalorder %s17, 0
    %p73 = por %p71, %p72
    %p74 = scmp.ne.s32.totalorder %s62, %s63
    %p75 = scmp.eq.s32.totalorder %s18, 3
    %p76 = por %p74, %p75
    %p78 = scmp.ne.s32.totalorder %s63, %s77
    %p79 = scmp.eq.s32.totalorder %s18, 0
    %p80 = por %p78, %p79
    %s82 = sadd.s32 %s81, 1
    %p85 = scmp.eq.s32.totalorder %s12, 3
    %p86 = scmp.ne.s32.totalorder %s81, %s83
    %p87 = scmp.eq.s32.totalorder %s12, 0
    %p88 = por %p86, %p87
    %p89 = scmp.ne.s32.totalorder %s81, %s83
    %p90 = scmp.eq.s32.totalorder %s17, 3
    %p91 = por %p89, %p90
    %p92 = scmp.ne.s32.totalorder %s83, %s84
    %p93 = scmp.eq.s32.totalorder %s17, 0
    %p94 = por %p92, %p93
    %p95 = scmp.ne.s32.totalorder %s83, %s84
    %p96 = scmp.eq.s32.totalorder %s18, 3
    %p97 = por %p95, %p96
    %p99 = scmp.ne.s32.totalorder %s84, %s98
    %p100 = scmp.eq.s32.totalorder %s18, 0
    %p101 = por %p99, %p100
    %s102 = ssub.s32 %s19, %s31
    %s103 = ssub.s32 %s20, %s27
    %s104 = sor.u32 %s102, %s103
    %p105 = scmp.eq.s32.totalorder %s104, 0
    %s107 = sadd.s32 %s106, 1
    %s108 = scalar_select %p105, %s106, %s107
    %p111 = pneg %p105
    %p112 = scmp.eq.s32.totalorder %s12, 3
    %p113 = por %p111, %p112
    %p114 = scmp.ne.s32.totalorder %s106, %s109
    %p115 = scmp.eq.s32.totalorder %s12, 0
    %p116 = por %p114, %p115
    %p117 = scmp.ne.s32.totalorder %s106, %s109
    %p118 = scmp.eq.s32.totalorder %s17, 3
    %p119 = por %p117, %p118
    %p120 = scmp.ne.s32.totalorder %s109, %s110
    %p121 = scmp.eq.s32.totalorder %s17, 0
    %p122 = por %p120, %p121
    %p123 = scmp.ne.s32.totalorder %s109, %s110
    %p124 = scmp.eq.s32.totalorder %s18, 3
    %p125 = por %p123, %p124
    %p127 = scmp.ne.s32.totalorder %s110, %s126
    %p128 = scmp.eq.s32.totalorder %s18, 0
    %p129 = por %p127, %p128
    %s130 = ssub.s32 %s19, %s31
    %s131 = ssub.s32 %s20, %s27
    %s132 = sor.u32 %s130, %s131
    %p133 = scmp.eq.s32.totalorder %s132, 0
    %s135 = sadd.s32 %s134, 1
    %s136 = scalar_select %p133, %s134, %s135
    %p139 = pneg %p133
    %p140 = scmp.eq.s32.totalorder %s12, 3
    %p141 = por %p139, %p140
    %p142 = scmp.ne.s32.totalorder %s134, %s137
    %p143 = scmp.eq.s32.totalorder %s12, 0
    %p144 = por %p142, %p143
    %p145 = scmp.ne.s32.totalorder %s134, %s137
    %p146 = scmp.eq.s32.totalorder %s17, 3
    %p147 = por %p145, %p146
    %p148 = scmp.ne.s32.totalorder %s137, %s138
    %p149 = scmp.eq.s32.totalorder %s17, 0
    %p150 = por %p148, %p149
    %p151 = scmp.ne.s32.totalorder %s137, %s138
    %p152 = scmp.eq.s32.totalorder %s18, 3
    %p153 = por %p151, %p152
    %p155 = scmp.ne.s32.totalorder %s138, %s154
    %p156 = scmp.eq.s32.totalorder %s18, 0
    %p157 = por %p155, %p156
    %s158 = ssub.s32 %s19, %s31
    %s159 = ssub.s32 %s20, %s27
    %s160 = sor.u32 %s158, %s159
    %p161 = scmp.eq.s32.totalorder %s160, 0
    %s163 = sadd.s32 %s162, 1
    %s164 = scalar_select %p161, %s162, %s163
    %p167 = pneg %p161
    %p168 = scmp.eq.s32.totalorder %s12, 3
    %p169 = por %p167, %p168
    %p170 = scmp.ne.s32.totalorder %s162, %s165
    %p171 = scmp.eq.s32.totalorder %s12, 0
    %p172 = por %p170, %p171
    %p173 = scmp.ne.s32.totalorder %s162, %s165
    %p174 = scmp.eq.s32.totalorder %s17, 3
    %p175 = por %p173, %p174
    %p176 = scmp.ne.s32.totalorder %s165, %s166
    %p177 = scmp.eq.s32.totalorder %s17, 0
    %p178 = por %p176, %p177
    %p179 = scmp.ne.s32.totalorder %s165, %s166
    %p180 = scmp.eq.s32.totalorder %s18, 3
    %p181 = por %p179, %p180
    %p183 = scmp.ne.s32.totalorder %s166, %s182
    %p184 = scmp.eq.s32.totalorder %s18, 0
    %p185 = por %p183, %p184
    %p186 = scmp.le.s32.totalorder 1, %s12
    %p187 = scmp.lt.s32.totalorder %s12, 5
    %p188 = pnand %p186, %p187
    %p189 = pneg %p188
    // Predicated region
    $region9: #{decoder_block_forward.8} parent=5 // pred_check
      _
    $region10: #{decoder_block_forward.8} parent=5 // pred_check_branch
      %191 = sbr.rel (%p188) target = $region12
    $region11: #{decoder_block_forward.8} parent=5 // pred_region
      %s192 = ssub.s32 %s12, 1
      // Predicated region
      $region13: #{decoder_block_forward.8} parent=11 // pred_check
        %p193 = pneg %p73
      $region14: #{decoder_block_forward.8} parent=11 // pred_check_branch
        %195 = sbr.rel (%p193) target = $region16
      $region15: #{decoder_block_forward.8} parent=11 // pred_region
        _
      $region16: #{decoder_block_forward.8} parent=11 // pred_fallthru
        _
      // Predicated region
      $region17: #{decoder_block_forward.8} parent=11 // pred_check
        %p196 = pneg %p94
      $region18: #{decoder_block_forward.8} parent=11 // pred_check_branch
        %198 = sbr.rel (%p196) target = $region20
      $region19: #{decoder_block_forward.8} parent=11 // pred_region
        _
      $region20: #{decoder_block_forward.8} parent=11 // pred_fallthru
        _
    $region12: #{decoder_block_forward.8} parent=5 // pred_fallthru
      _
    %p199 = scmp.lt.s32.totalorder %s12, 4
    // Predicated region
    $region21: #{decoder_block_forward.8} parent=5 // pred_check
      %p200 = pneg %p199
    $region22: #{decoder_block_forward.8} parent=5 // pred_check_branch
      %202 = sbr.rel (%p200) target = $region24
    $region23: #{decoder_block_forward.8} parent=5 // pred_region
      // Predicated region
      $region25: #{decoder_block_forward.8} parent=23 // pred_check
        %p203 = pneg %p46
      $region26: #{decoder_block_forward.8} parent=23 // pred_check_branch
        %205 = sbr.rel (%p203) target = $region28
      $region27: #{decoder_block_forward.8} parent=23 // pred_region
        %p206 = scmp.lt.s32.totalorder %s19, 1
        %s207 = scalar_select %p206, %s19, 1
        %p208 = scmp.lt.s32.totalorder %s20, 1
        %s209 = scalar_select %p208, %s20, 1
        %s210 = smul.addr %s209, 30
        %s211 = smul.addr %s207, 60
        %s212 = sadd.s32 %s210, %s211
        %s213 = smul.addr %s212, 4
        %s214 = scalar_lea.vmem %s0, %s213
      $region28: #{decoder_block_forward.8} parent=23 // pred_fallthru
        _
    $region24: #{decoder_block_forward.8} parent=5 // pred_fallthru
      _
    %p215 = scmp.le.s32.totalorder 1, %s12
    %p216 = scmp.lt.s32.totalorder %s12, 5
    %p217 = pnand %p215, %p216
    %p218 = pneg %p217
    // Predicated region
    $region29: #{decoder_block_forward.8} parent=5 // pred_check
      _
    $region30: #{decoder_block_forward.8} parent=5 // pred_check_branch
      %220 = sbr.rel (%p217) target = $region32
    $region31: #{decoder_block_forward.8} parent=5 // pred_region
      %s221 = ssub.s32 %s12, 1
      %p222 = scmp.lt.s32.totalorder %s21, 1
      %s223 = scalar_select %p222, %s21, 1
      %p224 = scmp.lt.s32.totalorder %s22, 1
      %s225 = scalar_select %p224, %s22, 1
      %s226 = smul.addr %s225, 30
      %s227 = smul.addr %s223, 60
      %s228 = sadd.s32 %s226, %s227
      %s229 = smul.addr %s228, 4
      %s230 = scalar_lea.vmem %s0, %s229
      %p231 = pneg %p52
      %p232 = pneg %p49
      %p233 = pneg %p73
      %p234 = pneg %p70
      %p235 = pneg %p94
      %p236 = pneg %p91
      %p237 = pneg %p122
      %p238 = pneg %p119
      %s239 = smul.u32 8, %s22
      %p240 = scmp.lt.s32.totalorder %s21, 1
      %s241 = scalar_select %p240, %s21, 1
      %p242 = scmp.lt.s32.totalorder %s239, 15
      %s243 = scalar_select %p242, %s239, 15
      %s244 = smul.addr %s243, 2
      %s245 = smul.addr %s241, 32
      %s246 = sadd.s32 %s244, %s245
      %s247 = smul.addr %s246, 8
      %s248 = scalar_lea.vmem %s3, %s247
      %p249 = pneg %p150
      %p250 = pneg %p147
      %p251 = scmp.lt.s32.totalorder %s21, 1
      %s252 = scalar_select %p251, %s21, 1
      %p253 = scmp.lt.s32.totalorder %s22, 1
      %s254 = scalar_select %p253, %s22, 1
      %s255 = smul.addr %s252, 2
      %s256 = sadd.s32 %s254, %s255
      %s257 = scalar_lea.vmem %s4, %s256
      %p258 = pneg %p178
      %p259 = pneg %p175
      %p260 = scmp.lt.s32.totalorder %s21, 1
      %s261 = scalar_select %p260, %s21, 1
      %p262 = scmp.lt.s32.totalorder %s22, 1
      %s263 = scalar_select %p262, %s22, 1
      %s264 = smul.addr %s261, 2
      %s265 = sadd.s32 %s263, %s264
      %s266 = scalar_lea.vmem %s5, %s265
      %p267 = scmp.lt.s32.totalorder %s21, 1
      %s268 = scalar_select %p267, %s21, 1
      %p269 = scmp.lt.s32.totalorder %s22, 1
      %s270 = scalar_select %p269, %s22, 1
      %s271 = smul.addr %s270, 30
      %s272 = smul.addr %s268, 60
      %s273 = sadd.s32 %s271, %s272
      %s274 = smul.addr %s273, 4
      %s275 = scalar_lea.vmem %s0, %s274
      %s276 = smul.u32 8, %s22
      %p277 = scmp.lt.s32.totalorder %s21, 1
      %s278 = scalar_select %p277, %s21, 1
      %p279 = scmp.lt.s32.totalorder %s276, 15
      %s280 = scalar_select %p279, %s276, 15
      %s281 = smul.addr %s280, 2
      %s282 = smul.addr %s278, 32
      %s283 = sadd.s32 %s281, %s282
      %s284 = smul.addr %s283, 8
      %s285 = scalar_lea.vmem %s3, %s284
      %s286 = smul.u32 8, %s22
      %p287 = scmp.lt.s32.totalorder %s21, 1
      %s288 = scalar_select %p287, %s21, 1
      %p289 = scmp.lt.s32.totalorder %s22, 1
      %s290 = scalar_select %p289, %s22, 1
      %s291 = smul.addr %s288, 2
      %s292 = sadd.s32 %s290, %s291
      %s293 = scalar_lea.vmem %s4, %s292
      %p294 = scmp.lt.s32.totalorder %s21, 1
      %s295 = scalar_select %p294, %s21, 1
      %p296 = scmp.lt.s32.totalorder %s22, 1
      %s297 = scalar_select %p296, %s22, 1
      %s298 = smul.addr %s295, 2
      %s299 = sadd.s32 %s297, %s298
      %s300 = scalar_lea.vmem %s5, %s299
      %v302 = vld [vmem:[%s275] sm:$0xf]
      %v303 = vld [vmem:[%s275 + $0x4] sm:$0xf]
      %v304 = vld [vmem:[%s275 + $0xc] sm:$0xf]
      %v305 = vld [vmem:[%s275 + $0x10] sm:$0xf]
      %v306 = vld [vmem:[%s275 + $0x18] sm:$0xf]
      %v307 = vld [vmem:[%s275 + $0x1c] sm:$0xf]
      %v308 = vld [vmem:[%s275 + $0x24] sm:$0xf]
      %v309 = vld [vmem:[%s275 + $0x28] sm:$0xf]
      %v310 = vld [vmem:[%s275 + $0x30] sm:$0xf]
      %v311 = vld [vmem:[%s275 + $0x34] sm:$0xf]
      %v312 = vld [vmem:[%s275 + $0x3c] sm:$0xf]
      %v313 = vld [vmem:[%s275 + $0x40] sm:$0xf]
      %v314 = vld [vmem:[%s275 + $0x48] sm:$0xf]
      %v315 = vld [vmem:[%s275 + $0x4c] sm:$0xf]
      %v316 = vld [vmem:[%s275 + $0x54] sm:$0xf]
      %v317 = vld [vmem:[%s275 + $0x58] sm:$0xf]
      %v318 = vld [vmem:[%s1] sm:$0x3]
      %v319 = vld [vmem:[%s275 + $0x8] sm:$0x1]
      %v320 = vld [vmem:[%s275 + $0x14] sm:$0x1]
      %v321 = vld [vmem:[%s275 + $0x20] sm:$0x1]
      %v322 = vld [vmem:[%s275 + $0x2c] sm:$0x1]
      %v323 = vld [vmem:[%s275 + $0x38] sm:$0x1]
      %v324 = vld [vmem:[%s275 + $0x44] sm:$0x1]
      %v325 = vld [vmem:[%s275 + $0x50] sm:$0x1]
      %v326 = vld [vmem:[%s275 + $0x5c] sm:$0x1]
      %vm327 = vsmask.f32 3328
      %vm328 = vsmask.f32 7440
      %vm329 = vmor %vm327, %vm328
      %v331 = vshrl.u32 %v302, 16
      %v333 = vrot.slane %v331, 4
      %v334 = vshll.u32 %v302, 16
      %v336 = vrot.slane %v334, 5
      %v337 = vor.u32 %v333, %v336
      %v338 = vrot.slane %v337, 4
      %v340 = vshll.u32 %v303, 16
      %v342 = vrot.slane %v340, 5
      %v343 = vsel %vm329, %v338, %v342
      %v344 = vshrl.u32 %v303, 16
      %v346 = vrot.slane %v344, 4
      %v347 = vor.u32 %v346, %v342
      %v348 = vrot.slane %v347, 4
      %v350 = vshll.u32 %v319, 16
      %v352 = vrot.slane %v350, 5
      %v353 = vsel %vm329, %v348, %v352
      %v355 = vshrl.u32 %v304, 16
      %v357 = vrot.slane %v355, 4
      %v358 = vshll.u32 %v304, 16
      %v360 = vrot.slane %v358, 5
      %v361 = vor.u32 %v357, %v360
      %v362 = vrot.slane %v361, 4
      %v364 = vshll.u32 %v305, 16
      %v366 = vrot.slane %v364, 5
      %v367 = vsel %vm329, %v362, %v366
      %v368 = vshrl.u32 %v305, 16
      %v370 = vrot.slane %v368, 4
      %v371 = vor.u32 %v370, %v366
      %v372 = vrot.slane %v371, 4
      %v374 = vshll.u32 %v320, 16
      %v376 = vrot.slane %v374, 5
      %v377 = vsel %vm329, %v372, %v376
      %v379 = vshrl.u32 %v306, 16
      %v381 = vrot.slane %v379, 4
      %v382 = vshll.u32 %v306, 16
      %v384 = vrot.slane %v382, 5
      %v385 = vor.u32 %v381, %v384
      %v386 = vrot.slane %v385, 4
      %v388 = vshll.u32 %v307, 16
      %v390 = vrot.slane %v388, 5
      %v391 = vsel %vm329, %v386, %v390
      %v392 = vshrl.u32 %v307, 16
      %v394 = vrot.slane %v392, 4
      %v395 = vor.u32 %v394, %v390
      %v396 = vrot.slane %v395, 4
      %v398 = vshll.u32 %v321, 16
      %v400 = vrot.slane %v398, 5
      %v401 = vsel %vm329, %v396, %v400
      %v403 = vshrl.u32 %v308, 16
      %v405 = vrot.slane %v403, 4
      %v406 = vshll.u32 %v308, 16
      %v408 = vrot.slane %v406, 5
      %v409 = vor.u32 %v405, %v408
      %v410 = vrot.slane %v409, 4
      %v412 = vshll.u32 %v309, 16
      %v414 = vrot.slane %v412, 5
      %v415 = vsel %vm329, %v410, %v414
      %v416 = vshrl.u32 %v309, 16
      %v418 = vrot.slane %v416, 4
      %v419 = vor.u32 %v418, %v414
      %v420 = vrot.slane %v419, 4
      %v422 = vshll.u32 %v322, 16
      %v424 = vrot.slane %v422, 5
      %v425 = vsel %vm329, %v420, %v424
      %v427 = vshrl.u32 %v310, 16
      %v429 = vrot.slane %v427, 4
      %v430 = vshll.u32 %v310, 16
      %v432 = vrot.slane %v430, 5
      %v433 = vor.u32 %v429, %v432
      %v434 = vrot.slane %v433, 4
      %v436 = vshll.u32 %v311, 16
      %v438 = vrot.slane %v436, 5
      %v439 = vsel %vm329, %v434, %v438
      %v440 = vshrl.u32 %v311, 16
      %v442 = vrot.slane %v440, 4
      %v443 = vor.u32 %v442, %v438
      %v444 = vrot.slane %v443, 4
      %v446 = vshll.u32 %v323, 16
      %v448 = vrot.slane %v446, 5
      %v449 = vsel %vm329, %v444, %v448
      %v451 = vshrl.u32 %v312, 16
      %v453 = vrot.slane %v451, 4
      %v454 = vshll.u32 %v312, 16
      %v456 = vrot.slane %v454, 5
      %v457 = vor.u32 %v453, %v456
      %v458 = vrot.slane %v457, 4
      %v460 = vshll.u32 %v313, 16
      %v462 = vrot.slane %v460, 5
      %v463 = vsel %vm329, %v458, %v462
      %v464 = vshrl.u32 %v313, 16
      %v466 = vrot.slane %v464, 4
      %v467 = vor.u32 %v466, %v462
      %v468 = vrot.slane %v467, 4
      %v470 = vshll.u32 %v324, 16
      %v472 = vrot.slane %v470, 5
      %v473 = vsel %vm329, %v468, %v472
      %v475 = vshrl.u32 %v314, 16
      %v477 = vrot.slane %v475, 4
      %v478 = vshll.u32 %v314, 16
      %v480 = vrot.slane %v478, 5
      %v481 = vor.u32 %v477, %v480
      %v482 = vrot.slane %v481, 4
      %v484 = vshll.u32 %v315, 16
      %v486 = vrot.slane %v484, 5
      %v487 = vsel %vm329, %v482, %v486
      %v488 = vshrl.u32 %v315, 16
      %v490 = vrot.slane %v488, 4
      %v491 = vor.u32 %v490, %v486
      %v492 = vrot.slane %v491, 4
      %v494 = vshll.u32 %v325, 16
      %v496 = vrot.slane %v494, 5
      %v497 = vsel %vm329, %v492, %v496
      %v499 = vshrl.u32 %v316, 16
      %v501 = vrot.slane %v499, 4
      %v502 = vshll.u32 %v316, 16
      %v504 = vrot.slane %v502, 5
      %v505 = vor.u32 %v501, %v504
      %v506 = vrot.slane %v505, 4
      %v508 = vshll.u32 %v317, 16
      %v510 = vrot.slane %v508, 5
      %v511 = vsel %vm329, %v506, %v510
      %v512 = vshrl.u32 %v317, 16
      %v514 = vrot.slane %v512, 4
      %v515 = vor.u32 %v514, %v510
      %v516 = vrot.slane %v515, 4
      %v518 = vshll.u32 %v326, 16
      %v520 = vrot.slane %v518, 5
      %v521 = vsel %vm329, %v516, %v520
      %s522 = scalar_lea.vmem %s1, 2
      %v523 = vld [vmem:[%s522] sm:$0x3]
      %v524 = vunpack.c.l.b16 %v343
      %v525 = vunpack.c.l.b16 %v353
      %v526 = vunpack.c.l.b16 %v367
      %v527 = vunpack.c.l.b16 %v377
      %v528 = vunpack.c.l.b16 %v391
      %v529 = vunpack.c.l.b16 %v401
      %v530 = vunpack.c.l.b16 %v415
      %v531 = vunpack.c.l.b16 %v425
      %v532 = vunpack.c.l.b16 %v439
      %v533 = vunpack.c.l.b16 %v449
      %v534 = vunpack.c.l.b16 %v463
      %v535 = vunpack.c.l.b16 %v473
      %v536 = vunpack.c.l.b16 %v487
      %v537 = vunpack.c.l.b16 %v497
      %v538 = vunpack.c.l.b16 %v511
      %v539 = vunpack.c.l.b16 %v521
      %v540 = vpack.c.b16 %v525, %v524
      %v541 = vpack.c.b16 %v527, %v526
      %v542 = vpack.c.b16 %v529, %v528
      %v543 = vpack.c.b16 %v531, %v530
      %v544 = vpack.c.b16 %v533, %v532
      %v545 = vpack.c.b16 %v535, %v534
      %v546 = vpack.c.b16 %v537, %v536
      %v547 = vpack.c.b16 %v539, %v538
      %vm548 = vcmask 31744
      %v550 = vsel %vm548, %v540, 0
      %v553 = vsel %vm548, %v541, 0
      %v556 = vsel %vm548, %v542, 0
      %v559 = vsel %vm548, %v543, 0
      %v562 = vsel %vm548, %v544, 0
      %v565 = vsel %vm548, %v545, 0
      %v568 = vsel %vm548, %v546, 0
      %v571 = vsel %vm548, %v547, 0
      %vm573 = vcmask 1041408
      %v575 = vsel %vm573, %v523, 0
      %577 = vmatprep.subr.bf16.mxu0 0
      %578 = vmatpush1.bf16.msra.mxu0 %v575
      %579 = vmatprep.subr.bf16.mxu0 0
      %580 = vmatpush1.bf16.msra.mxu0 0
      %581 = vmatprep.subr.bf16.mxu0 0
      %582 = vmatpush1.bf16.msra.mxu0 0
      %583 = vmatprep.subr.bf16.mxu0 0
      %584 = vmatpush1.bf16.msra.mxu0 0
      %585 = vmatprep.subr.bf16.mxu0 0
      %586 = vmatpush1.bf16.msra.mxu0 0
      %587 = vmatprep.subr.bf16.mxu0 0
      %588 = vmatpush1.bf16.msra.mxu0 0
      %589 = vmatprep.subr.bf16.mxu0 0
      %590 = vmatpush1.bf16.msra.mxu0 0
      %591 = vmatprep.subr.bf16.mxu0 0
      %592 = vmatpush1.bf16.msra.mxu0 0
      %593 = vmatprep.subr.bf16.mxu0 0
      %594 = vmatpush1.bf16.msra.mxu0 0
      %595 = vmatprep.subr.bf16.mxu0 0
      %596 = vmatpush1.bf16.msra.mxu0 0
      %597 = vmatprep.subr.bf16.mxu0 0
      %598 = vmatpush1.bf16.msra.mxu0 0
      %599 = vmatprep.subr.bf16.mxu0 0
      %600 = vmatpush1.bf16.msra.mxu0 0
      %601 = vmatprep.subr.bf16.mxu0 0
      %602 = vmatpush1.bf16.msra.mxu0 0
      %603 = vmatprep.subr.bf16.mxu0 0
      %604 = vmatpush1.bf16.msra.mxu0 0
      %605 = vmatprep.subr.bf16.mxu0 0
      %606 = vmatpush1.bf16.msra.mxu0 0
      %607 = vmatprep.subr.bf16.mxu0 0
      %608 = vmatpush1.bf16.msra.mxu0 0
      %609 = vmatprep.mubr.bf16.mxu0 0
      %610 = vmatmul.mubr.bf16.gmra.mrb[0].mxu0 %v550
      %v611 = vpop.f32.mrb[0].mxu0
      %v612 = vadd.f32 0.0, %v611
      %v613 = vpop.f32.mrb[0].mxu0
      %v614 = vpop.f32.mrb[0].mxu0
      %v615 = vadd.f32 0.0, %v614
      %v616 = vpop.f32.mrb[0].mxu0
      %617 = vmatprep.mubr.bf16.mxu0 0
      %618 = vmatmul.mubr.bf16.gmra.mrb[0].mxu0 %v553
      %v619 = vpop.f32.mrb[0].mxu0
      %v620 = vadd.f32 0.0, %v619
      %v621 = vpop.f32.mrb[0].mxu0
      %v622 = vpop.f32.mrb[0].mxu0
      %v623 = vadd.f32 0.0, %v622
      %v624 = vpop.f32.mrb[0].mxu0
      %625 = vmatprep.mubr.bf16.mxu0 0
      %626 = vmatmul.mubr.bf16.gmra.mrb[0].mxu0 %v556
      %v627 = vpop.f32.mrb[0].mxu0
      %v628 = vadd.f32 0.0, %v627
      %v629 = vpop.f32.mrb[0].mxu0
      %v630 = vpop.f32.mrb[0].mxu0
      %v631 = vadd.f32 0.0, %v630
      %v632 = vpop.f32.mrb[0].mxu0
      %633 = vmatprep.mubr.bf16.mxu0 0
      %634 = vmatmul.mubr.bf16.gmra.mrb[0].mxu0 %v559
      %v635 = vpop.f32.mrb[0].mxu0
      %v636 = vadd.f32 0.0, %v635
      %v637 = vpop.f32.mrb[0].mxu0
      %v638 = vpop.f32.mrb[0].mxu0
      %v639 = vadd.f32 0.0, %v638
      %v640 = vpop.f32.mrb[0].mxu0
      %641 = vmatprep.mubr.bf16.mxu0 0
      %642 = vmatmul.mubr.bf16.gmra.mrb[0].mxu0 %v562
      %v643 = vpop.f32.mrb[0].mxu0
      %v644 = vadd.f32 0.0, %v643
      %v645 = vpop.f32.mrb[0].mxu0
      %v646 = vpop.f32.mrb[0].mxu0
      %v647 = vadd.f32 0.0, %v646
      %v648 = vpop.f32.mrb[0].mxu0
      %649 = vmatprep.mubr.bf16.mxu0 0
      %650 = vmatmul.mubr.bf16.gmra.mrb[0].mxu0 %v565
      %v651 = vpop.f32.mrb[0].mxu0
      %v652 = vadd.f32 0.0, %v651
      %v653 = vpop.f32.mrb[0].mxu0
      %v654 = vpop.f32.mrb[0].mxu0
      %v655 = vadd.f32 0.0, %v654
      %v656 = vpop.f32.mrb[0].mxu0
      %657 = vmatprep.mubr.bf16.mxu0 0
      %658 = vmatmul.mubr.bf16.gmra.mrb[0].mxu0 %v568
      %v659 = vpop.f32.mrb[0].mxu0
      %v660 = vadd.f32 0.0, %v659
      %v661 = vpop.f32.mrb[0].mxu0
      %v662 = vpop.f32.mrb[0].mxu0
      %v663 = vadd.f32 0.0, %v662
      %v664 = vpop.f32.mrb[0].mxu0
      %665 = vmatprep.mubr.bf16.mxu0 0
      %666 = vmatmul.mubr.bf16.gmra.mrb[0].mxu0 %v571
      %v667 = vpop.f32.mrb[0].mxu0
      %v668 = vadd.f32 0.0, %v667
      %v669 = vpop.f32.mrb[0].mxu0
      %v670 = vpop.f32.mrb[0].mxu0
      %v671 = vadd.f32 0.0, %v670
      %v672 = vpop.f32.mrb[0].mxu0
      %673 = vdwg.mxu0
      %v690 = vunpack.c.l.b16 %v302
      %v691 = vunpack.c.l.b16 %v303
      %v692 = vunpack.c.l.b16 %v304
      %v693 = vunpack.c.l.b16 %v305
      %v694 = vunpack.c.l.b16 %v306
      %v695 = vunpack.c.l.b16 %v307
      %v696 = vunpack.c.l.b16 %v308
      %v697 = vunpack.c.l.b16 %v309
      %v698 = vunpack.c.l.b16 %v310
      %v699 = vunpack.c.l.b16 %v311
      %v700 = vunpack.c.l.b16 %v312
      %v701 = vunpack.c.l.b16 %v313
      %v702 = vunpack.c.l.b16 %v314
      %v703 = vunpack.c.l.b16 %v315
      %v704 = vunpack.c.l.b16 %v316
      %v705 = vunpack.c.l.b16 %v317
      %v706 = vpack.c.b16 %v691, %v690
      %v707 = vpack.c.b16 %v693, %v692
      %v708 = vpack.c.b16 %v695, %v694
      %v709 = vpack.c.b16 %v697, %v696
      %v710 = vpack.c.b16 %v699, %v698
      %v711 = vpack.c.b16 %v701, %v700
      %v712 = vpack.c.b16 %v703, %v702
      %v713 = vpack.c.b16 %v705, %v704
      %v715 = vsel %vm548, %v706, 0
      %v718 = vsel %vm548, %v707, 0
      %v721 = vsel %vm548, %v708, 0
      %v724 = vsel %vm548, %v709, 0
      %v727 = vsel %vm548, %v710, 0
      %v730 = vsel %vm548, %v711, 0
      %v733 = vsel %vm548, %v712, 0
      %v736 = vsel %vm548, %v713, 0
      %v739 = vsel %vm573, %v318, 0
      %741 = vmatprep.subr.bf16.mxu0 0
      %742 = vmatpush1.bf16.msra.mxu0 %v739
      %743 = vmatprep.subr.bf16.mxu0 0
      %744 = vmatpush1.bf16.msra.mxu0 0
      %745 = vmatprep.subr.bf16.mxu0 0
      %746 = vmatpush1.bf16.msra.mxu0 0
      %747 = vmatprep.subr.bf16.mxu0 0
      %748 = vmatpush1.bf16.msra.mxu0 0
      %749 = vmatprep.subr.bf16.mxu0 0
      %750 = vmatpush1.bf16.msra.mxu0 0
      %751 = vmatprep.subr.bf16.mxu0 0
      %752 = vmatpush1.bf16.msra.mxu0 0
      %753 = vmatprep.subr.bf16.mxu0 0
      %754 = vmatpush1.bf16.msra.mxu0 0
      %755 = vmatprep.subr.bf16.mxu0 0
      %756 = vmatpush1.bf16.msra.mxu0 0
      %757 = vmatprep.subr.bf16.mxu0 0
      %758 = vmatpush1.bf16.msra.mxu0 0
      %759 = vmatprep.subr.bf16.mxu0 0
      %760 = vmatpush1.bf16.msra.mxu0 0
      %761 = vmatprep.subr.bf16.mxu0 0
      %762 = vmatpush1.bf16.msra.mxu0 0
      %763 = vmatprep.subr.bf16.mxu0 0
      %764 = vmatpush1.bf16.msra.mxu0 0
      %765 = vmatprep.subr.bf16.mxu0 0
      %766 = vmatpush1.bf16.msra.mxu0 0
      %767 = vmatprep.subr.bf16.mxu0 0
      %768 = vmatpush1.bf16.msra.mxu0 0
      %769 = vmatprep.subr.bf16.mxu0 0
      %770 = vmatpush1.bf16.msra.mxu0 0
      %771 = vmatprep.subr.bf16.mxu0 0
      %772 = vmatpush1.bf16.msra.mxu0 0
      %773 = vmatprep.mubr.bf16.mxu0 0
      %774 = vmatmul.mubr.bf16.gmra.mrb[0].mxu0 %v715
      %v775 = vpop.f32.mrb[0].mxu0
      %v776 = vadd.f32 %v612, %v775
      %v777 = vpop.f32.mrb[0].mxu0
      %v778 = vpop.f32.mrb[0].mxu0
      %v779 = vadd.f32 %v615, %v778
      %v780 = vpop.f32.mrb[0].mxu0
      %781 = vmatprep.mubr.bf16.mxu0 0
      %782 = vmatmul.mubr.bf16.gmra.mrb[0].mxu0 %v718
      %v783 = vpop.f32.mrb[0].mxu0
      %v784 = vadd.f32 %v620, %v783
      %v785 = vpop.f32.mrb[0].mxu0
      %v786 = vpop.f32.mrb[0].mxu0
      %v787 = vadd.f32 %v623, %v786
      %v788 = vpop.f32.mrb[0].mxu0
      %789 = vmatprep.mubr.bf16.mxu0 0
      %790 = vmatmul.mubr.bf16.gmra.mrb[0].mxu0 %v721
      %v791 = vpop.f32.mrb[0].mxu0
      %v792 = vadd.f32 %v628, %v791
      %v793 = vpop.f32.mrb[0].mxu0
      %v794 = vpop.f32.mrb[0].mxu0
      %v795 = vadd.f32 %v631, %v794
      %v796 = vpop.f32.mrb[0].mxu0
      %797 = vmatprep.mubr.bf16.mxu0 0
      %798 = vmatmul.mubr.bf16.gmra.mrb[0].mxu0 %v724
      %v799 = vpop.f32.mrb[0].mxu0
      %v800 = vadd.f32 %v636, %v799
      %v801 = vpop.f32.mrb[0].mxu0
      %v802 = vpop.f32.mrb[0].mxu0
      %v803 = vadd.f32 %v639, %v802
      %v804 = vpop.f32.mrb[0].mxu0
      %805 = vmatprep.mubr.bf16.mxu0 0
      %806 = vmatmul.mubr.bf16.gmra.mrb[0].mxu0 %v727
      %v807 = vpop.f32.mrb[0].mxu0
      %v808 = vadd.f32 %v644, %v807
      %v809 = vpop.f32.mrb[0].mxu0
      %v810 = vpop.f32.mrb[0].mxu0
      %v811 = vadd.f32 %v647, %v810
      %v812 = vpop.f32.mrb[0].mxu0
      %813 = vmatprep.mubr.bf16.mxu0 0
      %814 = vmatmul.mubr.bf16.gmra.mrb[0].mxu0 %v730
      %v815 = vpop.f32.mrb[0].mxu0
      %v816 = vadd.f32 %v652, %v815
      %v817 = vpop.f32.mrb[0].mxu0
      %v818 = vpop.f32.mrb[0].mxu0
      %v819 = vadd.f32 %v655, %v818
      %v820 = vpop.f32.mrb[0].mxu0
      %821 = vmatprep.mubr.bf16.mxu0 0
      %822 = vmatmul.mubr.bf16.gmra.mrb[0].mxu0 %v733
      %v823 = vpop.f32.mrb[0].mxu0
      %v824 = vadd.f32 %v660, %v823
      %v825 = vpop.f32.mrb[0].mxu0
      %v826 = vpop.f32.mrb[0].mxu0
      %v827 = vadd.f32 %v663, %v826
      %v828 = vpop.f32.mrb[0].mxu0
      %829 = vmatprep.mubr.bf16.mxu0 0
      %830 = vmatmul.mubr.bf16.gmra.mrb[0].mxu0 %v736
      %v831 = vpop.f32.mrb[0].mxu0
      %v832 = vadd.f32 %v668, %v831
      %v833 = vpop.f32.mrb[0].mxu0
      %v834 = vpop.f32.mrb[0].mxu0
      %v835 = vadd.f32 %v671, %v834
      %v836 = vpop.f32.mrb[0].mxu0
      %837 = vdwg.mxu0
      %v838 = vld [vmem:[%s275] sm:$0xe]
      %v839 = vld [vmem:[%s275 + $0xc] sm:$0xe]
      %v840 = vld [vmem:[%s275 + $0x18] sm:$0xe]
      %v841 = vld [vmem:[%s275 + $0x24] sm:$0xe]
      %v842 = vld [vmem:[%s275 + $0x30] sm:$0xe]
      %v843 = vld [vmem:[%s275 + $0x3c] sm:$0xe]
      %v844 = vld [vmem:[%s275 + $0x48] sm:$0xe]
      %v845 = vld [vmem:[%s275 + $0x54] sm:$0xe]
      %vm862 = vcmask 1042432
      %vm863 = vcmask 1046532
      %vm864 = vmor %vm862, %vm863
      %v865 = vrot.slane %v838, 5
      %v866 = vrot.slane %v865, 4
      %v867 = vrot.slane %v303, 5
      %v868 = vsel %vm864, %v866, %v867
      %v869 = vrot.slane %v867, 4
      %v870 = vrot.slane %v319, 5
      %v871 = vsel %vm864, %v869, %v870
      %v872 = vrot.slane %v839, 5
      %v873 = vrot.slane %v872, 4
      %v874 = vrot.slane %v305, 5
      %v875 = vsel %vm864, %v873, %v874
      %v876 = vrot.slane %v874, 4
      %v877 = vrot.slane %v320, 5
      %v878 = vsel %vm864, %v876, %v877
      %v879 = vrot.slane %v840, 5
      %v880 = vrot.slane %v879, 4
      %v881 = vrot.slane %v307, 5
      %v882 = vsel %vm864, %v880, %v881
      %v883 = vrot.slane %v881, 4
      %v884 = vrot.slane %v321, 5
      %v885 = vsel %vm864, %v883, %v884
      %v886 = vrot.slane %v841, 5
      %v887 = vrot.slane %v886, 4
      %v888 = vrot.slane %v309, 5
      %v889 = vsel %vm864, %v887, %v888
      %v890 = vrot.slane %v888, 4
      %v891 = vrot.slane %v322, 5
      %v892 = vsel %vm864, %v890, %v891
      %v893 = vrot.slane %v842, 5
      %v894 = vrot.slane %v893, 4
      %v895 = vrot.slane %v311, 5
      %v896 = vsel %vm864, %v894, %v895
      %v897 = vrot.slane %v895, 4
      %v898 = vrot.slane %v323, 5
      %v899 = vsel %vm864, %v897, %v898
      %v900 = vrot.slane %v843, 5
      %v901 = vrot.slane %v900, 4
      %v902 = vrot.slane %v313, 5
      %v903 = vsel %vm864, %v901, %v902
      %v904 = vrot.slane %v902, 4
      %v905 = vrot.slane %v324, 5
      %v906 = vsel %vm864, %v904, %v905
      %v907 = vrot.slane %v844, 5
      %v908 = vrot.slane %v907, 4
      %v909 = vrot.slane %v315, 5
      %v910 = vsel %vm864, %v908, %v909
      %v911 = vrot.slane %v909, 4
      %v912 = vrot.slane %v325, 5
      %v913 = vsel %vm864, %v911, %v912
      %v914 = vrot.slane %v845, 5
      %v915 = vrot.slane %v914, 4
      %v916 = vrot.slane %v317, 5
      %v917 = vsel %vm864, %v915, %v916
      %v918 = vrot.slane %v916, 4
      %v919 = vrot.slane %v326, 5
      %v920 = vsel %vm864, %v918, %v919
      %s921 = scalar_lea.vmem %s1, 4
      %v922 = vld [vmem:[%s921] sm:$0x3]
      %v923 = vunpack.c.l.b16 %v868
      %v924 = vunpack.c.l.b16 %v871
      %v925 = vunpack.c.l.b16 %v875
      %v926 = vunpack.c.l.b16 %v878
      %v927 = vunpack.c.l.b16 %v882
      %v928 = vunpack.c.l.b16 %v885
      %v929 = vunpack.c.l.b16 %v889
      %v930 = vunpack.c.l.b16 %v892
      %v931 = vunpack.c.l.b16 %v896
      %v932 = vunpack.c.l.b16 %v899
      %v933 = vunpack.c.l.b16 %v903
      %v934 = vunpack.c.l.b16 %v906
      %v935 = vunpack.c.l.b16 %v910
      %v936 = vunpack.c.l.b16 %v913
      %v937 = vunpack.c.l.b16 %v917
      %v938 = vunpack.c.l.b16 %v920
      %v939 = vpack.c.b16 %v924, %v923
      %v940 = vpack.c.b16 %v926, %v925
      %v941 = vpack.c.b16 %v928, %v927
      %v942 = vpack.c.b16 %v930, %v929
      %v943 = vpack.c.b16 %v932, %v931
      %v944 = vpack.c.b16 %v934, %v933
      %v945 = vpack.c.b16 %v936, %v935
      %v946 = vpack.c.b16 %v938, %v937
      %v948 = vsel %vm548, %v939, 0
      %v951 = vsel %vm548, %v940, 0
      %v954 = vsel %vm548, %v941, 0
      %v957 = vsel %vm548, %v942, 0
      %v960 = vsel %vm548, %v943, 0
      %v963 = vsel %vm548, %v944, 0
      %v966 = vsel %vm548, %v945, 0
      %v969 = vsel %vm548, %v946, 0
      %v972 = vsel %vm573, %v922, 0
      %974 = vmatprep.subr.bf16.mxu0 0
      %975 = vmatpush1.bf16.msra.mxu0 %v972
      %976 = vmatprep.subr.bf16.mxu0 0
      %977 = vmatpush1.bf16.msra.mxu0 0
      %978 = vmatprep.subr.bf16.mxu0 0
      %979 = vmatpush1.bf16.msra.mxu0 0
      %980 = vmatprep.subr.bf16.mxu0 0
      %981 = vmatpush1.bf16.msra.mxu0 0
      %982 = vmatprep.subr.bf16.mxu0 0
      %983 = vmatpush1.bf16.msra.mxu0 0
      %984 = vmatprep.subr.bf16.mxu0 0
      %985 = vmatpush1.bf16.msra.mxu0 0
      %986 = vmatprep.subr.bf16.mxu0 0
      %987 = vmatpush1.bf16.msra.mxu0 0
      %988 = vmatprep.subr.bf16.mxu0 0
      %989 = vmatpush1.bf16.msra.mxu0 0
      %990 = vmatprep.subr.bf16.mxu0 0
      %991 = vmatpush1.bf16.msra.mxu0 0
      %992 = vmatprep.subr.bf16.mxu0 0
      %993 = vmatpush1.bf16.msra.mxu0 0
      %994 = vmatprep.subr.bf16.mxu0 0
      %995 = vmatpush1.bf16.msra.mxu0 0
      %996 = vmatprep.subr.bf16.mxu0 0
      %997 = vmatpush1.bf16.msra.mxu0 0
      %998 = vmatprep.subr.bf16.mxu0 0
      %999 = vmatpush1.bf16.msra.mxu0 0
      %1000 = vmatprep.subr.bf16.mxu0 0
      %1001 = vmatpush1.bf16.msra.mxu0 0
      %1002 = vmatprep.subr.bf16.mxu0 0
      %1003 = vmatpush1.bf16.msra.mxu0 0
      %1004 = vmatprep.subr.bf16.mxu0 0
      %1005 = vmatpush1.bf16.msra.mxu0 0
      %1006 = vmatprep.mubr.bf16.mxu0 0
      %1007 = vmatmul.mubr.bf16.gmra.mrb[0].mxu0 %v948
      %v1008 = vpop.f32.mrb[0].mxu0
      %v1009 = vadd.f32 0.0, %v1008
      %v1010 = vpop.f32.mrb[0].mxu0
      %v1011 = vpop.f32.mrb[0].mxu0
      %v1012 = vadd.f32 0.0, %v1011
      %v1013 = vpop.f32.mrb[0].mxu0
      %1014 = vmatprep.mubr.bf16.mxu0 0
      %1015 = vmatmul.mubr.bf16.gmra.mrb[0].mxu0 %v951
      %v1016 = vpop.f32.mrb[0].mxu0
      %v1017 = vadd.f32 0.0, %v1016
      %v1018 = vpop.f32.mrb[0].mxu0
      %v1019 = vpop.f32.mrb[0].mxu0
      %v1020 = vadd.f32 0.0, %v1019
      %v1021 = vpop.f32.mrb[0].mxu0
      %1022 = vmatprep.mubr.bf16.mxu0 0
      %1023 = vmatmul.mubr.bf16.gmra.mrb[0].mxu0 %v954
      %v1024 = vpop.f32.mrb[0].mxu0
      %v1025 = vadd.f32 0.0, %v1024
      %v1026 = vpop.f32.mrb[0].mxu0
      %v1027 = vpop.f32.mrb[0].mxu0
      %v1028 = vadd.f32 0.0, %v1027
      %v1029 = vpop.f32.mrb[0].mxu0
      %1030 = vmatprep.mubr.bf16.mxu0 0
      %1031 = vmatmul.mubr.bf16.gmra.mrb[0].mxu0 %v957
      %v1032 = vpop.f32.mrb[0].mxu0
      %v1033 = vadd.f32 0.0, %v1032
      %v1034 = vpop.f32.mrb[0].mxu0
      %v1035 = vpop.f32.mrb[0].mxu0
      %v1036 = vadd.f32 0.0, %v1035
      %v1037 = vpop.f32.mrb[0].mxu0
      %1038 = vmatprep.mubr.bf16.mxu0 0
      %1039 = vmatmul.mubr.bf16.gmra.mrb[0].mxu0 %v960
      %v1040 = vpop.f32.mrb[0].mxu0
      %v1041 = vadd.f32 0.0, %v1040
      %v1042 = vpop.f32.mrb[0].mxu0
      %v1043 = vpop.f32.mrb[0].mxu0
      %v1044 = vadd.f32 0.0, %v1043
      %v1045 = vpop.f32.mrb[0].mxu0
      %1046 = vmatprep.mubr.bf16.mxu0 0
      %1047 = vmatmul.mubr.bf16.gmra.mrb[0].mxu0 %v963
      %v1048 = vpop.f32.mrb[0].mxu0
      %v1049 = vadd.f32 0.0, %v1048
      %v1050 = vpop.f32.mrb[0].mxu0
      %v1051 = vpop.f32.mrb[0].mxu0
      %v1052 = vadd.f32 0.0, %v1051
      %v1053 = vpop.f32.mrb[0].mxu0
      %1054 = vmatprep.mubr.bf16.mxu0 0
      %1055 = vmatmul.mubr.bf16.gmra.mrb[0].mxu0 %v966
      %v1056 = vpop.f32.mrb[0].mxu0
      %v1057 = vadd.f32 0.0, %v1056
      %v1058 = vpop.f32.mrb[0].mxu0
      %v1059 = vpop.f32.mrb[0].mxu0
      %v1060 = vadd.f32 0.0, %v1059
      %v1061 = vpop.f32.mrb[0].mxu0
      %1062 = vmatprep.mubr.bf16.mxu0 0
      %1063 = vmatmul.mubr.bf16.gmra.mrb[0].mxu0 %v969
      %v1064 = vpop.f32.mrb[0].mxu0
      %v1065 = vadd.f32 0.0, %v1064
      %v1066 = vpop.f32.mrb[0].mxu0
      %v1067 = vpop.f32.mrb[0].mxu0
      %v1068 = vadd.f32 0.0, %v1067
      %v1069 = vpop.f32.mrb[0].mxu0
      %1070 = vdwg.mxu0
      %v1071 = vadd.f32 %v776, %v1009
      %v1072 = vadd.f32 %v779, %v1012
      %v1073 = vadd.f32 %v784, %v1017
      %v1074 = vadd.f32 %v787, %v1020
      %v1075 = vadd.f32 %v792, %v1025
      %v1076 = vadd.f32 %v795, %v1028
      %v1077 = vadd.f32 %v800, %v1033
      %v1078 = vadd.f32 %v803, %v1036
      %v1079 = vadd.f32 %v808, %v1041
      %v1080 = vadd.f32 %v811, %v1044
      %v1081 = vadd.f32 %v816, %v1049
      %v1082 = vadd.f32 %v819, %v1052
      %v1083 = vadd.f32 %v824, %v1057
      %v1084 = vadd.f32 %v827, %v1060
      %v1085 = vadd.f32 %v832, %v1065
      %v1086 = vadd.f32 %v835, %v1068
      %s1087 = scalar_lea.vmem %s275, 12
      %v1088 = vld [vmem:[%s1087] sm:$0xf]
      %v1089 = vld [vmem:[%s1087 + $0x4] sm:$0xf]
      %v1090 = vld [vmem:[%s1087 + $0xc] sm:$0xf]
      %v1091 = vld [vmem:[%s1087 + $0x10] sm:$0xf]
      %v1092 = vld [vmem:[%s1087 + $0x18] sm:$0xf]
      %v1093 = vld [vmem:[%s1087 + $0x1c] sm:$0xf]
      %v1094 = vld [vmem:[%s1087 + $0x24] sm:$0xf]
      %v1095 = vld [vmem:[%s1087 + $0x28] sm:$0xf]
      %v1096 = vld [vmem:[%s1087 + $0x30] sm:$0xf]
      %v1097 = vld [vmem:[%s1087 + $0x34] sm:$0xf]
      %v1098 = vld [vmem:[%s1087 + $0x3c] sm:$0xf]
      %v1099 = vld [vmem:[%s1087 + $0x40] sm:$0xf]
      %v1100 = vld [vmem:[%s1087 + $0x48] sm:$0xf]
      %v1101 = vld [vmem:[%s1087 + $0x4c] sm:$0xf]
      %v1102 = vld [vmem:[%s1087 + $0x54] sm:$0xf]
      %v1103 = vld [vmem:[%s1087 + $0x58] sm:$0xf]
      %s1104 = scalar_lea.vmem %s1, 6
      %v1105 = vld [vmem:[%s1104] sm:$0x3]
      %v1122 = vunpack.c.l.b16 %v1088
      %v1123 = vunpack.c.l.b16 %v1089
      %v1124 = vunpack.c.l.b16 %v1090
      %v1125 = vunpack.c.l.b16 %v1091
      %v1126 = vunpack.c.l.b16 %v1092
      %v1127 = vunpack.c.l.b16 %v1093
      %v1128 = vunpack.c.l.b16 %v1094
      %v1129 = vunpack.c.l.b16 %v1095
      %v1130 = vunpack.c.l.b16 %v1096
      %v1131 = vunpack.c.l.b16 %v1097
      %v1132 = vunpack.c.l.b16 %v1098
      %v1133 = vunpack.c.l.b16 %v1099
      %v1134 = vunpack.c.l.b16 %v1100
      %v1135 = vunpack.c.l.b16 %v1101
      %v1136 = vunpack.c.l.b16 %v1102
      %v1137 = vunpack.c.l.b16 %v1103
      %v1138 = vpack.c.b16 %v1123, %v1122
      %v1139 = vpack.c.b16 %v1125, %v1124
      %v1140 = vpack.c.b16 %v1127, %v1126
      %v1141 = vpack.c.b16 %v1129, %v1128
      %v1142 = vpack.c.b16 %v1131, %v1130
      %v1143 = vpack.c.b16 %v1133, %v1132
      %v1144 = vpack.c.b16 %v1135, %v1134
      %v1145 = vpack.c.b16 %v1137, %v1136
      %v1147 = vsel %vm548, %v1138, 0
      %v1150 = vsel %vm548, %v1139, 0
      %v1153 = vsel %vm548, %v1140, 0
      %v1156 = vsel %vm548, %v1141, 0
      %v1159 = vsel %vm548, %v1142, 0
      %v1162 = vsel %vm548, %v1143, 0
      %v1165 = vsel %vm548, %v1144, 0
      %v1168 = vsel %vm548, %v1145, 0
      %v1171 = vsel %vm573, %v1105, 0
      %1173 = vmatprep.subr.bf16.mxu0 0
      %1174 = vmatpush1.bf16.msra.mxu0 %v1171
      %1175 = vmatprep.subr.bf16.mxu0 0
      %1176 = vmatpush1.bf16.msra.mxu0 0
      %1177 = vmatprep.subr.bf16.mxu0 0
      %1178 = vmatpush1.bf16.msra.mxu0 0
      %1179 = vmatprep.subr.bf16.mxu0 0
      %1180 = vmatpush1.bf16.msra.mxu0 0
      %1181 = vmatprep.subr.bf16.mxu0 0
      %1182 = vmatpush1.bf16.msra.mxu0 0
      %1183 = vmatprep.subr.bf16.mxu0 0
      %1184 = vmatpush1.bf16.msra.mxu0 0
      %1185 = vmatprep.subr.bf16.mxu0 0
      %1186 = vmatpush1.bf16.msra.mxu0 0
      %1187 = vmatprep.subr.bf16.mxu0 0
      %1188 = vmatpush1.bf16.msra.mxu0 0
      %1189 = vmatprep.subr.bf16.mxu0 0
      %1190 = vmatpush1.bf16.msra.mxu0 0
      %1191 = vmatprep.subr.bf16.mxu0 0
      %1192 = vmatpush1.bf16.msra.mxu0 0
      %1193 = vmatprep.subr.bf16.mxu0 0
      %1194 = vmatpush1.bf16.msra.mxu0 0
      %1195 = vmatprep.subr.bf16.mxu0 0
      %1196 = vmatpush1.bf16.msra.mxu0 0
      %1197 = vmatprep.subr.bf16.mxu0 0
      %1198 = vmatpush1.bf16.msra.mxu0 0
      %1199 = vmatprep.subr.bf16.mxu0 0
      %1200 = vmatpush1.bf16.msra.mxu0 0
      %1201 = vmatprep.subr.bf16.mxu0 0
      %1202 = vmatpush1.bf16.msra.mxu0 0
      %1203 = vmatprep.subr.bf16.mxu0 0
      %1204 = vmatpush1.bf16.msra.mxu0 0
      %1205 = vmatprep.mubr.bf16.mxu0 0
      %1206 = vmatmul.mubr.bf16.gmra.mrb[0].mxu0 %v1147
      %v1207 = vpop.f32.mrb[0].mxu0
      %v1208 = vadd.f32 0.0, %v1207
      %v1209 = vpop.f32.mrb[0].mxu0
      %v1210 = vpop.f32.mrb[0].mxu0
      %v1211 = vadd.f32 0.0, %v1210
      %v1212 = vpop.f32.mrb[0].mxu0
      %1213 = vmatprep.mubr.bf16.mxu0 0
      %1214 = vmatmul.mubr.bf16.gmra.mrb[0].mxu0 %v1150
      %v1215 = vpop.f32.mrb[0].mxu0
      %v1216 = vadd.f32 0.0, %v1215
      %v1217 = vpop.f32.mrb[0].mxu0
      %v1218 = vpop.f32.mrb[0].mxu0
      %v1219 = vadd.f32 0.0, %v1218
      %v1220 = vpop.f32.mrb[0].mxu0
      %1221 = vmatprep.mubr.bf16.mxu0 0
      %1222 = vmatmul.mubr.bf16.gmra.mrb[0].mxu0 %v1153
      %v1223 = vpop.f32.mrb[0].mxu0
      %v1224 = vadd.f32 0.0, %v1223
      %v1225 = vpop.f32.mrb[0].mxu0
      %v1226 = vpop.f32.mrb[0].mxu0
      %v1227 = vadd.f32 0.0, %v1226
      %v1228 = vpop.f32.mrb[0].mxu0
      %1229 = vmatprep.mubr.bf16.mxu0 0
      %1230 = vmatmul.mubr.bf16.gmra.mrb[0].mxu0 %v1156
      %v1231 = vpop.f32.mrb[0].mxu0
      %v1232 = vadd.f32 0.0, %v1231
      %v1233 = vpop.f32.mrb[0].mxu0
      %v1234 = vpop.f32.mrb[0].mxu0
      %v1235 = vadd.f32 0.0, %v1234
      %v1236 = vpop.f32.mrb[0].mxu0
      %1237 = vmatprep.mubr.bf16.mxu0 0
      %1238 = vmatmul.mubr.bf16.gmra.mrb[0].mxu0 %v1159
      %v1239 = vpop.f32.mrb[0].mxu0
      %v1240 = vadd.f32 0.0, %v1239
      %v1241 = vpop.f32.mrb[0].mxu0
      %v1242 = vpop.f32.mrb[0].mxu0
      %v1243 = vadd.f32 0.0, %v1242
      %v1244 = vpop.f32.mrb[0].mxu0
      %1245 = vmatprep.mubr.bf16.mxu0 0
      %1246 = vmatmul.mubr.bf16.gmra.mrb[0].mxu0 %v1162
      %v1247 = vpop.f32.mrb[0].mxu0
      %v1248 = vadd.f32 0.0, %v1247
      %v1249 = vpop.f32.mrb[0].mxu0
      %v1250 = vpop.f32.mrb[0].mxu0
      %v1251 = vadd.f32 0.0, %v1250
      %v1252 = vpop.f32.mrb[0].mxu0
      %1253 = vmatprep.mubr.bf16.mxu0 0
      %1254 = vmatmul.mubr.bf16.gmra.mrb[0].mxu0 %v1165
      %v1255 = vpop.f32.mrb[0].mxu0
      %v1256 = vadd.f32 0.0, %v1255
      %v1257 = vpop.f32.mrb[0].mxu0
      %v1258 = vpop.f32.mrb[0].mxu0
      %v1259 = vadd.f32 0.0, %v1258
      %v1260 = vpop.f32.mrb[0].mxu0
      %1261 = vmatprep.mubr.bf16.mxu0 0
      %1262 = vmatmul.mubr.bf16.gmra.mrb[0].mxu0 %v1168
      %v1263 = vpop.f32.mrb[0].mxu0
      %v1264 = vadd.f32 0.0, %v1263
      %v1265 = vpop.f32.mrb[0].mxu0
      %v1266 = vpop.f32.mrb[0].mxu0
      %v1267 = vadd.f32 0.0, %v1266
      %v1268 = vpop.f32.mrb[0].mxu0
      %1269 = vdwg.mxu0
      %v1270 = vadd.f32 %v1071, %v1208
      %v1271 = vadd.f32 %v1072, %v1211
      %v1272 = vadd.f32 %v1073, %v1216
      %v1273 = vadd.f32 %v1074, %v1219
      %v1274 = vadd.f32 %v1075, %v1224
      %v1275 = vadd.f32 %v1076, %v1227
      %v1276 = vadd.f32 %v1077, %v1232
      %v1277 = vadd.f32 %v1078, %v1235
      %v1278 = vadd.f32 %v1079, %v1240
      %v1279 = vadd.f32 %v1080, %v1243
      %v1280 = vadd.f32 %v1081, %v1248
      %v1281 = vadd.f32 %v1082, %v1251
      %v1282 = vadd.f32 %v1083, %v1256
      %v1283 = vadd.f32 %v1084, %v1259
      %v1284 = vadd.f32 %v1085, %v1264
      %v1285 = vadd.f32 %v1086, %v1267
      %v1286 = vld [vmem:[%s1087] sm:$0xf]
      %v1287 = vld [vmem:[%s1087 + $0x4] sm:$0xf]
      %v1288 = vld [vmem:[%s1087 + $0x8] sm:$0x1]
      %v1289 = vld [vmem:[%s1087 + $0xc] sm:$0xf]
      %v1290 = vld [vmem:[%s1087 + $0x10] sm:$0xf]
      %v1291 = vld [vmem:[%s1087 + $0x14] sm:$0x1]
      %v1292 = vld [vmem:[%s1087 + $0x18] sm:$0xf]
      %v1293 = vld [vmem:[%s1087 + $0x1c] sm:$0xf]
      %v1294 = vld [vmem:[%s1087 + $0x20] sm:$0x1]
      %v1295 = vld [vmem:[%s1087 + $0x24] sm:$0xf]
      %v1296 = vld [vmem:[%s1087 + $0x28] sm:$0xf]
      %v1297 = vld [vmem:[%s1087 + $0x2c] sm:$0x1]
      %v1298 = vld [vmem:[%s1087 + $0x30] sm:$0xf]
      %v1299 = vld [vmem:[%s1087 + $0x34] sm:$0xf]
      %v1300 = vld [vmem:[%s1087 + $0x38] sm:$0x1]
      %v1301 = vld [vmem:[%s1087 + $0x3c] sm:$0xf]
      %v1302 = vld [vmem:[%s1087 + $0x40] sm:$0xf]
      %v1303 = vld [vmem:[%s1087 + $0x44] sm:$0x1]
      %v1304 = vld [vmem:[%s1087 + $0x48] sm:$0xf]
      %v1305 = vld [vmem:[%s1087 + $0x4c] sm:$0xf]
      %v1306 = vld [vmem:[%s1087 + $0x50] sm:$0x1]
      %v1307 = vld [vmem:[%s1087 + $0x54] sm:$0xf]
      %v1308 = vld [vmem:[%s1087 + $0x58] sm:$0xf]
      %v1309 = vld [vmem:[%s1087 + $0x5c] sm:$0x1]
      %v1311 = vshrl.u32 %v1286, 16
      %v1313 = vrot.slane %v1311, 4
      %v1314 = vshll.u32 %v1286, 16
      %v1316 = vrot.slane %v1314, 5
      %v1317 = vor.u32 %v1313, %v1316
      %v1318 = vrot.slane %v1317, 4
      %v1320 = vshll.u32 %v1287, 16
      %v1322 = vrot.slane %v1320, 5
      %v1323 = vsel %vm329, %v1318, %v1322
      %v1324 = vshrl.u32 %v1287, 16
      %v1326 = vrot.slane %v1324, 4
      %v1327 = vor.u32 %v1326, %v1322
      %v1328 = vrot.slane %v1327, 4
      %v1330 = vshll.u32 %v1288, 16
      %v1332 = vrot.slane %v1330, 5
      %v1333 = vsel %vm329, %v1328, %v1332
      %v1335 = vshrl.u32 %v1289, 16
      %v1337 = vrot.slane %v1335, 4
      %v1338 = vshll.u32 %v1289, 16
      %v1340 = vrot.slane %v1338, 5
      %v1341 = vor.u32 %v1337, %v1340
      %v1342 = vrot.slane %v1341, 4
      %v1344 = vshll.u32 %v1290, 16
      %v1346 = vrot.slane %v1344, 5
      %v1347 = vsel %vm329, %v1342, %v1346
      %v1348 = vshrl.u32 %v1290, 16
      %v1350 = vrot.slane %v1348, 4
      %v1351 = vor.u32 %v1350, %v1346
      %v1352 = vrot.slane %v1351, 4
      %v1354 = vshll.u32 %v1291, 16
      %v1356 = vrot.slane %v1354, 5
      %v1357 = vsel %vm329, %v1352, %v1356
      %v1359 = vshrl.u32 %v1292, 16
      %v1361 = vrot.slane %v1359, 4
      %v1362 = vshll.u32 %v1292, 16
      %v1364 = vrot.slane %v1362, 5
      %v1365 = vor.u32 %v1361, %v1364
      %v1366 = vrot.slane %v1365, 4
      %v1368 = vshll.u32 %v1293, 16
      %v1370 = vrot.slane %v1368, 5
      %v1371 = vsel %vm329, %v1366, %v1370
      %v1372 = vshrl.u32 %v1293, 16
      %v1374 = vrot.slane %v1372, 4
      %v1375 = vor.u32 %v1374, %v1370
      %v1376 = vrot.slane %v1375, 4
      %v1378 = vshll.u32 %v1294, 16
      %v1380 = vrot.slane %v1378, 5
      %v1381 = vsel %vm329, %v1376, %v1380
      %v1383 = vshrl.u32 %v1295, 16
      %v1385 = vrot.slane %v1383, 4
      %v1386 = vshll.u32 %v1295, 16
      %v1388 = vrot.slane %v1386, 5
      %v1389 = vor.u32 %v1385, %v1388
      %v1390 = vrot.slane %v1389, 4
      %v1392 = vshll.u32 %v1296, 16
      %v1394 = vrot.slane %v1392, 5
      %v1395 = vsel %vm329, %v1390, %v1394
      %v1396 = vshrl.u32 %v1296, 16
      %v1398 = vrot.slane %v1396, 4
      %v1399 = vor.u32 %v1398, %v1394
      %v1400 = vrot.slane %v1399, 4
      %v1402 = vshll.u32 %v1297, 16
      %v1404 = vrot.slane %v1402, 5
      %v1405 = vsel %vm329, %v1400, %v1404
      %v1407 = vshrl.u32 %v1298, 16
      %v1409 = vrot.slane %v1407, 4
      %v1410 = vshll.u32 %v1298, 16
      %v1412 = vrot.slane %v1410, 5
      %v1413 = vor.u32 %v1409, %v1412
      %v1414 = vrot.slane %v1413, 4
      %v1416 = vshll.u32 %v1299, 16
      %v1418 = vrot.slane %v1416, 5
      %v1419 = vsel %vm329, %v1414, %v1418
      %v1420 = vshrl.u32 %v1299, 16
      %v1422 = vrot.slane %v1420, 4
      %v1423 = vor.u32 %v1422, %v1418
      %v1424 = vrot.slane %v1423, 4
      %v1426 = vshll.u32 %v1300, 16
      %v1428 = vrot.slane %v1426, 5
      %v1429 = vsel %vm329, %v1424, %v1428
      %v1431 = vshrl.u32 %v1301, 16
      %v1433 = vrot.slane %v1431, 4
      %v1434 = vshll.u32 %v1301, 16
      %v1436 = vrot.slane %v1434, 5
      %v1437 = vor.u32 %v1433, %v1436
      %v1438 = vrot.slane %v1437, 4
      %v1440 = vshll.u32 %v1302, 16
      %v1442 = vrot.slane %v1440, 5
      %v1443 = vsel %vm329, %v1438, %v1442
      %v1444 = vshrl.u32 %v1302, 16
      %v1446 = vrot.slane %v1444, 4
      %v1447 = vor.u32 %v1446, %v1442
      %v1448 = vrot.slane %v1447, 4
      %v1450 = vshll.u32 %v1303, 16
      %v1452 = vrot.slane %v1450, 5
      %v1453 = vsel %vm329, %v1448, %v1452
      %v1455 = vshrl.u32 %v1304, 16
      %v1457 = vrot.slane %v1455, 4
      %v1458 = vshll.u32 %v1304, 16
      %v1460 = vrot.slane %v1458, 5
      %v1461 = vor.u32 %v1457, %v1460
      %v1462 = vrot.slane %v1461, 4
      %v1464 = vshll.u32 %v1305, 16
      %v1466 = vrot.slane %v1464, 5
      %v1467 = vsel %vm329, %v1462, %v1466
      %v1468 = vshrl.u32 %v1305, 16
      %v1470 = vrot.slane %v1468, 4
      %v1471 = vor.u32 %v1470, %v1466
      %v1472 = vrot.slane %v1471, 4
      %v1474 = vshll.u32 %v1306, 16
      %v1476 = vrot.slane %v1474, 5
      %v1477 = vsel %vm329, %v1472, %v1476
      %v1479 = vshrl.u32 %v1307, 16
      %v1481 = vrot.slane %v1479, 4
      %v1482 = vshll.u32 %v1307, 16
      %v1484 = vrot.slane %v1482, 5
      %v1485 = vor.u32 %v1481, %v1484
      %v1486 = vrot.slane %v1485, 4
      %v1488 = vshll.u32 %v1308, 16
      %v1490 = vrot.slane %v1488, 5
      %v1491 = vsel %vm329, %v1486, %v1490
      %v1492 = vshrl.u32 %v1308, 16
      %v1494 = vrot.slane %v1492, 4
      %v1495 = vor.u32 %v1494, %v1490
      %v1496 = vrot.slane %v1495, 4
      %v1498 = vshll.u32 %v1309, 16
      %v1500 = vrot.slane %v1498, 5
      %v1501 = vsel %vm329, %v1496, %v1500
      %s1502 = scalar_lea.vmem %s1, 8
      %v1503 = vld [vmem:[%s1502] sm:$0x3]
      %v1504 = vunpack.c.l.b16 %v1323
      %v1505 = vunpack.c.l.b16 %v1333
      %v1506 = vunpack.c.l.b16 %v1347
      %v1507 = vunpack.c.l.b16 %v1357
      %v1508 = vunpack.c.l.b16 %v1371
      %v1509 = vunpack.c.l.b16 %v1381
      %v1510 = vunpack.c.l.b16 %v1395
      %v1511 = vunpack.c.l.b16 %v1405
      %v1512 = vunpack.c.l.b16 %v1419
      %v1513 = vunpack.c.l.b16 %v1429
      %v1514 = vunpack.c.l.b16 %v1443
      %v1515 = vunpack.c.l.b16 %v1453
      %v1516 = vunpack.c.l.b16 %v1467
      %v1517 = vunpack.c.l.b16 %v1477
      %v1518 = vunpack.c.l.b16 %v1491
      %v1519 = vunpack.c.l.b16 %v1501
      %v1520 = vpack.c.b16 %v1505, %v1504
      %v1521 = vpack.c.b16 %v1507, %v1506
      %v1522 = vpack.c.b16 %v1509, %v1508
      %v1523 = vpack.c.b16 %v1511, %v1510
      %v1524 = vpack.c.b16 %v1513, %v1512
      %v1525 = vpack.c.b16 %v1515, %v1514
      %v1526 = vpack.c.b16 %v1517, %v1516
      %v1527 = vpack.c.b16 %v1519, %v1518
      %v1529 = vsel %vm548, %v1520, 0
      %v1532 = vsel %vm548, %v1521, 0
      %v1535 = vsel %vm548, %v1522, 0
      %v1538 = vsel %vm548, %v1523, 0
      %v1541 = vsel %vm548, %v1524, 0
      %v1544 = vsel %vm548, %v1525, 0
      %v1547 = vsel %vm548, %v1526, 0
      %v1550 = vsel %vm548, %v1527, 0
      %v1553 = vsel %vm573, %v1503, 0
      %1555 = vmatprep.subr.bf16.mxu0 0
      %1556 = vmatpush1.bf16.msra.mxu0 %v1553
      %1557 = vmatprep.subr.bf16.mxu0 0
      %1558 = vmatpush1.bf16.msra.mxu0 0
      %1559 = vmatprep.subr.bf16.mxu0 0
      %1560 = vmatpush1.bf16.msra.mxu0 0
      %1561 = vmatprep.subr.bf16.mxu0 0
      %1562 = vmatpush1.bf16.msra.mxu0 0
      %1563 = vmatprep.subr.bf16.mxu0 0
      %1564 = vmatpush1.bf16.msra.mxu0 0
      %1565 = vmatprep.subr.bf16.mxu0 0
      %1566 = vmatpush1.bf16.msra.mxu0 0
      %1567 = vmatprep.subr.bf16.mxu0 0
      %1568 = vmatpush1.bf16.msra.mxu0 0
      %1569 = vmatprep.subr.bf16.mxu0 0
      %1570 = vmatpush1.bf16.msra.mxu0 0
      %1571 = vmatprep.subr.bf16.mxu0 0
      %1572 = vmatpush1.bf16.msra.mxu0 0
      %1573 = vmatprep.subr.bf16.mxu0 0
      %1574 = vmatpush1.bf16.msra.mxu0 0
      %1575 = vmatprep.subr.bf16.mxu0 0
      %1576 = vmatpush1.bf16.msra.mxu0 0
      %1577 = vmatprep.subr.bf16.mxu0 0
      %1578 = vmatpush1.bf16.msra.mxu0 0
      %1579 = vmatprep.subr.bf16.mxu0 0
      %1580 = vmatpush1.bf16.msra.mxu0 0
      %1581 = vmatprep.subr.bf16.mxu0 0
      %1582 = vmatpush1.bf16.msra.mxu0 0
      %1583 = vmatprep.subr.bf16.mxu0 0
      %1584 = vmatpush1.bf16.msra.mxu0 0
      %1585 = vmatprep.subr.bf16.mxu0 0
      %1586 = vmatpush1.bf16.msra.mxu0 0
      %1587 = vmatprep.mubr.bf16.mxu0 0
      %1588 = vmatmul.mubr.bf16.gmra.mrb[0].mxu0 %v1529
      %v1589 = vpop.f32.mrb[0].mxu0
      %v1590 = vadd.f32 0.0, %v1589
      %v1591 = vpop.f32.mrb[0].mxu0
      %v1592 = vpop.f32.mrb[0].mxu0
      %v1593 = vadd.f32 0.0, %v1592
      %v1594 = vpop.f32.mrb[0].mxu0
      %1595 = vmatprep.mubr.bf16.mxu0 0
      %1596 = vmatmul.mubr.bf16.gmra.mrb[0].mxu0 %v1532
      %v1597 = vpop.f32.mrb[0].mxu0
      %v1598 = vadd.f32 0.0, %v1597
      %v1599 = vpop.f32.mrb[0].mxu0
      %v1600 = vpop.f32.mrb[0].mxu0
      %v1601 = vadd.f32 0.0, %v1600
      %v1602 = vpop.f32.mrb[0].mxu0
      %1603 = vmatprep.mubr.bf16.mxu0 0
      %1604 = vmatmul.mubr.bf16.gmra.mrb[0].mxu0 %v1535
      %v1605 = vpop.f32.mrb[0].mxu0
      %v1606 = vadd.f32 0.0, %v1605
      %v1607 = vpop.f32.mrb[0].mxu0
      %v1608 = vpop.f32.mrb[0].mxu0
      %v1609 = vadd.f32 0.0, %v1608
      %v1610 = vpop.f32.mrb[0].mxu0
      %1611 = vmatprep.mubr.bf16.mxu0 0
      %1612 = vmatmul.mubr.bf16.gmra.mrb[0].mxu0 %v1538
      %v1613 = vpop.f32.mrb[0].mxu0
      %v1614 = vadd.f32 0.0, %v1613
      %v1615 = vpop.f32.mrb[0].mxu0
      %v1616 = vpop.f32.mrb[0].mxu0
      %v1617 = vadd.f32 0.0, %v1616
      %v1618 = vpop.f32.mrb[0].mxu0
      %1619 = vmatprep.mubr.bf16.mxu0 0
      %1620 = vmatmul.mubr.bf16.gmra.mrb[0].mxu0 %v1541
      %v1621 = vpop.f32.mrb[0].mxu0
      %v1622 = vadd.f32 0.0, %v1621
      %v1623 = vpop.f32.mrb[0].mxu0
      %v1624 = vpop.f32.mrb[0].mxu0
      %v1625 = vadd.f32 0.0, %v1624
      %v1626 = vpop.f32.mrb[0].mxu0
      %1627 = vmatprep.mubr.bf16.mxu0 0
      %1628 = vmatmul.mubr.bf16.gmra.mrb[0].mxu0 %v1544
      %v1629 = vpop.f32.mrb[0].mxu0
      %v1630 = vadd.f32 0.0, %v1629
      %v1631 = vpop.f32.mrb[0].mxu0
      %v1632 = vpop.f32.mrb[0].mxu0
      %v1633 = vadd.f32 0.0, %v1632
      %v1634 = vpop.f32.mrb[0].mxu0
      %1635 = vmatprep.mubr.bf16.mxu0 0
      %1636 = vmatmul.mubr.bf16.gmra.mrb[0].mxu0 %v1547
      %v1637 = vpop.f32.mrb[0].mxu0
      %v1638 = vadd.f32 0.0, %v1637
      %v1639 = vpop.f32.mrb[0].mxu0
      %v1640 = vpop.f32.mrb[0].mxu0
      %v1641 = vadd.f32 0.0, %v1640
      %v1642 = vpop.f32.mrb[0].mxu0
      %1643 = vmatprep.mubr.bf16.mxu0 0
      %1644 = vmatmul.mubr.bf16.gmra.mrb[0].mxu0 %v1550
      %v1645 = vpop.f32.mrb[0].mxu0
      %v1646 = vadd.f32 0.0, %v1645
      %v1647 = vpop.f32.mrb[0].mxu0
      %v1648 = vpop.f32.mrb[0].mxu0
      %v1649 = vadd.f32 0.0, %v1648
      %v1650 = vpop.f32.mrb[0].mxu0
      %1651 = vdwg.mxu0
      %v1652 = vadd.f32 %v1270, %v1590
      %v1653 = vadd.f32 %v1271, %v1593
      %v1654 = vadd.f32 %v1272, %v1598
      %v1655 = vadd.f32 %v1273, %v1601
      %v1656 = vadd.f32 %v1274, %v1606
      %v1657 = vadd.f32 %v1275, %v1609
      %v1658 = vadd.f32 %v1276, %v1614
      %v1659 = vadd.f32 %v1277, %v1617
      %v1660 = vadd.f32 %v1278, %v1622
      %v1661 = vadd.f32 %v1279, %v1625
      %v1662 = vadd.f32 %v1280, %v1630
      %v1663 = vadd.f32 %v1281, %v1633
      %v1664 = vadd.f32 %v1282, %v1638
      %v1665 = vadd.f32 %v1283, %v1641
      %v1666 = vadd.f32 %v1284, %v1646
      %v1667 = vadd.f32 %v1285, %v1649
      %v1668 = vld [vmem:[%s1087] sm:$0xe]
      %v1669 = vld [vmem:[%s1087 + $0xc] sm:$0xe]
      %v1670 = vld [vmem:[%s1087 + $0x18] sm:$0xe]
      %v1671 = vld [vmem:[%s1087 + $0x24] sm:$0xe]
      %v1672 = vld [vmem:[%s1087 + $0x30] sm:$0xe]
      %v1673 = vld [vmem:[%s1087 + $0x3c] sm:$0xe]
      %v1674 = vld [vmem:[%s1087 + $0x48] sm:$0xe]
      %v1675 = vld [vmem:[%s1087 + $0x54] sm:$0xe]
      %v1700 = vrot.slane %v1668, 5
      %v1701 = vrot.slane %v1700, 4
      %v1702 = vrot.slane %v1287, 5
      %v1703 = vsel %vm864, %v1701, %v1702
      %v1704 = vrot.slane %v1702, 4
      %v1705 = vrot.slane %v1288, 5
      %v1706 = vsel %vm864, %v1704, %v1705
      %v1707 = vrot.slane %v1669, 5
      %v1708 = vrot.slane %v1707, 4
      %v1709 = vrot.slane %v1290, 5
      %v1710 = vsel %vm864, %v1708, %v1709
      %v1711 = vrot.slane %v1709, 4
      %v1712 = vrot.slane %v1291, 5
      %v1713 = vsel %vm864, %v1711, %v1712
      %v1714 = vrot.slane %v1670, 5
      %v1715 = vrot.slane %v1714, 4
      %v1716 = vrot.slane %v1293, 5
      %v1717 = vsel %vm864, %v1715, %v1716
      %v1718 = vrot.slane %v1716, 4
      %v1719 = vrot.slane %v1294, 5
      %v1720 = vsel %vm864, %v1718, %v1719
      %v1721 = vrot.slane %v1671, 5
      %v1722 = vrot.slane %v1721, 4
      %v1723 = vrot.slane %v1296, 5
      %v1724 = vsel %vm864, %v1722, %v1723
      %v1725 = vrot.slane %v1723, 4
      %v1726 = vrot.slane %v1297, 5
      %v1727 = vsel %vm864, %v1725, %v1726
      %v1728 = vrot.slane %v1672, 5
      %v1729 = vrot.slane %v1728, 4
      %v1730 = vrot.slane %v1299, 5
      %v1731 = vsel %vm864, %v1729, %v1730
      %v1732 = vrot.slane %v1730, 4
      %v1733 = vrot.slane %v1300, 5
      %v1734 = vsel %vm864, %v1732, %v1733
      %v1735 = vrot.slane %v1673, 5
      %v1736 = vrot.slane %v1735, 4
      %v1737 = vrot.slane %v1302, 5
      %v1738 = vsel %vm864, %v1736, %v1737
      %v1739 = vrot.slane %v1737, 4
      %v1740 = vrot.slane %v1303, 5
      %v1741 = vsel %vm864, %v1739, %v1740
      %v1742 = vrot.slane %v1674, 5
      %v1743 = vrot.slane %v1742, 4
      %v1744 = vrot.slane %v1305, 5
      %v1745 = vsel %vm864, %v1743, %v1744
      %v1746 = vrot.slane %v1744, 4
      %v1747 = vrot.slane %v1306, 5
      %v1748 = vsel %vm864, %v1746, %v1747
      %v1749 = vrot.slane %v1675, 5
      %v1750 = vrot.slane %v1749, 4
      %v1751 = vrot.slane %v1308, 5
      %v1752 = vsel %vm864, %v1750, %v1751
      %v1753 = vrot.slane %v1751, 4
      %v1754 = vrot.slane %v1309, 5
      %v1755 = vsel %vm864, %v1753, %v1754
      %s1756 = scalar_lea.vmem %s1, 10
      %v1757 = vld [vmem:[%s1756] sm:$0x3]
      %v1758 = vunpack.c.l.b16 %v1703
      %v1759 = vunpack.c.l.b16 %v1706
      %v1760 = vunpack.c.l.b16 %v1710
      %v1761 = vunpack.c.l.b16 %v1713
      %v1762 = vunpack.c.l.b16 %v1717
      %v1763 = vunpack.c.l.b16 %v1720
      %v1764 = vunpack.c.l.b16 %v1724
      %v1765 = vunpack.c.l.b16 %v1727
      %v1766 = vunpack.c.l.b16 %v1731
      %v1767 = vunpack.c.l.b16 %v1734
      %v1768 = vunpack.c.l.b16 %v1738
      %v1769 = vunpack.c.l.b16 %v1741
      %v1770 = vunpack.c.l.b16 %v1745
      %v1771 = vunpack.c.l.b16 %v1748
      %v1772 = vunpack.c.l.b16 %v1752
      %v1773 = vunpack.c.l.b16 %v1755
      %v1774 = vpack.c.b16 %v1759, %v1758
      %v1775 = vpack.c.b16 %v1761, %v1760
      %v1776 = vpack.c.b16 %v1763, %v1762
      %v1777 = vpack.c.b16 %v1765, %v1764
      %v1778 = vpack.c.b16 %v1767, %v1766
      %v1779 = vpack.c.b16 %v1769, %v1768
      %v1780 = vpack.c.b16 %v1771, %v1770
      %v1781 = vpack.c.b16 %v1773, %v1772
      %v1783 = vsel %vm548, %v1774, 0
      %v1786 = vsel %vm548, %v1775, 0
      %v1789 = vsel %vm548, %v1776, 0
      %v1792 = vsel %vm548, %v1777, 0
      %v1795 = vsel %vm548, %v1778, 0
      %v1798 = vsel %vm548, %v1779, 0
      %v1801 = vsel %vm548, %v1780, 0
      %v1804 = vsel %vm548, %v1781, 0
      %v1807 = vsel %vm573, %v1757, 0
      %1809 = vmatprep.subr.bf16.mxu0 0
      %1810 = vmatpush1.bf16.msra.mxu0 %v1807
      %1811 = vmatprep.subr.bf16.mxu0 0
      %1812 = vmatpush1.bf16.msra.mxu0 0
      %1813 = vmatprep.subr.bf16.mxu0 0
      %1814 = vmatpush1.bf16.msra.mxu0 0
      %1815 = vmatprep.subr.bf16.mxu0 0
      %1816 = vmatpush1.bf16.msra.mxu0 0
      %1817 = vmatprep.subr.bf16.mxu0 0
      %1818 = vmatpush1.bf16.msra.mxu0 0
      %1819 = vmatprep.subr.bf16.mxu0 0
      %1820 = vmatpush1.bf16.msra.mxu0 0
      %1821 = vmatprep.subr.bf16.mxu0 0
      %1822 = vmatpush1.bf16.msra.mxu0 0
      %1823 = vmatprep.subr.bf16.mxu0 0
      %1824 = vmatpush1.bf16.msra.mxu0 0
      %1825 = vmatprep.subr.bf16.mxu0 0
      %1826 = vmatpush1.bf16.msra.mxu0 0
      %1827 = vmatprep.subr.bf16.mxu0 0
      %1828 = vmatpush1.bf16.msra.mxu0 0
      %1829 = vmatprep.subr.bf16.mxu0 0
      %1830 = vmatpush1.bf16.msra.mxu0 0
      %1831 = vmatprep.subr.bf16.mxu0 0
      %1832 = vmatpush1.bf16.msra.mxu0 0
      %1833 = vmatprep.subr.bf16.mxu0 0
      %1834 = vmatpush1.bf16.msra.mxu0 0
      %1835 = vmatprep.subr.bf16.mxu0 0
      %1836 = vmatpush1.bf16.msra.mxu0 0
      %1837 = vmatprep.subr.bf16.mxu0 0
      %1838 = vmatpush1.bf16.msra.mxu0 0
      %1839 = vmatprep.subr.bf16.mxu0 0
      %1840 = vmatpush1.bf16.msra.mxu0 0
      %1841 = vmatprep.mubr.bf16.mxu0 0
      %1842 = vmatmul.mubr.bf16.gmra.mrb[0].mxu0 %v1783
      %v1843 = vpop.f32.mrb[0].mxu0
      %v1844 = vadd.f32 0.0, %v1843
      %v1845 = vpop.f32.mrb[0].mxu0
      %v1846 = vpop.f32.mrb[0].mxu0
      %v1847 = vadd.f32 0.0, %v1846
      %v1848 = vpop.f32.mrb[0].mxu0
      %1849 = vmatprep.mubr.bf16.mxu0 0
      %1850 = vmatmul.mubr.bf16.gmra.mrb[0].mxu0 %v1786
      %v1851 = vpop.f32.mrb[0].mxu0
      %v1852 = vadd.f32 0.0, %v1851
      %v1853 = vpop.f32.mrb[0].mxu0
      %v1854 = vpop.f32.mrb[0].mxu0
      %v1855 = vadd.f32 0.0, %v1854
      %v1856 = vpop.f32.mrb[0].mxu0
      %1857 = vmatprep.mubr.bf16.mxu0 0
      %1858 = vmatmul.mubr.bf16.gmra.mrb[0].mxu0 %v1789
      %v1859 = vpop.f32.mrb[0].mxu0
      %v1860 = vadd.f32 0.0, %v1859
      %v1861 = vpop.f32.mrb[0].mxu0
      %v1862 = vpop.f32.mrb[0].mxu0
      %v1863 = vadd.f32 0.0, %v1862
      %v1864 = vpop.f32.mrb[0].mxu0
      %1865 = vmatprep.mubr.bf16.mxu0 0
      %1866 = vmatmul.mubr.bf16.gmra.mrb[0].mxu0 %v1792
      %v1867 = vpop.f32.mrb[0].mxu0
      %v1868 = vadd.f32 0.0, %v1867
      %v1869 = vpop.f32.mrb[0].mxu0
      %v1870 = vpop.f32.mrb[0].mxu0
      %v1871 = vadd.f32 0.0, %v1870
      %v1872 = vpop.f32.mrb[0].mxu0
      %1873 = vmatprep.mubr.bf16.mxu0 0
      %1874 = vmatmul.mubr.bf16.gmra.mrb[0].mxu0 %v1795
      %v1875 = vpop.f32.mrb[0].mxu0
      %v1876 = vadd.f32 0.0, %v1875
      %v1877 = vpop.f32.mrb[0].mxu0
      %v1878 = vpop.f32.mrb[0].mxu0
      %v1879 = vadd.f32 0.0, %v1878
      %v1880 = vpop.f32.mrb[0].mxu0
      %1881 = vmatprep.mubr.bf16.mxu0 0
      %1882 = vmatmul.mubr.bf16.gmra.mrb[0].mxu0 %v1798
      %v1883 = vpop.f32.mrb[0].mxu0
      %v1884 = vadd.f32 0.0, %v1883
      %v1885 = vpop.f32.mrb[0].mxu0
      %v1886 = vpop.f32.mrb[0].mxu0
      %v1887 = vadd.f32 0.0, %v1886
      %v1888 = vpop.f32.mrb[0].mxu0
      %1889 = vmatprep.mubr.bf16.mxu0 0
      %1890 = vmatmul.mubr.bf16.gmra.mrb[0].mxu0 %v1801
      %v1891 = vpop.f32.mrb[0].mxu0
      %v1892 = vadd.f32 0.0, %v1891
      %v1893 = vpop.f32.mrb[0].mxu0
      %v1894 = vpop.f32.mrb[0].mxu0
      %v1895 = vadd.f32 0.0, %v1894
      %v1896 = vpop.f32.mrb[0].mxu0
      %1897 = vmatprep.mubr.bf16.mxu0 0
      %1898 = vmatmul.mubr.bf16.gmra.mrb[0].mxu0 %v1804
      %v1899 = vpop.f32.mrb[0].mxu0
      %v1900 = vadd.f32 0.0, %v1899
      %v1901 = vpop.f32.mrb[0].mxu0
      %v1902 = vpop.f32.mrb[0].mxu0
      %v1903 = vadd.f32 0.0, %v1902
      %v1904 = vpop.f32.mrb[0].mxu0
      %1905 = vdwg.mxu0
      %v1906 = vadd.f32 %v1652, %v1844
      %v1907 = vadd.f32 %v1653, %v1847
      %v1908 = vadd.f32 %v1654, %v1852
      %v1909 = vadd.f32 %v1655, %v1855
      %v1910 = vadd.f32 %v1656, %v1860
      %v1911 = vadd.f32 %v1657, %v1863
      %v1912 = vadd.f32 %v1658, %v1868
      %v1913 = vadd.f32 %v1659, %v1871
      %v1914 = vadd.f32 %v1660, %v1876
      %v1915 = vadd.f32 %v1661, %v1879
      %v1916 = vadd.f32 %v1662, %v1884
      %v1917 = vadd.f32 %v1663, %v1887
      %v1918 = vadd.f32 %v1664, %v1892
      %v1919 = vadd.f32 %v1665, %v1895
      %v1920 = vadd.f32 %v1666, %v1900
      %v1921 = vadd.f32 %v1667, %v1903
      %s1922 = scalar_lea.vmem %s275, 24
      %v1923 = vld [vmem:[%s1922] sm:$0xf]
      %v1924 = vld [vmem:[%s1922 + $0x4] sm:$0xf]
      %v1925 = vld [vmem:[%s1922 + $0xc] sm:$0xf]
      %v1926 = vld [vmem:[%s1922 + $0x10] sm:$0xf]
      %v1927 = vld [vmem:[%s1922 + $0x18] sm:$0xf]
      %v1928 = vld [vmem:[%s1922 + $0x1c] sm:$0xf]
      %v1929 = vld [vmem:[%s1922 + $0x24] sm:$0xf]
      %v1930 = vld [vmem:[%s1922 + $0x28] sm:$0xf]
      %v1931 = vld [vmem:[%s1922 + $0x30] sm:$0xf]
      %v1932 = vld [vmem:[%s1922 + $0x34] sm:$0xf]
      %v1933 = vld [vmem:[%s1922 + $0x3c] sm:$0xf]
      %v1934 = vld [vmem:[%s1922 + $0x40] sm:$0xf]
      %v1935 = vld [vmem:[%s1922 + $0x48] sm:$0xf]
      %v1936 = vld [vmem:[%s1922 + $0x4c] sm:$0xf]
      %v1937 = vld [vmem:[%s1922 + $0x54] sm:$0xf]
      %v1938 = vld [vmem:[%s1922 + $0x58] sm:$0xf]
      %s1939 = scalar_lea.vmem %s1, 12
      %v1940 = vld [vmem:[%s1939] sm:$0x3]
      %v1957 = vunpack.c.l.b16 %v1923
      %v1958 = vunpack.c.l.b16 %v1924
      %v1959 = vunpack.c.l.b16 %v1925
      %v1960 = vunpack.c.l.b16 %v1926
      %v1961 = vunpack.c.l.b16 %v1927
      %v1962 = vunpack.c.l.b16 %v1928
      %v1963 = vunpack.c.l.b16 %v1929
      %v1964 = vunpack.c.l.b16 %v1930
      %v1965 = vunpack.c.l.b16 %v1931
      %v1966 = vunpack.c.l.b16 %v1932
      %v1967 = vunpack.c.l.b16 %v1933
      %v1968 = vunpack.c.l.b16 %v1934
      %v1969 = vunpack.c.l.b16 %v1935
      %v1970 = vunpack.c.l.b16 %v1936
      %v1971 = vunpack.c.l.b16 %v1937
      %v1972 = vunpack.c.l.b16 %v1938
      %v1973 = vpack.c.b16 %v1958, %v1957
      %v1974 = vpack.c.b16 %v1960, %v1959
      %v1975 = vpack.c.b16 %v1962, %v1961
      %v1976 = vpack.c.b16 %v1964, %v1963
      %v1977 = vpack.c.b16 %v1966, %v1965
      %v1978 = vpack.c.b16 %v1968, %v1967
      %v1979 = vpack.c.b16 %v1970, %v1969
      %v1980 = vpack.c.b16 %v1972, %v1971
      %v1982 = vsel %vm548, %v1973, 0
      %v1985 = vsel %vm548, %v1974, 0
      %v1988 = vsel %vm548, %v1975, 0
      %v1991 = vsel %vm548, %v1976, 0
      %v1994 = vsel %vm548, %v1977, 0
      %v1997 = vsel %vm548, %v1978, 0
      %v2000 = vsel %vm548, %v1979, 0
      %v2003 = vsel %vm548, %v1980, 0
      %v2006 = vsel %vm573, %v1940, 0
      %2008 = vmatprep.subr.bf16.mxu0 0
      %2009 = vmatpush1.bf16.msra.mxu0 %v2006
      %2010 = vmatprep.subr.bf16.mxu0 0
      %2011 = vmatpush1.bf16.msra.mxu0 0
      %2012 = vmatprep.subr.bf16.mxu0 0
      %2013 = vmatpush1.bf16.msra.mxu0 0
      %2014 = vmatprep.subr.bf16.mxu0 0
      %2015 = vmatpush1.bf16.msra.mxu0 0
      %2016 = vmatprep.subr.bf16.mxu0 0
      %2017 = vmatpush1.bf16.msra.mxu0 0
      %2018 = vmatprep.subr.bf16.mxu0 0
      %2019 = vmatpush1.bf16.msra.mxu0 0
      %2020 = vmatprep.subr.bf16.mxu0 0
      %2021 = vmatpush1.bf16.msra.mxu0 0
      %2022 = vmatprep.subr.bf16.mxu0 0
      %2023 = vmatpush1.bf16.msra.mxu0 0
      %2024 = vmatprep.subr.bf16.mxu0 0
      %2025 = vmatpush1.bf16.msra.mxu0 0
      %2026 = vmatprep.subr.bf16.mxu0 0
      %2027 = vmatpush1.bf16.msra.mxu0 0
      %2028 = vmatprep.subr.bf16.mxu0 0
      %2029 = vmatpush1.bf16.msra.mxu0 0
      %2030 = vmatprep.subr.bf16.mxu0 0
      %2031 = vmatpush1.bf16.msra.mxu0 0
      %2032 = vmatprep.subr.bf16.mxu0 0
      %2033 = vmatpush1.bf16.msra.mxu0 0
      %2034 = vmatprep.subr.bf16.mxu0 0
      %2035 = vmatpush1.bf16.msra.mxu0 0
      %2036 = vmatprep.subr.bf16.mxu0 0
      %2037 = vmatpush1.bf16.msra.mxu0 0
      %2038 = vmatprep.subr.bf16.mxu0 0
      %2039 = vmatpush1.bf16.msra.mxu0 0
      %2040 = vmatprep.mubr.bf16.mxu0 0
      %2041 = vmatmul.mubr.bf16.gmra.mrb[0].mxu0 %v1982
      %v2042 = vpop.f32.mrb[0].mxu0
      %v2043 = vadd.f32 0.0, %v2042
      %v2044 = vpop.f32.mrb[0].mxu0
      %v2045 = vpop.f32.mrb[0].mxu0
      %v2046 = vadd.f32 0.0, %v2045
      %v2047 = vpop.f32.mrb[0].mxu0
      %2048 = vmatprep.mubr.bf16.mxu0 0
      %2049 = vmatmul.mubr.bf16.gmra.mrb[0].mxu0 %v1985
      %v2050 = vpop.f32.mrb[0].mxu0
      %v2051 = vadd.f32 0.0, %v2050
      %v2052 = vpop.f32.mrb[0].mxu0
      %v2053 = vpop.f32.mrb[0].mxu0
      %v2054 = vadd.f32 0.0, %v2053
      %v2055 = vpop.f32.mrb[0].mxu0
      %2056 = vmatprep.mubr.bf16.mxu0 0
      %2057 = vmatmul.mubr.bf16.gmra.mrb[0].mxu0 %v1988
      %v2058 = vpop.f32.mrb[0].mxu0
      %v2059 = vadd.f32 0.0, %v2058
      %v2060 = vpop.f32.mrb[0].mxu0
      %v2061 = vpop.f32.mrb[0].mxu0
      %v2062 = vadd.f32 0.0, %v2061
      %v2063 = vpop.f32.mrb[0].mxu0
      %2064 = vmatprep.mubr.bf16.mxu0 0
      %2065 = vmatmul.mubr.bf16.gmra.mrb[0].mxu0 %v1991
      %v2066 = vpop.f32.mrb[0].mxu0
      %v2067 = vadd.f32 0.0, %v2066
      %v2068 = vpop.f32.mrb[0].mxu0
      %v2069 = vpop.f32.mrb[0].mxu0
      %v2070 = vadd.f32 0.0, %v2069
      %v2071 = vpop.f32.mrb[0].mxu0
      %2072 = vmatprep.mubr.bf16.mxu0 0
      %2073 = vmatmul.mubr.bf16.gmra.mrb[0].mxu0 %v1994
      %v2074 = vpop.f32.mrb[0].mxu0
      %v2075 = vadd.f32 0.0, %v2074
      %v2076 = vpop.f32.mrb[0].mxu0
      %v2077 = vpop.f32.mrb[0].mxu0
      %v2078 = vadd.f32 0.0, %v2077
      %v2079 = vpop.f32.mrb[0].mxu0
      %2080 = vmatprep.mubr.bf16.mxu0 0
      %2081 = vmatmul.mubr.bf16.gmra.mrb[0].mxu0 %v1997
      %v2082 = vpop.f32.mrb[0].mxu0
      %v2083 = vadd.f32 0.0, %v2082
      %v2084 = vpop.f32.mrb[0].mxu0
      %v2085 = vpop.f32.mrb[0].mxu0
      %v2086 = vadd.f32 0.0, %v2085
      %v2087 = vpop.f32.mrb[0].mxu0
      %2088 = vmatprep.mubr.bf16.mxu0 0
      %2089 = vmatmul.mubr.bf16.gmra.mrb[0].mxu0 %v2000
      %v2090 = vpop.f32.mrb[0].mxu0
      %v2091 = vadd.f32 0.0, %v2090
      %v2092 = vpop.f32.mrb[0].mxu0
      %v2093 = vpop.f32.mrb[0].mxu0
      %v2094 = vadd.f32 0.0, %v2093
      %v2095 = vpop.f32.mrb[0].mxu0
      %2096 = vmatprep.mubr.bf16.mxu0 0
      %2097 = vmatmul.mubr.bf16.gmra.mrb[0].mxu0 %v2003
      %v2098 = vpop.f32.mrb[0].mxu0
      %v2099 = vadd.f32 0.0, %v2098
      %v2100 = vpop.f32.mrb[0].mxu0
      %v2101 = vpop.f32.mrb[0].mxu0
      %v2102 = vadd.f32 0.0, %v2101
      %v2103 = vpop.f32.mrb[0].mxu0
      %2104 = vdwg.mxu0
      %v2105 = vadd.f32 %v1906, %v2043
      %v2106 = vadd.f32 %v1907, %v2046
      %v2107 = vadd.f32 %v1908, %v2051
      %v2108 = vadd.f32 %v1909, %v2054
      %v2109 = vadd.f32 %v1910, %v2059
      %v2110 = vadd.f32 %v1911, %v2062
      %v2111 = vadd.f32 %v1912, %v2067
      %v2112 = vadd.f32 %v1913, %v2070
      %v2113 = vadd.f32 %v1914, %v2075
      %v2114 = vadd.f32 %v1915, %v2078
      %v2115 = vadd.f32 %v1916, %v2083
      %v2116 = vadd.f32 %v1917, %v2086
      %v2117 = vadd.f32 %v1918, %v2091
      %v2118 = vadd.f32 %v1919, %v2094
      %v2119 = vadd.f32 %v1920, %v2099
      %v2120 = vadd.f32 %v1921, %v2102
      %v2121 = vld [vmem:[%s1922] sm:$0xf]
      %v2122 = vld [vmem:[%s1922 + $0x4] sm:$0xf]
      %v2123 = vld [vmem:[%s1922 + $0x8] sm:$0x1]
      %v2124 = vld [vmem:[%s1922 + $0xc] sm:$0xf]
      %v2125 = vld [vmem:[%s1922 + $0x10] sm:$0xf]
      %v2126 = vld [vmem:[%s1922 + $0x14] sm:$0x1]
      %v2127 = vld [vmem:[%s1922 + $0x18] sm:$0xf]
      %v2128 = vld [vmem:[%s1922 + $0x1c] sm:$0xf]
      %v2129 = vld [vmem:[%s1922 + $0x20] sm:$0x1]
      %v2130 = vld [vmem:[%s1922 + $0x24] sm:$0xf]
      %v2131 = vld [vmem:[%s1922 + $0x28] sm:$0xf]
      %v2132 = vld [vmem:[%s1922 + $0x2c] sm:$0x1]
      %v2133 = vld [vmem:[%s1922 + $0x30] sm:$0xf]
      %v2134 = vld [vmem:[%s1922 + $0x34] sm:$0xf]
      %v2135 = vld [vmem:[%s1922 + $0x38] sm:$0x1]
      %v2136 = vld [vmem:[%s1922 + $0x3c] sm:$0xf]
      %v2137 = vld [vmem:[%s1922 + $0x40] sm:$0xf]
      %v2138 = vld [vmem:[%s1922 + $0x44] sm:$0x1]
      %v2139 = vld [vmem:[%s1922 + $0x48] sm:$0xf]
      %v2140 = vld [vmem:[%s1922 + $0x4c] sm:$0xf]
      %v2141 = vld [vmem:[%s1922 + $0x50] sm:$0x1]
      %v2142 = vld [vmem:[%s1922 + $0x54] sm:$0xf]
      %v2143 = vld [vmem:[%s1922 + $0x58] sm:$0xf]
      %v2144 = vld [vmem:[%s1922 + $0x5c] sm:$0x1]
      %v2146 = vshrl.u32 %v2121, 16
      %v2148 = vrot.slane %v2146, 4
      %v2149 = vshll.u32 %v2121, 16
      %v2151 = vrot.slane %v2149, 5
      %v2152 = vor.u32 %v2148, %v2151
      %v2153 = vrot.slane %v2152, 4
      %v2155 = vshll.u32 %v2122, 16
      %v2157 = vrot.slane %v2155, 5
      %v2158 = vsel %vm329, %v2153, %v2157
      %v2159 = vshrl.u32 %v2122, 16
      %v2161 = vrot.slane %v2159, 4
      %v2162 = vor.u32 %v2161, %v2157
      %v2163 = vrot.slane %v2162, 4
      %v2165 = vshll.u32 %v2123, 16
      %v2167 = vrot.slane %v2165, 5
      %v2168 = vsel %vm329, %v2163, %v2167
      %v2170 = vshrl.u32 %v2124, 16
      %v2172 = vrot.slane %v2170, 4
      %v2173 = vshll.u32 %v2124, 16
      %v2175 = vrot.slane %v2173, 5
      %v2176 = vor.u32 %v2172, %v2175
      %v2177 = vrot.slane %v2176, 4
      %v2179 = vshll.u32 %v2125, 16
      %v2181 = vrot.slane %v2179, 5
      %v2182 = vsel %vm329, %v2177, %v2181
      %v2183 = vshrl.u32 %v2125, 16
      %v2185 = vrot.slane %v2183, 4
      %v2186 = vor.u32 %v2185, %v2181
      %v2187 = vrot.slane %v2186, 4
      %v2189 = vshll.u32 %v2126, 16
      %v2191 = vrot.slane %v2189, 5
      %v2192 = vsel %vm329, %v2187, %v2191
      %v2194 = vshrl.u32 %v2127, 16
      %v2196 = vrot.slane %v2194, 4
      %v2197 = vshll.u32 %v2127, 16
      %v2199 = vrot.slane %v2197, 5
      %v2200 = vor.u32 %v2196, %v2199
      %v2201 = vrot.slane %v2200, 4
      %v2203 = vshll.u32 %v2128, 16
      %v2205 = vrot.slane %v2203, 5
      %v2206 = vsel %vm329, %v2201, %v2205
      %v2207 = vshrl.u32 %v2128, 16
      %v2209 = vrot.slane %v2207, 4
      %v2210 = vor.u32 %v2209, %v2205
      %v2211 = vrot.slane %v2210, 4
      %v2213 = vshll.u32 %v2129, 16
      %v2215 = vrot.slane %v2213, 5
      %v2216 = vsel %vm329, %v2211, %v2215
      %v2218 = vshrl.u32 %v2130, 16
      %v2220 = vrot.slane %v2218, 4
      %v2221 = vshll.u32 %v2130, 16
      %v2223 = vrot.slane %v2221, 5
      %v2224 = vor.u32 %v2220, %v2223
      %v2225 = vrot.slane %v2224, 4
      %v2227 = vshll.u32 %v2131, 16
      %v2229 = vrot.slane %v2227, 5
      %v2230 = vsel %vm329, %v2225, %v2229
      %v2231 = vshrl.u32 %v2131, 16
      %v2233 = vrot.slane %v2231, 4
      %v2234 = vor.u32 %v2233, %v2229
      %v2235 = vrot.slane %v2234, 4
      %v2237 = vshll.u32 %v2132, 16
      %v2239 = vrot.slane %v2237, 5
      %v2240 = vsel %vm329, %v2235, %v2239
      %v2242 = vshrl.u32 %v2133, 16
      %v2244 = vrot.slane %v2242, 4
      %v2245 = vshll.u32 %v2133, 16
      %v2247 = vrot.slane %v2245, 5
      %v2248 = vor.u32 %v2244, %v2247
      %v2249 = vrot.slane %v2248, 4
      %v2251 = vshll.u32 %v2134, 16
      %v2253 = vrot.slane %v2251, 5
      %v2254 = vsel %vm329, %v2249, %v2253
      %v2255 = vshrl.u32 %v2134, 16
      %v2257 = vrot.slane %v2255, 4
      %v2258 = vor.u32 %v2257, %v2253
      %v2259 = vrot.slane %v2258, 4
      %v2261 = vshll.u32 %v2135, 16
      %v2263 = vrot.slane %v2261, 5
      %v2264 = vsel %vm329, %v2259, %v2263
      %v2266 = vshrl.u32 %v2136, 16
      %v2268 = vrot.slane %v2266, 4
      %v2269 = vshll.u32 %v2136, 16
      %v2271 = vrot.slane %v2269, 5
      %v2272 = vor.u32 %v2268, %v2271
      %v2273 = vrot.slane %v2272, 4
      %v2275 = vshll.u32 %v2137, 16
      %v2277 = vrot.slane %v2275, 5
      %v2278 = vsel %vm329, %v2273, %v2277
      %v2279 = vshrl.u32 %v2137, 16
      %v2281 = vrot.slane %v2279, 4
      %v2282 = vor.u32 %v2281, %v2277
      %v2283 = vrot.slane %v2282, 4
      %v2285 = vshll.u32 %v2138, 16
      %v2287 = vrot.slane %v2285, 5
      %v2288 = vsel %vm329, %v2283, %v2287
      %v2290 = vshrl.u32 %v2139, 16
      %v2292 = vrot.slane %v2290, 4
      %v2293 = vshll.u32 %v2139, 16
      %v2295 = vrot.slane %v2293, 5
      %v2296 = vor.u32 %v2292, %v2295
      %v2297 = vrot.slane %v2296, 4
      %v2299 = vshll.u32 %v2140, 16
      %v2301 = vrot.slane %v2299, 5
      %v2302 = vsel %vm329, %v2297, %v2301
      %v2303 = vshrl.u32 %v2140, 16
      %v2305 = vrot.slane %v2303, 4
      %v2306 = vor.u32 %v2305, %v2301
      %v2307 = vrot.slane %v2306, 4
      %v2309 = vshll.u32 %v2141, 16
      %v2311 = vrot.slane %v2309, 5
      %v2312 = vsel %vm329, %v2307, %v2311
      %v2314 = vshrl.u32 %v2142, 16
      %v2316 = vrot.slane %v2314, 4
      %v2317 = vshll.u32 %v2142, 16
      %v2319 = vrot.slane %v2317, 5
      %v2320 = vor.u32 %v2316, %v2319
      %v2321 = vrot.slane %v2320, 4
      %v2323 = vshll.u32 %v2143, 16
      %v2325 = vrot.slane %v2323, 5
      %v2326 = vsel %vm329, %v2321, %v2325
      %v2327 = vshrl.u32 %v2143, 16
      %v2329 = vrot.slane %v2327, 4
      %v2330 = vor.u32 %v2329, %v2325
      %v2331 = vrot.slane %v2330, 4
      %v2333 = vshll.u32 %v2144, 16
      %v2335 = vrot.slane %v2333, 5
      %v2336 = vsel %vm329, %v2331, %v2335
      %s2337 = scalar_lea.vmem %s1, 14
      %v2338 = vld [vmem:[%s2337] sm:$0x3]
      %v2339 = vunpack.c.l.b16 %v2158
      %v2340 = vunpack.c.l.b16 %v2168
      %v2341 = vunpack.c.l.b16 %v2182
      %v2342 = vunpack.c.l.b16 %v2192
      %v2343 = vunpack.c.l.b16 %v2206
      %v2344 = vunpack.c.l.b16 %v2216
      %v2345 = vunpack.c.l.b16 %v2230
      %v2346 = vunpack.c.l.b16 %v2240
      %v2347 = vunpack.c.l.b16 %v2254
      %v2348 = vunpack.c.l.b16 %v2264
      %v2349 = vunpack.c.l.b16 %v2278
      %v2350 = vunpack.c.l.b16 %v2288
      %v2351 = vunpack.c.l.b16 %v2302
      %v2352 = vunpack.c.l.b16 %v2312
      %v2353 = vunpack.c.l.b16 %v2326
      %v2354 = vunpack.c.l.b16 %v2336
      %v2355 = vpack.c.b16 %v2340, %v2339
      %v2356 = vpack.c.b16 %v2342, %v2341
      %v2357 = vpack.c.b16 %v2344, %v2343
      %v2358 = vpack.c.b16 %v2346, %v2345
      %v2359 = vpack.c.b16 %v2348, %v2347
      %v2360 = vpack.c.b16 %v2350, %v2349
      %v2361 = vpack.c.b16 %v2352, %v2351
      %v2362 = vpack.c.b16 %v2354, %v2353
      %v2364 = vsel %vm548, %v2355, 0
      %v2367 = vsel %vm548, %v2356, 0
      %v2370 = vsel %vm548, %v2357, 0
      %v2373 = vsel %vm548, %v2358, 0
      %v2376 = vsel %vm548, %v2359, 0
      %v2379 = vsel %vm548, %v2360, 0
      %v2382 = vsel %vm548, %v2361, 0
      %v2385 = vsel %vm548, %v2362, 0
      %v2388 = vsel %vm573, %v2338, 0
      %2390 = vmatprep.subr.bf16.mxu0 0
      %2391 = vmatpush1.bf16.msra.mxu0 %v2388
      %2392 = vmatprep.subr.bf16.mxu0 0
      %2393 = vmatpush1.bf16.msra.mxu0 0
      %2394 = vmatprep.subr.bf16.mxu0 0
      %2395 = vmatpush1.bf16.msra.mxu0 0
      %2396 = vmatprep.subr.bf16.mxu0 0
      %2397 = vmatpush1.bf16.msra.mxu0 0
      %2398 = vmatprep.subr.bf16.mxu0 0
      %2399 = vmatpush1.bf16.msra.mxu0 0
      %2400 = vmatprep.subr.bf16.mxu0 0
      %2401 = vmatpush1.bf16.msra.mxu0 0
      %2402 = vmatprep.subr.bf16.mxu0 0
      %2403 = vmatpush1.bf16.msra.mxu0 0
      %2404 = vmatprep.subr.bf16.mxu0 0
      %2405 = vmatpush1.bf16.msra.mxu0 0
      %2406 = vmatprep.subr.bf16.mxu0 0
      %2407 = vmatpush1.bf16.msra.mxu0 0
      %2408 = vmatprep.subr.bf16.mxu0 0
      %2409 = vmatpush1.bf16.msra.mxu0 0
      %2410 = vmatprep.subr.bf16.mxu0 0
      %2411 = vmatpush1.bf16.msra.mxu0 0
      %2412 = vmatprep.subr.bf16.mxu0 0
      %2413 = vmatpush1.bf16.msra.mxu0 0
      %2414 = vmatprep.subr.bf16.mxu0 0
      %2415 = vmatpush1.bf16.msra.mxu0 0
      %2416 = vmatprep.subr.bf16.mxu0 0
      %2417 = vmatpush1.bf16.msra.mxu0 0
      %2418 = vmatprep.subr.bf16.mxu0 0
      %2419 = vmatpush1.bf16.msra.mxu0 0
      %2420 = vmatprep.subr.bf16.mxu0 0
      %2421 = vmatpush1.bf16.msra.mxu0 0
      %2422 = vmatprep.mubr.bf16.mxu0 0
      %2423 = vmatmul.mubr.bf16.gmra.mrb[0].mxu0 %v2364
      %v2424 = vpop.f32.mrb[0].mxu0
      %v2425 = vadd.f32 0.0, %v2424
      %v2426 = vpop.f32.mrb[0].mxu0
      %v2427 = vpop.f32.mrb[0].mxu0
      %v2428 = vadd.f32 0.0, %v2427
      %v2429 = vpop.f32.mrb[0].mxu0
      %2430 = vmatprep.mubr.bf16.mxu0 0
      %2431 = vmatmul.mubr.bf16.gmra.mrb[0].mxu0 %v2367
      %v2432 = vpop.f32.mrb[0].mxu0
      %v2433 = vadd.f32 0.0, %v2432
      %v2434 = vpop.f32.mrb[0].mxu0
      %v2435 = vpop.f32.mrb[0].mxu0
      %v2436 = vadd.f32 0.0, %v2435
      %v2437 = vpop.f32.mrb[0].mxu0
      %2438 = vmatprep.mubr.bf16.mxu0 0
      %2439 = vmatmul.mubr.bf16.gmra.mrb[0].mxu0 %v2370
      %v2440 = vpop.f32.mrb[0].mxu0
      %v2441 = vadd.f32 0.0, %v2440
      %v2442 = vpop.f32.mrb[0].mxu0
      %v2443 = vpop.f32.mrb[0].mxu0
      %v2444 = vadd.f32 0.0, %v2443
      %v2445 = vpop.f32.mrb[0].mxu0
      %2446 = vmatprep.mubr.bf16.mxu0 0
      %2447 = vmatmul.mubr.bf16.gmra.mrb[0].mxu0 %v2373
      %v2448 = vpop.f32.mrb[0].mxu0
      %v2449 = vadd.f32 0.0, %v2448
      %v2450 = vpop.f32.mrb[0].mxu0
      %v2451 = vpop.f32.mrb[0].mxu0
      %v2452 = vadd.f32 0.0, %v2451
      %v2453 = vpop.f32.mrb[0].mxu0
      %2454 = vmatprep.mubr.bf16.mxu0 0
      %2455 = vmatmul.mubr.bf16.gmra.mrb[0].mxu0 %v2376
      %v2456 = vpop.f32.mrb[0].mxu0
      %v2457 = vadd.f32 0.0, %v2456
      %v2458 = vpop.f32.mrb[0].mxu0
      %v2459 = vpop.f32.mrb[0].mxu0
      %v2460 = vadd.f32 0.0, %v2459
      %v2461 = vpop.f32.mrb[0].mxu0
      %2462 = vmatprep.mubr.bf16.mxu0 0
      %2463 = vmatmul.mubr.bf16.gmra.mrb[0].mxu0 %v2379
      %v2464 = vpop.f32.mrb[0].mxu0
      %v2465 = vadd.f32 0.0, %v2464
      %v2466 = vpop.f32.mrb[0].mxu0
      %v2467 = vpop.f32.mrb[0].mxu0
      %v2468 = vadd.f32 0.0, %v2467
      %v2469 = vpop.f32.mrb[0].mxu0
      %2470 = vmatprep.mubr.bf16.mxu0 0
      %2471 = vmatmul.mubr.bf16.gmra.mrb[0].mxu0 %v2382
      %v2472 = vpop.f32.mrb[0].mxu0
      %v2473 = vadd.f32 0.0, %v2472
      %v2474 = vpop.f32.mrb[0].mxu0
      %v2475 = vpop.f32.mrb[0].mxu0
      %v2476 = vadd.f32 0.0, %v2475
      %v2477 = vpop.f32.mrb[0].mxu0
      %2478 = vmatprep.mubr.bf16.mxu0 0
      %2479 = vmatmul.mubr.bf16.gmra.mrb[0].mxu0 %v2385
      %v2480 = vpop.f32.mrb[0].mxu0
      %v2481 = vadd.f32 0.0, %v2480
      %v2482 = vpop.f32.mrb[0].mxu0
      %v2483 = vpop.f32.mrb[0].mxu0
      %v2484 = vadd.f32 0.0, %v2483
      %v2485 = vpop.f32.mrb[0].mxu0
      %2486 = vdwg.mxu0
      %v2487 = vadd.f32 %v2105, %v2425
      %v2488 = vadd.f32 %v2106, %v2428
      %v2489 = vadd.f32 %v2107, %v2433
      %v2490 = vadd.f32 %v2108, %v2436
      %v2491 = vadd.f32 %v2109, %v2441
      %v2492 = vadd.f32 %v2110, %v2444
      %v2493 = vadd.f32 %v2111, %v2449
      %v2494 = vadd.f32 %v2112, %v2452
      %v2495 = vadd.f32 %v2113, %v2457
      %v2496 = vadd.f32 %v2114, %v2460
      %v2497 = vadd.f32 %v2115, %v2465
      %v2498 = vadd.f32 %v2116, %v2468
      %v2499 = vadd.f32 %v2117, %v2473
      %v2500 = vadd.f32 %v2118, %v2476
      %v2501 = vadd.f32 %v2119, %v2481
      %v2502 = vadd.f32 %v2120, %v2484
      %v2503 = vld [vmem:[%s1922] sm:$0xe]
      %v2504 = vld [vmem:[%s1922 + $0xc] sm:$0xe]
      %v2505 = vld [vmem:[%s1922 + $0x18] sm:$0xe]
      %v2506 = vld [vmem:[%s1922 + $0x24] sm:$0xe]
      %v2507 = vld [vmem:[%s1922 + $0x30] sm:$0xe]
      %v2508 = vld [vmem:[%s1922 + $0x3c] sm:$0xe]
      %v2509 = vld [vmem:[%s1922 + $0x48] sm:$0xe]
      %v2510 = vld [vmem:[%s1922 + $0x54] sm:$0xe]
      %v2535 = vrot.slane %v2503, 5
      %v2536 = vrot.slane %v2535, 4
      %v2537 = vrot.slane %v2122, 5
      %v2538 = vsel %vm864, %v2536, %v2537
      %v2539 = vrot.slane %v2537, 4
      %v2540 = vrot.slane %v2123, 5
      %v2541 = vsel %vm864, %v2539, %v2540
      %v2542 = vrot.slane %v2504, 5
      %v2543 = vrot.slane %v2542, 4
      %v2544 = vrot.slane %v2125, 5
      %v2545 = vsel %vm864, %v2543, %v2544
      %v2546 = vrot.slane %v2544, 4
      %v2547 = vrot.slane %v2126, 5
      %v2548 = vsel %vm864, %v2546, %v2547
      %v2549 = vrot.slane %v2505, 5
      %v2550 = vrot.slane %v2549, 4
      %v2551 = vrot.slane %v2128, 5
      %v2552 = vsel %vm864, %v2550, %v2551
      %v2553 = vrot.slane %v2551, 4
      %v2554 = vrot.slane %v2129, 5
      %v2555 = vsel %vm864, %v2553, %v2554
      %v2556 = vrot.slane %v2506, 5
      %v2557 = vrot.slane %v2556, 4
      %v2558 = vrot.slane %v2131, 5
      %v2559 = vsel %vm864, %v2557, %v2558
      %v2560 = vrot.slane %v2558, 4
      %v2561 = vrot.slane %v2132, 5
      %v2562 = vsel %vm864, %v2560, %v2561
      %v2563 = vrot.slane %v2507, 5
      %v2564 = vrot.slane %v2563, 4
      %v2565 = vrot.slane %v2134, 5
      %v2566 = vsel %vm864, %v2564, %v2565
      %v2567 = vrot.slane %v2565, 4
      %v2568 = vrot.slane %v2135, 5
      %v2569 = vsel %vm864, %v2567, %v2568
      %v2570 = vrot.slane %v2508, 5
      %v2571 = vrot.slane %v2570, 4
      %v2572 = vrot.slane %v2137, 5
      %v2573 = vsel %vm864, %v2571, %v2572
      %v2574 = vrot.slane %v2572, 4
      %v2575 = vrot.slane %v2138, 5
      %v2576 = vsel %vm864, %v2574, %v2575
      %v2577 = vrot.slane %v2509, 5
      %v2578 = vrot.slane %v2577, 4
      %v2579 = vrot.slane %v2140, 5
      %v2580 = vsel %vm864, %v2578, %v2579
      %v2581 = vrot.slane %v2579, 4
      %v2582 = vrot.slane %v2141, 5
      %v2583 = vsel %vm864, %v2581, %v2582
      %v2584 = vrot.slane %v2510, 5
      %v2585 = vrot.slane %v2584, 4
      %v2586 = vrot.slane %v2143, 5
      %v2587 = vsel %vm864, %v2585, %v2586
      %v2588 = vrot.slane %v2586, 4
      %v2589 = vrot.slane %v2144, 5
      %v2590 = vsel %vm864, %v2588, %v2589
      %s2591 = scalar_lea.vmem %s1, 16
      %v2592 = vld [vmem:[%s2591] sm:$0x3]
      %v2593 = vunpack.c.l.b16 %v2538
      %v2594 = vunpack.c.l.b16 %v2541
      %v2595 = vunpack.c.l.b16 %v2545
      %v2596 = vunpack.c.l.b16 %v2548
      %v2597 = vunpack.c.l.b16 %v2552
      %v2598 = vunpack.c.l.b16 %v2555
      %v2599 = vunpack.c.l.b16 %v2559
      %v2600 = vunpack.c.l.b16 %v2562
      %v2601 = vunpack.c.l.b16 %v2566
      %v2602 = vunpack.c.l.b16 %v2569
      %v2603 = vunpack.c.l.b16 %v2573
      %v2604 = vunpack.c.l.b16 %v2576
      %v2605 = vunpack.c.l.b16 %v2580
      %v2606 = vunpack.c.l.b16 %v2583
      %v2607 = vunpack.c.l.b16 %v2587
      %v2608 = vunpack.c.l.b16 %v2590
      %v2609 = vpack.c.b16 %v2594, %v2593
      %v2610 = vpack.c.b16 %v2596, %v2595
      %v2611 = vpack.c.b16 %v2598, %v2597
      %v2612 = vpack.c.b16 %v2600, %v2599
      %v2613 = vpack.c.b16 %v2602, %v2601
      %v2614 = vpack.c.b16 %v2604, %v2603
      %v2615 = vpack.c.b16 %v2606, %v2605
      %v2616 = vpack.c.b16 %v2608, %v2607
      %v2618 = vsel %vm548, %v2609, 0
      %v2621 = vsel %vm548, %v2610, 0
      %v2624 = vsel %vm548, %v2611, 0
      %v2627 = vsel %vm548, %v2612, 0
      %v2630 = vsel %vm548, %v2613, 0
      %v2633 = vsel %vm548, %v2614, 0
      %v2636 = vsel %vm548, %v2615, 0
      %v2639 = vsel %vm548, %v2616, 0
      %v2642 = vsel %vm573, %v2592, 0
      %2644 = vmatprep.subr.bf16.mxu0 0
      %2645 = vmatpush1.bf16.msra.mxu0 %v2642
      %2646 = vmatprep.subr.bf16.mxu0 0
      %2647 = vmatpush1.bf16.msra.mxu0 0
      %2648 = vmatprep.subr.bf16.mxu0 0
      %2649 = vmatpush1.bf16.msra.mxu0 0
      %2650 = vmatprep.subr.bf16.mxu0 0
      %2651 = vmatpush1.bf16.msra.mxu0 0
      %2652 = vmatprep.subr.bf16.mxu0 0
      %2653 = vmatpush1.bf16.msra.mxu0 0
      %2654 = vmatprep.subr.bf16.mxu0 0
      %2655 = vmatpush1.bf16.msra.mxu0 0
      %2656 = vmatprep.subr.bf16.mxu0 0
      %2657 = vmatpush1.bf16.msra.mxu0 0
      %2658 = vmatprep.subr.bf16.mxu0 0
      %2659 = vmatpush1.bf16.msra.mxu0 0
      %2660 = vmatprep.subr.bf16.mxu0 0
      %2661 = vmatpush1.bf16.msra.mxu0 0
      %2662 = vmatprep.subr.bf16.mxu0 0
      %2663 = vmatpush1.bf16.msra.mxu0 0
      %2664 = vmatprep.subr.bf16.mxu0 0
      %2665 = vmatpush1.bf16.msra.mxu0 0
      %2666 = vmatprep.subr.bf16.mxu0 0
      %2667 = vmatpush1.bf16.msra.mxu0 0
      %2668 = vmatprep.subr.bf16.mxu0 0
      %2669 = vmatpush1.bf16.msra.mxu0 0
      %2670 = vmatprep.subr.bf16.mxu0 0
      %2671 = vmatpush1.bf16.msra.mxu0 0
      %2672 = vmatprep.subr.bf16.mxu0 0
      %2673 = vmatpush1.bf16.msra.mxu0 0
      %2674 = vmatprep.subr.bf16.mxu0 0
      %2675 = vmatpush1.bf16.msra.mxu0 0
      %2676 = vmatprep.mubr.bf16.mxu0 0
      %2677 = vmatmul.mubr.bf16.gmra.mrb[0].mxu0 %v2618
      %v2678 = vpop.f32.mrb[0].mxu0
      %v2679 = vadd.f32 0.0, %v2678
      %v2680 = vpop.f32.mrb[0].mxu0
      %v2681 = vpop.f32.mrb[0].mxu0
      %v2682 = vadd.f32 0.0, %v2681
      %v2683 = vpop.f32.mrb[0].mxu0
      %2684 = vmatprep.mubr.bf16.mxu0 0
      %2685 = vmatmul.mubr.bf16.gmra.mrb[0].mxu0 %v2621
      %v2686 = vpop.f32.mrb[0].mxu0
      %v2687 = vadd.f32 0.0, %v2686
      %v2688 = vpop.f32.mrb[0].mxu0
      %v2689 = vpop.f32.mrb[0].mxu0
      %v2690 = vadd.f32 0.0, %v2689
      %v2691 = vpop.f32.mrb[0].mxu0
      %2692 = vmatprep.mubr.bf16.mxu0 0
      %2693 = vmatmul.mubr.bf16.gmra.mrb[0].mxu0 %v2624
      %v2694 = vpop.f32.mrb[0].mxu0
      %v2695 = vadd.f32 0.0, %v2694
      %v2696 = vpop.f32.mrb[0].mxu0
      %v2697 = vpop.f32.mrb[0].mxu0
      %v2698 = vadd.f32 0.0, %v2697
      %v2699 = vpop.f32.mrb[0].mxu0
      %2700 = vmatprep.mubr.bf16.mxu0 0
      %2701 = vmatmul.mubr.bf16.gmra.mrb[0].mxu0 %v2627
      %v2702 = vpop.f32.mrb[0].mxu0
      %v2703 = vadd.f32 0.0, %v2702
      %v2704 = vpop.f32.mrb[0].mxu0
      %v2705 = vpop.f32.mrb[0].mxu0
      %v2706 = vadd.f32 0.0, %v2705
      %v2707 = vpop.f32.mrb[0].mxu0
      %2708 = vmatprep.mubr.bf16.mxu0 0
      %2709 = vmatmul.mubr.bf16.gmra.mrb[0].mxu0 %v2630
      %v2710 = vpop.f32.mrb[0].mxu0
      %v2711 = vadd.f32 0.0, %v2710
      %v2712 = vpop.f32.mrb[0].mxu0
      %v2713 = vpop.f32.mrb[0].mxu0
      %v2714 = vadd.f32 0.0, %v2713
      %v2715 = vpop.f32.mrb[0].mxu0
      %2716 = vmatprep.mubr.bf16.mxu0 0
      %2717 = vmatmul.mubr.bf16.gmra.mrb[0].mxu0 %v2633
      %v2718 = vpop.f32.mrb[0].mxu0
      %v2719 = vadd.f32 0.0, %v2718
      %v2720 = vpop.f32.mrb[0].mxu0
      %v2721 = vpop.f32.mrb[0].mxu0
      %v2722 = vadd.f32 0.0, %v2721
      %v2723 = vpop.f32.mrb[0].mxu0
      %2724 = vmatprep.mubr.bf16.mxu0 0
      %2725 = vmatmul.mubr.bf16.gmra.mrb[0].mxu0 %v2636
      %v2726 = vpop.f32.mrb[0].mxu0
      %v2727 = vadd.f32 0.0, %v2726
      %v2728 = vpop.f32.mrb[0].mxu0
      %v2729 = vpop.f32.mrb[0].mxu0
      %v2730 = vadd.f32 0.0, %v2729
      %v2731 = vpop.f32.mrb[0].mxu0
      %2732 = vmatprep.mubr.bf16.mxu0 0
      %2733 = vmatmul.mubr.bf16.gmra.mrb[0].mxu0 %v2639
      %v2734 = vpop.f32.mrb[0].mxu0
      %v2735 = vadd.f32 0.0, %v2734
      %v2736 = vpop.f32.mrb[0].mxu0
      %v2737 = vpop.f32.mrb[0].mxu0
      %v2738 = vadd.f32 0.0, %v2737
      %v2739 = vpop.f32.mrb[0].mxu0
      %2740 = vdwg.mxu0
      %v2741 = vadd.f32 %v2487, %v2679
      %v2742 = vadd.f32 %v2488, %v2682
      %v2743 = vadd.f32 %v2489, %v2687
      %v2744 = vadd.f32 %v2490, %v2690
      %v2745 = vadd.f32 %v2491, %v2695
      %v2746 = vadd.f32 %v2492, %v2698
      %v2747 = vadd.f32 %v2493, %v2703
      %v2748 = vadd.f32 %v2494, %v2706
      %v2749 = vadd.f32 %v2495, %v2711
      %v2750 = vadd.f32 %v2496, %v2714
      %v2751 = vadd.f32 %v2497, %v2719
      %v2752 = vadd.f32 %v2498, %v2722
      %v2753 = vadd.f32 %v2499, %v2727
      %v2754 = vadd.f32 %v2500, %v2730
      %v2755 = vadd.f32 %v2501, %v2735
      %v2756 = vadd.f32 %v2502, %v2738
      %v2757 = vld [vmem:[%s2] sm:$0x1]
      %v2759 = vlaneseq
      %v2760 = vshrl.u32 %v2759, 7
      %v2761 = vsub.s32 0, %v2760
      %v2762 = vrot.slane %v2757, %v2761
      %v2764 = vadd.f32 %v2741, %v2762
      %v2765 = vadd.f32 %v2742, %v2762
      %v2766 = vadd.f32 %v2743, %v2762
      %v2767 = vadd.f32 %v2744, %v2762
      %v2768 = vadd.f32 %v2745, %v2762
      %v2769 = vadd.f32 %v2746, %v2762
      %v2770 = vadd.f32 %v2747, %v2762
      %v2771 = vadd.f32 %v2748, %v2762
      %v2772 = vadd.f32 %v2749, %v2762
      %v2773 = vadd.f32 %v2750, %v2762
      %v2774 = vadd.f32 %v2751, %v2762
      %v2775 = vadd.f32 %v2752, %v2762
      %v2776 = vadd.f32 %v2753, %v2762
      %v2777 = vadd.f32 %v2754, %v2762
      %v2778 = vadd.f32 %v2755, %v2762
      %v2779 = vadd.f32 %v2756, %v2762
      %v2780 = vsel %vm548, %v2764, 0.0
      %v2781 = vsel %vm548, %v2765, 0.0
      %v2782 = vadd.f32 %v2780, %v2781
      %v2783 = vsel %vm548, %v2766, 0.0
      %v2784 = vadd.f32 %v2782, %v2783
      %v2785 = vsel %vm548, %v2767, 0.0
      %v2786 = vadd.f32 %v2784, %v2785
      %v2787 = vsel %vm548, %v2768, 0.0
      %v2788 = vadd.f32 %v2786, %v2787
      %v2789 = vsel %vm548, %v2769, 0.0
      %v2790 = vadd.f32 %v2788, %v2789
      %v2791 = vsel %vm548, %v2770, 0.0
      %v2792 = vadd.f32 %v2790, %v2791
      %v2793 = vsel %vm548, %v2771, 0.0
      %v2794 = vadd.f32 %v2792, %v2793
      %v2795 = vsel %vm548, %v2772, 0.0
      %v2796 = vadd.f32 %v2794, %v2795
      %v2797 = vsel %vm548, %v2773, 0.0
      %v2798 = vadd.f32 %v2796, %v2797
      %v2799 = vsel %vm548, %v2774, 0.0
      %v2800 = vadd.f32 %v2798, %v2799
      %v2801 = vsel %vm548, %v2775, 0.0
      %v2802 = vadd.f32 %v2800, %v2801
      %v2803 = vsel %vm548, %v2776, 0.0
      %v2804 = vadd.f32 %v2802, %v2803
      %v2805 = vsel %vm548, %v2777, 0.0
      %v2806 = vadd.f32 %v2804, %v2805
      %v2807 = vsel %vm548, %v2778, 0.0
      %v2808 = vadd.f32 %v2806, %v2807
      %v2809 = vsel %vm548, %v2779, 0.0
      %v2810 = vadd.f32 %v2808, %v2809
      %v2811 = vrot.slane %v2810, 4
      %v2812 = vadd.f32 %v2810, %v2811
      %v2813 = vrot.slane %v2812, 2
      %v2814 = vadd.f32 %v2812, %v2813
      %v2815 = vrot.slane %v2814, 1
      %v2816 = vadd.f32 %v2814, %v2815
      %vm2817 = vcmask 24576
      %2818 = vst.msk [vmem:[%s293] sm:$0x1] %vm2817, %v2816
      %v2819 = vmul.f32 %v2764, %v2764
      %v2820 = vmul.f32 %v2765, %v2765
      %v2821 = vmul.f32 %v2766, %v2766
      %v2822 = vmul.f32 %v2767, %v2767
      %v2823 = vmul.f32 %v2768, %v2768
      %v2824 = vmul.f32 %v2769, %v2769
      %v2825 = vmul.f32 %v2770, %v2770
      %v2826 = vmul.f32 %v2771, %v2771
      %v2827 = vmul.f32 %v2772, %v2772
      %v2828 = vmul.f32 %v2773, %v2773
      %v2829 = vmul.f32 %v2774, %v2774
      %v2830 = vmul.f32 %v2775, %v2775
      %v2831 = vmul.f32 %v2776, %v2776
      %v2832 = vmul.f32 %v2777, %v2777
      %v2833 = vmul.f32 %v2778, %v2778
      %v2834 = vmul.f32 %v2779, %v2779
      %v2835 = vsel %vm548, %v2819, 0.0
      %v2836 = vsel %vm548, %v2820, 0.0
      %v2837 = vadd.f32 %v2835, %v2836
      %v2838 = vsel %vm548, %v2821, 0.0
      %v2839 = vadd.f32 %v2837, %v2838
      %v2840 = vsel %vm548, %v2822, 0.0
      %v2841 = vadd.f32 %v2839, %v2840
      %v2842 = vsel %vm548, %v2823, 0.0
      %v2843 = vadd.f32 %v2841, %v2842
      %v2844 = vsel %vm548, %v2824, 0.0
      %v2845 = vadd.f32 %v2843, %v2844
      %v2846 = vsel %vm548, %v2825, 0.0
      %v2847 = vadd.f32 %v2845, %v2846
      %v2848 = vsel %vm548, %v2826, 0.0
      %v2849 = vadd.f32 %v2847, %v2848
      %v2850 = vsel %vm548, %v2827, 0.0
      %v2851 = vadd.f32 %v2849, %v2850
      %v2852 = vsel %vm548, %v2828, 0.0
      %v2853 = vadd.f32 %v2851, %v2852
      %v2854 = vsel %vm548, %v2829, 0.0
      %v2855 = vadd.f32 %v2853, %v2854
      %v2856 = vsel %vm548, %v2830, 0.0
      %v2857 = vadd.f32 %v2855, %v2856
      %v2858 = vsel %vm548, %v2831, 0.0
      %v2859 = vadd.f32 %v2857, %v2858
      %v2860 = vsel %vm548, %v2832, 0.0
      %v2861 = vadd.f32 %v2859, %v2860
      %v2862 = vsel %vm548, %v2833, 0.0
      %v2863 = vadd.f32 %v2861, %v2862
      %v2864 = vsel %vm548, %v2834, 0.0
      %v2865 = vadd.f32 %v2863, %v2864
      %v2866 = vrot.slane %v2865, 4
      %v2867 = vadd.f32 %v2865, %v2866
      %v2868 = vrot.slane %v2867, 2
      %v2869 = vadd.f32 %v2867, %v2868
      %v2870 = vrot.slane %v2869, 1
      %v2871 = vadd.f32 %v2869, %v2870
      %2872 = vst.msk [vmem:[%s300] sm:$0x1] %vm2817, %v2871
      %2873 = vst.msk [vmem:[%s285] sm:$0xff] %vm548, %v2764
      %2874 = vst.msk [vmem:[%s285 + $0x8] sm:$0xff] %vm548, %v2765
      %2875 = vst.msk [vmem:[%s285 + $0x10] sm:$0xff] %vm548, %v2766
      %2876 = vst.msk [vmem:[%s285 + $0x18] sm:$0xff] %vm548, %v2767
      %2877 = vst.msk [vmem:[%s285 + $0x20] sm:$0xff] %vm548, %v2768
      %2878 = vst.msk [vmem:[%s285 + $0x28] sm:$0xff] %vm548, %v2769
      %2879 = vst.msk [vmem:[%s285 + $0x30] sm:$0xff] %vm548, %v2770
      %2880 = vst.msk [vmem:[%s285 + $0x38] sm:$0xff] %vm548, %v2771
      %2881 = vst.msk [vmem:[%s285 + $0x40] sm:$0xff] %vm548, %v2772
      %2882 = vst.msk [vmem:[%s285 + $0x48] sm:$0xff] %vm548, %v2773
      %2883 = vst.msk [vmem:[%s285 + $0x50] sm:$0xff] %vm548, %v2774
      %2884 = vst.msk [vmem:[%s285 + $0x58] sm:$0xff] %vm548, %v2775
      %2885 = vst.msk [vmem:[%s285 + $0x60] sm:$0xff] %vm548, %v2776
      %2886 = vst.msk [vmem:[%s285 + $0x68] sm:$0xff] %vm548, %v2777
      %2887 = vst.msk [vmem:[%s285 + $0x70] sm:$0xff] %vm548, %v2778
      %2888 = vst.msk [vmem:[%s285 + $0x78] sm:$0xff] %vm548, %v2779
      %s2889 = smul.u32 8, %s22
      %p2890 = scmp.lt.s32.totalorder %s21, 1
      %s2891 = scalar_select %p2890, %s21, 1
      %p2892 = scmp.lt.s32.totalorder %s2889, 15
      %s2893 = scalar_select %p2892, %s2889, 15
      %s2894 = smul.addr %s2893, 2
      %s2895 = smul.addr %s2891, 32
      %s2896 = sadd.s32 %s2894, %s2895
      %s2897 = smul.addr %s2896, 8
      %s2898 = scalar_lea.vmem %s3, %s2897
      %p2899 = scmp.lt.s32.totalorder %s21, 1
      %s2900 = scalar_select %p2899, %s21, 1
      %p2901 = scmp.lt.s32.totalorder %s22, 1
      %s2902 = scalar_select %p2901, %s22, 1
      %s2903 = smul.addr %s2900, 2
      %s2904 = sadd.s32 %s2902, %s2903
      %s2905 = scalar_lea.vmem %s4, %s2904
      %p2906 = scmp.lt.s32.totalorder %s21, 1
      %s2907 = scalar_select %p2906, %s21, 1
      %p2908 = scmp.lt.s32.totalorder %s22, 1
      %s2909 = scalar_select %p2908, %s22, 1
      %s2910 = smul.addr %s2907, 2
      %s2911 = sadd.s32 %s2909, %s2910
      %s2912 = scalar_lea.vmem %s5, %s2911
      // Predicated region
      $region33: #{decoder_block_forward.8} parent=31 // pred_check
        %p2913 = pneg %p119
      $region34: #{decoder_block_forward.8} parent=31 // pred_check_branch
        %2915 = sbr.rel (%p2913) target = $region36
      $region35: #{decoder_block_forward.8} parent=31 // pred_region
        %s2916 = smul.u32 8, %s22
      $region36: #{decoder_block_forward.8} parent=31 // pred_fallthru
        _
      // Predicated region
      $region37: #{decoder_block_forward.8} parent=31 // pred_check
        %p2917 = pneg %p147
      $region38: #{decoder_block_forward.8} parent=31 // pred_check_branch
        %2919 = sbr.rel (%p2917) target = $region40
      $region39: #{decoder_block_forward.8} parent=31 // pred_region
        _
      $region40: #{decoder_block_forward.8} parent=31 // pred_fallthru
        _
      // Predicated region
      $region41: #{decoder_block_forward.8} parent=31 // pred_check
        %p2920 = pneg %p175
      $region42: #{decoder_block_forward.8} parent=31 // pred_check_branch
        %2922 = sbr.rel (%p2920) target = $region44
      $region43: #{decoder_block_forward.8} parent=31 // pred_region
        _
      $region44: #{decoder_block_forward.8} parent=31 // pred_fallthru
        _
    $region32: #{decoder_block_forward.8} parent=5 // pred_fallthru
      _
    %p2923 = scmp.le.s32.totalorder 2, %s12
    // Predicated region
    $region45: #{decoder_block_forward.8} parent=5 // pred_check
      %p2924 = pneg %p2923
    $region46: #{decoder_block_forward.8} parent=5 // pred_check_branch
      %2926 = sbr.rel (%p2924) target = $region48
    $region47: #{decoder_block_forward.8} parent=5 // pred_region
      %s2927 = ssub.s32 %s12, 2
      // Predicated region
      $region49: #{decoder_block_forward.8} parent=47 // pred_check
        %p2928 = pneg %p125
      $region50: #{decoder_block_forward.8} parent=47 // pred_check_branch
        %2930 = sbr.rel (%p2928) target = $region52
      $region51: #{decoder_block_forward.8} parent=47 // pred_region
        %s2931 = smul.u32 8, %s24
        %p2932 = scmp.lt.s32.totalorder %s23, 1
        %s2933 = scalar_select %p2932, %s23, 1
        %p2934 = scmp.lt.s32.totalorder %s2931, 15
        %s2935 = scalar_select %p2934, %s2931, 15
        %s2936 = smul.addr %s2935, 2
        %s2937 = smul.addr %s2933, 32
        %s2938 = sadd.s32 %s2936, %s2937
        %s2939 = smul.addr %s2938, 8
        %s2940 = scalar_lea.vmem %s3, %s2939
      $region52: #{decoder_block_forward.8} parent=47 // pred_fallthru
        _
      // Predicated region
      $region53: #{decoder_block_forward.8} parent=47 // pred_check
        %p2941 = pneg %p153
      $region54: #{decoder_block_forward.8} parent=47 // pred_check_branch
        %2943 = sbr.rel (%p2941) target = $region56
      $region55: #{decoder_block_forward.8} parent=47 // pred_region
        %p2944 = scmp.lt.s32.totalorder %s23, 1
        %s2945 = scalar_select %p2944, %s23, 1
        %p2946 = scmp.lt.s32.totalorder %s24, 1
        %s2947 = scalar_select %p2946, %s24, 1
        %s2948 = smul.addr %s2945, 2
        %s2949 = sadd.s32 %s2947, %s2948
        %s2950 = scalar_lea.vmem %s4, %s2949
      $region56: #{decoder_block_forward.8} parent=47 // pred_fallthru
        _
      // Predicated region
      $region57: #{decoder_block_forward.8} parent=47 // pred_check
        %p2951 = pneg %p181
      $region58: #{decoder_block_forward.8} parent=47 // pred_check_branch
        %2953 = sbr.rel (%p2951) target = $region60
      $region59: #{decoder_block_forward.8} parent=47 // pred_region
        %p2954 = scmp.lt.s32.totalorder %s23, 1
        %s2955 = scalar_select %p2954, %s23, 1
        %p2956 = scmp.lt.s32.totalorder %s24, 1
        %s2957 = scalar_select %p2956, %s24, 1
        %s2958 = smul.addr %s2955, 2
        %s2959 = sadd.s32 %s2957, %s2958
        %s2960 = scalar_lea.vmem %s5, %s2959
      $region60: #{decoder_block_forward.8} parent=47 // pred_fallthru
        _
    $region48: #{decoder_block_forward.8} parent=5 // pred_fallthru
      _
  $region6: #{decoder_block_forward.8} parent=0 // loop_footer
    %s16 = sadd.s32 1, %s12
  $region7: #{decoder_block_forward.8} parent=0 // loop_footer_branch
    %11 = sbr.rel target = $region3
  $region8: #{decoder_block_forward.8} parent=0 // loop_exit
    _

// kernel: decoder_block_forward.6
$region0: #{decoder_block_forward.6}
  #allocation0 [shape = 'u32[]', space=smem, size = 0x4, offset = 0x4, fixed_abs, tag = 'smem constant byte address 0x4 - core index']
  #allocation1 [shape = 'u32[144,128]{1,0:T(1,128)}', space=vmem, size = 0x12000, scoped, tag = 'internal scratch']
  %s0 = inlined_call_operand.vmem [shape: bf16[2,2,10,18,4], index: 0, kind: input, shape index: {}]
  %s1 = inlined_call_operand.vmem [shape: bf16[2,2,10,18,4], index: 1, kind: input, shape index: {}]
  %s2 = inlined_call_operand.vmem [shape: bf16[3,3,4,4], index: 2, kind: input, shape index: {}]
  %s3 = inlined_call_operand.vmem [shape: bf16[3,3,4,4], index: 3, kind: input, shape index: {}]
  %s4 = inlined_call_operand.vmem [shape: f32[1,4], index: 4, kind: input, shape index: {}]
  %s5 = inlined_call_operand.vmem [shape: f32[2,16,16,4], index: 5, kind: output, shape index: {0}]
  %s6 = inlined_call_operand.vmem [shape: f32[2,2,1,4], index: 6, kind: output, shape index: {1}]
  %s7 = inlined_call_operand.vmem [shape: f32[2,2,1,4], index: 7, kind: output, shape index: {2}]
  %8 = xla_tuple %s5, %s6, %s7
  %s9 = sld [smem:[#allocation0]]
  $region69: #{decoder_block_forward.6} parent=0
    _
  %s11 = ssub.s32 1, %s9
  %s12 = scalar_select 0, %s11, %s9
  loop: start=0, step=1, limit=6
  $region2: #{decoder_block_forward.6} parent=0 // loop_pre_header
    _
  $region3: #{decoder_block_forward.6} parent=0 // loop_header
    %s14 = sphi 0, %s18
    %p15 = scmp.ge.s32.totalorder %s14, 6
    %s21 = sphi 0, %s33
    %s22 = sphi 0, %s29
    %s23 = sphi 0, %s21
    %s24 = sphi 0, %s22
    %s25 = sphi 0, %s23
    %s26 = sphi 0, %s24
    %s38 = sphi 0, %s40
    %s41 = sphi 0, %s38
    %s42 = sphi 0, %s41
    %s58 = sphi 0, %s42
    %s66 = sphi 0, %s68
    %s69 = sphi 0, %s66
    %s70 = sphi 0, %s69
    %s86 = sphi 0, %s70
    %s90 = sphi 0, %s90
    %s92 = sphi 0, %s90
    %s93 = sphi 0, %s92
    %s107 = sphi 0, %s93
    %s111 = sphi 0, %s111
    %s113 = sphi 0, %s111
    %s114 = sphi 0, %s113
    %s128 = sphi 0, %s114
    %s132 = sphi 0, %s132
    %s134 = sphi 0, %s132
    %s135 = sphi 0, %s134
    %s149 = sphi 0, %s135
    %s157 = sphi 0, %s159
    %s160 = sphi 0, %s157
    %s161 = sphi 0, %s160
    %s177 = sphi 0, %s161
    %s185 = sphi 0, %s187
    %s188 = sphi 0, %s185
    %s189 = sphi 0, %s188
    %s205 = sphi 0, %s189
    %s213 = sphi 0, %s215
    %s216 = sphi 0, %s213
    %s217 = sphi 0, %s216
    %s233 = sphi 0, %s217
  $region4: #{decoder_block_forward.6} parent=0 // loop_header_branch
    %17 = sbr.rel (%p15) target = $region8
  $region5: #{decoder_block_forward.6} parent=0 // loop_body
    %s19 = ssub.s32 %s14, 1
    %s20 = ssub.s32 %s14, 2
    %s27 = sadd.s32 1, %s22
    %p28 = scmp.ge.s32.totalorder %s27, 2
    %s29 = scalar_select %p28, 0, %s27
    %s30 = sadd.s32 1, %s21
    %s31 = scalar_select %p28, %s30, %s21
    %p32 = scmp.ge.s32.totalorder %s31, 2
    %s33 = scalar_select %p32, 0, %s31
    %s34 = ssub.s32 %s21, %s33
    %s35 = ssub.s32 %s22, %s29
    %s36 = sor.u32 %s34, %s35
    %p37 = scmp.eq.s32.totalorder %s36, 0
    %s39 = sadd.s32 %s38, 1
    %s40 = scalar_select %p37, %s38, %s39
    %p43 = pneg %p37
    %p44 = scmp.eq.s32.totalorder %s14, 3
    %p45 = por %p43, %p44
    %p46 = scmp.ne.s32.totalorder %s38, %s41
    %p47 = scmp.eq.s32.totalorder %s14, 0
    %p48 = por %p46, %p47
    %p49 = scmp.ne.s32.totalorder %s38, %s41
    %p50 = scmp.eq.s32.totalorder %s19, 3
    %p51 = por %p49, %p50
    %p52 = scmp.ne.s32.totalorder %s41, %s42
    %p53 = scmp.eq.s32.totalorder %s19, 0
    %p54 = por %p52, %p53
    %p55 = scmp.ne.s32.totalorder %s41, %s42
    %p56 = scmp.eq.s32.totalorder %s20, 3
    %p57 = por %p55, %p56
    %p59 = scmp.ne.s32.totalorder %s42, %s58
    %p60 = scmp.eq.s32.totalorder %s20, 0
    %p61 = por %p59, %p60
    %s62 = ssub.s32 %s21, %s33
    %s63 = ssub.s32 %s22, %s29
    %s64 = sor.u32 %s62, %s63
    %p65 = scmp.eq.s32.totalorder %s64, 0
    %s67 = sadd.s32 %s66, 1
    %s68 = scalar_select %p65, %s66, %s67
    %p71 = pneg %p65
    %p72 = scmp.eq.s32.totalorder %s14, 3
    %p73 = por %p71, %p72
    %p74 = scmp.ne.s32.totalorder %s66, %s69
    %p75 = scmp.eq.s32.totalorder %s14, 0
    %p76 = por %p74, %p75
    %p77 = scmp.ne.s32.totalorder %s66, %s69
    %p78 = scmp.eq.s32.totalorder %s19, 3
    %p79 = por %p77, %p78
    %p80 = scmp.ne.s32.totalorder %s69, %s70
    %p81 = scmp.eq.s32.totalorder %s19, 0
    %p82 = por %p80, %p81
    %p83 = scmp.ne.s32.totalorder %s69, %s70
    %p84 = scmp.eq.s32.totalorder %s20, 3
    %p85 = por %p83, %p84
    %p87 = scmp.ne.s32.totalorder %s70, %s86
    %p88 = scmp.eq.s32.totalorder %s20, 0
    %p89 = por %p87, %p88
    %s91 = sadd.s32 %s90, 1
    %p94 = scmp.eq.s32.totalorder %s14, 3
    %p95 = scmp.ne.s32.totalorder %s90, %s92
    %p96 = scmp.eq.s32.totalorder %s14, 0
    %p97 = por %p95, %p96
    %p98 = scmp.ne.s32.totalorder %s90, %s92
    %p99 = scmp.eq.s32.totalorder %s19, 3
    %p100 = por %p98, %p99
    %p101 = scmp.ne.s32.totalorder %s92, %s93
    %p102 = scmp.eq.s32.totalorder %s19, 0
    %p103 = por %p101, %p102
    %p104 = scmp.ne.s32.totalorder %s92, %s93
    %p105 = scmp.eq.s32.totalorder %s20, 3
    %p106 = por %p104, %p105
    %p108 = scmp.ne.s32.totalorder %s93, %s107
    %p109 = scmp.eq.s32.totalorder %s20, 0
    %p110 = por %p108, %p109
    %s112 = sadd.s32 %s111, 1
    %p115 = scmp.eq.s32.totalorder %s14, 3
    %p116 = scmp.ne.s32.totalorder %s111, %s113
    %p117 = scmp.eq.s32.totalorder %s14, 0
    %p118 = por %p116, %p117
    %p119 = scmp.ne.s32.totalorder %s111, %s113
    %p120 = scmp.eq.s32.totalorder %s19, 3
    %p121 = por %p119, %p120
    %p122 = scmp.ne.s32.totalorder %s113, %s114
    %p123 = scmp.eq.s32.totalorder %s19, 0
    %p124 = por %p122, %p123
    %p125 = scmp.ne.s32.totalorder %s113, %s114
    %p126 = scmp.eq.s32.totalorder %s20, 3
    %p127 = por %p125, %p126
    %p129 = scmp.ne.s32.totalorder %s114, %s128
    %p130 = scmp.eq.s32.totalorder %s20, 0
    %p131 = por %p129, %p130
    %s133 = sadd.s32 %s132, 1
    %p136 = scmp.eq.s32.totalorder %s14, 3
    %p137 = scmp.ne.s32.totalorder %s132, %s134
    %p138 = scmp.eq.s32.totalorder %s14, 0
    %p139 = por %p137, %p138
    %p140 = scmp.ne.s32.totalorder %s132, %s134
    %p141 = scmp.eq.s32.totalorder %s19, 3
    %p142 = por %p140, %p141
    %p143 = scmp.ne.s32.totalorder %s134, %s135
    %p144 = scmp.eq.s32.totalorder %s19, 0
    %p145 = por %p143, %p144
    %p146 = scmp.ne.s32.totalorder %s134, %s135
    %p147 = scmp.eq.s32.totalorder %s20, 3
    %p148 = por %p146, %p147
    %p150 = scmp.ne.s32.totalorder %s135, %s149
    %p151 = scmp.eq.s32.totalorder %s20, 0
    %p152 = por %p150, %p151
    %s153 = ssub.s32 %s21, %s33
    %s154 = ssub.s32 %s22, %s29
    %s155 = sor.u32 %s153, %s154
    %p156 = scmp.eq.s32.totalorder %s155, 0
    %s158 = sadd.s32 %s157, 1
    %s159 = scalar_select %p156, %s157, %s158
    %p162 = pneg %p156
    %p163 = scmp.eq.s32.totalorder %s14, 3
    %p164 = por %p162, %p163
    %p165 = scmp.ne.s32.totalorder %s157, %s160
    %p166 = scmp.eq.s32.totalorder %s14, 0
    %p167 = por %p165, %p166
    %p168 = scmp.ne.s32.totalorder %s157, %s160
    %p169 = scmp.eq.s32.totalorder %s19, 3
    %p170 = por %p168, %p169
    %p171 = scmp.ne.s32.totalorder %s160, %s161
    %p172 = scmp.eq.s32.totalorder %s19, 0
    %p173 = por %p171, %p172
    %p174 = scmp.ne.s32.totalorder %s160, %s161
    %p175 = scmp.eq.s32.totalorder %s20, 3
    %p176 = por %p174, %p175
    %p178 = scmp.ne.s32.totalorder %s161, %s177
    %p179 = scmp.eq.s32.totalorder %s20, 0
    %p180 = por %p178, %p179
    %s181 = ssub.s32 %s21, %s33
    %s182 = ssub.s32 %s22, %s29
    %s183 = sor.u32 %s181, %s182
    %p184 = scmp.eq.s32.totalorder %s183, 0
    %s186 = sadd.s32 %s185, 1
    %s187 = scalar_select %p184, %s185, %s186
    %p190 = pneg %p184
    %p191 = scmp.eq.s32.totalorder %s14, 3
    %p192 = por %p190, %p191
    %p193 = scmp.ne.s32.totalorder %s185, %s188
    %p194 = scmp.eq.s32.totalorder %s14, 0
    %p195 = por %p193, %p194
    %p196 = scmp.ne.s32.totalorder %s185, %s188
    %p197 = scmp.eq.s32.totalorder %s19, 3
    %p198 = por %p196, %p197
    %p199 = scmp.ne.s32.totalorder %s188, %s189
    %p200 = scmp.eq.s32.totalorder %s19, 0
    %p201 = por %p199, %p200
    %p202 = scmp.ne.s32.totalorder %s188, %s189
    %p203 = scmp.eq.s32.totalorder %s20, 3
    %p204 = por %p202, %p203
    %p206 = scmp.ne.s32.totalorder %s189, %s205
    %p207 = scmp.eq.s32.totalorder %s20, 0
    %p208 = por %p206, %p207
    %s209 = ssub.s32 %s21, %s33
    %s210 = ssub.s32 %s22, %s29
    %s211 = sor.u32 %s209, %s210
    %p212 = scmp.eq.s32.totalorder %s211, 0
    %s214 = sadd.s32 %s213, 1
    %s215 = scalar_select %p212, %s213, %s214
    %p218 = pneg %p212
    %p219 = scmp.eq.s32.totalorder %s14, 3
    %p220 = por %p218, %p219
    %p221 = scmp.ne.s32.totalorder %s213, %s216
    %p222 = scmp.eq.s32.totalorder %s14, 0
    %p223 = por %p221, %p222
    %p224 = scmp.ne.s32.totalorder %s213, %s216
    %p225 = scmp.eq.s32.totalorder %s19, 3
    %p226 = por %p224, %p225
    %p227 = scmp.ne.s32.totalorder %s216, %s217
    %p228 = scmp.eq.s32.totalorder %s19, 0
    %p229 = por %p227, %p228
    %p230 = scmp.ne.s32.totalorder %s216, %s217
    %p231 = scmp.eq.s32.totalorder %s20, 3
    %p232 = por %p230, %p231
    %p234 = scmp.ne.s32.totalorder %s217, %s233
    %p235 = scmp.eq.s32.totalorder %s20, 0
    %p236 = por %p234, %p235
    %p237 = scmp.le.s32.totalorder 1, %s14
    %p238 = scmp.lt.s32.totalorder %s14, 5
    %p239 = pnand %p237, %p238
    %p240 = pneg %p239
    // Predicated region
    $region9: #{decoder_block_forward.6} parent=5 // pred_check
      _
    $region10: #{decoder_block_forward.6} parent=5 // pred_check_branch
      %242 = sbr.rel (%p239) target = $region12
    $region11: #{decoder_block_forward.6} parent=5 // pred_region
      %s243 = ssub.s32 %s14, 1
      // Predicated region
      $region13: #{decoder_block_forward.6} parent=11 // pred_check
        %p244 = pneg %p103
      $region14: #{decoder_block_forward.6} parent=11 // pred_check_branch
        %246 = sbr.rel (%p244) target = $region16
      $region15: #{decoder_block_forward.6} parent=11 // pred_region
        _
      $region16: #{decoder_block_forward.6} parent=11 // pred_fallthru
        _
      // Predicated region
      $region17: #{decoder_block_forward.6} parent=11 // pred_check
        %p247 = pneg %p124
      $region18: #{decoder_block_forward.6} parent=11 // pred_check_branch
        %249 = sbr.rel (%p247) target = $region20
      $region19: #{decoder_block_forward.6} parent=11 // pred_region
        _
      $region20: #{decoder_block_forward.6} parent=11 // pred_fallthru
        _
      // Predicated region
      $region21: #{decoder_block_forward.6} parent=11 // pred_check
        %p250 = pneg %p145
      $region22: #{decoder_block_forward.6} parent=11 // pred_check_branch
        %252 = sbr.rel (%p250) target = $region24
      $region23: #{decoder_block_forward.6} parent=11 // pred_region
        _
      $region24: #{decoder_block_forward.6} parent=11 // pred_fallthru
        _
    $region12: #{decoder_block_forward.6} parent=5 // pred_fallthru
      _
    %p253 = scmp.lt.s32.totalorder %s14, 4
    // Predicated region
    $region25: #{decoder_block_forward.6} parent=5 // pred_check
      %p254 = pneg %p253
    $region26: #{decoder_block_forward.6} parent=5 // pred_check_branch
      %256 = sbr.rel (%p254) target = $region28
    $region27: #{decoder_block_forward.6} parent=5 // pred_region
      // Predicated region
      $region29: #{decoder_block_forward.6} parent=27 // pred_check
        %p257 = pneg %p48
      $region30: #{decoder_block_forward.6} parent=27 // pred_check_branch
        %259 = sbr.rel (%p257) target = $region32
      $region31: #{decoder_block_forward.6} parent=27 // pred_region
        %p260 = scmp.lt.s32.totalorder %s21, 1
        %s261 = scalar_select %p260, %s21, 1
        %p262 = scmp.lt.s32.totalorder %s22, 1
        %s263 = scalar_select %p262, %s22, 1
        %s264 = smul.addr %s263, 30
        %s265 = smul.addr %s261, 60
        %s266 = sadd.s32 %s264, %s265
        %s267 = smul.addr %s266, 4
        %s268 = scalar_lea.vmem %s0, %s267
      $region32: #{decoder_block_forward.6} parent=27 // pred_fallthru
        _
      // Predicated region
      $region33: #{decoder_block_forward.6} parent=27 // pred_check
        %p269 = pneg %p76
      $region34: #{decoder_block_forward.6} parent=27 // pred_check_branch
        %271 = sbr.rel (%p269) target = $region36
      $region35: #{decoder_block_forward.6} parent=27 // pred_region
        %p272 = scmp.lt.s32.totalorder %s21, 1
        %s273 = scalar_select %p272, %s21, 1
        %p274 = scmp.lt.s32.totalorder %s22, 1
        %s275 = scalar_select %p274, %s22, 1
        %s276 = smul.addr %s275, 30
        %s277 = smul.addr %s273, 60
        %s278 = sadd.s32 %s276, %s277
        %s279 = smul.addr %s278, 4
        %s280 = scalar_lea.vmem %s1, %s279
      $region36: #{decoder_block_forward.6} parent=27 // pred_fallthru
        _
    $region28: #{decoder_block_forward.6} parent=5 // pred_fallthru
      _
    %p281 = scmp.le.s32.totalorder 1, %s14
    %p282 = scmp.lt.s32.totalorder %s14, 5
    %p283 = pnand %p281, %p282
    %p284 = pneg %p283
    // Predicated region
    $region37: #{decoder_block_forward.6} parent=5 // pred_check
      _
    $region38: #{decoder_block_forward.6} parent=5 // pred_check_branch
      %286 = sbr.rel (%p283) target = $region40
    $region39: #{decoder_block_forward.6} parent=5 // pred_region
      %s287 = ssub.s32 %s14, 1
      %p288 = scmp.lt.s32.totalorder %s23, 1
      %s289 = scalar_select %p288, %s23, 1
      %p290 = scmp.lt.s32.totalorder %s24, 1
      %s291 = scalar_select %p290, %s24, 1
      %s292 = smul.addr %s291, 30
      %s293 = smul.addr %s289, 60
      %s294 = sadd.s32 %s292, %s293
      %s295 = smul.addr %s294, 4
      %s296 = scalar_lea.vmem %s0, %s295
      %p297 = pneg %p54
      %p298 = pneg %p51
      %p299 = scmp.lt.s32.totalorder %s23, 1
      %s300 = scalar_select %p299, %s23, 1
      %p301 = scmp.lt.s32.totalorder %s24, 1
      %s302 = scalar_select %p301, %s24, 1
      %s303 = smul.addr %s302, 30
      %s304 = smul.addr %s300, 60
      %s305 = sadd.s32 %s303, %s304
      %s306 = smul.addr %s305, 4
      %s307 = scalar_lea.vmem %s1, %s306
      %p308 = pneg %p82
      %p309 = pneg %p79
      %p310 = pneg %p103
      %p311 = pneg %p100
      %p312 = pneg %p124
      %p313 = pneg %p121
      %p314 = pneg %p145
      %p315 = pneg %p142
      %p316 = pneg %p173
      %p317 = pneg %p170
      %s318 = smul.u32 8, %s24
      %p319 = scmp.lt.s32.totalorder %s23, 1
      %s320 = scalar_select %p319, %s23, 1
      %p321 = scmp.lt.s32.totalorder %s318, 15
      %s322 = scalar_select %p321, %s318, 15
      %s323 = smul.addr %s322, 2
      %s324 = smul.addr %s320, 32
      %s325 = sadd.s32 %s323, %s324
      %s326 = smul.addr %s325, 8
      %s327 = scalar_lea.vmem %s5, %s326
      %p328 = pneg %p201
      %p329 = pneg %p198
      %p330 = scmp.lt.s32.totalorder %s23, 1
      %s331 = scalar_select %p330, %s23, 1
      %p332 = scmp.lt.s32.totalorder %s24, 1
      %s333 = scalar_select %p332, %s24, 1
      %s334 = smul.addr %s331, 2
      %s335 = sadd.s32 %s333, %s334
      %s336 = scalar_lea.vmem %s6, %s335
      %p337 = pneg %p229
      %p338 = pneg %p226
      %p339 = scmp.lt.s32.totalorder %s23, 1
      %s340 = scalar_select %p339, %s23, 1
      %p341 = scmp.lt.s32.totalorder %s24, 1
      %s342 = scalar_select %p341, %s24, 1
      %s343 = smul.addr %s340, 2
      %s344 = sadd.s32 %s342, %s343
      %s345 = scalar_lea.vmem %s7, %s344
      %p346 = scmp.lt.s32.totalorder %s23, 1
      %s347 = scalar_select %p346, %s23, 1
      %p348 = scmp.lt.s32.totalorder %s24, 1
      %s349 = scalar_select %p348, %s24, 1
      %s350 = smul.addr %s349, 30
      %s351 = smul.addr %s347, 60
      %s352 = sadd.s32 %s350, %s351
      %s353 = smul.addr %s352, 4
      %s354 = scalar_lea.vmem %s0, %s353
      %p355 = scmp.lt.s32.totalorder %s23, 1
      %s356 = scalar_select %p355, %s23, 1
      %p357 = scmp.lt.s32.totalorder %s24, 1
      %s358 = scalar_select %p357, %s24, 1
      %s359 = smul.addr %s358, 30
      %s360 = smul.addr %s356, 60
      %s361 = sadd.s32 %s359, %s360
      %s362 = smul.addr %s361, 4
      %s363 = scalar_lea.vmem %s1, %s362
      %s364 = smul.u32 8, %s24
      %p365 = scmp.lt.s32.totalorder %s23, 1
      %s366 = scalar_select %p365, %s23, 1
      %p367 = scmp.lt.s32.totalorder %s364, 15
      %s368 = scalar_select %p367, %s364, 15
      %s369 = smul.addr %s368, 2
      %s370 = smul.addr %s366, 32
      %s371 = sadd.s32 %s369, %s370
      %s372 = smul.addr %s371, 8
      %s373 = scalar_lea.vmem %s5, %s372
      %s374 = smul.u32 8, %s24
      %p375 = scmp.lt.s32.totalorder %s23, 1
      %s376 = scalar_select %p375, %s23, 1
      %p377 = scmp.lt.s32.totalorder %s24, 1
      %s378 = scalar_select %p377, %s24, 1
      %s379 = smul.addr %s376, 2
      %s380 = sadd.s32 %s378, %s379
      %s381 = scalar_lea.vmem %s6, %s380
      %p382 = scmp.lt.s32.totalorder %s23, 1
      %s383 = scalar_select %p382, %s23, 1
      %p384 = scmp.lt.s32.totalorder %s24, 1
      %s385 = scalar_select %p384, %s24, 1
      %s386 = smul.addr %s383, 2
      %s387 = sadd.s32 %s385, %s386
      %s388 = scalar_lea.vmem %s7, %s387
      %v390 = vld [vmem:[%s354] sm:$0xf]
      %v391 = vld [vmem:[%s354 + $0x4] sm:$0xf]
      %v392 = vld [vmem:[%s354 + $0xc] sm:$0xf]
      %v393 = vld [vmem:[%s354 + $0x10] sm:$0xf]
      %v394 = vld [vmem:[%s354 + $0x18] sm:$0xf]
      %v395 = vld [vmem:[%s354 + $0x1c] sm:$0xf]
      %v396 = vld [vmem:[%s354 + $0x24] sm:$0xf]
      %v397 = vld [vmem:[%s354 + $0x28] sm:$0xf]
      %v398 = vld [vmem:[%s354 + $0x30] sm:$0xf]
      %v399 = vld [vmem:[%s354 + $0x34] sm:$0xf]
      %v400 = vld [vmem:[%s354 + $0x3c] sm:$0xf]
      %v401 = vld [vmem:[%s354 + $0x40] sm:$0xf]
      %v402 = vld [vmem:[%s354 + $0x48] sm:$0xf]
      %v403 = vld [vmem:[%s354 + $0x4c] sm:$0xf]
      %v404 = vld [vmem:[%s354 + $0x54] sm:$0xf]
      %v405 = vld [vmem:[%s354 + $0x58] sm:$0xf]
      %v406 = vld [vmem:[%s2] sm:$0x3]
      %v407 = vld [vmem:[%s354 + $0x8] sm:$0x1]
      %v408 = vld [vmem:[%s354 + $0x14] sm:$0x1]
      %v409 = vld [vmem:[%s354 + $0x20] sm:$0x1]
      %v410 = vld [vmem:[%s354 + $0x2c] sm:$0x1]
      %v411 = vld [vmem:[%s354 + $0x38] sm:$0x1]
      %v412 = vld [vmem:[%s354 + $0x44] sm:$0x1]
      %v413 = vld [vmem:[%s354 + $0x50] sm:$0x1]
      %v414 = vld [vmem:[%s354 + $0x5c] sm:$0x1]
      %vm415 = vsmask.f32 3328
      %vm416 = vsmask.f32 7440
      %vm417 = vmor %vm415, %vm416
      %v419 = vshrl.u32 %v390, 16
      %v421 = vrot.slane %v419, 4
      %v422 = vshll.u32 %v390, 16
      %v424 = vrot.slane %v422, 5
      %v425 = vor.u32 %v421, %v424
      %v426 = vrot.slane %v425, 4
      %v428 = vshll.u32 %v391, 16
      %v430 = vrot.slane %v428, 5
      %v431 = vsel %vm417, %v426, %v430
      %v432 = vshrl.u32 %v391, 16
      %v434 = vrot.slane %v432, 4
      %v435 = vor.u32 %v434, %v430
      %v436 = vrot.slane %v435, 4
      %v438 = vshll.u32 %v407, 16
      %v440 = vrot.slane %v438, 5
      %v441 = vsel %vm417, %v436, %v440
      %v443 = vshrl.u32 %v392, 16
      %v445 = vrot.slane %v443, 4
      %v446 = vshll.u32 %v392, 16
      %v448 = vrot.slane %v446, 5
      %v449 = vor.u32 %v445, %v448
      %v450 = vrot.slane %v449, 4
      %v452 = vshll.u32 %v393, 16
      %v454 = vrot.slane %v452, 5
      %v455 = vsel %vm417, %v450, %v454
      %v456 = vshrl.u32 %v393, 16
      %v458 = vrot.slane %v456, 4
      %v459 = vor.u32 %v458, %v454
      %v460 = vrot.slane %v459, 4
      %v462 = vshll.u32 %v408, 16
      %v464 = vrot.slane %v462, 5
      %v465 = vsel %vm417, %v460, %v464
      %v467 = vshrl.u32 %v394, 16
      %v469 = vrot.slane %v467, 4
      %v470 = vshll.u32 %v394, 16
      %v472 = vrot.slane %v470, 5
      %v473 = vor.u32 %v469, %v472
      %v474 = vrot.slane %v473, 4
      %v476 = vshll.u32 %v395, 16
      %v478 = vrot.slane %v476, 5
      %v479 = vsel %vm417, %v474, %v478
      %v480 = vshrl.u32 %v395, 16
      %v482 = vrot.slane %v480, 4
      %v483 = vor.u32 %v482, %v478
      %v484 = vrot.slane %v483, 4
      %v486 = vshll.u32 %v409, 16
      %v488 = vrot.slane %v486, 5
      %v489 = vsel %vm417, %v484, %v488
      %v491 = vshrl.u32 %v396, 16
      %v493 = vrot.slane %v491, 4
      %v494 = vshll.u32 %v396, 16
      %v496 = vrot.slane %v494, 5
      %v497 = vor.u32 %v493, %v496
      %v498 = vrot.slane %v497, 4
      %v500 = vshll.u32 %v397, 16
      %v502 = vrot.slane %v500, 5
      %v503 = vsel %vm417, %v498, %v502
      %v504 = vshrl.u32 %v397, 16
      %v506 = vrot.slane %v504, 4
      %v507 = vor.u32 %v506, %v502
      %v508 = vrot.slane %v507, 4
      %v510 = vshll.u32 %v410, 16
      %v512 = vrot.slane %v510, 5
      %v513 = vsel %vm417, %v508, %v512
      %v515 = vshrl.u32 %v398, 16
      %v517 = vrot.slane %v515, 4
      %v518 = vshll.u32 %v398, 16
      %v520 = vrot.slane %v518, 5
      %v521 = vor.u32 %v517, %v520
      %v522 = vrot.slane %v521, 4
      %v524 = vshll.u32 %v399, 16
      %v526 = vrot.slane %v524, 5
      %v527 = vsel %vm417, %v522, %v526
      %v528 = vshrl.u32 %v399, 16
      %v530 = vrot.slane %v528, 4
      %v531 = vor.u32 %v530, %v526
      %v532 = vrot.slane %v531, 4
      %v534 = vshll.u32 %v411, 16
      %v536 = vrot.slane %v534, 5
      %v537 = vsel %vm417, %v532, %v536
      %v539 = vshrl.u32 %v400, 16
      %v541 = vrot.slane %v539, 4
      %v542 = vshll.u32 %v400, 16
      %v544 = vrot.slane %v542, 5
      %v545 = vor.u32 %v541, %v544
      %v546 = vrot.slane %v545, 4
      %v548 = vshll.u32 %v401, 16
      %v550 = vrot.slane %v548, 5
      %v551 = vsel %vm417, %v546, %v550
      %v552 = vshrl.u32 %v401, 16
      %v554 = vrot.slane %v552, 4
      %v555 = vor.u32 %v554, %v550
      %v556 = vrot.slane %v555, 4
      %v558 = vshll.u32 %v412, 16
      %v560 = vrot.slane %v558, 5
      %v561 = vsel %vm417, %v556, %v560
      %v563 = vshrl.u32 %v402, 16
      %v565 = vrot.slane %v563, 4
      %v566 = vshll.u32 %v402, 16
      %v568 = vrot.slane %v566, 5
      %v569 = vor.u32 %v565, %v568
      %v570 = vrot.slane %v569, 4
      %v572 = vshll.u32 %v403, 16
      %v574 = vrot.slane %v572, 5
      %v575 = vsel %vm417, %v570, %v574
      %v576 = vshrl.u32 %v403, 16
      %v578 = vrot.slane %v576, 4
      %v579 = vor.u32 %v578, %v574
      %v580 = vrot.slane %v579, 4
      %v582 = vshll.u32 %v413, 16
      %v584 = vrot.slane %v582, 5
      %v585 = vsel %vm417, %v580, %v584
      %v587 = vshrl.u32 %v404, 16
      %v589 = vrot.slane %v587, 4
      %v590 = vshll.u32 %v404, 16
      %v592 = vrot.slane %v590, 5
      %v593 = vor.u32 %v589, %v592
      %v594 = vrot.slane %v593, 4
      %v596 = vshll.u32 %v405, 16
      %v598 = vrot.slane %v596, 5
      %v599 = vsel %vm417, %v594, %v598
      %v600 = vshrl.u32 %v405, 16
      %v602 = vrot.slane %v600, 4
      %v603 = vor.u32 %v602, %v598
      %v604 = vrot.slane %v603, 4
      %v606 = vshll.u32 %v414, 16
      %v608 = vrot.slane %v606, 5
      %v609 = vsel %vm417, %v604, %v608
      %s610 = scalar_lea.vmem %s2, 2
      %v611 = vld [vmem:[%s610] sm:$0x3]
      %v612 = vunpack.c.l.b16 %v431
      %v613 = vunpack.c.l.b16 %v441
      %v614 = vunpack.c.l.b16 %v455
      %v615 = vunpack.c.l.b16 %v465
      %v616 = vunpack.c.l.b16 %v479
      %v617 = vunpack.c.l.b16 %v489
      %v618 = vunpack.c.l.b16 %v503
      %v619 = vunpack.c.l.b16 %v513
      %v620 = vunpack.c.l.b16 %v527
      %v621 = vunpack.c.l.b16 %v537
      %v622 = vunpack.c.l.b16 %v551
      %v623 = vunpack.c.l.b16 %v561
      %v624 = vunpack.c.l.b16 %v575
      %v625 = vunpack.c.l.b16 %v585
      %v626 = vunpack.c.l.b16 %v599
      %v627 = vunpack.c.l.b16 %v609
      %v628 = vpack.c.b16 %v613, %v612
      %v629 = vpack.c.b16 %v615, %v614
      %v630 = vpack.c.b16 %v617, %v616
      %v631 = vpack.c.b16 %v619, %v618
      %v632 = vpack.c.b16 %v621, %v620
      %v633 = vpack.c.b16 %v623, %v622
      %v634 = vpack.c.b16 %v625, %v624
      %v635 = vpack.c.b16 %v627, %v626
      %vm636 = vcmask 31744
      %v638 = vsel %vm636, %v628, 0
      %v641 = vsel %vm636, %v629, 0
      %v644 = vsel %vm636, %v630, 0
      %v647 = vsel %vm636, %v631, 0
      %v650 = vsel %vm636, %v632, 0
      %v653 = vsel %vm636, %v633, 0
      %v656 = vsel %vm636, %v634, 0
      %v659 = vsel %vm636, %v635, 0
      %vm661 = vcmask 1041408
      %v663 = vsel %vm661, %v611, 0
      %665 = vmatprep.subr.bf16.mxu0 0
      %666 = vmatpush1.bf16.msra.mxu0 %v663
      %667 = vmatprep.subr.bf16.mxu0 0
      %668 = vmatpush1.bf16.msra.mxu0 0
      %669 = vmatprep.subr.bf16.mxu0 0
      %670 = vmatpush1.bf16.msra.mxu0 0
      %671 = vmatprep.subr.bf16.mxu0 0
      %672 = vmatpush1.bf16.msra.mxu0 0
      %673 = vmatprep.subr.bf16.mxu0 0
      %674 = vmatpush1.bf16.msra.mxu0 0
      %675 = vmatprep.subr.bf16.mxu0 0
      %676 = vmatpush1.bf16.msra.mxu0 0
      %677 = vmatprep.subr.bf16.mxu0 0
      %678 = vmatpush1.bf16.msra.mxu0 0
      %679 = vmatprep.subr.bf16.mxu0 0
      %680 = vmatpush1.bf16.msra.mxu0 0
      %681 = vmatprep.subr.bf16.mxu0 0
      %682 = vmatpush1.bf16.msra.mxu0 0
      %683 = vmatprep.subr.bf16.mxu0 0
      %684 = vmatpush1.bf16.msra.mxu0 0
      %685 = vmatprep.subr.bf16.mxu0 0
      %686 = vmatpush1.bf16.msra.mxu0 0
      %687 = vmatprep.subr.bf16.mxu0 0
      %688 = vmatpush1.bf16.msra.mxu0 0
      %689 = vmatprep.subr.bf16.mxu0 0
      %690 = vmatpush1.bf16.msra.mxu0 0
      %691 = vmatprep.subr.bf16.mxu0 0
      %692 = vmatpush1.bf16.msra.mxu0 0
      %693 = vmatprep.subr.bf16.mxu0 0
      %694 = vmatpush1.bf16.msra.mxu0 0
      %695 = vmatprep.subr.bf16.mxu0 0
      %696 = vmatpush1.bf16.msra.mxu0 0
      %697 = vmatprep.mubr.bf16.mxu0 0
      %698 = vmatmul.mubr.bf16.gmra.mrb[0].mxu0 %v638
      %v699 = vpop.f32.mrb[0].mxu0
      %v700 = vadd.f32 0.0, %v699
      %v701 = vpop.f32.mrb[0].mxu0
      %v702 = vpop.f32.mrb[0].mxu0
      %v703 = vadd.f32 0.0, %v702
      %v704 = vpop.f32.mrb[0].mxu0
      %705 = vmatprep.mubr.bf16.mxu0 0
      %706 = vmatmul.mubr.bf16.gmra.mrb[0].mxu0 %v641
      %v707 = vpop.f32.mrb[0].mxu0
      %v708 = vadd.f32 0.0, %v707
      %v709 = vpop.f32.mrb[0].mxu0
      %v710 = vpop.f32.mrb[0].mxu0
      %v711 = vadd.f32 0.0, %v710
      %v712 = vpop.f32.mrb[0].mxu0
      %713 = vmatprep.mubr.bf16.mxu0 0
      %714 = vmatmul.mubr.bf16.gmra.mrb[0].mxu0 %v644
      %v715 = vpop.f32.mrb[0].mxu0
      %v716 = vadd.f32 0.0, %v715
      %v717 = vpop.f32.mrb[0].mxu0
      %v718 = vpop.f32.mrb[0].mxu0
      %v719 = vadd.f32 0.0, %v718
      %v720 = vpop.f32.mrb[0].mxu0
      %721 = vmatprep.mubr.bf16.mxu0 0
      %722 = vmatmul.mubr.bf16.gmra.mrb[0].mxu0 %v647
      %v723 = vpop.f32.mrb[0].mxu0
      %v724 = vadd.f32 0.0, %v723
      %v725 = vpop.f32.mrb[0].mxu0
      %v726 = vpop.f32.mrb[0].mxu0
      %v727 = vadd.f32 0.0, %v726
      %v728 = vpop.f32.mrb[0].mxu0
      %729 = vmatprep.mubr.bf16.mxu0 0
      %730 = vmatmul.mubr.bf16.gmra.mrb[0].mxu0 %v650
      %v731 = vpop.f32.mrb[0].mxu0
      %v732 = vadd.f32 0.0, %v731
      %v733 = vpop.f32.mrb[0].mxu0
      %v734 = vpop.f32.mrb[0].mxu0
      %v735 = vadd.f32 0.0, %v734
      %v736 = vpop.f32.mrb[0].mxu0
      %737 = vmatprep.mubr.bf16.mxu0 0
      %738 = vmatmul.mubr.bf16.gmra.mrb[0].mxu0 %v653
      %v739 = vpop.f32.mrb[0].mxu0
      %v740 = vadd.f32 0.0, %v739
      %v741 = vpop.f32.mrb[0].mxu0
      %v742 = vpop.f32.mrb[0].mxu0
      %v743 = vadd.f32 0.0, %v742
      %v744 = vpop.f32.mrb[0].mxu0
      %745 = vmatprep.mubr.bf16.mxu0 0
      %746 = vmatmul.mubr.bf16.gmra.mrb[0].mxu0 %v656
      %v747 = vpop.f32.mrb[0].mxu0
      %v748 = vadd.f32 0.0, %v747
      %v749 = vpop.f32.mrb[0].mxu0
      %v750 = vpop.f32.mrb[0].mxu0
      %v751 = vadd.f32 0.0, %v750
      %v752 = vpop.f32.mrb[0].mxu0
      %753 = vmatprep.mubr.bf16.mxu0 0
      %754 = vmatmul.mubr.bf16.gmra.mrb[0].mxu0 %v659
      %v755 = vpop.f32.mrb[0].mxu0
      %v756 = vadd.f32 0.0, %v755
      %v757 = vpop.f32.mrb[0].mxu0
      %v758 = vpop.f32.mrb[0].mxu0
      %v759 = vadd.f32 0.0, %v758
      %v760 = vpop.f32.mrb[0].mxu0
      %761 = vdwg.mxu0
      %v778 = vunpack.c.l.b16 %v390
      %v779 = vunpack.c.l.b16 %v391
      %v780 = vunpack.c.l.b16 %v392
      %v781 = vunpack.c.l.b16 %v393
      %v782 = vunpack.c.l.b16 %v394
      %v783 = vunpack.c.l.b16 %v395
      %v784 = vunpack.c.l.b16 %v396
      %v785 = vunpack.c.l.b16 %v397
      %v786 = vunpack.c.l.b16 %v398
      %v787 = vunpack.c.l.b16 %v399
      %v788 = vunpack.c.l.b16 %v400
      %v789 = vunpack.c.l.b16 %v401
      %v790 = vunpack.c.l.b16 %v402
      %v791 = vunpack.c.l.b16 %v403
      %v792 = vunpack.c.l.b16 %v404
      %v793 = vunpack.c.l.b16 %v405
      %v794 = vpack.c.b16 %v779, %v778
      %v795 = vpack.c.b16 %v781, %v780
      %v796 = vpack.c.b16 %v783, %v782
      %v797 = vpack.c.b16 %v785, %v784
      %v798 = vpack.c.b16 %v787, %v786
      %v799 = vpack.c.b16 %v789, %v788
      %v800 = vpack.c.b16 %v791, %v790
      %v801 = vpack.c.b16 %v793, %v792
      %v803 = vsel %vm636, %v794, 0
      %v806 = vsel %vm636, %v795, 0
      %v809 = vsel %vm636, %v796, 0
      %v812 = vsel %vm636, %v797, 0
      %v815 = vsel %vm636, %v798, 0
      %v818 = vsel %vm636, %v799, 0
      %v821 = vsel %vm636, %v800, 0
      %v824 = vsel %vm636, %v801, 0
      %v827 = vsel %vm661, %v406, 0
      %829 = vmatprep.subr.bf16.mxu0 0
      %830 = vmatpush1.bf16.msra.mxu0 %v827
      %831 = vmatprep.subr.bf16.mxu0 0
      %832 = vmatpush1.bf16.msra.mxu0 0
      %833 = vmatprep.subr.bf16.mxu0 0
      %834 = vmatpush1.bf16.msra.mxu0 0
      %835 = vmatprep.subr.bf16.mxu0 0
      %836 = vmatpush1.bf16.msra.mxu0 0
      %837 = vmatprep.subr.bf16.mxu0 0
      %838 = vmatpush1.bf16.msra.mxu0 0
      %839 = vmatprep.subr.bf16.mxu0 0
      %840 = vmatpush1.bf16.msra.mxu0 0
      %841 = vmatprep.subr.bf16.mxu0 0
      %842 = vmatpush1.bf16.msra.mxu0 0
      %843 = vmatprep.subr.bf16.mxu0 0
      %844 = vmatpush1.bf16.msra.mxu0 0
      %845 = vmatprep.subr.bf16.mxu0 0
      %846 = vmatpush1.bf16.msra.mxu0 0
      %847 = vmatprep.subr.bf16.mxu0 0
      %848 = vmatpush1.bf16.msra.mxu0 0
      %849 = vmatprep.subr.bf16.mxu0 0
      %850 = vmatpush1.bf16.msra.mxu0 0
      %851 = vmatprep.subr.bf16.mxu0 0
      %852 = vmatpush1.bf16.msra.mxu0 0
      %853 = vmatprep.subr.bf16.mxu0 0
      %854 = vmatpush1.bf16.msra.mxu0 0
      %855 = vmatprep.subr.bf16.mxu0 0
      %856 = vmatpush1.bf16.msra.mxu0 0
      %857 = vmatprep.subr.bf16.mxu0 0
      %858 = vmatpush1.bf16.msra.mxu0 0
      %859 = vmatprep.subr.bf16.mxu0 0
      %860 = vmatpush1.bf16.msra.mxu0 0
      %861 = vmatprep.mubr.bf16.mxu0 0
      %862 = vmatmul.mubr.bf16.gmra.mrb[0].mxu0 %v803
      %v863 = vpop.f32.mrb[0].mxu0
      %v864 = vadd.f32 %v700, %v863
      %v865 = vpop.f32.mrb[0].mxu0
      %v866 = vpop.f32.mrb[0].mxu0
      %v867 = vadd.f32 %v703, %v866
      %v868 = vpop.f32.mrb[0].mxu0
      %869 = vmatprep.mubr.bf16.mxu0 0
      %870 = vmatmul.mubr.bf16.gmra.mrb[0].mxu0 %v806
      %v871 = vpop.f32.mrb[0].mxu0
      %v872 = vadd.f32 %v708, %v871
      %v873 = vpop.f32.mrb[0].mxu0
      %v874 = vpop.f32.mrb[0].mxu0
      %v875 = vadd.f32 %v711, %v874
      %v876 = vpop.f32.mrb[0].mxu0
      %877 = vmatprep.mubr.bf16.mxu0 0
      %878 = vmatmul.mubr.bf16.gmra.mrb[0].mxu0 %v809
      %v879 = vpop.f32.mrb[0].mxu0
      %v880 = vadd.f32 %v716, %v879
      %v881 = vpop.f32.mrb[0].mxu0
      %v882 = vpop.f32.mrb[0].mxu0
      %v883 = vadd.f32 %v719, %v882
      %v884 = vpop.f32.mrb[0].mxu0
      %885 = vmatprep.mubr.bf16.mxu0 0
      %886 = vmatmul.mubr.bf16.gmra.mrb[0].mxu0 %v812
      %v887 = vpop.f32.mrb[0].mxu0
      %v888 = vadd.f32 %v724, %v887
      %v889 = vpop.f32.mrb[0].mxu0
      %v890 = vpop.f32.mrb[0].mxu0
      %v891 = vadd.f32 %v727, %v890
      %v892 = vpop.f32.mrb[0].mxu0
      %893 = vmatprep.mubr.bf16.mxu0 0
      %894 = vmatmul.mubr.bf16.gmra.mrb[0].mxu0 %v815
      %v895 = vpop.f32.mrb[0].mxu0
      %v896 = vadd.f32 %v732, %v895
      %v897 = vpop.f32.mrb[0].mxu0
      %v898 = vpop.f32.mrb[0].mxu0
      %v899 = vadd.f32 %v735, %v898
      %v900 = vpop.f32.mrb[0].mxu0
      %901 = vmatprep.mubr.bf16.mxu0 0
      %902 = vmatmul.mubr.bf16.gmra.mrb[0].mxu0 %v818
      %v903 = vpop.f32.mrb[0].mxu0
      %v904 = vadd.f32 %v740, %v903
      %v905 = vpop.f32.mrb[0].mxu0
      %v906 = vpop.f32.mrb[0].mxu0
      %v907 = vadd.f32 %v743, %v906
      %v908 = vpop.f32.mrb[0].mxu0
      %909 = vmatprep.mubr.bf16.mxu0 0
      %910 = vmatmul.mubr.bf16.gmra.mrb[0].mxu0 %v821
      %v911 = vpop.f32.mrb[0].mxu0
      %v912 = vadd.f32 %v748, %v911
      %v913 = vpop.f32.mrb[0].mxu0
      %v914 = vpop.f32.mrb[0].mxu0
      %v915 = vadd.f32 %v751, %v914
      %v916 = vpop.f32.mrb[0].mxu0
      %917 = vmatprep.mubr.bf16.mxu0 0
      %918 = vmatmul.mubr.bf16.gmra.mrb[0].mxu0 %v824
      %v919 = vpop.f32.mrb[0].mxu0
      %v920 = vadd.f32 %v756, %v919
      %v921 = vpop.f32.mrb[0].mxu0
      %v922 = vpop.f32.mrb[0].mxu0
      %v923 = vadd.f32 %v759, %v922
      %v924 = vpop.f32.mrb[0].mxu0
      %925 = vdwg.mxu0
      %v926 = vld [vmem:[%s354] sm:$0xe]
      %v927 = vld [vmem:[%s354 + $0xc] sm:$0xe]
      %v928 = vld [vmem:[%s354 + $0x18] sm:$0xe]
      %v929 = vld [vmem:[%s354 + $0x24] sm:$0xe]
      %v930 = vld [vmem:[%s354 + $0x30] sm:$0xe]
      %v931 = vld [vmem:[%s354 + $0x3c] sm:$0xe]
      %v932 = vld [vmem:[%s354 + $0x48] sm:$0xe]
      %v933 = vld [vmem:[%s354 + $0x54] sm:$0xe]
      %vm950 = vcmask 1042432
      %vm951 = vcmask 1046532
      %vm952 = vmor %vm950, %vm951
      %v953 = vrot.slane %v926, 5
      %v954 = vrot.slane %v953, 4
      %v955 = vrot.slane %v391, 5
      %v956 = vsel %vm952, %v954, %v955
      %v957 = vrot.slane %v955, 4
      %v958 = vrot.slane %v407, 5
      %v959 = vsel %vm952, %v957, %v958
      %v960 = vrot.slane %v927, 5
      %v961 = vrot.slane %v960, 4
      %v962 = vrot.slane %v393, 5
      %v963 = vsel %vm952, %v961, %v962
      %v964 = vrot.slane %v962, 4
      %v965 = vrot.slane %v408, 5
      %v966 = vsel %vm952, %v964, %v965
      %v967 = vrot.slane %v928, 5
      %v968 = vrot.slane %v967, 4
      %v969 = vrot.slane %v395, 5
      %v970 = vsel %vm952, %v968, %v969
      %v971 = vrot.slane %v969, 4
      %v972 = vrot.slane %v409, 5
      %v973 = vsel %vm952, %v971, %v972
      %v974 = vrot.slane %v929, 5
      %v975 = vrot.slane %v974, 4
      %v976 = vrot.slane %v397, 5
      %v977 = vsel %vm952, %v975, %v976
      %v978 = vrot.slane %v976, 4
      %v979 = vrot.slane %v410, 5
      %v980 = vsel %vm952, %v978, %v979
      %v981 = vrot.slane %v930, 5
      %v982 = vrot.slane %v981, 4
      %v983 = vrot.slane %v399, 5
      %v984 = vsel %vm952, %v982, %v983
      %v985 = vrot.slane %v983, 4
      %v986 = vrot.slane %v411, 5
      %v987 = vsel %vm952, %v985, %v986
      %v988 = vrot.slane %v931, 5
      %v989 = vrot.slane %v988, 4
      %v990 = vrot.slane %v401, 5
      %v991 = vsel %vm952, %v989, %v990
      %v992 = vrot.slane %v990, 4
      %v993 = vrot.slane %v412, 5
      %v994 = vsel %vm952, %v992, %v993
      %v995 = vrot.slane %v932, 5
      %v996 = vrot.slane %v995, 4
      %v997 = vrot.slane %v403, 5
      %v998 = vsel %vm952, %v996, %v997
      %v999 = vrot.slane %v997, 4
      %v1000 = vrot.slane %v413, 5
      %v1001 = vsel %vm952, %v999, %v1000
      %v1002 = vrot.slane %v933, 5
      %v1003 = vrot.slane %v1002, 4
      %v1004 = vrot.slane %v405, 5
      %v1005 = vsel %vm952, %v1003, %v1004
      %v1006 = vrot.slane %v1004, 4
      %v1007 = vrot.slane %v414, 5
      %v1008 = vsel %vm952, %v1006, %v1007
      %s1009 = scalar_lea.vmem %s2, 4
      %v1010 = vld [vmem:[%s1009] sm:$0x3]
      %v1011 = vunpack.c.l.b16 %v956
      %v1012 = vunpack.c.l.b16 %v959
      %v1013 = vunpack.c.l.b16 %v963
      %v1014 = vunpack.c.l.b16 %v966
      %v1015 = vunpack.c.l.b16 %v970
      %v1016 = vunpack.c.l.b16 %v973
      %v1017 = vunpack.c.l.b16 %v977
      %v1018 = vunpack.c.l.b16 %v980
      %v1019 = vunpack.c.l.b16 %v984
      %v1020 = vunpack.c.l.b16 %v987
      %v1021 = vunpack.c.l.b16 %v991
      %v1022 = vunpack.c.l.b16 %v994
      %v1023 = vunpack.c.l.b16 %v998
      %v1024 = vunpack.c.l.b16 %v1001
      %v1025 = vunpack.c.l.b16 %v1005
      %v1026 = vunpack.c.l.b16 %v1008
      %v1027 = vpack.c.b16 %v1012, %v1011
      %v1028 = vpack.c.b16 %v1014, %v1013
      %v1029 = vpack.c.b16 %v1016, %v1015
      %v1030 = vpack.c.b16 %v1018, %v1017
      %v1031 = vpack.c.b16 %v1020, %v1019
      %v1032 = vpack.c.b16 %v1022, %v1021
      %v1033 = vpack.c.b16 %v1024, %v1023
      %v1034 = vpack.c.b16 %v1026, %v1025
      %v1036 = vsel %vm636, %v1027, 0
      %v1039 = vsel %vm636, %v1028, 0
      %v1042 = vsel %vm636, %v1029, 0
      %v1045 = vsel %vm636, %v1030, 0
      %v1048 = vsel %vm636, %v1031, 0
      %v1051 = vsel %vm636, %v1032, 0
      %v1054 = vsel %vm636, %v1033, 0
      %v1057 = vsel %vm636, %v1034, 0
      %v1060 = vsel %vm661, %v1010, 0
      %1062 = vmatprep.subr.bf16.mxu0 0
      %1063 = vmatpush1.bf16.msra.mxu0 %v1060
      %1064 = vmatprep.subr.bf16.mxu0 0
      %1065 = vmatpush1.bf16.msra.mxu0 0
      %1066 = vmatprep.subr.bf16.mxu0 0
      %1067 = vmatpush1.bf16.msra.mxu0 0
      %1068 = vmatprep.subr.bf16.mxu0 0
      %1069 = vmatpush1.bf16.msra.mxu0 0
      %1070 = vmatprep.subr.bf16.mxu0 0
      %1071 = vmatpush1.bf16.msra.mxu0 0
      %1072 = vmatprep.subr.bf16.mxu0 0
      %1073 = vmatpush1.bf16.msra.mxu0 0
      %1074 = vmatprep.subr.bf16.mxu0 0
      %1075 = vmatpush1.bf16.msra.mxu0 0
      %1076 = vmatprep.subr.bf16.mxu0 0
      %1077 = vmatpush1.bf16.msra.mxu0 0
      %1078 = vmatprep.subr.bf16.mxu0 0
      %1079 = vmatpush1.bf16.msra.mxu0 0
      %1080 = vmatprep.subr.bf16.mxu0 0
      %1081 = vmatpush1.bf16.msra.mxu0 0
      %1082 = vmatprep.subr.bf16.mxu0 0
      %1083 = vmatpush1.bf16.msra.mxu0 0
      %1084 = vmatprep.subr.bf16.mxu0 0
      %1085 = vmatpush1.bf16.msra.mxu0 0
      %1086 = vmatprep.subr.bf16.mxu0 0
      %1087 = vmatpush1.bf16.msra.mxu0 0
      %1088 = vmatprep.subr.bf16.mxu0 0
      %1089 = vmatpush1.bf16.msra.mxu0 0
      %1090 = vmatprep.subr.bf16.mxu0 0
      %1091 = vmatpush1.bf16.msra.mxu0 0
      %1092 = vmatprep.subr.bf16.mxu0 0
      %1093 = vmatpush1.bf16.msra.mxu0 0
      %1094 = vmatprep.mubr.bf16.mxu0 0
      %1095 = vmatmul.mubr.bf16.gmra.mrb[0].mxu0 %v1036
      %v1096 = vpop.f32.mrb[0].mxu0
      %v1097 = vadd.f32 0.0, %v1096
      %v1098 = vpop.f32.mrb[0].mxu0
      %v1099 = vpop.f32.mrb[0].mxu0
      %v1100 = vadd.f32 0.0, %v1099
      %v1101 = vpop.f32.mrb[0].mxu0
      %1102 = vmatprep.mubr.bf16.mxu0 0
      %1103 = vmatmul.mubr.bf16.gmra.mrb[0].mxu0 %v1039
      %v1104 = vpop.f32.mrb[0].mxu0
      %v1105 = vadd.f32 0.0, %v1104
      %v1106 = vpop.f32.mrb[0].mxu0
      %v1107 = vpop.f32.mrb[0].mxu0
      %v1108 = vadd.f32 0.0, %v1107
      %v1109 = vpop.f32.mrb[0].mxu0
      %1110 = vmatprep.mubr.bf16.mxu0 0
      %1111 = vmatmul.mubr.bf16.gmra.mrb[0].mxu0 %v1042
      %v1112 = vpop.f32.mrb[0].mxu0
      %v1113 = vadd.f32 0.0, %v1112
      %v1114 = vpop.f32.mrb[0].mxu0
      %v1115 = vpop.f32.mrb[0].mxu0
      %v1116 = vadd.f32 0.0, %v1115
      %v1117 = vpop.f32.mrb[0].mxu0
      %1118 = vmatprep.mubr.bf16.mxu0 0
      %1119 = vmatmul.mubr.bf16.gmra.mrb[0].mxu0 %v1045
      %v1120 = vpop.f32.mrb[0].mxu0
      %v1121 = vadd.f32 0.0, %v1120
      %v1122 = vpop.f32.mrb[0].mxu0
      %v1123 = vpop.f32.mrb[0].mxu0
      %v1124 = vadd.f32 0.0, %v1123
      %v1125 = vpop.f32.mrb[0].mxu0
      %1126 = vmatprep.mubr.bf16.mxu0 0
      %1127 = vmatmul.mubr.bf16.gmra.mrb[0].mxu0 %v1048
      %v1128 = vpop.f32.mrb[0].mxu0
      %v1129 = vadd.f32 0.0, %v1128
      %v1130 = vpop.f32.mrb[0].mxu0
      %v1131 = vpop.f32.mrb[0].mxu0
      %v1132 = vadd.f32 0.0, %v1131
      %v1133 = vpop.f32.mrb[0].mxu0
      %1134 = vmatprep.mubr.bf16.mxu0 0
      %1135 = vmatmul.mubr.bf16.gmra.mrb[0].mxu0 %v1051
      %v1136 = vpop.f32.mrb[0].mxu0
      %v1137 = vadd.f32 0.0, %v1136
      %v1138 = vpop.f32.mrb[0].mxu0
      %v1139 = vpop.f32.mrb[0].mxu0
      %v1140 = vadd.f32 0.0, %v1139
      %v1141 = vpop.f32.mrb[0].mxu0
      %1142 = vmatprep.mubr.bf16.mxu0 0
      %1143 = vmatmul.mubr.bf16.gmra.mrb[0].mxu0 %v1054
      %v1144 = vpop.f32.mrb[0].mxu0
      %v1145 = vadd.f32 0.0, %v1144
      %v1146 = vpop.f32.mrb[0].mxu0
      %v1147 = vpop.f32.mrb[0].mxu0
      %v1148 = vadd.f32 0.0, %v1147
      %v1149 = vpop.f32.mrb[0].mxu0
      %1150 = vmatprep.mubr.bf16.mxu0 0
      %1151 = vmatmul.mubr.bf16.gmra.mrb[0].mxu0 %v1057
      %v1152 = vpop.f32.mrb[0].mxu0
      %v1153 = vadd.f32 0.0, %v1152
      %v1154 = vpop.f32.mrb[0].mxu0
      %v1155 = vpop.f32.mrb[0].mxu0
      %v1156 = vadd.f32 0.0, %v1155
      %v1157 = vpop.f32.mrb[0].mxu0
      %1158 = vdwg.mxu0
      %v1159 = vadd.f32 %v864, %v1097
      %v1160 = vadd.f32 %v867, %v1100
      %v1161 = vadd.f32 %v872, %v1105
      %v1162 = vadd.f32 %v875, %v1108
      %v1163 = vadd.f32 %v880, %v1113
      %v1164 = vadd.f32 %v883, %v1116
      %v1165 = vadd.f32 %v888, %v1121
      %v1166 = vadd.f32 %v891, %v1124
      %v1167 = vadd.f32 %v896, %v1129
      %v1168 = vadd.f32 %v899, %v1132
      %v1169 = vadd.f32 %v904, %v1137
      %v1170 = vadd.f32 %v907, %v1140
      %v1171 = vadd.f32 %v912, %v1145
      %v1172 = vadd.f32 %v915, %v1148
      %v1173 = vadd.f32 %v920, %v1153
      %v1174 = vadd.f32 %v923, %v1156
      %s1175 = scalar_lea.vmem %s354, 12
      %v1176 = vld [vmem:[%s1175] sm:$0xf]
      %v1177 = vld [vmem:[%s1175 + $0x4] sm:$0xf]
      %v1178 = vld [vmem:[%s1175 + $0xc] sm:$0xf]
      %v1179 = vld [vmem:[%s1175 + $0x10] sm:$0xf]
      %v1180 = vld [vmem:[%s1175 + $0x18] sm:$0xf]
      %v1181 = vld [vmem:[%s1175 + $0x1c] sm:$0xf]
      %v1182 = vld [vmem:[%s1175 + $0x24] sm:$0xf]
      %v1183 = vld [vmem:[%s1175 + $0x28] sm:$0xf]
      %v1184 = vld [vmem:[%s1175 + $0x30] sm:$0xf]
      %v1185 = vld [vmem:[%s1175 + $0x34] sm:$0xf]
      %v1186 = vld [vmem:[%s1175 + $0x3c] sm:$0xf]
      %v1187 = vld [vmem:[%s1175 + $0x40] sm:$0xf]
      %v1188 = vld [vmem:[%s1175 + $0x48] sm:$0xf]
      %v1189 = vld [vmem:[%s1175 + $0x4c] sm:$0xf]
      %v1190 = vld [vmem:[%s1175 + $0x54] sm:$0xf]
      %v1191 = vld [vmem:[%s1175 + $0x58] sm:$0xf]
      %s1192 = scalar_lea.vmem %s2, 6
      %v1193 = vld [vmem:[%s1192] sm:$0x3]
      %v1210 = vunpack.c.l.b16 %v1176
      %v1211 = vunpack.c.l.b16 %v1177
      %v1212 = vunpack.c.l.b16 %v1178
      %v1213 = vunpack.c.l.b16 %v1179
      %v1214 = vunpack.c.l.b16 %v1180
      %v1215 = vunpack.c.l.b16 %v1181
      %v1216 = vunpack.c.l.b16 %v1182
      %v1217 = vunpack.c.l.b16 %v1183
      %v1218 = vunpack.c.l.b16 %v1184
      %v1219 = vunpack.c.l.b16 %v1185
      %v1220 = vunpack.c.l.b16 %v1186
      %v1221 = vunpack.c.l.b16 %v1187
      %v1222 = vunpack.c.l.b16 %v1188
      %v1223 = vunpack.c.l.b16 %v1189
      %v1224 = vunpack.c.l.b16 %v1190
      %v1225 = vunpack.c.l.b16 %v1191
      %v1226 = vpack.c.b16 %v1211, %v1210
      %v1227 = vpack.c.b16 %v1213, %v1212
      %v1228 = vpack.c.b16 %v1215, %v1214
      %v1229 = vpack.c.b16 %v1217, %v1216
      %v1230 = vpack.c.b16 %v1219, %v1218
      %v1231 = vpack.c.b16 %v1221, %v1220
      %v1232 = vpack.c.b16 %v1223, %v1222
      %v1233 = vpack.c.b16 %v1225, %v1224
      %v1235 = vsel %vm636, %v1226, 0
      %v1238 = vsel %vm636, %v1227, 0
      %v1241 = vsel %vm636, %v1228, 0
      %v1244 = vsel %vm636, %v1229, 0
      %v1247 = vsel %vm636, %v1230, 0
      %v1250 = vsel %vm636, %v1231, 0
      %v1253 = vsel %vm636, %v1232, 0
      %v1256 = vsel %vm636, %v1233, 0
      %v1259 = vsel %vm661, %v1193, 0
      %1261 = vmatprep.subr.bf16.mxu0 0
      %1262 = vmatpush1.bf16.msra.mxu0 %v1259
      %1263 = vmatprep.subr.bf16.mxu0 0
      %1264 = vmatpush1.bf16.msra.mxu0 0
      %1265 = vmatprep.subr.bf16.mxu0 0
      %1266 = vmatpush1.bf16.msra.mxu0 0
      %1267 = vmatprep.subr.bf16.mxu0 0
      %1268 = vmatpush1.bf16.msra.mxu0 0
      %1269 = vmatprep.subr.bf16.mxu0 0
      %1270 = vmatpush1.bf16.msra.mxu0 0
      %1271 = vmatprep.subr.bf16.mxu0 0
      %1272 = vmatpush1.bf16.msra.mxu0 0
      %1273 = vmatprep.subr.bf16.mxu0 0
      %1274 = vmatpush1.bf16.msra.mxu0 0
      %1275 = vmatprep.subr.bf16.mxu0 0
      %1276 = vmatpush1.bf16.msra.mxu0 0
      %1277 = vmatprep.subr.bf16.mxu0 0
      %1278 = vmatpush1.bf16.msra.mxu0 0
      %1279 = vmatprep.subr.bf16.mxu0 0
      %1280 = vmatpush1.bf16.msra.mxu0 0
      %1281 = vmatprep.subr.bf16.mxu0 0
      %1282 = vmatpush1.bf16.msra.mxu0 0
      %1283 = vmatprep.subr.bf16.mxu0 0
      %1284 = vmatpush1.bf16.msra.mxu0 0
      %1285 = vmatprep.subr.bf16.mxu0 0
      %1286 = vmatpush1.bf16.msra.mxu0 0
      %1287 = vmatprep.subr.bf16.mxu0 0
      %1288 = vmatpush1.bf16.msra.mxu0 0
      %1289 = vmatprep.subr.bf16.mxu0 0
      %1290 = vmatpush1.bf16.msra.mxu0 0
      %1291 = vmatprep.subr.bf16.mxu0 0
      %1292 = vmatpush1.bf16.msra.mxu0 0
      %1293 = vmatprep.mubr.bf16.mxu0 0
      %1294 = vmatmul.mubr.bf16.gmra.mrb[0].mxu0 %v1235
      %v1295 = vpop.f32.mrb[0].mxu0
      %v1296 = vadd.f32 0.0, %v1295
      %v1297 = vpop.f32.mrb[0].mxu0
      %v1298 = vpop.f32.mrb[0].mxu0
      %v1299 = vadd.f32 0.0, %v1298
      %v1300 = vpop.f32.mrb[0].mxu0
      %1301 = vmatprep.mubr.bf16.mxu0 0
      %1302 = vmatmul.mubr.bf16.gmra.mrb[0].mxu0 %v1238
      %v1303 = vpop.f32.mrb[0].mxu0
      %v1304 = vadd.f32 0.0, %v1303
      %v1305 = vpop.f32.mrb[0].mxu0
      %v1306 = vpop.f32.mrb[0].mxu0
      %v1307 = vadd.f32 0.0, %v1306
      %v1308 = vpop.f32.mrb[0].mxu0
      %1309 = vmatprep.mubr.bf16.mxu0 0
      %1310 = vmatmul.mubr.bf16.gmra.mrb[0].mxu0 %v1241
      %v1311 = vpop.f32.mrb[0].mxu0
      %v1312 = vadd.f32 0.0, %v1311
      %v1313 = vpop.f32.mrb[0].mxu0
      %v1314 = vpop.f32.mrb[0].mxu0
      %v1315 = vadd.f32 0.0, %v1314
      %v1316 = vpop.f32.mrb[0].mxu0
      %1317 = vmatprep.mubr.bf16.mxu0 0
      %1318 = vmatmul.mubr.bf16.gmra.mrb[0].mxu0 %v1244
      %v1319 = vpop.f32.mrb[0].mxu0
      %v1320 = vadd.f32 0.0, %v1319
      %v1321 = vpop.f32.mrb[0].mxu0
      %v1322 = vpop.f32.mrb[0].mxu0
      %v1323 = vadd.f32 0.0, %v1322
      %v1324 = vpop.f32.mrb[0].mxu0
      %1325 = vmatprep.mubr.bf16.mxu0 0
      %1326 = vmatmul.mubr.bf16.gmra.mrb[0].mxu0 %v1247
      %v1327 = vpop.f32.mrb[0].mxu0
      %v1328 = vadd.f32 0.0, %v1327
      %v1329 = vpop.f32.mrb[0].mxu0
      %v1330 = vpop.f32.mrb[0].mxu0
      %v1331 = vadd.f32 0.0, %v1330
      %v1332 = vpop.f32.mrb[0].mxu0
      %1333 = vmatprep.mubr.bf16.mxu0 0
      %1334 = vmatmul.mubr.bf16.gmra.mrb[0].mxu0 %v1250
      %v1335 = vpop.f32.mrb[0].mxu0
      %v1336 = vadd.f32 0.0, %v1335
      %v1337 = vpop.f32.mrb[0].mxu0
      %v1338 = vpop.f32.mrb[0].mxu0
      %v1339 = vadd.f32 0.0, %v1338
      %v1340 = vpop.f32.mrb[0].mxu0
      %1341 = vmatprep.mubr.bf16.mxu0 0
      %1342 = vmatmul.mubr.bf16.gmra.mrb[0].mxu0 %v1253
      %v1343 = vpop.f32.mrb[0].mxu0
      %v1344 = vadd.f32 0.0, %v1343
      %v1345 = vpop.f32.mrb[0].mxu0
      %v1346 = vpop.f32.mrb[0].mxu0
      %v1347 = vadd.f32 0.0, %v1346
      %v1348 = vpop.f32.mrb[0].mxu0
      %1349 = vmatprep.mubr.bf16.mxu0 0
      %1350 = vmatmul.mubr.bf16.gmra.mrb[0].mxu0 %v1256
      %v1351 = vpop.f32.mrb[0].mxu0
      %v1352 = vadd.f32 0.0, %v1351
      %v1353 = vpop.f32.mrb[0].mxu0
      %v1354 = vpop.f32.mrb[0].mxu0
      %v1355 = vadd.f32 0.0, %v1354
      %v1356 = vpop.f32.mrb[0].mxu0
      %1357 = vdwg.mxu0
      %v1358 = vadd.f32 %v1159, %v1296
      %v1359 = vadd.f32 %v1160, %v1299
      %v1360 = vadd.f32 %v1161, %v1304
      %v1361 = vadd.f32 %v1162, %v1307
      %v1362 = vadd.f32 %v1163, %v1312
      %v1363 = vadd.f32 %v1164, %v1315
      %v1364 = vadd.f32 %v1165, %v1320
      %v1365 = vadd.f32 %v1166, %v1323
      %v1366 = vadd.f32 %v1167, %v1328
      %v1367 = vadd.f32 %v1168, %v1331
      %v1368 = vadd.f32 %v1169, %v1336
      %v1369 = vadd.f32 %v1170, %v1339
      %v1370 = vadd.f32 %v1171, %v1344
      %v1371 = vadd.f32 %v1172, %v1347
      %v1372 = vadd.f32 %v1173, %v1352
      %v1373 = vadd.f32 %v1174, %v1355
      %v1374 = vld [vmem:[%s1175] sm:$0xf]
      %v1375 = vld [vmem:[%s1175 + $0x4] sm:$0xf]
      %v1376 = vld [vmem:[%s1175 + $0x8] sm:$0x1]
      %v1377 = vld [vmem:[%s1175 + $0xc] sm:$0xf]
      %v1378 = vld [vmem:[%s1175 + $0x10] sm:$0xf]
      %v1379 = vld [vmem:[%s1175 + $0x14] sm:$0x1]
      %v1380 = vld [vmem:[%s1175 + $0x18] sm:$0xf]
      %v1381 = vld [vmem:[%s1175 + $0x1c] sm:$0xf]
      %v1382 = vld [vmem:[%s1175 + $0x20] sm:$0x1]
      %v1383 = vld [vmem:[%s1175 + $0x24] sm:$0xf]
      %v1384 = vld [vmem:[%s1175 + $0x28] sm:$0xf]
      %v1385 = vld [vmem:[%s1175 + $0x2c] sm:$0x1]
      %v1386 = vld [vmem:[%s1175 + $0x30] sm:$0xf]
      %v1387 = vld [vmem:[%s1175 + $0x34] sm:$0xf]
      %v1388 = vld [vmem:[%s1175 + $0x38] sm:$0x1]
      %v1389 = vld [vmem:[%s1175 + $0x3c] sm:$0xf]
      %v1390 = vld [vmem:[%s1175 + $0x40] sm:$0xf]
      %v1391 = vld [vmem:[%s1175 + $0x44] sm:$0x1]
      %v1392 = vld [vmem:[%s1175 + $0x48] sm:$0xf]
      %v1393 = vld [vmem:[%s1175 + $0x4c] sm:$0xf]
      %v1394 = vld [vmem:[%s1175 + $0x50] sm:$0x1]
      %v1395 = vld [vmem:[%s1175 + $0x54] sm:$0xf]
      %v1396 = vld [vmem:[%s1175 + $0x58] sm:$0xf]
      %v1397 = vld [vmem:[%s1175 + $0x5c] sm:$0x1]
      %v1399 = vshrl.u32 %v1374, 16
      %v1401 = vrot.slane %v1399, 4
      %v1402 = vshll.u32 %v1374, 16
      %v1404 = vrot.slane %v1402, 5
      %v1405 = vor.u32 %v1401, %v1404
      %v1406 = vrot.slane %v1405, 4
      %v1408 = vshll.u32 %v1375, 16
      %v1410 = vrot.slane %v1408, 5
      %v1411 = vsel %vm417, %v1406, %v1410
      %v1412 = vshrl.u32 %v1375, 16
      %v1414 = vrot.slane %v1412, 4
      %v1415 = vor.u32 %v1414, %v1410
      %v1416 = vrot.slane %v1415, 4
      %v1418 = vshll.u32 %v1376, 16
      %v1420 = vrot.slane %v1418, 5
      %v1421 = vsel %vm417, %v1416, %v1420
      %v1423 = vshrl.u32 %v1377, 16
      %v1425 = vrot.slane %v1423, 4
      %v1426 = vshll.u32 %v1377, 16
      %v1428 = vrot.slane %v1426, 5
      %v1429 = vor.u32 %v1425, %v1428
      %v1430 = vrot.slane %v1429, 4
      %v1432 = vshll.u32 %v1378, 16
      %v1434 = vrot.slane %v1432, 5
      %v1435 = vsel %vm417, %v1430, %v1434
      %v1436 = vshrl.u32 %v1378, 16
      %v1438 = vrot.slane %v1436, 4
      %v1439 = vor.u32 %v1438, %v1434
      %v1440 = vrot.slane %v1439, 4
      %v1442 = vshll.u32 %v1379, 16
      %v1444 = vrot.slane %v1442, 5
      %v1445 = vsel %vm417, %v1440, %v1444
      %v1447 = vshrl.u32 %v1380, 16
      %v1449 = vrot.slane %v1447, 4
      %v1450 = vshll.u32 %v1380, 16
      %v1452 = vrot.slane %v1450, 5
      %v1453 = vor.u32 %v1449, %v1452
      %v1454 = vrot.slane %v1453, 4
      %v1456 = vshll.u32 %v1381, 16
      %v1458 = vrot.slane %v1456, 5
      %v1459 = vsel %vm417, %v1454, %v1458
      %v1460 = vshrl.u32 %v1381, 16
      %v1462 = vrot.slane %v1460, 4
      %v1463 = vor.u32 %v1462, %v1458
      %v1464 = vrot.slane %v1463, 4
      %v1466 = vshll.u32 %v1382, 16
      %v1468 = vrot.slane %v1466, 5
      %v1469 = vsel %vm417, %v1464, %v1468
      %v1471 = vshrl.u32 %v1383, 16
      %v1473 = vrot.slane %v1471, 4
      %v1474 = vshll.u32 %v1383, 16
      %v1476 = vrot.slane %v1474, 5
      %v1477 = vor.u32 %v1473, %v1476
      %v1478 = vrot.slane %v1477, 4
      %v1480 = vshll.u32 %v1384, 16
      %v1482 = vrot.slane %v1480, 5
      %v1483 = vsel %vm417, %v1478, %v1482
      %v1484 = vshrl.u32 %v1384, 16
      %v1486 = vrot.slane %v1484, 4
      %v1487 = vor.u32 %v1486, %v1482
      %v1488 = vrot.slane %v1487, 4
      %v1490 = vshll.u32 %v1385, 16
      %v1492 = vrot.slane %v1490, 5
      %v1493 = vsel %vm417, %v1488, %v1492
      %v1495 = vshrl.u32 %v1386, 16
      %v1497 = vrot.slane %v1495, 4
      %v1498 = vshll.u32 %v1386, 16
      %v1500 = vrot.slane %v1498, 5
      %v1501 = vor.u32 %v1497, %v1500
      %v1502 = vrot.slane %v1501, 4
      %v1504 = vshll.u32 %v1387, 16
      %v1506 = vrot.slane %v1504, 5
      %v1507 = vsel %vm417, %v1502, %v1506
      %v1508 = vshrl.u32 %v1387, 16
      %v1510 = vrot.slane %v1508, 4
      %v1511 = vor.u32 %v1510, %v1506
      %v1512 = vrot.slane %v1511, 4
      %v1514 = vshll.u32 %v1388, 16
      %v1516 = vrot.slane %v1514, 5
      %v1517 = vsel %vm417, %v1512, %v1516
      %v1519 = vshrl.u32 %v1389, 16
      %v1521 = vrot.slane %v1519, 4
      %v1522 = vshll.u32 %v1389, 16
      %v1524 = vrot.slane %v1522, 5
      %v1525 = vor.u32 %v1521, %v1524
      %v1526 = vrot.slane %v1525, 4
      %v1528 = vshll.u32 %v1390, 16
      %v1530 = vrot.slane %v1528, 5
      %v1531 = vsel %vm417, %v1526, %v1530
      %v1532 = vshrl.u32 %v1390, 16
      %v1534 = vrot.slane %v1532, 4
      %v1535 = vor.u32 %v1534, %v1530
      %v1536 = vrot.slane %v1535, 4
      %v1538 = vshll.u32 %v1391, 16
      %v1540 = vrot.slane %v1538, 5
      %v1541 = vsel %vm417, %v1536, %v1540
      %v1543 = vshrl.u32 %v1392, 16
      %v1545 = vrot.slane %v1543, 4
      %v1546 = vshll.u32 %v1392, 16
      %v1548 = vrot.slane %v1546, 5
      %v1549 = vor.u32 %v1545, %v1548
      %v1550 = vrot.slane %v1549, 4
      %v1552 = vshll.u32 %v1393, 16
      %v1554 = vrot.slane %v1552, 5
      %v1555 = vsel %vm417, %v1550, %v1554
      %v1556 = vshrl.u32 %v1393, 16
      %v1558 = vrot.slane %v1556, 4
      %v1559 = vor.u32 %v1558, %v1554
      %v1560 = vrot.slane %v1559, 4
      %v1562 = vshll.u32 %v1394, 16
      %v1564 = vrot.slane %v1562, 5
      %v1565 = vsel %vm417, %v1560, %v1564
      %v1567 = vshrl.u32 %v1395, 16
      %v1569 = vrot.slane %v1567, 4
      %v1570 = vshll.u32 %v1395, 16
      %v1572 = vrot.slane %v1570, 5
      %v1573 = vor.u32 %v1569, %v1572
      %v1574 = vrot.slane %v1573, 4
      %v1576 = vshll.u32 %v1396, 16
      %v1578 = vrot.slane %v1576, 5
      %v1579 = vsel %vm417, %v1574, %v1578
      %v1580 = vshrl.u32 %v1396, 16
      %v1582 = vrot.slane %v1580, 4
      %v1583 = vor.u32 %v1582, %v1578
      %v1584 = vrot.slane %v1583, 4
      %v1586 = vshll.u32 %v1397, 16
      %v1588 = vrot.slane %v1586, 5
      %v1589 = vsel %vm417, %v1584, %v1588
      %s1590 = scalar_lea.vmem %s2, 8
      %v1591 = vld [vmem:[%s1590] sm:$0x3]
      %v1592 = vunpack.c.l.b16 %v1411
      %v1593 = vunpack.c.l.b16 %v1421
      %v1594 = vunpack.c.l.b16 %v1435
      %v1595 = vunpack.c.l.b16 %v1445
      %v1596 = vunpack.c.l.b16 %v1459
      %v1597 = vunpack.c.l.b16 %v1469
      %v1598 = vunpack.c.l.b16 %v1483
      %v1599 = vunpack.c.l.b16 %v1493
      %v1600 = vunpack.c.l.b16 %v1507
      %v1601 = vunpack.c.l.b16 %v1517
      %v1602 = vunpack.c.l.b16 %v1531
      %v1603 = vunpack.c.l.b16 %v1541
      %v1604 = vunpack.c.l.b16 %v1555
      %v1605 = vunpack.c.l.b16 %v1565
      %v1606 = vunpack.c.l.b16 %v1579
      %v1607 = vunpack.c.l.b16 %v1589
      %v1608 = vpack.c.b16 %v1593, %v1592
      %v1609 = vpack.c.b16 %v1595, %v1594
      %v1610 = vpack.c.b16 %v1597, %v1596
      %v1611 = vpack.c.b16 %v1599, %v1598
      %v1612 = vpack.c.b16 %v1601, %v1600
      %v1613 = vpack.c.b16 %v1603, %v1602
      %v1614 = vpack.c.b16 %v1605, %v1604
      %v1615 = vpack.c.b16 %v1607, %v1606
      %v1617 = vsel %vm636, %v1608, 0
      %v1620 = vsel %vm636, %v1609, 0
      %v1623 = vsel %vm636, %v1610, 0
      %v1626 = vsel %vm636, %v1611, 0
      %v1629 = vsel %vm636, %v1612, 0
      %v1632 = vsel %vm636, %v1613, 0
      %v1635 = vsel %vm636, %v1614, 0
      %v1638 = vsel %vm636, %v1615, 0
      %v1641 = vsel %vm661, %v1591, 0
      %1643 = vmatprep.subr.bf16.mxu0 0
      %1644 = vmatpush1.bf16.msra.mxu0 %v1641
      %1645 = vmatprep.subr.bf16.mxu0 0
      %1646 = vmatpush1.bf16.msra.mxu0 0
      %1647 = vmatprep.subr.bf16.mxu0 0
      %1648 = vmatpush1.bf16.msra.mxu0 0
      %1649 = vmatprep.subr.bf16.mxu0 0
      %1650 = vmatpush1.bf16.msra.mxu0 0
      %1651 = vmatprep.subr.bf16.mxu0 0
      %1652 = vmatpush1.bf16.msra.mxu0 0
      %1653 = vmatprep.subr.bf16.mxu0 0
      %1654 = vmatpush1.bf16.msra.mxu0 0
      %1655 = vmatprep.subr.bf16.mxu0 0
      %1656 = vmatpush1.bf16.msra.mxu0 0
      %1657 = vmatprep.subr.bf16.mxu0 0
      %1658 = vmatpush1.bf16.msra.mxu0 0
      %1659 = vmatprep.subr.bf16.mxu0 0
      %1660 = vmatpush1.bf16.msra.mxu0 0
      %1661 = vmatprep.subr.bf16.mxu0 0
      %1662 = vmatpush1.bf16.msra.mxu0 0
      %1663 = vmatprep.subr.bf16.mxu0 0
      %1664 = vmatpush1.bf16.msra.mxu0 0
      %1665 = vmatprep.subr.bf16.mxu0 0
      %1666 = vmatpush1.bf16.msra.mxu0 0
      %1667 = vmatprep.subr.bf16.mxu0 0
      %1668 = vmatpush1.bf16.msra.mxu0 0
      %1669 = vmatprep.subr.bf16.mxu0 0
      %1670 = vmatpush1.bf16.msra.mxu0 0
      %1671 = vmatprep.subr.bf16.mxu0 0
      %1672 = vmatpush1.bf16.msra.mxu0 0
      %1673 = vmatprep.subr.bf16.mxu0 0
      %1674 = vmatpush1.bf16.msra.mxu0 0
      %1675 = vmatprep.mubr.bf16.mxu0 0
      %1676 = vmatmul.mubr.bf16.gmra.mrb[0].mxu0 %v1617
      %v1677 = vpop.f32.mrb[0].mxu0
      %v1678 = vadd.f32 0.0, %v1677
      %v1679 = vpop.f32.mrb[0].mxu0
      %v1680 = vpop.f32.mrb[0].mxu0
      %v1681 = vadd.f32 0.0, %v1680
      %v1682 = vpop.f32.mrb[0].mxu0
      %1683 = vmatprep.mubr.bf16.mxu0 0
      %1684 = vmatmul.mubr.bf16.gmra.mrb[0].mxu0 %v1620
      %v1685 = vpop.f32.mrb[0].mxu0
      %v1686 = vadd.f32 0.0, %v1685
      %v1687 = vpop.f32.mrb[0].mxu0
      %v1688 = vpop.f32.mrb[0].mxu0
      %v1689 = vadd.f32 0.0, %v1688
      %v1690 = vpop.f32.mrb[0].mxu0
      %1691 = vmatprep.mubr.bf16.mxu0 0
      %1692 = vmatmul.mubr.bf16.gmra.mrb[0].mxu0 %v1623
      %v1693 = vpop.f32.mrb[0].mxu0
      %v1694 = vadd.f32 0.0, %v1693
      %v1695 = vpop.f32.mrb[0].mxu0
      %v1696 = vpop.f32.mrb[0].mxu0
      %v1697 = vadd.f32 0.0, %v1696
      %v1698 = vpop.f32.mrb[0].mxu0
      %1699 = vmatprep.mubr.bf16.mxu0 0
      %1700 = vmatmul.mubr.bf16.gmra.mrb[0].mxu0 %v1626
      %v1701 = vpop.f32.mrb[0].mxu0
      %v1702 = vadd.f32 0.0, %v1701
      %v1703 = vpop.f32.mrb[0].mxu0
      %v1704 = vpop.f32.mrb[0].mxu0
      %v1705 = vadd.f32 0.0, %v1704
      %v1706 = vpop.f32.mrb[0].mxu0
      %1707 = vmatprep.mubr.bf16.mxu0 0
      %1708 = vmatmul.mubr.bf16.gmra.mrb[0].mxu0 %v1629
      %v1709 = vpop.f32.mrb[0].mxu0
      %v1710 = vadd.f32 0.0, %v1709
      %v1711 = vpop.f32.mrb[0].mxu0
      %v1712 = vpop.f32.mrb[0].mxu0
      %v1713 = vadd.f32 0.0, %v1712
      %v1714 = vpop.f32.mrb[0].mxu0
      %1715 = vmatprep.mubr.bf16.mxu0 0
      %1716 = vmatmul.mubr.bf16.gmra.mrb[0].mxu0 %v1632
      %v1717 = vpop.f32.mrb[0].mxu0
      %v1718 = vadd.f32 0.0, %v1717
      %v1719 = vpop.f32.mrb[0].mxu0
      %v1720 = vpop.f32.mrb[0].mxu0
      %v1721 = vadd.f32 0.0, %v1720
      %v1722 = vpop.f32.mrb[0].mxu0
      %1723 = vmatprep.mubr.bf16.mxu0 0
      %1724 = vmatmul.mubr.bf16.gmra.mrb[0].mxu0 %v1635
      %v1725 = vpop.f32.mrb[0].mxu0
      %v1726 = vadd.f32 0.0, %v1725
      %v1727 = vpop.f32.mrb[0].mxu0
      %v1728 = vpop.f32.mrb[0].mxu0
      %v1729 = vadd.f32 0.0, %v1728
      %v1730 = vpop.f32.mrb[0].mxu0
      %1731 = vmatprep.mubr.bf16.mxu0 0
      %1732 = vmatmul.mubr.bf16.gmra.mrb[0].mxu0 %v1638
      %v1733 = vpop.f32.mrb[0].mxu0
      %v1734 = vadd.f32 0.0, %v1733
      %v1735 = vpop.f32.mrb[0].mxu0
      %v1736 = vpop.f32.mrb[0].mxu0
      %v1737 = vadd.f32 0.0, %v1736
      %v1738 = vpop.f32.mrb[0].mxu0
      %1739 = vdwg.mxu0
      %v1740 = vadd.f32 %v1358, %v1678
      %v1741 = vadd.f32 %v1359, %v1681
      %v1742 = vadd.f32 %v1360, %v1686
      %v1743 = vadd.f32 %v1361, %v1689
      %v1744 = vadd.f32 %v1362, %v1694
      %v1745 = vadd.f32 %v1363, %v1697
      %v1746 = vadd.f32 %v1364, %v1702
      %v1747 = vadd.f32 %v1365, %v1705
      %v1748 = vadd.f32 %v1366, %v1710
      %v1749 = vadd.f32 %v1367, %v1713
      %v1750 = vadd.f32 %v1368, %v1718
      %v1751 = vadd.f32 %v1369, %v1721
      %v1752 = vadd.f32 %v1370, %v1726
      %v1753 = vadd.f32 %v1371, %v1729
      %v1754 = vadd.f32 %v1372, %v1734
      %v1755 = vadd.f32 %v1373, %v1737
      %v1756 = vld [vmem:[%s1175] sm:$0xe]
      %v1757 = vld [vmem:[%s1175 + $0xc] sm:$0xe]
      %v1758 = vld [vmem:[%s1175 + $0x18] sm:$0xe]
      %v1759 = vld [vmem:[%s1175 + $0x24] sm:$0xe]
      %v1760 = vld [vmem:[%s1175 + $0x30] sm:$0xe]
      %v1761 = vld [vmem:[%s1175 + $0x3c] sm:$0xe]
      %v1762 = vld [vmem:[%s1175 + $0x48] sm:$0xe]
      %v1763 = vld [vmem:[%s1175 + $0x54] sm:$0xe]
      %v1788 = vrot.slane %v1756, 5
      %v1789 = vrot.slane %v1788, 4
      %v1790 = vrot.slane %v1375, 5
      %v1791 = vsel %vm952, %v1789, %v1790
      %v1792 = vrot.slane %v1790, 4
      %v1793 = vrot.slane %v1376, 5
      %v1794 = vsel %vm952, %v1792, %v1793
      %v1795 = vrot.slane %v1757, 5
      %v1796 = vrot.slane %v1795, 4
      %v1797 = vrot.slane %v1378, 5
      %v1798 = vsel %vm952, %v1796, %v1797
      %v1799 = vrot.slane %v1797, 4
      %v1800 = vrot.slane %v1379, 5
      %v1801 = vsel %vm952, %v1799, %v1800
      %v1802 = vrot.slane %v1758, 5
      %v1803 = vrot.slane %v1802, 4
      %v1804 = vrot.slane %v1381, 5
      %v1805 = vsel %vm952, %v1803, %v1804
      %v1806 = vrot.slane %v1804, 4
      %v1807 = vrot.slane %v1382, 5
      %v1808 = vsel %vm952, %v1806, %v1807
      %v1809 = vrot.slane %v1759, 5
      %v1810 = vrot.slane %v1809, 4
      %v1811 = vrot.slane %v1384, 5
      %v1812 = vsel %vm952, %v1810, %v1811
      %v1813 = vrot.slane %v1811, 4
      %v1814 = vrot.slane %v1385, 5
      %v1815 = vsel %vm952, %v1813, %v1814
      %v1816 = vrot.slane %v1760, 5
      %v1817 = vrot.slane %v1816, 4
      %v1818 = vrot.slane %v1387, 5
      %v1819 = vsel %vm952, %v1817, %v1818
      %v1820 = vrot.slane %v1818, 4
      %v1821 = vrot.slane %v1388, 5
      %v1822 = vsel %vm952, %v1820, %v1821
      %v1823 = vrot.slane %v1761, 5
      %v1824 = vrot.slane %v1823, 4
      %v1825 = vrot.slane %v1390, 5
      %v1826 = vsel %vm952, %v1824, %v1825
      %v1827 = vrot.slane %v1825, 4
      %v1828 = vrot.slane %v1391, 5
      %v1829 = vsel %vm952, %v1827, %v1828
      %v1830 = vrot.slane %v1762, 5
      %v1831 = vrot.slane %v1830, 4
      %v1832 = vrot.slane %v1393, 5
      %v1833 = vsel %vm952, %v1831, %v1832
      %v1834 = vrot.slane %v1832, 4
      %v1835 = vrot.slane %v1394, 5
      %v1836 = vsel %vm952, %v1834, %v1835
      %v1837 = vrot.slane %v1763, 5
      %v1838 = vrot.slane %v1837, 4
      %v1839 = vrot.slane %v1396, 5
      %v1840 = vsel %vm952, %v1838, %v1839
      %v1841 = vrot.slane %v1839, 4
      %v1842 = vrot.slane %v1397, 5
      %v1843 = vsel %vm952, %v1841, %v1842
      %s1844 = scalar_lea.vmem %s2, 10
      %v1845 = vld [vmem:[%s1844] sm:$0x3]
      %v1846 = vunpack.c.l.b16 %v1791
      %v1847 = vunpack.c.l.b16 %v1794
      %v1848 = vunpack.c.l.b16 %v1798
      %v1849 = vunpack.c.l.b16 %v1801
      %v1850 = vunpack.c.l.b16 %v1805
      %v1851 = vunpack.c.l.b16 %v1808
      %v1852 = vunpack.c.l.b16 %v1812
      %v1853 = vunpack.c.l.b16 %v1815
      %v1854 = vunpack.c.l.b16 %v1819
      %v1855 = vunpack.c.l.b16 %v1822
      %v1856 = vunpack.c.l.b16 %v1826
      %v1857 = vunpack.c.l.b16 %v1829
      %v1858 = vunpack.c.l.b16 %v1833
      %v1859 = vunpack.c.l.b16 %v1836
      %v1860 = vunpack.c.l.b16 %v1840
      %v1861 = vunpack.c.l.b16 %v1843
      %v1862 = vpack.c.b16 %v1847, %v1846
      %v1863 = vpack.c.b16 %v1849, %v1848
      %v1864 = vpack.c.b16 %v1851, %v1850
      %v1865 = vpack.c.b16 %v1853, %v1852
      %v1866 = vpack.c.b16 %v1855, %v1854
      %v1867 = vpack.c.b16 %v1857, %v1856
      %v1868 = vpack.c.b16 %v1859, %v1858
      %v1869 = vpack.c.b16 %v1861, %v1860
      %v1871 = vsel %vm636, %v1862, 0
      %v1874 = vsel %vm636, %v1863, 0
      %v1877 = vsel %vm636, %v1864, 0
      %v1880 = vsel %vm636, %v1865, 0
      %v1883 = vsel %vm636, %v1866, 0
      %v1886 = vsel %vm636, %v1867, 0
      %v1889 = vsel %vm636, %v1868, 0
      %v1892 = vsel %vm636, %v1869, 0
      %v1895 = vsel %vm661, %v1845, 0
      %1897 = vmatprep.subr.bf16.mxu0 0
      %1898 = vmatpush1.bf16.msra.mxu0 %v1895
      %1899 = vmatprep.subr.bf16.mxu0 0
      %1900 = vmatpush1.bf16.msra.mxu0 0
      %1901 = vmatprep.subr.bf16.mxu0 0
      %1902 = vmatpush1.bf16.msra.mxu0 0
      %1903 = vmatprep.subr.bf16.mxu0 0
      %1904 = vmatpush1.bf16.msra.mxu0 0
      %1905 = vmatprep.subr.bf16.mxu0 0
      %1906 = vmatpush1.bf16.msra.mxu0 0
      %1907 = vmatprep.subr.bf16.mxu0 0
      %1908 = vmatpush1.bf16.msra.mxu0 0
      %1909 = vmatprep.subr.bf16.mxu0 0
      %1910 = vmatpush1.bf16.msra.mxu0 0
      %1911 = vmatprep.subr.bf16.mxu0 0
      %1912 = vmatpush1.bf16.msra.mxu0 0
      %1913 = vmatprep.subr.bf16.mxu0 0
      %1914 = vmatpush1.bf16.msra.mxu0 0
      %1915 = vmatprep.subr.bf16.mxu0 0
      %1916 = vmatpush1.bf16.msra.mxu0 0
      %1917 = vmatprep.subr.bf16.mxu0 0
      %1918 = vmatpush1.bf16.msra.mxu0 0
      %1919 = vmatprep.subr.bf16.mxu0 0
      %1920 = vmatpush1.bf16.msra.mxu0 0
      %1921 = vmatprep.subr.bf16.mxu0 0
      %1922 = vmatpush1.bf16.msra.mxu0 0
      %1923 = vmatprep.subr.bf16.mxu0 0
      %1924 = vmatpush1.bf16.msra.mxu0 0
      %1925 = vmatprep.subr.bf16.mxu0 0
      %1926 = vmatpush1.bf16.msra.mxu0 0
      %1927 = vmatprep.subr.bf16.mxu0 0
      %1928 = vmatpush1.bf16.msra.mxu0 0
      %1929 = vmatprep.mubr.bf16.mxu0 0
      %1930 = vmatmul.mubr.bf16.gmra.mrb[0].mxu0 %v1871
      %v1931 = vpop.f32.mrb[0].mxu0
      %v1932 = vadd.f32 0.0, %v1931
      %v1933 = vpop.f32.mrb[0].mxu0
      %v1934 = vpop.f32.mrb[0].mxu0
      %v1935 = vadd.f32 0.0, %v1934
      %v1936 = vpop.f32.mrb[0].mxu0
      %1937 = vmatprep.mubr.bf16.mxu0 0
      %1938 = vmatmul.mubr.bf16.gmra.mrb[0].mxu0 %v1874
      %v1939 = vpop.f32.mrb[0].mxu0
      %v1940 = vadd.f32 0.0, %v1939
      %v1941 = vpop.f32.mrb[0].mxu0
      %v1942 = vpop.f32.mrb[0].mxu0
      %v1943 = vadd.f32 0.0, %v1942
      %v1944 = vpop.f32.mrb[0].mxu0
      %1945 = vmatprep.mubr.bf16.mxu0 0
      %1946 = vmatmul.mubr.bf16.gmra.mrb[0].mxu0 %v1877
      %v1947 = vpop.f32.mrb[0].mxu0
      %v1948 = vadd.f32 0.0, %v1947
      %v1949 = vpop.f32.mrb[0].mxu0
      %v1950 = vpop.f32.mrb[0].mxu0
      %v1951 = vadd.f32 0.0, %v1950
      %v1952 = vpop.f32.mrb[0].mxu0
      %1953 = vmatprep.mubr.bf16.mxu0 0
      %1954 = vmatmul.mubr.bf16.gmra.mrb[0].mxu0 %v1880
      %v1955 = vpop.f32.mrb[0].mxu0
      %v1956 = vadd.f32 0.0, %v1955
      %v1957 = vpop.f32.mrb[0].mxu0
      %v1958 = vpop.f32.mrb[0].mxu0
      %v1959 = vadd.f32 0.0, %v1958
      %v1960 = vpop.f32.mrb[0].mxu0
      %1961 = vmatprep.mubr.bf16.mxu0 0
      %1962 = vmatmul.mubr.bf16.gmra.mrb[0].mxu0 %v1883
      %v1963 = vpop.f32.mrb[0].mxu0
      %v1964 = vadd.f32 0.0, %v1963
      %v1965 = vpop.f32.mrb[0].mxu0
      %v1966 = vpop.f32.mrb[0].mxu0
      %v1967 = vadd.f32 0.0, %v1966
      %v1968 = vpop.f32.mrb[0].mxu0
      %1969 = vmatprep.mubr.bf16.mxu0 0
      %1970 = vmatmul.mubr.bf16.gmra.mrb[0].mxu0 %v1886
      %v1971 = vpop.f32.mrb[0].mxu0
      %v1972 = vadd.f32 0.0, %v1971
      %v1973 = vpop.f32.mrb[0].mxu0
      %v1974 = vpop.f32.mrb[0].mxu0
      %v1975 = vadd.f32 0.0, %v1974
      %v1976 = vpop.f32.mrb[0].mxu0
      %1977 = vmatprep.mubr.bf16.mxu0 0
      %1978 = vmatmul.mubr.bf16.gmra.mrb[0].mxu0 %v1889
      %v1979 = vpop.f32.mrb[0].mxu0
      %v1980 = vadd.f32 0.0, %v1979
      %v1981 = vpop.f32.mrb[0].mxu0
      %v1982 = vpop.f32.mrb[0].mxu0
      %v1983 = vadd.f32 0.0, %v1982
      %v1984 = vpop.f32.mrb[0].mxu0
      %1985 = vmatprep.mubr.bf16.mxu0 0
      %1986 = vmatmul.mubr.bf16.gmra.mrb[0].mxu0 %v1892
      %v1987 = vpop.f32.mrb[0].mxu0
      %v1988 = vadd.f32 0.0, %v1987
      %v1989 = vpop.f32.mrb[0].mxu0
      %v1990 = vpop.f32.mrb[0].mxu0
      %v1991 = vadd.f32 0.0, %v1990
      %v1992 = vpop.f32.mrb[0].mxu0
      %1993 = vdwg.mxu0
      %v1994 = vadd.f32 %v1740, %v1932
      %v1995 = vadd.f32 %v1741, %v1935
      %v1996 = vadd.f32 %v1742, %v1940
      %v1997 = vadd.f32 %v1743, %v1943
      %v1998 = vadd.f32 %v1744, %v1948
      %v1999 = vadd.f32 %v1745, %v1951
      %v2000 = vadd.f32 %v1746, %v1956
      %v2001 = vadd.f32 %v1747, %v1959
      %v2002 = vadd.f32 %v1748, %v1964
      %v2003 = vadd.f32 %v1749, %v1967
      %v2004 = vadd.f32 %v1750, %v1972
      %v2005 = vadd.f32 %v1751, %v1975
      %v2006 = vadd.f32 %v1752, %v1980
      %v2007 = vadd.f32 %v1753, %v1983
      %v2008 = vadd.f32 %v1754, %v1988
      %v2009 = vadd.f32 %v1755, %v1991
      %s2010 = scalar_lea.vmem %s354, 24
      %v2011 = vld [vmem:[%s2010] sm:$0xf]
      %v2012 = vld [vmem:[%s2010 + $0x4] sm:$0xf]
      %v2013 = vld [vmem:[%s2010 + $0xc] sm:$0xf]
      %v2014 = vld [vmem:[%s2010 + $0x10] sm:$0xf]
      %v2015 = vld [vmem:[%s2010 + $0x18] sm:$0xf]
      %v2016 = vld [vmem:[%s2010 + $0x1c] sm:$0xf]
      %v2017 = vld [vmem:[%s2010 + $0x24] sm:$0xf]
      %v2018 = vld [vmem:[%s2010 + $0x28] sm:$0xf]
      %v2019 = vld [vmem:[%s2010 + $0x30] sm:$0xf]
      %v2020 = vld [vmem:[%s2010 + $0x34] sm:$0xf]
      %v2021 = vld [vmem:[%s2010 + $0x3c] sm:$0xf]
      %v2022 = vld [vmem:[%s2010 + $0x40] sm:$0xf]
      %v2023 = vld [vmem:[%s2010 + $0x48] sm:$0xf]
      %v2024 = vld [vmem:[%s2010 + $0x4c] sm:$0xf]
      %v2025 = vld [vmem:[%s2010 + $0x54] sm:$0xf]
      %v2026 = vld [vmem:[%s2010 + $0x58] sm:$0xf]
      %s2027 = scalar_lea.vmem %s2, 12
      %v2028 = vld [vmem:[%s2027] sm:$0x3]
      %v2045 = vunpack.c.l.b16 %v2011
      %v2046 = vunpack.c.l.b16 %v2012
      %v2047 = vunpack.c.l.b16 %v2013
      %v2048 = vunpack.c.l.b16 %v2014
      %v2049 = vunpack.c.l.b16 %v2015
      %v2050 = vunpack.c.l.b16 %v2016
      %v2051 = vunpack.c.l.b16 %v2017
      %v2052 = vunpack.c.l.b16 %v2018
      %v2053 = vunpack.c.l.b16 %v2019
      %v2054 = vunpack.c.l.b16 %v2020
      %v2055 = vunpack.c.l.b16 %v2021
      %v2056 = vunpack.c.l.b16 %v2022
      %v2057 = vunpack.c.l.b16 %v2023
      %v2058 = vunpack.c.l.b16 %v2024
      %v2059 = vunpack.c.l.b16 %v2025
      %v2060 = vunpack.c.l.b16 %v2026
      %v2061 = vpack.c.b16 %v2046, %v2045
      %v2062 = vpack.c.b16 %v2048, %v2047
      %v2063 = vpack.c.b16 %v2050, %v2049
      %v2064 = vpack.c.b16 %v2052, %v2051
      %v2065 = vpack.c.b16 %v2054, %v2053
      %v2066 = vpack.c.b16 %v2056, %v2055
      %v2067 = vpack.c.b16 %v2058, %v2057
      %v2068 = vpack.c.b16 %v2060, %v2059
      %v2070 = vsel %vm636, %v2061, 0
      %v2073 = vsel %vm636, %v2062, 0
      %v2076 = vsel %vm636, %v2063, 0
      %v2079 = vsel %vm636, %v2064, 0
      %v2082 = vsel %vm636, %v2065, 0
      %v2085 = vsel %vm636, %v2066, 0
      %v2088 = vsel %vm636, %v2067, 0
      %v2091 = vsel %vm636, %v2068, 0
      %v2094 = vsel %vm661, %v2028, 0
      %2096 = vmatprep.subr.bf16.mxu0 0
      %2097 = vmatpush1.bf16.msra.mxu0 %v2094
      %2098 = vmatprep.subr.bf16.mxu0 0
      %2099 = vmatpush1.bf16.msra.mxu0 0
      %2100 = vmatprep.subr.bf16.mxu0 0
      %2101 = vmatpush1.bf16.msra.mxu0 0
      %2102 = vmatprep.subr.bf16.mxu0 0
      %2103 = vmatpush1.bf16.msra.mxu0 0
      %2104 = vmatprep.subr.bf16.mxu0 0
      %2105 = vmatpush1.bf16.msra.mxu0 0
      %2106 = vmatprep.subr.bf16.mxu0 0
      %2107 = vmatpush1.bf16.msra.mxu0 0
      %2108 = vmatprep.subr.bf16.mxu0 0
      %2109 = vmatpush1.bf16.msra.mxu0 0
      %2110 = vmatprep.subr.bf16.mxu0 0
      %2111 = vmatpush1.bf16.msra.mxu0 0
      %2112 = vmatprep.subr.bf16.mxu0 0
      %2113 = vmatpush1.bf16.msra.mxu0 0
      %2114 = vmatprep.subr.bf16.mxu0 0
      %2115 = vmatpush1.bf16.msra.mxu0 0
      %2116 = vmatprep.subr.bf16.mxu0 0
      %2117 = vmatpush1.bf16.msra.mxu0 0
      %2118 = vmatprep.subr.bf16.mxu0 0
      %2119 = vmatpush1.bf16.msra.mxu0 0
      %2120 = vmatprep.subr.bf16.mxu0 0
      %2121 = vmatpush1.bf16.msra.mxu0 0
      %2122 = vmatprep.subr.bf16.mxu0 0
      %2123 = vmatpush1.bf16.msra.mxu0 0
      %2124 = vmatprep.subr.bf16.mxu0 0
      %2125 = vmatpush1.bf16.msra.mxu0 0
      %2126 = vmatprep.subr.bf16.mxu0 0
      %2127 = vmatpush1.bf16.msra.mxu0 0
      %2128 = vmatprep.mubr.bf16.mxu0 0
      %2129 = vmatmul.mubr.bf16.gmra.mrb[0].mxu0 %v2070
      %v2130 = vpop.f32.mrb[0].mxu0
      %v2131 = vadd.f32 0.0, %v2130
      %v2132 = vpop.f32.mrb[0].mxu0
      %v2133 = vpop.f32.mrb[0].mxu0
      %v2134 = vadd.f32 0.0, %v2133
      %v2135 = vpop.f32.mrb[0].mxu0
      %2136 = vmatprep.mubr.bf16.mxu0 0
      %2137 = vmatmul.mubr.bf16.gmra.mrb[0].mxu0 %v2073
      %v2138 = vpop.f32.mrb[0].mxu0
      %v2139 = vadd.f32 0.0, %v2138
      %v2140 = vpop.f32.mrb[0].mxu0
      %v2141 = vpop.f32.mrb[0].mxu0
      %v2142 = vadd.f32 0.0, %v2141
      %v2143 = vpop.f32.mrb[0].mxu0
      %2144 = vmatprep.mubr.bf16.mxu0 0
      %2145 = vmatmul.mubr.bf16.gmra.mrb[0].mxu0 %v2076
      %v2146 = vpop.f32.mrb[0].mxu0
      %v2147 = vadd.f32 0.0, %v2146
      %v2148 = vpop.f32.mrb[0].mxu0
      %v2149 = vpop.f32.mrb[0].mxu0
      %v2150 = vadd.f32 0.0, %v2149
      %v2151 = vpop.f32.mrb[0].mxu0
      %2152 = vmatprep.mubr.bf16.mxu0 0
      %2153 = vmatmul.mubr.bf16.gmra.mrb[0].mxu0 %v2079
      %v2154 = vpop.f32.mrb[0].mxu0
      %v2155 = vadd.f32 0.0, %v2154
      %v2156 = vpop.f32.mrb[0].mxu0
      %v2157 = vpop.f32.mrb[0].mxu0
      %v2158 = vadd.f32 0.0, %v2157
      %v2159 = vpop.f32.mrb[0].mxu0
      %2160 = vmatprep.mubr.bf16.mxu0 0
      %2161 = vmatmul.mubr.bf16.gmra.mrb[0].mxu0 %v2082
      %v2162 = vpop.f32.mrb[0].mxu0
      %v2163 = vadd.f32 0.0, %v2162
      %v2164 = vpop.f32.mrb[0].mxu0
      %v2165 = vpop.f32.mrb[0].mxu0
      %v2166 = vadd.f32 0.0, %v2165
      %v2167 = vpop.f32.mrb[0].mxu0
      %2168 = vmatprep.mubr.bf16.mxu0 0
      %2169 = vmatmul.mubr.bf16.gmra.mrb[0].mxu0 %v2085
      %v2170 = vpop.f32.mrb[0].mxu0
      %v2171 = vadd.f32 0.0, %v2170
      %v2172 = vpop.f32.mrb[0].mxu0
      %v2173 = vpop.f32.mrb[0].mxu0
      %v2174 = vadd.f32 0.0, %v2173
      %v2175 = vpop.f32.mrb[0].mxu0
      %2176 = vmatprep.mubr.bf16.mxu0 0
      %2177 = vmatmul.mubr.bf16.gmra.mrb[0].mxu0 %v2088
      %v2178 = vpop.f32.mrb[0].mxu0
      %v2179 = vadd.f32 0.0, %v2178
      %v2180 = vpop.f32.mrb[0].mxu0
      %v2181 = vpop.f32.mrb[0].mxu0
      %v2182 = vadd.f32 0.0, %v2181
      %v2183 = vpop.f32.mrb[0].mxu0
      %2184 = vmatprep.mubr.bf16.mxu0 0
      %2185 = vmatmul.mubr.bf16.gmra.mrb[0].mxu0 %v2091
      %v2186 = vpop.f32.mrb[0].mxu0
      %v2187 = vadd.f32 0.0, %v2186
      %v2188 = vpop.f32.mrb[0].mxu0
      %v2189 = vpop.f32.mrb[0].mxu0
      %v2190 = vadd.f32 0.0, %v2189
      %v2191 = vpop.f32.mrb[0].mxu0
      %2192 = vdwg.mxu0
      %v2193 = vadd.f32 %v1994, %v2131
      %v2194 = vadd.f32 %v1995, %v2134
      %v2195 = vadd.f32 %v1996, %v2139
      %v2196 = vadd.f32 %v1997, %v2142
      %v2197 = vadd.f32 %v1998, %v2147
      %v2198 = vadd.f32 %v1999, %v2150
      %v2199 = vadd.f32 %v2000, %v2155
      %v2200 = vadd.f32 %v2001, %v2158
      %v2201 = vadd.f32 %v2002, %v2163
      %v2202 = vadd.f32 %v2003, %v2166
      %v2203 = vadd.f32 %v2004, %v2171
      %v2204 = vadd.f32 %v2005, %v2174
      %v2205 = vadd.f32 %v2006, %v2179
      %v2206 = vadd.f32 %v2007, %v2182
      %v2207 = vadd.f32 %v2008, %v2187
      %v2208 = vadd.f32 %v2009, %v2190
      %v2209 = vld [vmem:[%s2010] sm:$0xf]
      %v2210 = vld [vmem:[%s2010 + $0x4] sm:$0xf]
      %v2211 = vld [vmem:[%s2010 + $0x8] sm:$0x1]
      %v2212 = vld [vmem:[%s2010 + $0xc] sm:$0xf]
      %v2213 = vld [vmem:[%s2010 + $0x10] sm:$0xf]
      %v2214 = vld [vmem:[%s2010 + $0x14] sm:$0x1]
      %v2215 = vld [vmem:[%s2010 + $0x18] sm:$0xf]
      %v2216 = vld [vmem:[%s2010 + $0x1c] sm:$0xf]
      %v2217 = vld [vmem:[%s2010 + $0x20] sm:$0x1]
      %v2218 = vld [vmem:[%s2010 + $0x24] sm:$0xf]
      %v2219 = vld [vmem:[%s2010 + $0x28] sm:$0xf]
      %v2220 = vld [vmem:[%s2010 + $0x2c] sm:$0x1]
      %v2221 = vld [vmem:[%s2010 + $0x30] sm:$0xf]
      %v2222 = vld [vmem:[%s2010 + $0x34] sm:$0xf]
      %v2223 = vld [vmem:[%s2010 + $0x38] sm:$0x1]
      %v2224 = vld [vmem:[%s2010 + $0x3c] sm:$0xf]
      %v2225 = vld [vmem:[%s2010 + $0x40] sm:$0xf]
      %v2226 = vld [vmem:[%s2010 + $0x44] sm:$0x1]
      %v2227 = vld [vmem:[%s2010 + $0x48] sm:$0xf]
      %v2228 = vld [vmem:[%s2010 + $0x4c] sm:$0xf]
      %v2229 = vld [vmem:[%s2010 + $0x50] sm:$0x1]
      %v2230 = vld [vmem:[%s2010 + $0x54] sm:$0xf]
      %v2231 = vld [vmem:[%s2010 + $0x58] sm:$0xf]
      %v2232 = vld [vmem:[%s2010 + $0x5c] sm:$0x1]
      %v2234 = vshrl.u32 %v2209, 16
      %v2236 = vrot.slane %v2234, 4
      %v2237 = vshll.u32 %v2209, 16
      %v2239 = vrot.slane %v2237, 5
      %v2240 = vor.u32 %v2236, %v2239
      %v2241 = vrot.slane %v2240, 4
      %v2243 = vshll.u32 %v2210, 16
      %v2245 = vrot.slane %v2243, 5
      %v2246 = vsel %vm417, %v2241, %v2245
      %v2247 = vshrl.u32 %v2210, 16
      %v2249 = vrot.slane %v2247, 4
      %v2250 = vor.u32 %v2249, %v2245
      %v2251 = vrot.slane %v2250, 4
      %v2253 = vshll.u32 %v2211, 16
      %v2255 = vrot.slane %v2253, 5
      %v2256 = vsel %vm417, %v2251, %v2255
      %v2258 = vshrl.u32 %v2212, 16
      %v2260 = vrot.slane %v2258, 4
      %v2261 = vshll.u32 %v2212, 16
      %v2263 = vrot.slane %v2261, 5
      %v2264 = vor.u32 %v2260, %v2263
      %v2265 = vrot.slane %v2264, 4
      %v2267 = vshll.u32 %v2213, 16
      %v2269 = vrot.slane %v2267, 5
      %v2270 = vsel %vm417, %v2265, %v2269
      %v2271 = vshrl.u32 %v2213, 16
      %v2273 = vrot.slane %v2271, 4
      %v2274 = vor.u32 %v2273, %v2269
      %v2275 = vrot.slane %v2274, 4
      %v2277 = vshll.u32 %v2214, 16
      %v2279 = vrot.slane %v2277, 5
      %v2280 = vsel %vm417, %v2275, %v2279
      %v2282 = vshrl.u32 %v2215, 16
      %v2284 = vrot.slane %v2282, 4
      %v2285 = vshll.u32 %v2215, 16
      %v2287 = vrot.slane %v2285, 5
      %v2288 = vor.u32 %v2284, %v2287
      %v2289 = vrot.slane %v2288, 4
      %v2291 = vshll.u32 %v2216, 16
      %v2293 = vrot.slane %v2291, 5
      %v2294 = vsel %vm417, %v2289, %v2293
      %v2295 = vshrl.u32 %v2216, 16
      %v2297 = vrot.slane %v2295, 4
      %v2298 = vor.u32 %v2297, %v2293
      %v2299 = vrot.slane %v2298, 4
      %v2301 = vshll.u32 %v2217, 16
      %v2303 = vrot.slane %v2301, 5
      %v2304 = vsel %vm417, %v2299, %v2303
      %v2306 = vshrl.u32 %v2218, 16
      %v2308 = vrot.slane %v2306, 4
      %v2309 = vshll.u32 %v2218, 16
      %v2311 = vrot.slane %v2309, 5
      %v2312 = vor.u32 %v2308, %v2311
      %v2313 = vrot.slane %v2312, 4
      %v2315 = vshll.u32 %v2219, 16
      %v2317 = vrot.slane %v2315, 5
      %v2318 = vsel %vm417, %v2313, %v2317
      %v2319 = vshrl.u32 %v2219, 16
      %v2321 = vrot.slane %v2319, 4
      %v2322 = vor.u32 %v2321, %v2317
      %v2323 = vrot.slane %v2322, 4
      %v2325 = vshll.u32 %v2220, 16
      %v2327 = vrot.slane %v2325, 5
      %v2328 = vsel %vm417, %v2323, %v2327
      %v2330 = vshrl.u32 %v2221, 16
      %v2332 = vrot.slane %v2330, 4
      %v2333 = vshll.u32 %v2221, 16
      %v2335 = vrot.slane %v2333, 5
      %v2336 = vor.u32 %v2332, %v2335
      %v2337 = vrot.slane %v2336, 4
      %v2339 = vshll.u32 %v2222, 16
      %v2341 = vrot.slane %v2339, 5
      %v2342 = vsel %vm417, %v2337, %v2341
      %v2343 = vshrl.u32 %v2222, 16
      %v2345 = vrot.slane %v2343, 4
      %v2346 = vor.u32 %v2345, %v2341
      %v2347 = vrot.slane %v2346, 4
      %v2349 = vshll.u32 %v2223, 16
      %v2351 = vrot.slane %v2349, 5
      %v2352 = vsel %vm417, %v2347, %v2351
      %v2354 = vshrl.u32 %v2224, 16
      %v2356 = vrot.slane %v2354, 4
      %v2357 = vshll.u32 %v2224, 16
      %v2359 = vrot.slane %v2357, 5
      %v2360 = vor.u32 %v2356, %v2359
      %v2361 = vrot.slane %v2360, 4
      %v2363 = vshll.u32 %v2225, 16
      %v2365 = vrot.slane %v2363, 5
      %v2366 = vsel %vm417, %v2361, %v2365
      %v2367 = vshrl.u32 %v2225, 16
      %v2369 = vrot.slane %v2367, 4
      %v2370 = vor.u32 %v2369, %v2365
      %v2371 = vrot.slane %v2370, 4
      %v2373 = vshll.u32 %v2226, 16
      %v2375 = vrot.slane %v2373, 5
      %v2376 = vsel %vm417, %v2371, %v2375
      %v2378 = vshrl.u32 %v2227, 16
      %v2380 = vrot.slane %v2378, 4
      %v2381 = vshll.u32 %v2227, 16
      %v2383 = vrot.slane %v2381, 5
      %v2384 = vor.u32 %v2380, %v2383
      %v2385 = vrot.slane %v2384, 4
      %v2387 = vshll.u32 %v2228, 16
      %v2389 = vrot.slane %v2387, 5
      %v2390 = vsel %vm417, %v2385, %v2389
      %v2391 = vshrl.u32 %v2228, 16
      %v2393 = vrot.slane %v2391, 4
      %v2394 = vor.u32 %v2393, %v2389
      %v2395 = vrot.slane %v2394, 4
      %v2397 = vshll.u32 %v2229, 16
      %v2399 = vrot.slane %v2397, 5
      %v2400 = vsel %vm417, %v2395, %v2399
      %v2402 = vshrl.u32 %v2230, 16
      %v2404 = vrot.slane %v2402, 4
      %v2405 = vshll.u32 %v2230, 16
      %v2407 = vrot.slane %v2405, 5
      %v2408 = vor.u32 %v2404, %v2407
      %v2409 = vrot.slane %v2408, 4
      %v2411 = vshll.u32 %v2231, 16
      %v2413 = vrot.slane %v2411, 5
      %v2414 = vsel %vm417, %v2409, %v2413
      %v2415 = vshrl.u32 %v2231, 16
      %v2417 = vrot.slane %v2415, 4
      %v2418 = vor.u32 %v2417, %v2413
      %v2419 = vrot.slane %v2418, 4
      %v2421 = vshll.u32 %v2232, 16
      %v2423 = vrot.slane %v2421, 5
      %v2424 = vsel %vm417, %v2419, %v2423
      %s2425 = scalar_lea.vmem %s2, 14
      %v2426 = vld [vmem:[%s2425] sm:$0x3]
      %v2427 = vunpack.c.l.b16 %v2246
      %v2428 = vunpack.c.l.b16 %v2256
      %v2429 = vunpack.c.l.b16 %v2270
      %v2430 = vunpack.c.l.b16 %v2280
      %v2431 = vunpack.c.l.b16 %v2294
      %v2432 = vunpack.c.l.b16 %v2304
      %v2433 = vunpack.c.l.b16 %v2318
      %v2434 = vunpack.c.l.b16 %v2328
      %v2435 = vunpack.c.l.b16 %v2342
      %v2436 = vunpack.c.l.b16 %v2352
      %v2437 = vunpack.c.l.b16 %v2366
      %v2438 = vunpack.c.l.b16 %v2376
      %v2439 = vunpack.c.l.b16 %v2390
      %v2440 = vunpack.c.l.b16 %v2400
      %v2441 = vunpack.c.l.b16 %v2414
      %v2442 = vunpack.c.l.b16 %v2424
      %v2443 = vpack.c.b16 %v2428, %v2427
      %v2444 = vpack.c.b16 %v2430, %v2429
      %v2445 = vpack.c.b16 %v2432, %v2431
      %v2446 = vpack.c.b16 %v2434, %v2433
      %v2447 = vpack.c.b16 %v2436, %v2435
      %v2448 = vpack.c.b16 %v2438, %v2437
      %v2449 = vpack.c.b16 %v2440, %v2439
      %v2450 = vpack.c.b16 %v2442, %v2441
      %v2452 = vsel %vm636, %v2443, 0
      %v2455 = vsel %vm636, %v2444, 0
      %v2458 = vsel %vm636, %v2445, 0
      %v2461 = vsel %vm636, %v2446, 0
      %v2464 = vsel %vm636, %v2447, 0
      %v2467 = vsel %vm636, %v2448, 0
      %v2470 = vsel %vm636, %v2449, 0
      %v2473 = vsel %vm636, %v2450, 0
      %v2476 = vsel %vm661, %v2426, 0
      %2478 = vmatprep.subr.bf16.mxu0 0
      %2479 = vmatpush1.bf16.msra.mxu0 %v2476
      %2480 = vmatprep.subr.bf16.mxu0 0
      %2481 = vmatpush1.bf16.msra.mxu0 0
      %2482 = vmatprep.subr.bf16.mxu0 0
      %2483 = vmatpush1.bf16.msra.mxu0 0
      %2484 = vmatprep.subr.bf16.mxu0 0
      %2485 = vmatpush1.bf16.msra.mxu0 0
      %2486 = vmatprep.subr.bf16.mxu0 0
      %2487 = vmatpush1.bf16.msra.mxu0 0
      %2488 = vmatprep.subr.bf16.mxu0 0
      %2489 = vmatpush1.bf16.msra.mxu0 0
      %2490 = vmatprep.subr.bf16.mxu0 0
      %2491 = vmatpush1.bf16.msra.mxu0 0
      %2492 = vmatprep.subr.bf16.mxu0 0
      %2493 = vmatpush1.bf16.msra.mxu0 0
      %2494 = vmatprep.subr.bf16.mxu0 0
      %2495 = vmatpush1.bf16.msra.mxu0 0
      %2496 = vmatprep.subr.bf16.mxu0 0
      %2497 = vmatpush1.bf16.msra.mxu0 0
      %2498 = vmatprep.subr.bf16.mxu0 0
      %2499 = vmatpush1.bf16.msra.mxu0 0
      %2500 = vmatprep.subr.bf16.mxu0 0
      %2501 = vmatpush1.bf16.msra.mxu0 0
      %2502 = vmatprep.subr.bf16.mxu0 0
      %2503 = vmatpush1.bf16.msra.mxu0 0
      %2504 = vmatprep.subr.bf16.mxu0 0
      %2505 = vmatpush1.bf16.msra.mxu0 0
      %2506 = vmatprep.subr.bf16.mxu0 0
      %2507 = vmatpush1.bf16.msra.mxu0 0
      %2508 = vmatprep.subr.bf16.mxu0 0
      %2509 = vmatpush1.bf16.msra.mxu0 0
      %2510 = vmatprep.mubr.bf16.mxu0 0
      %2511 = vmatmul.mubr.bf16.gmra.mrb[0].mxu0 %v2452
      %v2512 = vpop.f32.mrb[0].mxu0
      %v2513 = vadd.f32 0.0, %v2512
      %v2514 = vpop.f32.mrb[0].mxu0
      %v2515 = vpop.f32.mrb[0].mxu0
      %v2516 = vadd.f32 0.0, %v2515
      %v2517 = vpop.f32.mrb[0].mxu0
      %2518 = vmatprep.mubr.bf16.mxu0 0
      %2519 = vmatmul.mubr.bf16.gmra.mrb[0].mxu0 %v2455
      %v2520 = vpop.f32.mrb[0].mxu0
      %v2521 = vadd.f32 0.0, %v2520
      %v2522 = vpop.f32.mrb[0].mxu0
      %v2523 = vpop.f32.mrb[0].mxu0
      %v2524 = vadd.f32 0.0, %v2523
      %v2525 = vpop.f32.mrb[0].mxu0
      %2526 = vmatprep.mubr.bf16.mxu0 0
      %2527 = vmatmul.mubr.bf16.gmra.mrb[0].mxu0 %v2458
      %v2528 = vpop.f32.mrb[0].mxu0
      %v2529 = vadd.f32 0.0, %v2528
      %v2530 = vpop.f32.mrb[0].mxu0
      %v2531 = vpop.f32.mrb[0].mxu0
      %v2532 = vadd.f32 0.0, %v2531
      %v2533 = vpop.f32.mrb[0].mxu0
      %2534 = vmatprep.mubr.bf16.mxu0 0
      %2535 = vmatmul.mubr.bf16.gmra.mrb[0].mxu0 %v2461
      %v2536 = vpop.f32.mrb[0].mxu0
      %v2537 = vadd.f32 0.0, %v2536
      %v2538 = vpop.f32.mrb[0].mxu0
      %v2539 = vpop.f32.mrb[0].mxu0
      %v2540 = vadd.f32 0.0, %v2539
      %v2541 = vpop.f32.mrb[0].mxu0
      %2542 = vmatprep.mubr.bf16.mxu0 0
      %2543 = vmatmul.mubr.bf16.gmra.mrb[0].mxu0 %v2464
      %v2544 = vpop.f32.mrb[0].mxu0
      %v2545 = vadd.f32 0.0, %v2544
      %v2546 = vpop.f32.mrb[0].mxu0
      %v2547 = vpop.f32.mrb[0].mxu0
      %v2548 = vadd.f32 0.0, %v2547
      %v2549 = vpop.f32.mrb[0].mxu0
      %2550 = vmatprep.mubr.bf16.mxu0 0
      %2551 = vmatmul.mubr.bf16.gmra.mrb[0].mxu0 %v2467
      %v2552 = vpop.f32.mrb[0].mxu0
      %v2553 = vadd.f32 0.0, %v2552
      %v2554 = vpop.f32.mrb[0].mxu0
      %v2555 = vpop.f32.mrb[0].mxu0
      %v2556 = vadd.f32 0.0, %v2555
      %v2557 = vpop.f32.mrb[0].mxu0
      %2558 = vmatprep.mubr.bf16.mxu0 0
      %2559 = vmatmul.mubr.bf16.gmra.mrb[0].mxu0 %v2470
      %v2560 = vpop.f32.mrb[0].mxu0
      %v2561 = vadd.f32 0.0, %v2560
      %v2562 = vpop.f32.mrb[0].mxu0
      %v2563 = vpop.f32.mrb[0].mxu0
      %v2564 = vadd.f32 0.0, %v2563
      %v2565 = vpop.f32.mrb[0].mxu0
      %2566 = vmatprep.mubr.bf16.mxu0 0
      %2567 = vmatmul.mubr.bf16.gmra.mrb[0].mxu0 %v2473
      %v2568 = vpop.f32.mrb[0].mxu0
      %v2569 = vadd.f32 0.0, %v2568
      %v2570 = vpop.f32.mrb[0].mxu0
      %v2571 = vpop.f32.mrb[0].mxu0
      %v2572 = vadd.f32 0.0, %v2571
      %v2573 = vpop.f32.mrb[0].mxu0
      %2574 = vdwg.mxu0
      %v2575 = vadd.f32 %v2193, %v2513
      %v2576 = vadd.f32 %v2194, %v2516
      %v2577 = vadd.f32 %v2195, %v2521
      %v2578 = vadd.f32 %v2196, %v2524
      %v2579 = vadd.f32 %v2197, %v2529
      %v2580 = vadd.f32 %v2198, %v2532
      %v2581 = vadd.f32 %v2199, %v2537
      %v2582 = vadd.f32 %v2200, %v2540
      %v2583 = vadd.f32 %v2201, %v2545
      %v2584 = vadd.f32 %v2202, %v2548
      %v2585 = vadd.f32 %v2203, %v2553
      %v2586 = vadd.f32 %v2204, %v2556
      %v2587 = vadd.f32 %v2205, %v2561
      %v2588 = vadd.f32 %v2206, %v2564
      %v2589 = vadd.f32 %v2207, %v2569
      %v2590 = vadd.f32 %v2208, %v2572
      %v2591 = vld [vmem:[%s2010] sm:$0xe]
      %v2592 = vld [vmem:[%s2010 + $0xc] sm:$0xe]
      %v2593 = vld [vmem:[%s2010 + $0x18] sm:$0xe]
      %v2594 = vld [vmem:[%s2010 + $0x24] sm:$0xe]
      %v2595 = vld [vmem:[%s2010 + $0x30] sm:$0xe]
      %v2596 = vld [vmem:[%s2010 + $0x3c] sm:$0xe]
      %v2597 = vld [vmem:[%s2010 + $0x48] sm:$0xe]
      %v2598 = vld [vmem:[%s2010 + $0x54] sm:$0xe]
      %v2623 = vrot.slane %v2591, 5
      %v2624 = vrot.slane %v2623, 4
      %v2625 = vrot.slane %v2210, 5
      %v2626 = vsel %vm952, %v2624, %v2625
      %v2627 = vrot.slane %v2625, 4
      %v2628 = vrot.slane %v2211, 5
      %v2629 = vsel %vm952, %v2627, %v2628
      %v2630 = vrot.slane %v2592, 5
      %v2631 = vrot.slane %v2630, 4
      %v2632 = vrot.slane %v2213, 5
      %v2633 = vsel %vm952, %v2631, %v2632
      %v2634 = vrot.slane %v2632, 4
      %v2635 = vrot.slane %v2214, 5
      %v2636 = vsel %vm952, %v2634, %v2635
      %v2637 = vrot.slane %v2593, 5
      %v2638 = vrot.slane %v2637, 4
      %v2639 = vrot.slane %v2216, 5
      %v2640 = vsel %vm952, %v2638, %v2639
      %v2641 = vrot.slane %v2639, 4
      %v2642 = vrot.slane %v2217, 5
      %v2643 = vsel %vm952, %v2641, %v2642
      %v2644 = vrot.slane %v2594, 5
      %v2645 = vrot.slane %v2644, 4
      %v2646 = vrot.slane %v2219, 5
      %v2647 = vsel %vm952, %v2645, %v2646
      %v2648 = vrot.slane %v2646, 4
      %v2649 = vrot.slane %v2220, 5
      %v2650 = vsel %vm952, %v2648, %v2649
      %v2651 = vrot.slane %v2595, 5
      %v2652 = vrot.slane %v2651, 4
      %v2653 = vrot.slane %v2222, 5
      %v2654 = vsel %vm952, %v2652, %v2653
      %v2655 = vrot.slane %v2653, 4
      %v2656 = vrot.slane %v2223, 5
      %v2657 = vsel %vm952, %v2655, %v2656
      %v2658 = vrot.slane %v2596, 5
      %v2659 = vrot.slane %v2658, 4
      %v2660 = vrot.slane %v2225, 5
      %v2661 = vsel %vm952, %v2659, %v2660
      %v2662 = vrot.slane %v2660, 4
      %v2663 = vrot.slane %v2226, 5
      %v2664 = vsel %vm952, %v2662, %v2663
      %v2665 = vrot.slane %v2597, 5
      %v2666 = vrot.slane %v2665, 4
      %v2667 = vrot.slane %v2228, 5
      %v2668 = vsel %vm952, %v2666, %v2667
      %v2669 = vrot.slane %v2667, 4
      %v2670 = vrot.slane %v2229, 5
      %v2671 = vsel %vm952, %v2669, %v2670
      %v2672 = vrot.slane %v2598, 5
      %v2673 = vrot.slane %v2672, 4
      %v2674 = vrot.slane %v2231, 5
      %v2675 = vsel %vm952, %v2673, %v2674
      %v2676 = vrot.slane %v2674, 4
      %v2677 = vrot.slane %v2232, 5
      %v2678 = vsel %vm952, %v2676, %v2677
      %s2679 = scalar_lea.vmem %s2, 16
      %v2680 = vld [vmem:[%s2679] sm:$0x3]
      %v2681 = vunpack.c.l.b16 %v2626
      %v2682 = vunpack.c.l.b16 %v2629
      %v2683 = vunpack.c.l.b16 %v2633
      %v2684 = vunpack.c.l.b16 %v2636
      %v2685 = vunpack.c.l.b16 %v2640
      %v2686 = vunpack.c.l.b16 %v2643
      %v2687 = vunpack.c.l.b16 %v2647
      %v2688 = vunpack.c.l.b16 %v2650
      %v2689 = vunpack.c.l.b16 %v2654
      %v2690 = vunpack.c.l.b16 %v2657
      %v2691 = vunpack.c.l.b16 %v2661
      %v2692 = vunpack.c.l.b16 %v2664
      %v2693 = vunpack.c.l.b16 %v2668
      %v2694 = vunpack.c.l.b16 %v2671
      %v2695 = vunpack.c.l.b16 %v2675
      %v2696 = vunpack.c.l.b16 %v2678
      %v2697 = vpack.c.b16 %v2682, %v2681
      %v2698 = vpack.c.b16 %v2684, %v2683
      %v2699 = vpack.c.b16 %v2686, %v2685
      %v2700 = vpack.c.b16 %v2688, %v2687
      %v2701 = vpack.c.b16 %v2690, %v2689
      %v2702 = vpack.c.b16 %v2692, %v2691
      %v2703 = vpack.c.b16 %v2694, %v2693
      %v2704 = vpack.c.b16 %v2696, %v2695
      %v2706 = vsel %vm636, %v2697, 0
      %v2709 = vsel %vm636, %v2698, 0
      %v2712 = vsel %vm636, %v2699, 0
      %v2715 = vsel %vm636, %v2700, 0
      %v2718 = vsel %vm636, %v2701, 0
      %v2721 = vsel %vm636, %v2702, 0
      %v2724 = vsel %vm636, %v2703, 0
      %v2727 = vsel %vm636, %v2704, 0
      %v2730 = vsel %vm661, %v2680, 0
      %2732 = vmatprep.subr.bf16.mxu0 0
      %2733 = vmatpush1.bf16.msra.mxu0 %v2730
      %2734 = vmatprep.subr.bf16.mxu0 0
      %2735 = vmatpush1.bf16.msra.mxu0 0
      %2736 = vmatprep.subr.bf16.mxu0 0
      %2737 = vmatpush1.bf16.msra.mxu0 0
      %2738 = vmatprep.subr.bf16.mxu0 0
      %2739 = vmatpush1.bf16.msra.mxu0 0
      %2740 = vmatprep.subr.bf16.mxu0 0
      %2741 = vmatpush1.bf16.msra.mxu0 0
      %2742 = vmatprep.subr.bf16.mxu0 0
      %2743 = vmatpush1.bf16.msra.mxu0 0
      %2744 = vmatprep.subr.bf16.mxu0 0
      %2745 = vmatpush1.bf16.msra.mxu0 0
      %2746 = vmatprep.subr.bf16.mxu0 0
      %2747 = vmatpush1.bf16.msra.mxu0 0
      %2748 = vmatprep.subr.bf16.mxu0 0
      %2749 = vmatpush1.bf16.msra.mxu0 0
      %2750 = vmatprep.subr.bf16.mxu0 0
      %2751 = vmatpush1.bf16.msra.mxu0 0
      %2752 = vmatprep.subr.bf16.mxu0 0
      %2753 = vmatpush1.bf16.msra.mxu0 0
      %2754 = vmatprep.subr.bf16.mxu0 0
      %2755 = vmatpush1.bf16.msra.mxu0 0
      %2756 = vmatprep.subr.bf16.mxu0 0
      %2757 = vmatpush1.bf16.msra.mxu0 0
      %2758 = vmatprep.subr.bf16.mxu0 0
      %2759 = vmatpush1.bf16.msra.mxu0 0
      %2760 = vmatprep.subr.bf16.mxu0 0
      %2761 = vmatpush1.bf16.msra.mxu0 0
      %2762 = vmatprep.subr.bf16.mxu0 0
      %2763 = vmatpush1.bf16.msra.mxu0 0
      %2764 = vmatprep.mubr.bf16.mxu0 0
      %2765 = vmatmul.mubr.bf16.gmra.mrb[0].mxu0 %v2706
      %v2766 = vpop.f32.mrb[0].mxu0
      %v2767 = vadd.f32 0.0, %v2766
      %v2768 = vpop.f32.mrb[0].mxu0
      %v2769 = vpop.f32.mrb[0].mxu0
      %v2770 = vadd.f32 0.0, %v2769
      %v2771 = vpop.f32.mrb[0].mxu0
      %2772 = vmatprep.mubr.bf16.mxu0 0
      %2773 = vmatmul.mubr.bf16.gmra.mrb[0].mxu0 %v2709
      %v2774 = vpop.f32.mrb[0].mxu0
      %v2775 = vadd.f32 0.0, %v2774
      %v2776 = vpop.f32.mrb[0].mxu0
      %v2777 = vpop.f32.mrb[0].mxu0
      %v2778 = vadd.f32 0.0, %v2777
      %v2779 = vpop.f32.mrb[0].mxu0
      %2780 = vmatprep.mubr.bf16.mxu0 0
      %2781 = vmatmul.mubr.bf16.gmra.mrb[0].mxu0 %v2712
      %v2782 = vpop.f32.mrb[0].mxu0
      %v2783 = vadd.f32 0.0, %v2782
      %v2784 = vpop.f32.mrb[0].mxu0
      %v2785 = vpop.f32.mrb[0].mxu0
      %v2786 = vadd.f32 0.0, %v2785
      %v2787 = vpop.f32.mrb[0].mxu0
      %2788 = vmatprep.mubr.bf16.mxu0 0
      %2789 = vmatmul.mubr.bf16.gmra.mrb[0].mxu0 %v2715
      %v2790 = vpop.f32.mrb[0].mxu0
      %v2791 = vadd.f32 0.0, %v2790
      %v2792 = vpop.f32.mrb[0].mxu0
      %v2793 = vpop.f32.mrb[0].mxu0
      %v2794 = vadd.f32 0.0, %v2793
      %v2795 = vpop.f32.mrb[0].mxu0
      %2796 = vmatprep.mubr.bf16.mxu0 0
      %2797 = vmatmul.mubr.bf16.gmra.mrb[0].mxu0 %v2718
      %v2798 = vpop.f32.mrb[0].mxu0
      %v2799 = vadd.f32 0.0, %v2798
      %v2800 = vpop.f32.mrb[0].mxu0
      %v2801 = vpop.f32.mrb[0].mxu0
      %v2802 = vadd.f32 0.0, %v2801
      %v2803 = vpop.f32.mrb[0].mxu0
      %2804 = vmatprep.mubr.bf16.mxu0 0
      %2805 = vmatmul.mubr.bf16.gmra.mrb[0].mxu0 %v2721
      %v2806 = vpop.f32.mrb[0].mxu0
      %v2807 = vadd.f32 0.0, %v2806
      %v2808 = vpop.f32.mrb[0].mxu0
      %v2809 = vpop.f32.mrb[0].mxu0
      %v2810 = vadd.f32 0.0, %v2809
      %v2811 = vpop.f32.mrb[0].mxu0
      %2812 = vmatprep.mubr.bf16.mxu0 0
      %2813 = vmatmul.mubr.bf16.gmra.mrb[0].mxu0 %v2724
      %v2814 = vpop.f32.mrb[0].mxu0
      %v2815 = vadd.f32 0.0, %v2814
      %v2816 = vpop.f32.mrb[0].mxu0
      %v2817 = vpop.f32.mrb[0].mxu0
      %v2818 = vadd.f32 0.0, %v2817
      %v2819 = vpop.f32.mrb[0].mxu0
      %2820 = vmatprep.mubr.bf16.mxu0 0
      %2821 = vmatmul.mubr.bf16.gmra.mrb[0].mxu0 %v2727
      %v2822 = vpop.f32.mrb[0].mxu0
      %v2823 = vadd.f32 0.0, %v2822
      %v2824 = vpop.f32.mrb[0].mxu0
      %v2825 = vpop.f32.mrb[0].mxu0
      %v2826 = vadd.f32 0.0, %v2825
      %v2827 = vpop.f32.mrb[0].mxu0
      %2828 = vdwg.mxu0
      %v2829 = vadd.f32 %v2575, %v2767
      %v2830 = vadd.f32 %v2576, %v2770
      %v2831 = vadd.f32 %v2577, %v2775
      %v2832 = vadd.f32 %v2578, %v2778
      %v2833 = vadd.f32 %v2579, %v2783
      %v2834 = vadd.f32 %v2580, %v2786
      %v2835 = vadd.f32 %v2581, %v2791
      %v2836 = vadd.f32 %v2582, %v2794
      %v2837 = vadd.f32 %v2583, %v2799
      %v2838 = vadd.f32 %v2584, %v2802
      %v2839 = vadd.f32 %v2585, %v2807
      %v2840 = vadd.f32 %v2586, %v2810
      %v2841 = vadd.f32 %v2587, %v2815
      %v2842 = vadd.f32 %v2588, %v2818
      %v2843 = vadd.f32 %v2589, %v2823
      %v2844 = vadd.f32 %v2590, %v2826
      %v2845 = vld [vmem:[%s363] sm:$0xf]
      %v2846 = vld [vmem:[%s363 + $0x4] sm:$0xf]
      %v2847 = vld [vmem:[%s363 + $0xc] sm:$0xf]
      %v2848 = vld [vmem:[%s363 + $0x10] sm:$0xf]
      %v2849 = vld [vmem:[%s363 + $0x18] sm:$0xf]
      %v2850 = vld [vmem:[%s363 + $0x1c] sm:$0xf]
      %v2851 = vld [vmem:[%s363 + $0x24] sm:$0xf]
      %v2852 = vld [vmem:[%s363 + $0x28] sm:$0xf]
      %v2853 = vld [vmem:[%s363 + $0x30] sm:$0xf]
      %v2854 = vld [vmem:[%s363 + $0x34] sm:$0xf]
      %v2855 = vld [vmem:[%s363 + $0x3c] sm:$0xf]
      %v2856 = vld [vmem:[%s363 + $0x40] sm:$0xf]
      %v2857 = vld [vmem:[%s363 + $0x48] sm:$0xf]
      %v2858 = vld [vmem:[%s363 + $0x4c] sm:$0xf]
      %v2859 = vld [vmem:[%s363 + $0x54] sm:$0xf]
      %v2860 = vld [vmem:[%s363 + $0x58] sm:$0xf]
      %v2861 = vld [vmem:[%s3] sm:$0x3]
      %v2878 = vunpack.c.l.b16 %v2845
      %v2879 = vunpack.c.l.b16 %v2846
      %v2880 = vunpack.c.l.b16 %v2847
      %v2881 = vunpack.c.l.b16 %v2848
      %v2882 = vunpack.c.l.b16 %v2849
      %v2883 = vunpack.c.l.b16 %v2850
      %v2884 = vunpack.c.l.b16 %v2851
      %v2885 = vunpack.c.l.b16 %v2852
      %v2886 = vunpack.c.l.b16 %v2853
      %v2887 = vunpack.c.l.b16 %v2854
      %v2888 = vunpack.c.l.b16 %v2855
      %v2889 = vunpack.c.l.b16 %v2856
      %v2890 = vunpack.c.l.b16 %v2857
      %v2891 = vunpack.c.l.b16 %v2858
      %v2892 = vunpack.c.l.b16 %v2859
      %v2893 = vunpack.c.l.b16 %v2860
      %v2894 = vpack.c.b16 %v2879, %v2878
      %v2895 = vpack.c.b16 %v2881, %v2880
      %v2896 = vpack.c.b16 %v2883, %v2882
      %v2897 = vpack.c.b16 %v2885, %v2884
      %v2898 = vpack.c.b16 %v2887, %v2886
      %v2899 = vpack.c.b16 %v2889, %v2888
      %v2900 = vpack.c.b16 %v2891, %v2890
      %v2901 = vpack.c.b16 %v2893, %v2892
      %v2903 = vsel %vm636, %v2894, 0
      %v2906 = vsel %vm636, %v2895, 0
      %v2909 = vsel %vm636, %v2896, 0
      %v2912 = vsel %vm636, %v2897, 0
      %v2915 = vsel %vm636, %v2898, 0
      %v2918 = vsel %vm636, %v2899, 0
      %v2921 = vsel %vm636, %v2900, 0
      %v2924 = vsel %vm636, %v2901, 0
      %v2927 = vsel %vm661, %v2861, 0
      %2929 = vmatprep.subr.bf16.mxu0 0
      %2930 = vmatpush1.bf16.msra.mxu0 %v2927
      %2931 = vmatprep.subr.bf16.mxu0 0
      %2932 = vmatpush1.bf16.msra.mxu0 0
      %2933 = vmatprep.subr.bf16.mxu0 0
      %2934 = vmatpush1.bf16.msra.mxu0 0
      %2935 = vmatprep.subr.bf16.mxu0 0
      %2936 = vmatpush1.bf16.msra.mxu0 0
      %2937 = vmatprep.subr.bf16.mxu0 0
      %2938 = vmatpush1.bf16.msra.mxu0 0
      %2939 = vmatprep.subr.bf16.mxu0 0
      %2940 = vmatpush1.bf16.msra.mxu0 0
      %2941 = vmatprep.subr.bf16.mxu0 0
      %2942 = vmatpush1.bf16.msra.mxu0 0
      %2943 = vmatprep.subr.bf16.mxu0 0
      %2944 = vmatpush1.bf16.msra.mxu0 0
      %2945 = vmatprep.subr.bf16.mxu0 0
      %2946 = vmatpush1.bf16.msra.mxu0 0
      %2947 = vmatprep.subr.bf16.mxu0 0
      %2948 = vmatpush1.bf16.msra.mxu0 0
      %2949 = vmatprep.subr.bf16.mxu0 0
      %2950 = vmatpush1.bf16.msra.mxu0 0
      %2951 = vmatprep.subr.bf16.mxu0 0
      %2952 = vmatpush1.bf16.msra.mxu0 0
      %2953 = vmatprep.subr.bf16.mxu0 0
      %2954 = vmatpush1.bf16.msra.mxu0 0
      %2955 = vmatprep.subr.bf16.mxu0 0
      %2956 = vmatpush1.bf16.msra.mxu0 0
      %2957 = vmatprep.subr.bf16.mxu0 0
      %2958 = vmatpush1.bf16.msra.mxu0 0
      %2959 = vmatprep.subr.bf16.mxu0 0
      %2960 = vmatpush1.bf16.msra.mxu0 0
      %2961 = vmatprep.mubr.bf16.mxu0 0
      %2962 = vmatmul.mubr.bf16.gmra.mrb[0].mxu0 %v2903
      %v2963 = vpop.f32.mrb[0].mxu0
      %v2964 = vadd.f32 0.0, %v2963
      %v2965 = vpop.f32.mrb[0].mxu0
      %v2966 = vpop.f32.mrb[0].mxu0
      %v2967 = vadd.f32 0.0, %v2966
      %v2968 = vpop.f32.mrb[0].mxu0
      %2969 = vmatprep.mubr.bf16.mxu0 0
      %2970 = vmatmul.mubr.bf16.gmra.mrb[0].mxu0 %v2906
      %v2971 = vpop.f32.mrb[0].mxu0
      %v2972 = vadd.f32 0.0, %v2971
      %v2973 = vpop.f32.mrb[0].mxu0
      %v2974 = vpop.f32.mrb[0].mxu0
      %v2975 = vadd.f32 0.0, %v2974
      %v2976 = vpop.f32.mrb[0].mxu0
      %2977 = vmatprep.mubr.bf16.mxu0 0
      %2978 = vmatmul.mubr.bf16.gmra.mrb[0].mxu0 %v2909
      %v2979 = vpop.f32.mrb[0].mxu0
      %v2980 = vadd.f32 0.0, %v2979
      %v2981 = vpop.f32.mrb[0].mxu0
      %v2982 = vpop.f32.mrb[0].mxu0
      %v2983 = vadd.f32 0.0, %v2982
      %v2984 = vpop.f32.mrb[0].mxu0
      %2985 = vmatprep.mubr.bf16.mxu0 0
      %2986 = vmatmul.mubr.bf16.gmra.mrb[0].mxu0 %v2912
      %v2987 = vpop.f32.mrb[0].mxu0
      %v2988 = vadd.f32 0.0, %v2987
      %v2989 = vpop.f32.mrb[0].mxu0
      %v2990 = vpop.f32.mrb[0].mxu0
      %v2991 = vadd.f32 0.0, %v2990
      %v2992 = vpop.f32.mrb[0].mxu0
      %2993 = vmatprep.mubr.bf16.mxu0 0
      %2994 = vmatmul.mubr.bf16.gmra.mrb[0].mxu0 %v2915
      %v2995 = vpop.f32.mrb[0].mxu0
      %v2996 = vadd.f32 0.0, %v2995
      %v2997 = vpop.f32.mrb[0].mxu0
      %v2998 = vpop.f32.mrb[0].mxu0
      %v2999 = vadd.f32 0.0, %v2998
      %v3000 = vpop.f32.mrb[0].mxu0
      %3001 = vmatprep.mubr.bf16.mxu0 0
      %3002 = vmatmul.mubr.bf16.gmra.mrb[0].mxu0 %v2918
      %v3003 = vpop.f32.mrb[0].mxu0
      %v3004 = vadd.f32 0.0, %v3003
      %v3005 = vpop.f32.mrb[0].mxu0
      %v3006 = vpop.f32.mrb[0].mxu0
      %v3007 = vadd.f32 0.0, %v3006
      %v3008 = vpop.f32.mrb[0].mxu0
      %3009 = vmatprep.mubr.bf16.mxu0 0
      %3010 = vmatmul.mubr.bf16.gmra.mrb[0].mxu0 %v2921
      %v3011 = vpop.f32.mrb[0].mxu0
      %v3012 = vadd.f32 0.0, %v3011
      %v3013 = vpop.f32.mrb[0].mxu0
      %v3014 = vpop.f32.mrb[0].mxu0
      %v3015 = vadd.f32 0.0, %v3014
      %v3016 = vpop.f32.mrb[0].mxu0
      %3017 = vmatprep.mubr.bf16.mxu0 0
      %3018 = vmatmul.mubr.bf16.gmra.mrb[0].mxu0 %v2924
      %v3019 = vpop.f32.mrb[0].mxu0
      %v3020 = vadd.f32 0.0, %v3019
      %v3021 = vpop.f32.mrb[0].mxu0
      %v3022 = vpop.f32.mrb[0].mxu0
      %v3023 = vadd.f32 0.0, %v3022
      %v3024 = vpop.f32.mrb[0].mxu0
      %3025 = vdwg.mxu0
      %v3026 = vadd.f32 %v2829, %v2964
      %v3027 = vadd.f32 %v2830, %v2967
      %v3028 = vadd.f32 %v2831, %v2972
      %v3029 = vadd.f32 %v2832, %v2975
      %v3030 = vadd.f32 %v2833, %v2980
      %v3031 = vadd.f32 %v2834, %v2983
      %v3032 = vadd.f32 %v2835, %v2988
      %v3033 = vadd.f32 %v2836, %v2991
      %v3034 = vadd.f32 %v2837, %v2996
      %v3035 = vadd.f32 %v2838, %v2999
      %v3036 = vadd.f32 %v2839, %v3004
      %v3037 = vadd.f32 %v2840, %v3007
      %v3038 = vadd.f32 %v2841, %v3012
      %v3039 = vadd.f32 %v2842, %v3015
      %v3040 = vadd.f32 %v2843, %v3020
      %v3041 = vadd.f32 %v2844, %v3023
      %v3042 = vld [vmem:[%s363] sm:$0xf]
      %v3043 = vld [vmem:[%s363 + $0x4] sm:$0xf]
      %v3044 = vld [vmem:[%s363 + $0x8] sm:$0x1]
      %v3045 = vld [vmem:[%s363 + $0xc] sm:$0xf]
      %v3046 = vld [vmem:[%s363 + $0x10] sm:$0xf]
      %v3047 = vld [vmem:[%s363 + $0x14] sm:$0x1]
      %v3048 = vld [vmem:[%s363 + $0x18] sm:$0xf]
      %v3049 = vld [vmem:[%s363 + $0x1c] sm:$0xf]
      %v3050 = vld [vmem:[%s363 + $0x20] sm:$0x1]
      %v3051 = vld [vmem:[%s363 + $0x24] sm:$0xf]
      %v3052 = vld [vmem:[%s363 + $0x28] sm:$0xf]
      %v3053 = vld [vmem:[%s363 + $0x2c] sm:$0x1]
      %v3054 = vld [vmem:[%s363 + $0x30] sm:$0xf]
      %v3055 = vld [vmem:[%s363 + $0x34] sm:$0xf]
      %v3056 = vld [vmem:[%s363 + $0x38] sm:$0x1]
      %v3057 = vld [vmem:[%s363 + $0x3c] sm:$0xf]
      %v3058 = vld [vmem:[%s363 + $0x40] sm:$0xf]
      %v3059 = vld [vmem:[%s363 + $0x44] sm:$0x1]
      %v3060 = vld [vmem:[%s363 + $0x48] sm:$0xf]
      %v3061 = vld [vmem:[%s363 + $0x4c] sm:$0xf]
      %v3062 = vld [vmem:[%s363 + $0x50] sm:$0x1]
      %v3063 = vld [vmem:[%s363 + $0x54] sm:$0xf]
      %v3064 = vld [vmem:[%s363 + $0x58] sm:$0xf]
      %v3065 = vld [vmem:[%s363 + $0x5c] sm:$0x1]
      %v3067 = vshrl.u32 %v3042, 16
      %v3069 = vrot.slane %v3067, 4
      %v3070 = vshll.u32 %v3042, 16
      %v3072 = vrot.slane %v3070, 5
      %v3073 = vor.u32 %v3069, %v3072
      %v3074 = vrot.slane %v3073, 4
      %v3076 = vshll.u32 %v3043, 16
      %v3078 = vrot.slane %v3076, 5
      %v3079 = vsel %vm417, %v3074, %v3078
      %v3080 = vshrl.u32 %v3043, 16
      %v3082 = vrot.slane %v3080, 4
      %v3083 = vor.u32 %v3082, %v3078
      %v3084 = vrot.slane %v3083, 4
      %v3086 = vshll.u32 %v3044, 16
      %v3088 = vrot.slane %v3086, 5
      %v3089 = vsel %vm417, %v3084, %v3088
      %v3091 = vshrl.u32 %v3045, 16
      %v3093 = vrot.slane %v3091, 4
      %v3094 = vshll.u32 %v3045, 16
      %v3096 = vrot.slane %v3094, 5
      %v3097 = vor.u32 %v3093, %v3096
      %v3098 = vrot.slane %v3097, 4
      %v3100 = vshll.u32 %v3046, 16
      %v3102 = vrot.slane %v3100, 5
      %v3103 = vsel %vm417, %v3098, %v3102
      %v3104 = vshrl.u32 %v3046, 16
      %v3106 = vrot.slane %v3104, 4
      %v3107 = vor.u32 %v3106, %v3102
      %v3108 = vrot.slane %v3107, 4
      %v3110 = vshll.u32 %v3047, 16
      %v3112 = vrot.slane %v3110, 5
      %v3113 = vsel %vm417, %v3108, %v3112
      %v3115 = vshrl.u32 %v3048, 16
      %v3117 = vrot.slane %v3115, 4
      %v3118 = vshll.u32 %v3048, 16
      %v3120 = vrot.slane %v3118, 5
      %v3121 = vor.u32 %v3117, %v3120
      %v3122 = vrot.slane %v3121, 4
      %v3124 = vshll.u32 %v3049, 16
      %v3126 = vrot.slane %v3124, 5
      %v3127 = vsel %vm417, %v3122, %v3126
      %v3128 = vshrl.u32 %v3049, 16
      %v3130 = vrot.slane %v3128, 4
      %v3131 = vor.u32 %v3130, %v3126
      %v3132 = vrot.slane %v3131, 4
      %v3134 = vshll.u32 %v3050, 16
      %v3136 = vrot.slane %v3134, 5
      %v3137 = vsel %vm417, %v3132, %v3136
      %v3139 = vshrl.u32 %v3051, 16
      %v3141 = vrot.slane %v3139, 4
      %v3142 = vshll.u32 %v3051, 16
      %v3144 = vrot.slane %v3142, 5
      %v3145 = vor.u32 %v3141, %v3144
      %v3146 = vrot.slane %v3145, 4
      %v3148 = vshll.u32 %v3052, 16
      %v3150 = vrot.slane %v3148, 5
      %v3151 = vsel %vm417, %v3146, %v3150
      %v3152 = vshrl.u32 %v3052, 16
      %v3154 = vrot.slane %v3152, 4
      %v3155 = vor.u32 %v3154, %v3150
      %v3156 = vrot.slane %v3155, 4
      %v3158 = vshll.u32 %v3053, 16
      %v3160 = vrot.slane %v3158, 5
      %v3161 = vsel %vm417, %v3156, %v3160
      %v3163 = vshrl.u32 %v3054, 16
      %v3165 = vrot.slane %v3163, 4
      %v3166 = vshll.u32 %v3054, 16
      %v3168 = vrot.slane %v3166, 5
      %v3169 = vor.u32 %v3165, %v3168
      %v3170 = vrot.slane %v3169, 4
      %v3172 = vshll.u32 %v3055, 16
      %v3174 = vrot.slane %v3172, 5
      %v3175 = vsel %vm417, %v3170, %v3174
      %v3176 = vshrl.u32 %v3055, 16
      %v3178 = vrot.slane %v3176, 4
      %v3179 = vor.u32 %v3178, %v3174
      %v3180 = vrot.slane %v3179, 4
      %v3182 = vshll.u32 %v3056, 16
      %v3184 = vrot.slane %v3182, 5
      %v3185 = vsel %vm417, %v3180, %v3184
      %v3187 = vshrl.u32 %v3057, 16
      %v3189 = vrot.slane %v3187, 4
      %v3190 = vshll.u32 %v3057, 16
      %v3192 = vrot.slane %v3190, 5
      %v3193 = vor.u32 %v3189, %v3192
      %v3194 = vrot.slane %v3193, 4
      %v3196 = vshll.u32 %v3058, 16
      %v3198 = vrot.slane %v3196, 5
      %v3199 = vsel %vm417, %v3194, %v3198
      %v3200 = vshrl.u32 %v3058, 16
      %v3202 = vrot.slane %v3200, 4
      %v3203 = vor.u32 %v3202, %v3198
      %v3204 = vrot.slane %v3203, 4
      %v3206 = vshll.u32 %v3059, 16
      %v3208 = vrot.slane %v3206, 5
      %v3209 = vsel %vm417, %v3204, %v3208
      %v3211 = vshrl.u32 %v3060, 16
      %v3213 = vrot.slane %v3211, 4
      %v3214 = vshll.u32 %v3060, 16
      %v3216 = vrot.slane %v3214, 5
      %v3217 = vor.u32 %v3213, %v3216
      %v3218 = vrot.slane %v3217, 4
      %v3220 = vshll.u32 %v3061, 16
      %v3222 = vrot.slane %v3220, 5
      %v3223 = vsel %vm417, %v3218, %v3222
      %v3224 = vshrl.u32 %v3061, 16
      %v3226 = vrot.slane %v3224, 4
      %v3227 = vor.u32 %v3226, %v3222
      %v3228 = vrot.slane %v3227, 4
      %v3230 = vshll.u32 %v3062, 16
      %v3232 = vrot.slane %v3230, 5
      %v3233 = vsel %vm417, %v3228, %v3232
      %v3235 = vshrl.u32 %v3063, 16
      %v3237 = vrot.slane %v3235, 4
      %v3238 = vshll.u32 %v3063, 16
      %v3240 = vrot.slane %v3238, 5
      %v3241 = vor.u32 %v3237, %v3240
      %v3242 = vrot.slane %v3241, 4
      %v3244 = vshll.u32 %v3064, 16
      %v3246 = vrot.slane %v3244, 5
      %v3247 = vsel %vm417, %v3242, %v3246
      %v3248 = vshrl.u32 %v3064, 16
      %v3250 = vrot.slane %v3248, 4
      %v3251 = vor.u32 %v3250, %v3246
      %v3252 = vrot.slane %v3251, 4
      %v3254 = vshll.u32 %v3065, 16
      %v3256 = vrot.slane %v3254, 5
      %v3257 = vsel %vm417, %v3252, %v3256
      %s3258 = scalar_lea.vmem %s3, 2
      %v3259 = vld [vmem:[%s3258] sm:$0x3]
      %v3260 = vunpack.c.l.b16 %v3079
      %v3261 = vunpack.c.l.b16 %v3089
      %v3262 = vunpack.c.l.b16 %v3103
      %v3263 = vunpack.c.l.b16 %v3113
      %v3264 = vunpack.c.l.b16 %v3127
      %v3265 = vunpack.c.l.b16 %v3137
      %v3266 = vunpack.c.l.b16 %v3151
      %v3267 = vunpack.c.l.b16 %v3161
      %v3268 = vunpack.c.l.b16 %v3175
      %v3269 = vunpack.c.l.b16 %v3185
      %v3270 = vunpack.c.l.b16 %v3199
      %v3271 = vunpack.c.l.b16 %v3209
      %v3272 = vunpack.c.l.b16 %v3223
      %v3273 = vunpack.c.l.b16 %v3233
      %v3274 = vunpack.c.l.b16 %v3247
      %v3275 = vunpack.c.l.b16 %v3257
      %v3276 = vpack.c.b16 %v3261, %v3260
      %v3277 = vpack.c.b16 %v3263, %v3262
      %v3278 = vpack.c.b16 %v3265, %v3264
      %v3279 = vpack.c.b16 %v3267, %v3266
      %v3280 = vpack.c.b16 %v3269, %v3268
      %v3281 = vpack.c.b16 %v3271, %v3270
      %v3282 = vpack.c.b16 %v3273, %v3272
      %v3283 = vpack.c.b16 %v3275, %v3274
      %v3285 = vsel %vm636, %v3276, 0
      %v3288 = vsel %vm636, %v3277, 0
      %v3291 = vsel %vm636, %v3278, 0
      %v3294 = vsel %vm636, %v3279, 0
      %v3297 = vsel %vm636, %v3280, 0
      %v3300 = vsel %vm636, %v3281, 0
      %v3303 = vsel %vm636, %v3282, 0
      %v3306 = vsel %vm636, %v3283, 0
      %v3309 = vsel %vm661, %v3259, 0
      %3311 = vmatprep.subr.bf16.mxu0 0
      %3312 = vmatpush1.bf16.msra.mxu0 %v3309
      %3313 = vmatprep.subr.bf16.mxu0 0
      %3314 = vmatpush1.bf16.msra.mxu0 0
      %3315 = vmatprep.subr.bf16.mxu0 0
      %3316 = vmatpush1.bf16.msra.mxu0 0
      %3317 = vmatprep.subr.bf16.mxu0 0
      %3318 = vmatpush1.bf16.msra.mxu0 0
      %3319 = vmatprep.subr.bf16.mxu0 0
      %3320 = vmatpush1.bf16.msra.mxu0 0
      %3321 = vmatprep.subr.bf16.mxu0 0
      %3322 = vmatpush1.bf16.msra.mxu0 0
      %3323 = vmatprep.subr.bf16.mxu0 0
      %3324 = vmatpush1.bf16.msra.mxu0 0
      %3325 = vmatprep.subr.bf16.mxu0 0
      %3326 = vmatpush1.bf16.msra.mxu0 0
      %3327 = vmatprep.subr.bf16.mxu0 0
      %3328 = vmatpush1.bf16.msra.mxu0 0
      %3329 = vmatprep.subr.bf16.mxu0 0
      %3330 = vmatpush1.bf16.msra.mxu0 0
      %3331 = vmatprep.subr.bf16.mxu0 0
      %3332 = vmatpush1.bf16.msra.mxu0 0
      %3333 = vmatprep.subr.bf16.mxu0 0
      %3334 = vmatpush1.bf16.msra.mxu0 0
      %3335 = vmatprep.subr.bf16.mxu0 0
      %3336 = vmatpush1.bf16.msra.mxu0 0
      %3337 = vmatprep.subr.bf16.mxu0 0
      %3338 = vmatpush1.bf16.msra.mxu0 0
      %3339 = vmatprep.subr.bf16.mxu0 0
      %3340 = vmatpush1.bf16.msra.mxu0 0
      %3341 = vmatprep.subr.bf16.mxu0 0
      %3342 = vmatpush1.bf16.msra.mxu0 0
      %3343 = vmatprep.mubr.bf16.mxu0 0
      %3344 = vmatmul.mubr.bf16.gmra.mrb[0].mxu0 %v3285
      %v3345 = vpop.f32.mrb[0].mxu0
      %v3346 = vadd.f32 0.0, %v3345
      %v3347 = vpop.f32.mrb[0].mxu0
      %v3348 = vpop.f32.mrb[0].mxu0
      %v3349 = vadd.f32 0.0, %v3348
      %v3350 = vpop.f32.mrb[0].mxu0
      %3351 = vmatprep.mubr.bf16.mxu0 0
      %3352 = vmatmul.mubr.bf16.gmra.mrb[0].mxu0 %v3288
      %v3353 = vpop.f32.mrb[0].mxu0
      %v3354 = vadd.f32 0.0, %v3353
      %v3355 = vpop.f32.mrb[0].mxu0
      %v3356 = vpop.f32.mrb[0].mxu0
      %v3357 = vadd.f32 0.0, %v3356
      %v3358 = vpop.f32.mrb[0].mxu0
      %3359 = vmatprep.mubr.bf16.mxu0 0
      %3360 = vmatmul.mubr.bf16.gmra.mrb[0].mxu0 %v3291
      %v3361 = vpop.f32.mrb[0].mxu0
      %v3362 = vadd.f32 0.0, %v3361
      %v3363 = vpop.f32.mrb[0].mxu0
      %v3364 = vpop.f32.mrb[0].mxu0
      %v3365 = vadd.f32 0.0, %v3364
      %v3366 = vpop.f32.mrb[0].mxu0
      %3367 = vmatprep.mubr.bf16.mxu0 0
      %3368 = vmatmul.mubr.bf16.gmra.mrb[0].mxu0 %v3294
      %v3369 = vpop.f32.mrb[0].mxu0
      %v3370 = vadd.f32 0.0, %v3369
      %v3371 = vpop.f32.mrb[0].mxu0
      %v3372 = vpop.f32.mrb[0].mxu0
      %v3373 = vadd.f32 0.0, %v3372
      %v3374 = vpop.f32.mrb[0].mxu0
      %3375 = vmatprep.mubr.bf16.mxu0 0
      %3376 = vmatmul.mubr.bf16.gmra.mrb[0].mxu0 %v3297
      %v3377 = vpop.f32.mrb[0].mxu0
      %v3378 = vadd.f32 0.0, %v3377
      %v3379 = vpop.f32.mrb[0].mxu0
      %v3380 = vpop.f32.mrb[0].mxu0
      %v3381 = vadd.f32 0.0, %v3380
      %v3382 = vpop.f32.mrb[0].mxu0
      %3383 = vmatprep.mubr.bf16.mxu0 0
      %3384 = vmatmul.mubr.bf16.gmra.mrb[0].mxu0 %v3300
      %v3385 = vpop.f32.mrb[0].mxu0
      %v3386 = vadd.f32 0.0, %v3385
      %v3387 = vpop.f32.mrb[0].mxu0
      %v3388 = vpop.f32.mrb[0].mxu0
      %v3389 = vadd.f32 0.0, %v3388
      %v3390 = vpop.f32.mrb[0].mxu0
      %3391 = vmatprep.mubr.bf16.mxu0 0
      %3392 = vmatmul.mubr.bf16.gmra.mrb[0].mxu0 %v3303
      %v3393 = vpop.f32.mrb[0].mxu0
      %v3394 = vadd.f32 0.0, %v3393
      %v3395 = vpop.f32.mrb[0].mxu0
      %v3396 = vpop.f32.mrb[0].mxu0
      %v3397 = vadd.f32 0.0, %v3396
      %v3398 = vpop.f32.mrb[0].mxu0
      %3399 = vmatprep.mubr.bf16.mxu0 0
      %3400 = vmatmul.mubr.bf16.gmra.mrb[0].mxu0 %v3306
      %v3401 = vpop.f32.mrb[0].mxu0
      %v3402 = vadd.f32 0.0, %v3401
      %v3403 = vpop.f32.mrb[0].mxu0
      %v3404 = vpop.f32.mrb[0].mxu0
      %v3405 = vadd.f32 0.0, %v3404
      %v3406 = vpop.f32.mrb[0].mxu0
      %3407 = vdwg.mxu0
      %v3408 = vadd.f32 %v3026, %v3346
      %v3409 = vadd.f32 %v3027, %v3349
      %v3410 = vadd.f32 %v3028, %v3354
      %v3411 = vadd.f32 %v3029, %v3357
      %v3412 = vadd.f32 %v3030, %v3362
      %v3413 = vadd.f32 %v3031, %v3365
      %v3414 = vadd.f32 %v3032, %v3370
      %v3415 = vadd.f32 %v3033, %v3373
      %v3416 = vadd.f32 %v3034, %v3378
      %v3417 = vadd.f32 %v3035, %v3381
      %v3418 = vadd.f32 %v3036, %v3386
      %v3419 = vadd.f32 %v3037, %v3389
      %v3420 = vadd.f32 %v3038, %v3394
      %v3421 = vadd.f32 %v3039, %v3397
      %v3422 = vadd.f32 %v3040, %v3402
      %v3423 = vadd.f32 %v3041, %v3405
      %v3424 = vld [vmem:[%s363] sm:$0xe]
      %v3425 = vld [vmem:[%s363 + $0xc] sm:$0xe]
      %v3426 = vld [vmem:[%s363 + $0x18] sm:$0xe]
      %v3427 = vld [vmem:[%s363 + $0x24] sm:$0xe]
      %v3428 = vld [vmem:[%s363 + $0x30] sm:$0xe]
      %v3429 = vld [vmem:[%s363 + $0x3c] sm:$0xe]
      %v3430 = vld [vmem:[%s363 + $0x48] sm:$0xe]
      %v3431 = vld [vmem:[%s363 + $0x54] sm:$0xe]
      %v3456 = vrot.slane %v3424, 5
      %v3457 = vrot.slane %v3456, 4
      %v3458 = vrot.slane %v3043, 5
      %v3459 = vsel %vm952, %v3457, %v3458
      %v3460 = vrot.slane %v3458, 4
      %v3461 = vrot.slane %v3044, 5
      %v3462 = vsel %vm952, %v3460, %v3461
      %v3463 = vrot.slane %v3425, 5
      %v3464 = vrot.slane %v3463, 4
      %v3465 = vrot.slane %v3046, 5
      %v3466 = vsel %vm952, %v3464, %v3465
      %v3467 = vrot.slane %v3465, 4
      %v3468 = vrot.slane %v3047, 5
      %v3469 = vsel %vm952, %v3467, %v3468
      %v3470 = vrot.slane %v3426, 5
      %v3471 = vrot.slane %v3470, 4
      %v3472 = vrot.slane %v3049, 5
      %v3473 = vsel %vm952, %v3471, %v3472
      %v3474 = vrot.slane %v3472, 4
      %v3475 = vrot.slane %v3050, 5
      %v3476 = vsel %vm952, %v3474, %v3475
      %v3477 = vrot.slane %v3427, 5
      %v3478 = vrot.slane %v3477, 4
      %v3479 = vrot.slane %v3052, 5
      %v3480 = vsel %vm952, %v3478, %v3479
      %v3481 = vrot.slane %v3479, 4
      %v3482 = vrot.slane %v3053, 5
      %v3483 = vsel %vm952, %v3481, %v3482
      %v3484 = vrot.slane %v3428, 5
      %v3485 = vrot.slane %v3484, 4
      %v3486 = vrot.slane %v3055, 5
      %v3487 = vsel %vm952, %v3485, %v3486
      %v3488 = vrot.slane %v3486, 4
      %v3489 = vrot.slane %v3056, 5
      %v3490 = vsel %vm952, %v3488, %v3489
      %v3491 = vrot.slane %v3429, 5
      %v3492 = vrot.slane %v3491, 4
      %v3493 = vrot.slane %v3058, 5
      %v3494 = vsel %vm952, %v3492, %v3493
      %v3495 = vrot.slane %v3493, 4
      %v3496 = vrot.slane %v3059, 5
      %v3497 = vsel %vm952, %v3495, %v3496
      %v3498 = vrot.slane %v3430, 5
      %v3499 = vrot.slane %v3498, 4
      %v3500 = vrot.slane %v3061, 5
      %v3501 = vsel %vm952, %v3499, %v3500
      %v3502 = vrot.slane %v3500, 4
      %v3503 = vrot.slane %v3062, 5
      %v3504 = vsel %vm952, %v3502, %v3503
      %v3505 = vrot.slane %v3431, 5
      %v3506 = vrot.slane %v3505, 4
      %v3507 = vrot.slane %v3064, 5
      %v3508 = vsel %vm952, %v3506, %v3507
      %v3509 = vrot.slane %v3507, 4
      %v3510 = vrot.slane %v3065, 5
      %v3511 = vsel %vm952, %v3509, %v3510
      %s3512 = scalar_lea.vmem %s3, 4
      %v3513 = vld [vmem:[%s3512] sm:$0x3]
      %v3514 = vunpack.c.l.b16 %v3459
      %v3515 = vunpack.c.l.b16 %v3462
      %v3516 = vunpack.c.l.b16 %v3466
      %v3517 = vunpack.c.l.b16 %v3469
      %v3518 = vunpack.c.l.b16 %v3473
      %v3519 = vunpack.c.l.b16 %v3476
      %v3520 = vunpack.c.l.b16 %v3480
      %v3521 = vunpack.c.l.b16 %v3483
      %v3522 = vunpack.c.l.b16 %v3487
      %v3523 = vunpack.c.l.b16 %v3490
      %v3524 = vunpack.c.l.b16 %v3494
      %v3525 = vunpack.c.l.b16 %v3497
      %v3526 = vunpack.c.l.b16 %v3501
      %v3527 = vunpack.c.l.b16 %v3504
      %v3528 = vunpack.c.l.b16 %v3508
      %v3529 = vunpack.c.l.b16 %v3511
      %v3530 = vpack.c.b16 %v3515, %v3514
      %v3531 = vpack.c.b16 %v3517, %v3516
      %v3532 = vpack.c.b16 %v3519, %v3518
      %v3533 = vpack.c.b16 %v3521, %v3520
      %v3534 = vpack.c.b16 %v3523, %v3522
      %v3535 = vpack.c.b16 %v3525, %v3524
      %v3536 = vpack.c.b16 %v3527, %v3526
      %v3537 = vpack.c.b16 %v3529, %v3528
      %v3539 = vsel %vm636, %v3530, 0
      %v3542 = vsel %vm636, %v3531, 0
      %v3545 = vsel %vm636, %v3532, 0
      %v3548 = vsel %vm636, %v3533, 0
      %v3551 = vsel %vm636, %v3534, 0
      %v3554 = vsel %vm636, %v3535, 0
      %v3557 = vsel %vm636, %v3536, 0
      %v3560 = vsel %vm636, %v3537, 0
      %v3563 = vsel %vm661, %v3513, 0
      %3565 = vmatprep.subr.bf16.mxu0 0
      %3566 = vmatpush1.bf16.msra.mxu0 %v3563
      %3567 = vmatprep.subr.bf16.mxu0 0
      %3568 = vmatpush1.bf16.msra.mxu0 0
      %3569 = vmatprep.subr.bf16.mxu0 0
      %3570 = vmatpush1.bf16.msra.mxu0 0
      %3571 = vmatprep.subr.bf16.mxu0 0
      %3572 = vmatpush1.bf16.msra.mxu0 0
      %3573 = vmatprep.subr.bf16.mxu0 0
      %3574 = vmatpush1.bf16.msra.mxu0 0
      %3575 = vmatprep.subr.bf16.mxu0 0
      %3576 = vmatpush1.bf16.msra.mxu0 0
      %3577 = vmatprep.subr.bf16.mxu0 0
      %3578 = vmatpush1.bf16.msra.mxu0 0
      %3579 = vmatprep.subr.bf16.mxu0 0
      %3580 = vmatpush1.bf16.msra.mxu0 0
      %3581 = vmatprep.subr.bf16.mxu0 0
      %3582 = vmatpush1.bf16.msra.mxu0 0
      %3583 = vmatprep.subr.bf16.mxu0 0
      %3584 = vmatpush1.bf16.msra.mxu0 0
      %3585 = vmatprep.subr.bf16.mxu0 0
      %3586 = vmatpush1.bf16.msra.mxu0 0
      %3587 = vmatprep.subr.bf16.mxu0 0
      %3588 = vmatpush1.bf16.msra.mxu0 0
      %3589 = vmatprep.subr.bf16.mxu0 0
      %3590 = vmatpush1.bf16.msra.mxu0 0
      %3591 = vmatprep.subr.bf16.mxu0 0
      %3592 = vmatpush1.bf16.msra.mxu0 0
      %3593 = vmatprep.subr.bf16.mxu0 0
      %3594 = vmatpush1.bf16.msra.mxu0 0
      %3595 = vmatprep.subr.bf16.mxu0 0
      %3596 = vmatpush1.bf16.msra.mxu0 0
      %3597 = vmatprep.mubr.bf16.mxu0 0
      %3598 = vmatmul.mubr.bf16.gmra.mrb[0].mxu0 %v3539
      %v3599 = vpop.f32.mrb[0].mxu0
      %v3600 = vadd.f32 0.0, %v3599
      %v3601 = vpop.f32.mrb[0].mxu0
      %v3602 = vpop.f32.mrb[0].mxu0
      %v3603 = vadd.f32 0.0, %v3602
      %v3604 = vpop.f32.mrb[0].mxu0
      %3605 = vmatprep.mubr.bf16.mxu0 0
      %3606 = vmatmul.mubr.bf16.gmra.mrb[0].mxu0 %v3542
      %v3607 = vpop.f32.mrb[0].mxu0
      %v3608 = vadd.f32 0.0, %v3607
      %v3609 = vpop.f32.mrb[0].mxu0
      %v3610 = vpop.f32.mrb[0].mxu0
      %v3611 = vadd.f32 0.0, %v3610
      %v3612 = vpop.f32.mrb[0].mxu0
      %3613 = vmatprep.mubr.bf16.mxu0 0
      %3614 = vmatmul.mubr.bf16.gmra.mrb[0].mxu0 %v3545
      %v3615 = vpop.f32.mrb[0].mxu0
      %v3616 = vadd.f32 0.0, %v3615
      %v3617 = vpop.f32.mrb[0].mxu0
      %v3618 = vpop.f32.mrb[0].mxu0
      %v3619 = vadd.f32 0.0, %v3618
      %v3620 = vpop.f32.mrb[0].mxu0
      %3621 = vmatprep.mubr.bf16.mxu0 0
      %3622 = vmatmul.mubr.bf16.gmra.mrb[0].mxu0 %v3548
      %v3623 = vpop.f32.mrb[0].mxu0
      %v3624 = vadd.f32 0.0, %v3623
      %v3625 = vpop.f32.mrb[0].mxu0
      %v3626 = vpop.f32.mrb[0].mxu0
      %v3627 = vadd.f32 0.0, %v3626
      %v3628 = vpop.f32.mrb[0].mxu0
      %3629 = vmatprep.mubr.bf16.mxu0 0
      %3630 = vmatmul.mubr.bf16.gmra.mrb[0].mxu0 %v3551
      %v3631 = vpop.f32.mrb[0].mxu0
      %v3632 = vadd.f32 0.0, %v3631
      %v3633 = vpop.f32.mrb[0].mxu0
      %v3634 = vpop.f32.mrb[0].mxu0
      %v3635 = vadd.f32 0.0, %v3634
      %v3636 = vpop.f32.mrb[0].mxu0
      %3637 = vmatprep.mubr.bf16.mxu0 0
      %3638 = vmatmul.mubr.bf16.gmra.mrb[0].mxu0 %v3554
      %v3639 = vpop.f32.mrb[0].mxu0
      %v3640 = vadd.f32 0.0, %v3639
      %v3641 = vpop.f32.mrb[0].mxu0
      %v3642 = vpop.f32.mrb[0].mxu0
      %v3643 = vadd.f32 0.0, %v3642
      %v3644 = vpop.f32.mrb[0].mxu0
      %3645 = vmatprep.mubr.bf16.mxu0 0
      %3646 = vmatmul.mubr.bf16.gmra.mrb[0].mxu0 %v3557
      %v3647 = vpop.f32.mrb[0].mxu0
      %v3648 = vadd.f32 0.0, %v3647
      %v3649 = vpop.f32.mrb[0].mxu0
      %v3650 = vpop.f32.mrb[0].mxu0
      %v3651 = vadd.f32 0.0, %v3650
      %v3652 = vpop.f32.mrb[0].mxu0
      %3653 = vmatprep.mubr.bf16.mxu0 0
      %3654 = vmatmul.mubr.bf16.gmra.mrb[0].mxu0 %v3560
      %v3655 = vpop.f32.mrb[0].mxu0
      %v3656 = vadd.f32 0.0, %v3655
      %v3657 = vpop.f32.mrb[0].mxu0
      %v3658 = vpop.f32.mrb[0].mxu0
      %v3659 = vadd.f32 0.0, %v3658
      %v3660 = vpop.f32.mrb[0].mxu0
      %3661 = vdwg.mxu0
      %v3662 = vadd.f32 %v3408, %v3600
      %v3663 = vadd.f32 %v3409, %v3603
      %v3664 = vadd.f32 %v3410, %v3608
      %v3665 = vadd.f32 %v3411, %v3611
      %v3666 = vadd.f32 %v3412, %v3616
      %v3667 = vadd.f32 %v3413, %v3619
      %v3668 = vadd.f32 %v3414, %v3624
      %v3669 = vadd.f32 %v3415, %v3627
      %v3670 = vadd.f32 %v3416, %v3632
      %v3671 = vadd.f32 %v3417, %v3635
      %v3672 = vadd.f32 %v3418, %v3640
      %v3673 = vadd.f32 %v3419, %v3643
      %v3674 = vadd.f32 %v3420, %v3648
      %v3675 = vadd.f32 %v3421, %v3651
      %v3676 = vadd.f32 %v3422, %v3656
      %v3677 = vadd.f32 %v3423, %v3659
      %s3678 = scalar_lea.vmem %s363, 12
      %v3679 = vld [vmem:[%s3678] sm:$0xf]
      %v3680 = vld [vmem:[%s3678 + $0x4] sm:$0xf]
      %v3681 = vld [vmem:[%s3678 + $0xc] sm:$0xf]
      %v3682 = vld [vmem:[%s3678 + $0x10] sm:$0xf]
      %v3683 = vld [vmem:[%s3678 + $0x18] sm:$0xf]
      %v3684 = vld [vmem:[%s3678 + $0x1c] sm:$0xf]
      %v3685 = vld [vmem:[%s3678 + $0x24] sm:$0xf]
      %v3686 = vld [vmem:[%s3678 + $0x28] sm:$0xf]
      %v3687 = vld [vmem:[%s3678 + $0x30] sm:$0xf]
      %v3688 = vld [vmem:[%s3678 + $0x34] sm:$0xf]
      %v3689 = vld [vmem:[%s3678 + $0x3c] sm:$0xf]
      %v3690 = vld [vmem:[%s3678 + $0x40] sm:$0xf]
      %v3691 = vld [vmem:[%s3678 + $0x48] sm:$0xf]
      %v3692 = vld [vmem:[%s3678 + $0x4c] sm:$0xf]
      %v3693 = vld [vmem:[%s3678 + $0x54] sm:$0xf]
      %v3694 = vld [vmem:[%s3678 + $0x58] sm:$0xf]
      %s3695 = scalar_lea.vmem %s3, 6
      %v3696 = vld [vmem:[%s3695] sm:$0x3]
      %v3713 = vunpack.c.l.b16 %v3679
      %v3714 = vunpack.c.l.b16 %v3680
      %v3715 = vunpack.c.l.b16 %v3681
      %v3716 = vunpack.c.l.b16 %v3682
      %v3717 = vunpack.c.l.b16 %v3683
      %v3718 = vunpack.c.l.b16 %v3684
      %v3719 = vunpack.c.l.b16 %v3685
      %v3720 = vunpack.c.l.b16 %v3686
      %v3721 = vunpack.c.l.b16 %v3687
      %v3722 = vunpack.c.l.b16 %v3688
      %v3723 = vunpack.c.l.b16 %v3689
      %v3724 = vunpack.c.l.b16 %v3690
      %v3725 = vunpack.c.l.b16 %v3691
      %v3726 = vunpack.c.l.b16 %v3692
      %v3727 = vunpack.c.l.b16 %v3693
      %v3728 = vunpack.c.l.b16 %v3694
      %v3729 = vpack.c.b16 %v3714, %v3713
      %v3730 = vpack.c.b16 %v3716, %v3715
      %v3731 = vpack.c.b16 %v3718, %v3717
      %v3732 = vpack.c.b16 %v3720, %v3719
      %v3733 = vpack.c.b16 %v3722, %v3721
      %v3734 = vpack.c.b16 %v3724, %v3723
      %v3735 = vpack.c.b16 %v3726, %v3725
      %v3736 = vpack.c.b16 %v3728, %v3727
      %v3738 = vsel %vm636, %v3729, 0
      %v3741 = vsel %vm636, %v3730, 0
      %v3744 = vsel %vm636, %v3731, 0
      %v3747 = vsel %vm636, %v3732, 0
      %v3750 = vsel %vm636, %v3733, 0
      %v3753 = vsel %vm636, %v3734, 0
      %v3756 = vsel %vm636, %v3735, 0
      %v3759 = vsel %vm636, %v3736, 0
      %v3762 = vsel %vm661, %v3696, 0
      %3764 = vmatprep.subr.bf16.mxu0 0
      %3765 = vmatpush1.bf16.msra.mxu0 %v3762
      %3766 = vmatprep.subr.bf16.mxu0 0
      %3767 = vmatpush1.bf16.msra.mxu0 0
      %3768 = vmatprep.subr.bf16.mxu0 0
      %3769 = vmatpush1.bf16.msra.mxu0 0
      %3770 = vmatprep.subr.bf16.mxu0 0
      %3771 = vmatpush1.bf16.msra.mxu0 0
      %3772 = vmatprep.subr.bf16.mxu0 0
      %3773 = vmatpush1.bf16.msra.mxu0 0
      %3774 = vmatprep.subr.bf16.mxu0 0
      %3775 = vmatpush1.bf16.msra.mxu0 0
      %3776 = vmatprep.subr.bf16.mxu0 0
      %3777 = vmatpush1.bf16.msra.mxu0 0
      %3778 = vmatprep.subr.bf16.mxu0 0
      %3779 = vmatpush1.bf16.msra.mxu0 0
      %3780 = vmatprep.subr.bf16.mxu0 0
      %3781 = vmatpush1.bf16.msra.mxu0 0
      %3782 = vmatprep.subr.bf16.mxu0 0
      %3783 = vmatpush1.bf16.msra.mxu0 0
      %3784 = vmatprep.subr.bf16.mxu0 0
      %3785 = vmatpush1.bf16.msra.mxu0 0
      %3786 = vmatprep.subr.bf16.mxu0 0
      %3787 = vmatpush1.bf16.msra.mxu0 0
      %3788 = vmatprep.subr.bf16.mxu0 0
      %3789 = vmatpush1.bf16.msra.mxu0 0
      %3790 = vmatprep.subr.bf16.mxu0 0
      %3791 = vmatpush1.bf16.msra.mxu0 0
      %3792 = vmatprep.subr.bf16.mxu0 0
      %3793 = vmatpush1.bf16.msra.mxu0 0
      %3794 = vmatprep.subr.bf16.mxu0 0
      %3795 = vmatpush1.bf16.msra.mxu0 0
      %3796 = vmatprep.mubr.bf16.mxu0 0
      %3797 = vmatmul.mubr.bf16.gmra.mrb[0].mxu0 %v3738
      %v3798 = vpop.f32.mrb[0].mxu0
      %v3799 = vadd.f32 0.0, %v3798
      %v3800 = vpop.f32.mrb[0].mxu0
      %v3801 = vpop.f32.mrb[0].mxu0
      %v3802 = vadd.f32 0.0, %v3801
      %v3803 = vpop.f32.mrb[0].mxu0
      %3804 = vmatprep.mubr.bf16.mxu0 0
      %3805 = vmatmul.mubr.bf16.gmra.mrb[0].mxu0 %v3741
      %v3806 = vpop.f32.mrb[0].mxu0
      %v3807 = vadd.f32 0.0, %v3806
      %v3808 = vpop.f32.mrb[0].mxu0
      %v3809 = vpop.f32.mrb[0].mxu0
      %v3810 = vadd.f32 0.0, %v3809
      %v3811 = vpop.f32.mrb[0].mxu0
      %3812 = vmatprep.mubr.bf16.mxu0 0
      %3813 = vmatmul.mubr.bf16.gmra.mrb[0].mxu0 %v3744
      %v3814 = vpop.f32.mrb[0].mxu0
      %v3815 = vadd.f32 0.0, %v3814
      %v3816 = vpop.f32.mrb[0].mxu0
      %v3817 = vpop.f32.mrb[0].mxu0
      %v3818 = vadd.f32 0.0, %v3817
      %v3819 = vpop.f32.mrb[0].mxu0
      %3820 = vmatprep.mubr.bf16.mxu0 0
      %3821 = vmatmul.mubr.bf16.gmra.mrb[0].mxu0 %v3747
      %v3822 = vpop.f32.mrb[0].mxu0
      %v3823 = vadd.f32 0.0, %v3822
      %v3824 = vpop.f32.mrb[0].mxu0
      %v3825 = vpop.f32.mrb[0].mxu0
      %v3826 = vadd.f32 0.0, %v3825
      %v3827 = vpop.f32.mrb[0].mxu0
      %3828 = vmatprep.mubr.bf16.mxu0 0
      %3829 = vmatmul.mubr.bf16.gmra.mrb[0].mxu0 %v3750
      %v3830 = vpop.f32.mrb[0].mxu0
      %v3831 = vadd.f32 0.0, %v3830
      %v3832 = vpop.f32.mrb[0].mxu0
      %v3833 = vpop.f32.mrb[0].mxu0
      %v3834 = vadd.f32 0.0, %v3833
      %v3835 = vpop.f32.mrb[0].mxu0
      %3836 = vmatprep.mubr.bf16.mxu0 0
      %3837 = vmatmul.mubr.bf16.gmra.mrb[0].mxu0 %v3753
      %v3838 = vpop.f32.mrb[0].mxu0
      %v3839 = vadd.f32 0.0, %v3838
      %v3840 = vpop.f32.mrb[0].mxu0
      %v3841 = vpop.f32.mrb[0].mxu0
      %v3842 = vadd.f32 0.0, %v3841
      %v3843 = vpop.f32.mrb[0].mxu0
      %3844 = vmatprep.mubr.bf16.mxu0 0
      %3845 = vmatmul.mubr.bf16.gmra.mrb[0].mxu0 %v3756
      %v3846 = vpop.f32.mrb[0].mxu0
      %v3847 = vadd.f32 0.0, %v3846
      %v3848 = vpop.f32.mrb[0].mxu0
      %v3849 = vpop.f32.mrb[0].mxu0
      %v3850 = vadd.f32 0.0, %v3849
      %v3851 = vpop.f32.mrb[0].mxu0
      %3852 = vmatprep.mubr.bf16.mxu0 0
      %3853 = vmatmul.mubr.bf16.gmra.mrb[0].mxu0 %v3759
      %v3854 = vpop.f32.mrb[0].mxu0
      %v3855 = vadd.f32 0.0, %v3854
      %v3856 = vpop.f32.mrb[0].mxu0
      %v3857 = vpop.f32.mrb[0].mxu0
      %v3858 = vadd.f32 0.0, %v3857
      %v3859 = vpop.f32.mrb[0].mxu0
      %3860 = vdwg.mxu0
      %v3861 = vadd.f32 %v3662, %v3799
      %v3862 = vadd.f32 %v3663, %v3802
      %v3863 = vadd.f32 %v3664, %v3807
      %v3864 = vadd.f32 %v3665, %v3810
      %v3865 = vadd.f32 %v3666, %v3815
      %v3866 = vadd.f32 %v3667, %v3818
      %v3867 = vadd.f32 %v3668, %v3823
      %v3868 = vadd.f32 %v3669, %v3826
      %v3869 = vadd.f32 %v3670, %v3831
      %v3870 = vadd.f32 %v3671, %v3834
      %v3871 = vadd.f32 %v3672, %v3839
      %v3872 = vadd.f32 %v3673, %v3842
      %v3873 = vadd.f32 %v3674, %v3847
      %v3874 = vadd.f32 %v3675, %v3850
      %v3875 = vadd.f32 %v3676, %v3855
      %v3876 = vadd.f32 %v3677, %v3858
      %v3877 = vld [vmem:[%s3678] sm:$0xf]
      %v3878 = vld [vmem:[%s3678 + $0x4] sm:$0xf]
      %v3879 = vld [vmem:[%s3678 + $0x8] sm:$0x1]
      %v3880 = vld [vmem:[%s3678 + $0xc] sm:$0xf]
      %v3881 = vld [vmem:[%s3678 + $0x10] sm:$0xf]
      %v3882 = vld [vmem:[%s3678 + $0x14] sm:$0x1]
      %v3883 = vld [vmem:[%s3678 + $0x18] sm:$0xf]
      %v3884 = vld [vmem:[%s3678 + $0x1c] sm:$0xf]
      %v3885 = vld [vmem:[%s3678 + $0x20] sm:$0x1]
      %v3886 = vld [vmem:[%s3678 + $0x24] sm:$0xf]
      %v3887 = vld [vmem:[%s3678 + $0x28] sm:$0xf]
      %v3888 = vld [vmem:[%s3678 + $0x2c] sm:$0x1]
      %v3889 = vld [vmem:[%s3678 + $0x30] sm:$0xf]
      %v3890 = vld [vmem:[%s3678 + $0x34] sm:$0xf]
      %v3891 = vld [vmem:[%s3678 + $0x38] sm:$0x1]
      %v3892 = vld [vmem:[%s3678 + $0x3c] sm:$0xf]
      %v3893 = vld [vmem:[%s3678 + $0x40] sm:$0xf]
      %v3894 = vld [vmem:[%s3678 + $0x44] sm:$0x1]
      %v3895 = vld [vmem:[%s3678 + $0x48] sm:$0xf]
      %v3896 = vld [vmem:[%s3678 + $0x4c] sm:$0xf]
      %v3897 = vld [vmem:[%s3678 + $0x50] sm:$0x1]
      %v3898 = vld [vmem:[%s3678 + $0x54] sm:$0xf]
      %v3899 = vld [vmem:[%s3678 + $0x58] sm:$0xf]
      %v3900 = vld [vmem:[%s3678 + $0x5c] sm:$0x1]
      %v3902 = vshrl.u32 %v3877, 16
      %v3904 = vrot.slane %v3902, 4
      %v3905 = vshll.u32 %v3877, 16
      %v3907 = vrot.slane %v3905, 5
      %v3908 = vor.u32 %v3904, %v3907
      %v3909 = vrot.slane %v3908, 4
      %v3911 = vshll.u32 %v3878, 16
      %v3913 = vrot.slane %v3911, 5
      %v3914 = vsel %vm417, %v3909, %v3913
      %v3915 = vshrl.u32 %v3878, 16
      %v3917 = vrot.slane %v3915, 4
      %v3918 = vor.u32 %v3917, %v3913
      %v3919 = vrot.slane %v3918, 4
      %v3921 = vshll.u32 %v3879, 16
      %v3923 = vrot.slane %v3921, 5
      %v3924 = vsel %vm417, %v3919, %v3923
      %v3926 = vshrl.u32 %v3880, 16
      %v3928 = vrot.slane %v3926, 4
      %v3929 = vshll.u32 %v3880, 16
      %v3931 = vrot.slane %v3929, 5
      %v3932 = vor.u32 %v3928, %v3931
      %v3933 = vrot.slane %v3932, 4
      %v3935 = vshll.u32 %v3881, 16
      %v3937 = vrot.slane %v3935, 5
      %v3938 = vsel %vm417, %v3933, %v3937
      %v3939 = vshrl.u32 %v3881, 16
      %v3941 = vrot.slane %v3939, 4
      %v3942 = vor.u32 %v3941, %v3937
      %v3943 = vrot.slane %v3942, 4
      %v3945 = vshll.u32 %v3882, 16
      %v3947 = vrot.slane %v3945, 5
      %v3948 = vsel %vm417, %v3943, %v3947
      %v3950 = vshrl.u32 %v3883, 16
      %v3952 = vrot.slane %v3950, 4
      %v3953 = vshll.u32 %v3883, 16
      %v3955 = vrot.slane %v3953, 5
      %v3956 = vor.u32 %v3952, %v3955
      %v3957 = vrot.slane %v3956, 4
      %v3959 = vshll.u32 %v3884, 16
      %v3961 = vrot.slane %v3959, 5
      %v3962 = vsel %vm417, %v3957, %v3961
      %v3963 = vshrl.u32 %v3884, 16
      %v3965 = vrot.slane %v3963, 4
      %v3966 = vor.u32 %v3965, %v3961
      %v3967 = vrot.slane %v3966, 4
      %v3969 = vshll.u32 %v3885, 16
      %v3971 = vrot.slane %v3969, 5
      %v3972 = vsel %vm417, %v3967, %v3971
      %v3974 = vshrl.u32 %v3886, 16
      %v3976 = vrot.slane %v3974, 4
      %v3977 = vshll.u32 %v3886, 16
      %v3979 = vrot.slane %v3977, 5
      %v3980 = vor.u32 %v3976, %v3979
      %v3981 = vrot.slane %v3980, 4
      %v3983 = vshll.u32 %v3887, 16
      %v3985 = vrot.slane %v3983, 5
      %v3986 = vsel %vm417, %v3981, %v3985
      %v3987 = vshrl.u32 %v3887, 16
      %v3989 = vrot.slane %v3987, 4
      %v3990 = vor.u32 %v3989, %v3985
      %v3991 = vrot.slane %v3990, 4
      %v3993 = vshll.u32 %v3888, 16
      %v3995 = vrot.slane %v3993, 5
      %v3996 = vsel %vm417, %v3991, %v3995
      %v3998 = vshrl.u32 %v3889, 16
      %v4000 = vrot.slane %v3998, 4
      %v4001 = vshll.u32 %v3889, 16
      %v4003 = vrot.slane %v4001, 5
      %v4004 = vor.u32 %v4000, %v4003
      %v4005 = vrot.slane %v4004, 4
      %v4007 = vshll.u32 %v3890, 16
      %v4009 = vrot.slane %v4007, 5
      %v4010 = vsel %vm417, %v4005, %v4009
      %v4011 = vshrl.u32 %v3890, 16
      %v4013 = vrot.slane %v4011, 4
      %v4014 = vor.u32 %v4013, %v4009
      %v4015 = vrot.slane %v4014, 4
      %v4017 = vshll.u32 %v3891, 16
      %v4019 = vrot.slane %v4017, 5
      %v4020 = vsel %vm417, %v4015, %v4019
      %v4022 = vshrl.u32 %v3892, 16
      %v4024 = vrot.slane %v4022, 4
      %v4025 = vshll.u32 %v3892, 16
      %v4027 = vrot.slane %v4025, 5
      %v4028 = vor.u32 %v4024, %v4027
      %v4029 = vrot.slane %v4028, 4
      %v4031 = vshll.u32 %v3893, 16
      %v4033 = vrot.slane %v4031, 5
      %v4034 = vsel %vm417, %v4029, %v4033
      %v4035 = vshrl.u32 %v3893, 16
      %v4037 = vrot.slane %v4035, 4
      %v4038 = vor.u32 %v4037, %v4033
      %v4039 = vrot.slane %v4038, 4
      %v4041 = vshll.u32 %v3894, 16
      %v4043 = vrot.slane %v4041, 5
      %v4044 = vsel %vm417, %v4039, %v4043
      %v4046 = vshrl.u32 %v3895, 16
      %v4048 = vrot.slane %v4046, 4
      %v4049 = vshll.u32 %v3895, 16
      %v4051 = vrot.slane %v4049, 5
      %v4052 = vor.u32 %v4048, %v4051
      %v4053 = vrot.slane %v4052, 4
      %v4055 = vshll.u32 %v3896, 16
      %v4057 = vrot.slane %v4055, 5
      %v4058 = vsel %vm417, %v4053, %v4057
      %v4059 = vshrl.u32 %v3896, 16
      %v4061 = vrot.slane %v4059, 4
      %v4062 = vor.u32 %v4061, %v4057
      %v4063 = vrot.slane %v4062, 4
      %v4065 = vshll.u32 %v3897, 16
      %v4067 = vrot.slane %v4065, 5
      %v4068 = vsel %vm417, %v4063, %v4067
      %v4070 = vshrl.u32 %v3898, 16
      %v4072 = vrot.slane %v4070, 4
      %v4073 = vshll.u32 %v3898, 16
      %v4075 = vrot.slane %v4073, 5
      %v4076 = vor.u32 %v4072, %v4075
      %v4077 = vrot.slane %v4076, 4
      %v4079 = vshll.u32 %v3899, 16
      %v4081 = vrot.slane %v4079, 5
      %v4082 = vsel %vm417, %v4077, %v4081
      %v4083 = vshrl.u32 %v3899, 16
      %v4085 = vrot.slane %v4083, 4
      %v4086 = vor.u32 %v4085, %v4081
      %v4087 = vrot.slane %v4086, 4
      %v4089 = vshll.u32 %v3900, 16
      %v4091 = vrot.slane %v4089, 5
      %v4092 = vsel %vm417, %v4087, %v4091
      %s4093 = scalar_lea.vmem %s3, 8
      %v4094 = vld [vmem:[%s4093] sm:$0x3]
      %v4095 = vunpack.c.l.b16 %v3914
      %v4096 = vunpack.c.l.b16 %v3924
      %v4097 = vunpack.c.l.b16 %v3938
      %v4098 = vunpack.c.l.b16 %v3948
      %v4099 = vunpack.c.l.b16 %v3962
      %v4100 = vunpack.c.l.b16 %v3972
      %v4101 = vunpack.c.l.b16 %v3986
      %v4102 = vunpack.c.l.b16 %v3996
      %v4103 = vunpack.c.l.b16 %v4010
      %v4104 = vunpack.c.l.b16 %v4020
      %v4105 = vunpack.c.l.b16 %v4034
      %v4106 = vunpack.c.l.b16 %v4044
      %v4107 = vunpack.c.l.b16 %v4058
      %v4108 = vunpack.c.l.b16 %v4068
      %v4109 = vunpack.c.l.b16 %v4082
      %v4110 = vunpack.c.l.b16 %v4092
      %v4111 = vpack.c.b16 %v4096, %v4095
      %v4112 = vpack.c.b16 %v4098, %v4097
      %v4113 = vpack.c.b16 %v4100, %v4099
      %v4114 = vpack.c.b16 %v4102, %v4101
      %v4115 = vpack.c.b16 %v4104, %v4103
      %v4116 = vpack.c.b16 %v4106, %v4105
      %v4117 = vpack.c.b16 %v4108, %v4107
      %v4118 = vpack.c.b16 %v4110, %v4109
      %v4120 = vsel %vm636, %v4111, 0
      %v4123 = vsel %vm636, %v4112, 0
      %v4126 = vsel %vm636, %v4113, 0
      %v4129 = vsel %vm636, %v4114, 0
      %v4132 = vsel %vm636, %v4115, 0
      %v4135 = vsel %vm636, %v4116, 0
      %v4138 = vsel %vm636, %v4117, 0
      %v4141 = vsel %vm636, %v4118, 0
      %v4144 = vsel %vm661, %v4094, 0
      %4146 = vmatprep.subr.bf16.mxu0 0
      %4147 = vmatpush1.bf16.msra.mxu0 %v4144
      %4148 = vmatprep.subr.bf16.mxu0 0
      %4149 = vmatpush1.bf16.msra.mxu0 0
      %4150 = vmatprep.subr.bf16.mxu0 0
      %4151 = vmatpush1.bf16.msra.mxu0 0
      %4152 = vmatprep.subr.bf16.mxu0 0
      %4153 = vmatpush1.bf16.msra.mxu0 0
      %4154 = vmatprep.subr.bf16.mxu0 0
      %4155 = vmatpush1.bf16.msra.mxu0 0
      %4156 = vmatprep.subr.bf16.mxu0 0
      %4157 = vmatpush1.bf16.msra.mxu0 0
      %4158 = vmatprep.subr.bf16.mxu0 0
      %4159 = vmatpush1.bf16.msra.mxu0 0
      %4160 = vmatprep.subr.bf16.mxu0 0
      %4161 = vmatpush1.bf16.msra.mxu0 0
      %4162 = vmatprep.subr.bf16.mxu0 0
      %4163 = vmatpush1.bf16.msra.mxu0 0
      %4164 = vmatprep.subr.bf16.mxu0 0
      %4165 = vmatpush1.bf16.msra.mxu0 0
      %4166 = vmatprep.subr.bf16.mxu0 0
      %4167 = vmatpush1.bf16.msra.mxu0 0
      %4168 = vmatprep.subr.bf16.mxu0 0
      %4169 = vmatpush1.bf16.msra.mxu0 0
      %4170 = vmatprep.subr.bf16.mxu0 0
      %4171 = vmatpush1.bf16.msra.mxu0 0
      %4172 = vmatprep.subr.bf16.mxu0 0
      %4173 = vmatpush1.bf16.msra.mxu0 0
      %4174 = vmatprep.subr.bf16.mxu0 0
      %4175 = vmatpush1.bf16.msra.mxu0 0
      %4176 = vmatprep.subr.bf16.mxu0 0
      %4177 = vmatpush1.bf16.msra.mxu0 0
      %4178 = vmatprep.mubr.bf16.mxu0 0
      %4179 = vmatmul.mubr.bf16.gmra.mrb[0].mxu0 %v4120
      %v4180 = vpop.f32.mrb[0].mxu0
      %v4181 = vadd.f32 0.0, %v4180
      %v4182 = vpop.f32.mrb[0].mxu0
      %v4183 = vpop.f32.mrb[0].mxu0
      %v4184 = vadd.f32 0.0, %v4183
      %v4185 = vpop.f32.mrb[0].mxu0
      %4186 = vmatprep.mubr.bf16.mxu0 0
      %4187 = vmatmul.mubr.bf16.gmra.mrb[0].mxu0 %v4123
      %v4188 = vpop.f32.mrb[0].mxu0
      %v4189 = vadd.f32 0.0, %v4188
      %v4190 = vpop.f32.mrb[0].mxu0
      %v4191 = vpop.f32.mrb[0].mxu0
      %v4192 = vadd.f32 0.0, %v4191
      %v4193 = vpop.f32.mrb[0].mxu0
      %4194 = vmatprep.mubr.bf16.mxu0 0
      %4195 = vmatmul.mubr.bf16.gmra.mrb[0].mxu0 %v4126
      %v4196 = vpop.f32.mrb[0].mxu0
      %v4197 = vadd.f32 0.0, %v4196
      %v4198 = vpop.f32.mrb[0].mxu0
      %v4199 = vpop.f32.mrb[0].mxu0
      %v4200 = vadd.f32 0.0, %v4199
      %v4201 = vpop.f32.mrb[0].mxu0
      %4202 = vmatprep.mubr.bf16.mxu0 0
      %4203 = vmatmul.mubr.bf16.gmra.mrb[0].mxu0 %v4129
      %v4204 = vpop.f32.mrb[0].mxu0
      %v4205 = vadd.f32 0.0, %v4204
      %v4206 = vpop.f32.mrb[0].mxu0
      %v4207 = vpop.f32.mrb[0].mxu0
      %v4208 = vadd.f32 0.0, %v4207
      %v4209 = vpop.f32.mrb[0].mxu0
      %4210 = vmatprep.mubr.bf16.mxu0 0
      %4211 = vmatmul.mubr.bf16.gmra.mrb[0].mxu0 %v4132
      %v4212 = vpop.f32.mrb[0].mxu0
      %v4213 = vadd.f32 0.0, %v4212
      %v4214 = vpop.f32.mrb[0].mxu0
      %v4215 = vpop.f32.mrb[0].mxu0
      %v4216 = vadd.f32 0.0, %v4215
      %v4217 = vpop.f32.mrb[0].mxu0
      %4218 = vmatprep.mubr.bf16.mxu0 0
      %4219 = vmatmul.mubr.bf16.gmra.mrb[0].mxu0 %v4135
      %v4220 = vpop.f32.mrb[0].mxu0
      %v4221 = vadd.f32 0.0, %v4220
      %v4222 = vpop.f32.mrb[0].mxu0
      %v4223 = vpop.f32.mrb[0].mxu0
      %v4224 = vadd.f32 0.0, %v4223
      %v4225 = vpop.f32.mrb[0].mxu0
      %4226 = vmatprep.mubr.bf16.mxu0 0
      %4227 = vmatmul.mubr.bf16.gmra.mrb[0].mxu0 %v4138
      %v4228 = vpop.f32.mrb[0].mxu0
      %v4229 = vadd.f32 0.0, %v4228
      %v4230 = vpop.f32.mrb[0].mxu0
      %v4231 = vpop.f32.mrb[0].mxu0
      %v4232 = vadd.f32 0.0, %v4231
      %v4233 = vpop.f32.mrb[0].mxu0
      %4234 = vmatprep.mubr.bf16.mxu0 0
      %4235 = vmatmul.mubr.bf16.gmra.mrb[0].mxu0 %v4141
      %v4236 = vpop.f32.mrb[0].mxu0
      %v4237 = vadd.f32 0.0, %v4236
      %v4238 = vpop.f32.mrb[0].mxu0
      %v4239 = vpop.f32.mrb[0].mxu0
      %v4240 = vadd.f32 0.0, %v4239
      %v4241 = vpop.f32.mrb[0].mxu0
      %4242 = vdwg.mxu0
      %v4243 = vadd.f32 %v3861, %v4181
      %v4244 = vadd.f32 %v3862, %v4184
      %v4245 = vadd.f32 %v3863, %v4189
      %v4246 = vadd.f32 %v3864, %v4192
      %v4247 = vadd.f32 %v3865, %v4197
      %v4248 = vadd.f32 %v3866, %v4200
      %v4249 = vadd.f32 %v3867, %v4205
      %v4250 = vadd.f32 %v3868, %v4208
      %v4251 = vadd.f32 %v3869, %v4213
      %v4252 = vadd.f32 %v3870, %v4216
      %v4253 = vadd.f32 %v3871, %v4221
      %v4254 = vadd.f32 %v3872, %v4224
      %v4255 = vadd.f32 %v3873, %v4229
      %v4256 = vadd.f32 %v3874, %v4232
      %v4257 = vadd.f32 %v3875, %v4237
      %v4258 = vadd.f32 %v3876, %v4240
      %v4259 = vld [vmem:[%s3678] sm:$0xe]
      %v4260 = vld [vmem:[%s3678 + $0xc] sm:$0xe]
      %v4261 = vld [vmem:[%s3678 + $0x18] sm:$0xe]
      %v4262 = vld [vmem:[%s3678 + $0x24] sm:$0xe]
      %v4263 = vld [vmem:[%s3678 + $0x30] sm:$0xe]
      %v4264 = vld [vmem:[%s3678 + $0x3c] sm:$0xe]
      %v4265 = vld [vmem:[%s3678 + $0x48] sm:$0xe]
      %v4266 = vld [vmem:[%s3678 + $0x54] sm:$0xe]
      %v4291 = vrot.slane %v4259, 5
      %v4292 = vrot.slane %v4291, 4
      %v4293 = vrot.slane %v3878, 5
      %v4294 = vsel %vm952, %v4292, %v4293
      %v4295 = vrot.slane %v4293, 4
      %v4296 = vrot.slane %v3879, 5
      %v4297 = vsel %vm952, %v4295, %v4296
      %v4298 = vrot.slane %v4260, 5
      %v4299 = vrot.slane %v4298, 4
      %v4300 = vrot.slane %v3881, 5
      %v4301 = vsel %vm952, %v4299, %v4300
      %v4302 = vrot.slane %v4300, 4
      %v4303 = vrot.slane %v3882, 5
      %v4304 = vsel %vm952, %v4302, %v4303
      %v4305 = vrot.slane %v4261, 5
      %v4306 = vrot.slane %v4305, 4
      %v4307 = vrot.slane %v3884, 5
      %v4308 = vsel %vm952, %v4306, %v4307
      %v4309 = vrot.slane %v4307, 4
      %v4310 = vrot.slane %v3885, 5
      %v4311 = vsel %vm952, %v4309, %v4310
      %v4312 = vrot.slane %v4262, 5
      %v4313 = vrot.slane %v4312, 4
      %v4314 = vrot.slane %v3887, 5
      %v4315 = vsel %vm952, %v4313, %v4314
      %v4316 = vrot.slane %v4314, 4
      %v4317 = vrot.slane %v3888, 5
      %v4318 = vsel %vm952, %v4316, %v4317
      %v4319 = vrot.slane %v4263, 5
      %v4320 = vrot.slane %v4319, 4
      %v4321 = vrot.slane %v3890, 5
      %v4322 = vsel %vm952, %v4320, %v4321
      %v4323 = vrot.slane %v4321, 4
      %v4324 = vrot.slane %v3891, 5
      %v4325 = vsel %vm952, %v4323, %v4324
      %v4326 = vrot.slane %v4264, 5
      %v4327 = vrot.slane %v4326, 4
      %v4328 = vrot.slane %v3893, 5
      %v4329 = vsel %vm952, %v4327, %v4328
      %v4330 = vrot.slane %v4328, 4
      %v4331 = vrot.slane %v3894, 5
      %v4332 = vsel %vm952, %v4330, %v4331
      %v4333 = vrot.slane %v4265, 5
      %v4334 = vrot.slane %v4333, 4
      %v4335 = vrot.slane %v3896, 5
      %v4336 = vsel %vm952, %v4334, %v4335
      %v4337 = vrot.slane %v4335, 4
      %v4338 = vrot.slane %v3897, 5
      %v4339 = vsel %vm952, %v4337, %v4338
      %v4340 = vrot.slane %v4266, 5
      %v4341 = vrot.slane %v4340, 4
      %v4342 = vrot.slane %v3899, 5
      %v4343 = vsel %vm952, %v4341, %v4342
      %v4344 = vrot.slane %v4342, 4
      %v4345 = vrot.slane %v3900, 5
      %v4346 = vsel %vm952, %v4344, %v4345
      %s4347 = scalar_lea.vmem %s3, 10
      %v4348 = vld [vmem:[%s4347] sm:$0x3]
      %v4349 = vunpack.c.l.b16 %v4294
      %v4350 = vunpack.c.l.b16 %v4297
      %v4351 = vunpack.c.l.b16 %v4301
      %v4352 = vunpack.c.l.b16 %v4304
      %v4353 = vunpack.c.l.b16 %v4308
      %v4354 = vunpack.c.l.b16 %v4311
      %v4355 = vunpack.c.l.b16 %v4315
      %v4356 = vunpack.c.l.b16 %v4318
      %v4357 = vunpack.c.l.b16 %v4322
      %v4358 = vunpack.c.l.b16 %v4325
      %v4359 = vunpack.c.l.b16 %v4329
      %v4360 = vunpack.c.l.b16 %v4332
      %v4361 = vunpack.c.l.b16 %v4336
      %v4362 = vunpack.c.l.b16 %v4339
      %v4363 = vunpack.c.l.b16 %v4343
      %v4364 = vunpack.c.l.b16 %v4346
      %v4365 = vpack.c.b16 %v4350, %v4349
      %v4366 = vpack.c.b16 %v4352, %v4351
      %v4367 = vpack.c.b16 %v4354, %v4353
      %v4368 = vpack.c.b16 %v4356, %v4355
      %v4369 = vpack.c.b16 %v4358, %v4357
      %v4370 = vpack.c.b16 %v4360, %v4359
      %v4371 = vpack.c.b16 %v4362, %v4361
      %v4372 = vpack.c.b16 %v4364, %v4363
      %v4374 = vsel %vm636, %v4365, 0
      %v4377 = vsel %vm636, %v4366, 0
      %v4380 = vsel %vm636, %v4367, 0
      %v4383 = vsel %vm636, %v4368, 0
      %v4386 = vsel %vm636, %v4369, 0
      %v4389 = vsel %vm636, %v4370, 0
      %v4392 = vsel %vm636, %v4371, 0
      %v4395 = vsel %vm636, %v4372, 0
      %v4398 = vsel %vm661, %v4348, 0
      %4400 = vmatprep.subr.bf16.mxu0 0
      %4401 = vmatpush1.bf16.msra.mxu0 %v4398
      %4402 = vmatprep.subr.bf16.mxu0 0
      %4403 = vmatpush1.bf16.msra.mxu0 0
      %4404 = vmatprep.subr.bf16.mxu0 0
      %4405 = vmatpush1.bf16.msra.mxu0 0
      %4406 = vmatprep.subr.bf16.mxu0 0
      %4407 = vmatpush1.bf16.msra.mxu0 0
      %4408 = vmatprep.subr.bf16.mxu0 0
      %4409 = vmatpush1.bf16.msra.mxu0 0
      %4410 = vmatprep.subr.bf16.mxu0 0
      %4411 = vmatpush1.bf16.msra.mxu0 0
      %4412 = vmatprep.subr.bf16.mxu0 0
      %4413 = vmatpush1.bf16.msra.mxu0 0
      %4414 = vmatprep.subr.bf16.mxu0 0
      %4415 = vmatpush1.bf16.msra.mxu0 0
      %4416 = vmatprep.subr.bf16.mxu0 0
      %4417 = vmatpush1.bf16.msra.mxu0 0
      %4418 = vmatprep.subr.bf16.mxu0 0
      %4419 = vmatpush1.bf16.msra.mxu0 0
      %4420 = vmatprep.subr.bf16.mxu0 0
      %4421 = vmatpush1.bf16.msra.mxu0 0
      %4422 = vmatprep.subr.bf16.mxu0 0
      %4423 = vmatpush1.bf16.msra.mxu0 0
      %4424 = vmatprep.subr.bf16.mxu0 0
      %4425 = vmatpush1.bf16.msra.mxu0 0
      %4426 = vmatprep.subr.bf16.mxu0 0
      %4427 = vmatpush1.bf16.msra.mxu0 0
      %4428 = vmatprep.subr.bf16.mxu0 0
      %4429 = vmatpush1.bf16.msra.mxu0 0
      %4430 = vmatprep.subr.bf16.mxu0 0
      %4431 = vmatpush1.bf16.msra.mxu0 0
      %4432 = vmatprep.mubr.bf16.mxu0 0
      %4433 = vmatmul.mubr.bf16.gmra.mrb[0].mxu0 %v4374
      %v4434 = vpop.f32.mrb[0].mxu0
      %v4435 = vadd.f32 0.0, %v4434
      %v4436 = vpop.f32.mrb[0].mxu0
      %v4437 = vpop.f32.mrb[0].mxu0
      %v4438 = vadd.f32 0.0, %v4437
      %v4439 = vpop.f32.mrb[0].mxu0
      %4440 = vmatprep.mubr.bf16.mxu0 0
      %4441 = vmatmul.mubr.bf16.gmra.mrb[0].mxu0 %v4377
      %v4442 = vpop.f32.mrb[0].mxu0
      %v4443 = vadd.f32 0.0, %v4442
      %v4444 = vpop.f32.mrb[0].mxu0
      %v4445 = vpop.f32.mrb[0].mxu0
      %v4446 = vadd.f32 0.0, %v4445
      %v4447 = vpop.f32.mrb[0].mxu0
      %4448 = vmatprep.mubr.bf16.mxu0 0
      %4449 = vmatmul.mubr.bf16.gmra.mrb[0].mxu0 %v4380
      %v4450 = vpop.f32.mrb[0].mxu0
      %v4451 = vadd.f32 0.0, %v4450
      %v4452 = vpop.f32.mrb[0].mxu0
      %v4453 = vpop.f32.mrb[0].mxu0
      %v4454 = vadd.f32 0.0, %v4453
      %v4455 = vpop.f32.mrb[0].mxu0
      %4456 = vmatprep.mubr.bf16.mxu0 0
      %4457 = vmatmul.mubr.bf16.gmra.mrb[0].mxu0 %v4383
      %v4458 = vpop.f32.mrb[0].mxu0
      %v4459 = vadd.f32 0.0, %v4458
      %v4460 = vpop.f32.mrb[0].mxu0
      %v4461 = vpop.f32.mrb[0].mxu0
      %v4462 = vadd.f32 0.0, %v4461
      %v4463 = vpop.f32.mrb[0].mxu0
      %4464 = vmatprep.mubr.bf16.mxu0 0
      %4465 = vmatmul.mubr.bf16.gmra.mrb[0].mxu0 %v4386
      %v4466 = vpop.f32.mrb[0].mxu0
      %v4467 = vadd.f32 0.0, %v4466
      %v4468 = vpop.f32.mrb[0].mxu0
      %v4469 = vpop.f32.mrb[0].mxu0
      %v4470 = vadd.f32 0.0, %v4469
      %v4471 = vpop.f32.mrb[0].mxu0
      %4472 = vmatprep.mubr.bf16.mxu0 0
      %4473 = vmatmul.mubr.bf16.gmra.mrb[0].mxu0 %v4389
      %v4474 = vpop.f32.mrb[0].mxu0
      %v4475 = vadd.f32 0.0, %v4474
      %v4476 = vpop.f32.mrb[0].mxu0
      %v4477 = vpop.f32.mrb[0].mxu0
      %v4478 = vadd.f32 0.0, %v4477
      %v4479 = vpop.f32.mrb[0].mxu0
      %4480 = vmatprep.mubr.bf16.mxu0 0
      %4481 = vmatmul.mubr.bf16.gmra.mrb[0].mxu0 %v4392
      %v4482 = vpop.f32.mrb[0].mxu0
      %v4483 = vadd.f32 0.0, %v4482
      %v4484 = vpop.f32.mrb[0].mxu0
      %v4485 = vpop.f32.mrb[0].mxu0
      %v4486 = vadd.f32 0.0, %v4485
      %v4487 = vpop.f32.mrb[0].mxu0
      %4488 = vmatprep.mubr.bf16.mxu0 0
      %4489 = vmatmul.mubr.bf16.gmra.mrb[0].mxu0 %v4395
      %v4490 = vpop.f32.mrb[0].mxu0
      %v4491 = vadd.f32 0.0, %v4490
      %v4492 = vpop.f32.mrb[0].mxu0
      %v4493 = vpop.f32.mrb[0].mxu0
      %v4494 = vadd.f32 0.0, %v4493
      %v4495 = vpop.f32.mrb[0].mxu0
      %4496 = vdwg.mxu0
      %v4497 = vadd.f32 %v4243, %v4435
      %v4498 = vadd.f32 %v4244, %v4438
      %v4499 = vadd.f32 %v4245, %v4443
      %v4500 = vadd.f32 %v4246, %v4446
      %v4501 = vadd.f32 %v4247, %v4451
      %v4502 = vadd.f32 %v4248, %v4454
      %v4503 = vadd.f32 %v4249, %v4459
      %v4504 = vadd.f32 %v4250, %v4462
      %v4505 = vadd.f32 %v4251, %v4467
      %v4506 = vadd.f32 %v4252, %v4470
      %v4507 = vadd.f32 %v4253, %v4475
      %v4508 = vadd.f32 %v4254, %v4478
      %v4509 = vadd.f32 %v4255, %v4483
      %v4510 = vadd.f32 %v4256, %v4486
      %v4511 = vadd.f32 %v4257, %v4491
      %v4512 = vadd.f32 %v4258, %v4494
      %s4513 = scalar_lea.vmem %s363, 24
      %v4514 = vld [vmem:[%s4513] sm:$0xf]
      %v4515 = vld [vmem:[%s4513 + $0x4] sm:$0xf]
      %v4516 = vld [vmem:[%s4513 + $0xc] sm:$0xf]
      %v4517 = vld [vmem:[%s4513 + $0x10] sm:$0xf]
      %v4518 = vld [vmem:[%s4513 + $0x18] sm:$0xf]
      %v4519 = vld [vmem:[%s4513 + $0x1c] sm:$0xf]
      %v4520 = vld [vmem:[%s4513 + $0x24] sm:$0xf]
      %v4521 = vld [vmem:[%s4513 + $0x28] sm:$0xf]
      %v4522 = vld [vmem:[%s4513 + $0x30] sm:$0xf]
      %v4523 = vld [vmem:[%s4513 + $0x34] sm:$0xf]
      %v4524 = vld [vmem:[%s4513 + $0x3c] sm:$0xf]
      %v4525 = vld [vmem:[%s4513 + $0x40] sm:$0xf]
      %v4526 = vld [vmem:[%s4513 + $0x48] sm:$0xf]
      %v4527 = vld [vmem:[%s4513 + $0x4c] sm:$0xf]
      %v4528 = vld [vmem:[%s4513 + $0x54] sm:$0xf]
      %v4529 = vld [vmem:[%s4513 + $0x58] sm:$0xf]
      %s4530 = scalar_lea.vmem %s3, 12
      %v4531 = vld [vmem:[%s4530] sm:$0x3]
      %v4548 = vunpack.c.l.b16 %v4514
      %v4549 = vunpack.c.l.b16 %v4515
      %v4550 = vunpack.c.l.b16 %v4516
      %v4551 = vunpack.c.l.b16 %v4517
      %v4552 = vunpack.c.l.b16 %v4518
      %v4553 = vunpack.c.l.b16 %v4519
      %v4554 = vunpack.c.l.b16 %v4520
      %v4555 = vunpack.c.l.b16 %v4521
      %v4556 = vunpack.c.l.b16 %v4522
      %v4557 = vunpack.c.l.b16 %v4523
      %v4558 = vunpack.c.l.b16 %v4524
      %v4559 = vunpack.c.l.b16 %v4525
      %v4560 = vunpack.c.l.b16 %v4526
      %v4561 = vunpack.c.l.b16 %v4527
      %v4562 = vunpack.c.l.b16 %v4528
      %v4563 = vunpack.c.l.b16 %v4529
      %v4564 = vpack.c.b16 %v4549, %v4548
      %v4565 = vpack.c.b16 %v4551, %v4550
      %v4566 = vpack.c.b16 %v4553, %v4552
      %v4567 = vpack.c.b16 %v4555, %v4554
      %v4568 = vpack.c.b16 %v4557, %v4556
      %v4569 = vpack.c.b16 %v4559, %v4558
      %v4570 = vpack.c.b16 %v4561, %v4560
      %v4571 = vpack.c.b16 %v4563, %v4562
      %v4573 = vsel %vm636, %v4564, 0
      %v4576 = vsel %vm636, %v4565, 0
      %v4579 = vsel %vm636, %v4566, 0
      %v4582 = vsel %vm636, %v4567, 0
      %v4585 = vsel %vm636, %v4568, 0
      %v4588 = vsel %vm636, %v4569, 0
      %v4591 = vsel %vm636, %v4570, 0
      %v4594 = vsel %vm636, %v4571, 0
      %v4597 = vsel %vm661, %v4531, 0
      %4599 = vmatprep.subr.bf16.mxu0 0
      %4600 = vmatpush1.bf16.msra.mxu0 %v4597
      %4601 = vmatprep.subr.bf16.mxu0 0
      %4602 = vmatpush1.bf16.msra.mxu0 0
      %4603 = vmatprep.subr.bf16.mxu0 0
      %4604 = vmatpush1.bf16.msra.mxu0 0
      %4605 = vmatprep.subr.bf16.mxu0 0
      %4606 = vmatpush1.bf16.msra.mxu0 0
      %4607 = vmatprep.subr.bf16.mxu0 0
      %4608 = vmatpush1.bf16.msra.mxu0 0
      %4609 = vmatprep.subr.bf16.mxu0 0
      %4610 = vmatpush1.bf16.msra.mxu0 0
      %4611 = vmatprep.subr.bf16.mxu0 0
      %4612 = vmatpush1.bf16.msra.mxu0 0
      %4613 = vmatprep.subr.bf16.mxu0 0
      %4614 = vmatpush1.bf16.msra.mxu0 0
      %4615 = vmatprep.subr.bf16.mxu0 0
      %4616 = vmatpush1.bf16.msra.mxu0 0
      %4617 = vmatprep.subr.bf16.mxu0 0
      %4618 = vmatpush1.bf16.msra.mxu0 0
      %4619 = vmatprep.subr.bf16.mxu0 0
      %4620 = vmatpush1.bf16.msra.mxu0 0
      %4621 = vmatprep.subr.bf16.mxu0 0
      %4622 = vmatpush1.bf16.msra.mxu0 0
      %4623 = vmatprep.subr.bf16.mxu0 0
      %4624 = vmatpush1.bf16.msra.mxu0 0
      %4625 = vmatprep.subr.bf16.mxu0 0
      %4626 = vmatpush1.bf16.msra.mxu0 0
      %4627 = vmatprep.subr.bf16.mxu0 0
      %4628 = vmatpush1.bf16.msra.mxu0 0
      %4629 = vmatprep.subr.bf16.mxu0 0
      %4630 = vmatpush1.bf16.msra.mxu0 0
      %4631 = vmatprep.mubr.bf16.mxu0 0
      %4632 = vmatmul.mubr.bf16.gmra.mrb[0].mxu0 %v4573
      %v4633 = vpop.f32.mrb[0].mxu0
      %v4634 = vadd.f32 0.0, %v4633
      %v4635 = vpop.f32.mrb[0].mxu0
      %v4636 = vpop.f32.mrb[0].mxu0
      %v4637 = vadd.f32 0.0, %v4636
      %v4638 = vpop.f32.mrb[0].mxu0
      %4639 = vmatprep.mubr.bf16.mxu0 0
      %4640 = vmatmul.mubr.bf16.gmra.mrb[0].mxu0 %v4576
      %v4641 = vpop.f32.mrb[0].mxu0
      %v4642 = vadd.f32 0.0, %v4641
      %v4643 = vpop.f32.mrb[0].mxu0
      %v4644 = vpop.f32.mrb[0].mxu0
      %v4645 = vadd.f32 0.0, %v4644
      %v4646 = vpop.f32.mrb[0].mxu0
      %4647 = vmatprep.mubr.bf16.mxu0 0
      %4648 = vmatmul.mubr.bf16.gmra.mrb[0].mxu0 %v4579
      %v4649 = vpop.f32.mrb[0].mxu0
      %v4650 = vadd.f32 0.0, %v4649
      %v4651 = vpop.f32.mrb[0].mxu0
      %v4652 = vpop.f32.mrb[0].mxu0
      %v4653 = vadd.f32 0.0, %v4652
      %v4654 = vpop.f32.mrb[0].mxu0
      %4655 = vmatprep.mubr.bf16.mxu0 0
      %4656 = vmatmul.mubr.bf16.gmra.mrb[0].mxu0 %v4582
      %v4657 = vpop.f32.mrb[0].mxu0
      %v4658 = vadd.f32 0.0, %v4657
      %v4659 = vpop.f32.mrb[0].mxu0
      %v4660 = vpop.f32.mrb[0].mxu0
      %v4661 = vadd.f32 0.0, %v4660
      %v4662 = vpop.f32.mrb[0].mxu0
      %4663 = vmatprep.mubr.bf16.mxu0 0
      %4664 = vmatmul.mubr.bf16.gmra.mrb[0].mxu0 %v4585
      %v4665 = vpop.f32.mrb[0].mxu0
      %v4666 = vadd.f32 0.0, %v4665
      %v4667 = vpop.f32.mrb[0].mxu0
      %v4668 = vpop.f32.mrb[0].mxu0
      %v4669 = vadd.f32 0.0, %v4668
      %v4670 = vpop.f32.mrb[0].mxu0
      %4671 = vmatprep.mubr.bf16.mxu0 0
      %4672 = vmatmul.mubr.bf16.gmra.mrb[0].mxu0 %v4588
      %v4673 = vpop.f32.mrb[0].mxu0
      %v4674 = vadd.f32 0.0, %v4673
      %v4675 = vpop.f32.mrb[0].mxu0
      %v4676 = vpop.f32.mrb[0].mxu0
      %v4677 = vadd.f32 0.0, %v4676
      %v4678 = vpop.f32.mrb[0].mxu0
      %4679 = vmatprep.mubr.bf16.mxu0 0
      %4680 = vmatmul.mubr.bf16.gmra.mrb[0].mxu0 %v4591
      %v4681 = vpop.f32.mrb[0].mxu0
      %v4682 = vadd.f32 0.0, %v4681
      %v4683 = vpop.f32.mrb[0].mxu0
      %v4684 = vpop.f32.mrb[0].mxu0
      %v4685 = vadd.f32 0.0, %v4684
      %v4686 = vpop.f32.mrb[0].mxu0
      %4687 = vmatprep.mubr.bf16.mxu0 0
      %4688 = vmatmul.mubr.bf16.gmra.mrb[0].mxu0 %v4594
      %v4689 = vpop.f32.mrb[0].mxu0
      %v4690 = vadd.f32 0.0, %v4689
      %v4691 = vpop.f32.mrb[0].mxu0
      %v4692 = vpop.f32.mrb[0].mxu0
      %v4693 = vadd.f32 0.0, %v4692
      %v4694 = vpop.f32.mrb[0].mxu0
      %4695 = vdwg.mxu0
      %v4696 = vadd.f32 %v4497, %v4634
      %v4697 = vadd.f32 %v4498, %v4637
      %v4698 = vadd.f32 %v4499, %v4642
      %v4699 = vadd.f32 %v4500, %v4645
      %v4700 = vadd.f32 %v4501, %v4650
      %v4701 = vadd.f32 %v4502, %v4653
      %v4702 = vadd.f32 %v4503, %v4658
      %v4703 = vadd.f32 %v4504, %v4661
      %v4704 = vadd.f32 %v4505, %v4666
      %v4705 = vadd.f32 %v4506, %v4669
      %v4706 = vadd.f32 %v4507, %v4674
      %v4707 = vadd.f32 %v4508, %v4677
      %v4708 = vadd.f32 %v4509, %v4682
      %v4709 = vadd.f32 %v4510, %v4685
      %v4710 = vadd.f32 %v4511, %v4690
      %v4711 = vadd.f32 %v4512, %v4693
      %v4712 = vld [vmem:[%s4513] sm:$0xf]
      %v4713 = vld [vmem:[%s4513 + $0x4] sm:$0xf]
      %v4714 = vld [vmem:[%s4513 + $0x8] sm:$0x1]
      %v4715 = vld [vmem:[%s4513 + $0xc] sm:$0xf]
      %v4716 = vld [vmem:[%s4513 + $0x10] sm:$0xf]
      %v4717 = vld [vmem:[%s4513 + $0x14] sm:$0x1]
      %v4718 = vld [vmem:[%s4513 + $0x18] sm:$0xf]
      %v4719 = vld [vmem:[%s4513 + $0x1c] sm:$0xf]
      %v4720 = vld [vmem:[%s4513 + $0x20] sm:$0x1]
      %v4721 = vld [vmem:[%s4513 + $0x24] sm:$0xf]
      %v4722 = vld [vmem:[%s4513 + $0x28] sm:$0xf]
      %v4723 = vld [vmem:[%s4513 + $0x2c] sm:$0x1]
      %v4724 = vld [vmem:[%s4513 + $0x30] sm:$0xf]
      %v4725 = vld [vmem:[%s4513 + $0x34] sm:$0xf]
      %v4726 = vld [vmem:[%s4513 + $0x38] sm:$0x1]
      %v4727 = vld [vmem:[%s4513 + $0x3c] sm:$0xf]
      %v4728 = vld [vmem:[%s4513 + $0x40] sm:$0xf]
      %v4729 = vld [vmem:[%s4513 + $0x44] sm:$0x1]
      %v4730 = vld [vmem:[%s4513 + $0x48] sm:$0xf]
      %v4731 = vld [vmem:[%s4513 + $0x4c] sm:$0xf]
      %v4732 = vld [vmem:[%s4513 + $0x50] sm:$0x1]
      %v4733 = vld [vmem:[%s4513 + $0x54] sm:$0xf]
      %v4734 = vld [vmem:[%s4513 + $0x58] sm:$0xf]
      %v4735 = vld [vmem:[%s4513 + $0x5c] sm:$0x1]
      %v4737 = vshrl.u32 %v4712, 16
      %v4739 = vrot.slane %v4737, 4
      %v4740 = vshll.u32 %v4712, 16
      %v4742 = vrot.slane %v4740, 5
      %v4743 = vor.u32 %v4739, %v4742
      %v4744 = vrot.slane %v4743, 4
      %v4746 = vshll.u32 %v4713, 16
      %v4748 = vrot.slane %v4746, 5
      %v4749 = vsel %vm417, %v4744, %v4748
      %v4750 = vshrl.u32 %v4713, 16
      %v4752 = vrot.slane %v4750, 4
      %v4753 = vor.u32 %v4752, %v4748
      %v4754 = vrot.slane %v4753, 4
      %v4756 = vshll.u32 %v4714, 16
      %v4758 = vrot.slane %v4756, 5
      %v4759 = vsel %vm417, %v4754, %v4758
      %v4761 = vshrl.u32 %v4715, 16
      %v4763 = vrot.slane %v4761, 4
      %v4764 = vshll.u32 %v4715, 16
      %v4766 = vrot.slane %v4764, 5
      %v4767 = vor.u32 %v4763, %v4766
      %v4768 = vrot.slane %v4767, 4
      %v4770 = vshll.u32 %v4716, 16
      %v4772 = vrot.slane %v4770, 5
      %v4773 = vsel %vm417, %v4768, %v4772
      %v4774 = vshrl.u32 %v4716, 16
      %v4776 = vrot.slane %v4774, 4
      %v4777 = vor.u32 %v4776, %v4772
      %v4778 = vrot.slane %v4777, 4
      %v4780 = vshll.u32 %v4717, 16
      %v4782 = vrot.slane %v4780, 5
      %v4783 = vsel %vm417, %v4778, %v4782
      %v4785 = vshrl.u32 %v4718, 16
      %v4787 = vrot.slane %v4785, 4
      %v4788 = vshll.u32 %v4718, 16
      %v4790 = vrot.slane %v4788, 5
      %v4791 = vor.u32 %v4787, %v4790
      %v4792 = vrot.slane %v4791, 4
      %v4794 = vshll.u32 %v4719, 16
      %v4796 = vrot.slane %v4794, 5
      %v4797 = vsel %vm417, %v4792, %v4796
      %v4798 = vshrl.u32 %v4719, 16
      %v4800 = vrot.slane %v4798, 4
      %v4801 = vor.u32 %v4800, %v4796
      %v4802 = vrot.slane %v4801, 4
      %v4804 = vshll.u32 %v4720, 16
      %v4806 = vrot.slane %v4804, 5
      %v4807 = vsel %vm417, %v4802, %v4806
      %v4809 = vshrl.u32 %v4721, 16
      %v4811 = vrot.slane %v4809, 4
      %v4812 = vshll.u32 %v4721, 16
      %v4814 = vrot.slane %v4812, 5
      %v4815 = vor.u32 %v4811, %v4814
      %v4816 = vrot.slane %v4815, 4
      %v4818 = vshll.u32 %v4722, 16
      %v4820 = vrot.slane %v4818, 5
      %v4821 = vsel %vm417, %v4816, %v4820
      %v4822 = vshrl.u32 %v4722, 16
      %v4824 = vrot.slane %v4822, 4
      %v4825 = vor.u32 %v4824, %v4820
      %v4826 = vrot.slane %v4825, 4
      %v4828 = vshll.u32 %v4723, 16
      %v4830 = vrot.slane %v4828, 5
      %v4831 = vsel %vm417, %v4826, %v4830
      %v4833 = vshrl.u32 %v4724, 16
      %v4835 = vrot.slane %v4833, 4
      %v4836 = vshll.u32 %v4724, 16
      %v4838 = vrot.slane %v4836, 5
      %v4839 = vor.u32 %v4835, %v4838
      %v4840 = vrot.slane %v4839, 4
      %v4842 = vshll.u32 %v4725, 16
      %v4844 = vrot.slane %v4842, 5
      %v4845 = vsel %vm417, %v4840, %v4844
      %v4846 = vshrl.u32 %v4725, 16
      %v4848 = vrot.slane %v4846, 4
      %v4849 = vor.u32 %v4848, %v4844
      %v4850 = vrot.slane %v4849, 4
      %v4852 = vshll.u32 %v4726, 16
      %v4854 = vrot.slane %v4852, 5
      %v4855 = vsel %vm417, %v4850, %v4854
      %v4857 = vshrl.u32 %v4727, 16
      %v4859 = vrot.slane %v4857, 4
      %v4860 = vshll.u32 %v4727, 16
      %v4862 = vrot.slane %v4860, 5
      %v4863 = vor.u32 %v4859, %v4862
      %v4864 = vrot.slane %v4863, 4
      %v4866 = vshll.u32 %v4728, 16
      %v4868 = vrot.slane %v4866, 5
      %v4869 = vsel %vm417, %v4864, %v4868
      %v4870 = vshrl.u32 %v4728, 16
      %v4872 = vrot.slane %v4870, 4
      %v4873 = vor.u32 %v4872, %v4868
      %v4874 = vrot.slane %v4873, 4
      %v4876 = vshll.u32 %v4729, 16
      %v4878 = vrot.slane %v4876, 5
      %v4879 = vsel %vm417, %v4874, %v4878
      %v4881 = vshrl.u32 %v4730, 16
      %v4883 = vrot.slane %v4881, 4
      %v4884 = vshll.u32 %v4730, 16
      %v4886 = vrot.slane %v4884, 5
      %v4887 = vor.u32 %v4883, %v4886
      %v4888 = vrot.slane %v4887, 4
      %v4890 = vshll.u32 %v4731, 16
      %v4892 = vrot.slane %v4890, 5
      %v4893 = vsel %vm417, %v4888, %v4892
      %v4894 = vshrl.u32 %v4731, 16
      %v4896 = vrot.slane %v4894, 4
      %v4897 = vor.u32 %v4896, %v4892
      %v4898 = vrot.slane %v4897, 4
      %v4900 = vshll.u32 %v4732, 16
      %v4902 = vrot.slane %v4900, 5
      %v4903 = vsel %vm417, %v4898, %v4902
      %v4905 = vshrl.u32 %v4733, 16
      %v4907 = vrot.slane %v4905, 4
      %v4908 = vshll.u32 %v4733, 16
      %v4910 = vrot.slane %v4908, 5
      %v4911 = vor.u32 %v4907, %v4910
      %v4912 = vrot.slane %v4911, 4
      %v4914 = vshll.u32 %v4734, 16
      %v4916 = vrot.slane %v4914, 5
      %v4917 = vsel %vm417, %v4912, %v4916
      %v4918 = vshrl.u32 %v4734, 16
      %v4920 = vrot.slane %v4918, 4
      %v4921 = vor.u32 %v4920, %v4916
      %v4922 = vrot.slane %v4921, 4
      %v4924 = vshll.u32 %v4735, 16
      %v4926 = vrot.slane %v4924, 5
      %v4927 = vsel %vm417, %v4922, %v4926
      %s4928 = scalar_lea.vmem %s3, 14
      %v4929 = vld [vmem:[%s4928] sm:$0x3]
      %v4930 = vunpack.c.l.b16 %v4749
      %v4931 = vunpack.c.l.b16 %v4759
      %v4932 = vunpack.c.l.b16 %v4773
      %v4933 = vunpack.c.l.b16 %v4783
      %v4934 = vunpack.c.l.b16 %v4797
      %v4935 = vunpack.c.l.b16 %v4807
      %v4936 = vunpack.c.l.b16 %v4821
      %v4937 = vunpack.c.l.b16 %v4831
      %v4938 = vunpack.c.l.b16 %v4845
      %v4939 = vunpack.c.l.b16 %v4855
      %v4940 = vunpack.c.l.b16 %v4869
      %v4941 = vunpack.c.l.b16 %v4879
      %v4942 = vunpack.c.l.b16 %v4893
      %v4943 = vunpack.c.l.b16 %v4903
      %v4944 = vunpack.c.l.b16 %v4917
      %v4945 = vunpack.c.l.b16 %v4927
      %v4946 = vpack.c.b16 %v4931, %v4930
      %v4947 = vpack.c.b16 %v4933, %v4932
      %v4948 = vpack.c.b16 %v4935, %v4934
      %v4949 = vpack.c.b16 %v4937, %v4936
      %v4950 = vpack.c.b16 %v4939, %v4938
      %v4951 = vpack.c.b16 %v4941, %v4940
      %v4952 = vpack.c.b16 %v4943, %v4942
      %v4953 = vpack.c.b16 %v4945, %v4944
      %v4955 = vsel %vm636, %v4946, 0
      %v4958 = vsel %vm636, %v4947, 0
      %v4961 = vsel %vm636, %v4948, 0
      %v4964 = vsel %vm636, %v4949, 0
      %v4967 = vsel %vm636, %v4950, 0
      %v4970 = vsel %vm636, %v4951, 0
      %v4973 = vsel %vm636, %v4952, 0
      %v4976 = vsel %vm636, %v4953, 0
      %v4979 = vsel %vm661, %v4929, 0
      %4981 = vmatprep.subr.bf16.mxu0 0
      %4982 = vmatpush1.bf16.msra.mxu0 %v4979
      %4983 = vmatprep.subr.bf16.mxu0 0
      %4984 = vmatpush1.bf16.msra.mxu0 0
      %4985 = vmatprep.subr.bf16.mxu0 0
      %4986 = vmatpush1.bf16.msra.mxu0 0
      %4987 = vmatprep.subr.bf16.mxu0 0
      %4988 = vmatpush1.bf16.msra.mxu0 0
      %4989 = vmatprep.subr.bf16.mxu0 0
      %4990 = vmatpush1.bf16.msra.mxu0 0
      %4991 = vmatprep.subr.bf16.mxu0 0
      %4992 = vmatpush1.bf16.msra.mxu0 0
      %4993 = vmatprep.subr.bf16.mxu0 0
      %4994 = vmatpush1.bf16.msra.mxu0 0
      %4995 = vmatprep.subr.bf16.mxu0 0
      %4996 = vmatpush1.bf16.msra.mxu0 0
      %4997 = vmatprep.subr.bf16.mxu0 0
      %4998 = vmatpush1.bf16.msra.mxu0 0
      %4999 = vmatprep.subr.bf16.mxu0 0
      %5000 = vmatpush1.bf16.msra.mxu0 0
      %5001 = vmatprep.subr.bf16.mxu0 0
      %5002 = vmatpush1.bf16.msra.mxu0 0
      %5003 = vmatprep.subr.bf16.mxu0 0
      %5004 = vmatpush1.bf16.msra.mxu0 0
      %5005 = vmatprep.subr.bf16.mxu0 0
      %5006 = vmatpush1.bf16.msra.mxu0 0
      %5007 = vmatprep.subr.bf16.mxu0 0
      %5008 = vmatpush1.bf16.msra.mxu0 0
      %5009 = vmatprep.subr.bf16.mxu0 0
      %5010 = vmatpush1.bf16.msra.mxu0 0
      %5011 = vmatprep.subr.bf16.mxu0 0
      %5012 = vmatpush1.bf16.msra.mxu0 0
      %5013 = vmatprep.mubr.bf16.mxu0 0
      %5014 = vmatmul.mubr.bf16.gmra.mrb[0].mxu0 %v4955
      %v5015 = vpop.f32.mrb[0].mxu0
      %v5016 = vadd.f32 0.0, %v5015
      %v5017 = vpop.f32.mrb[0].mxu0
      %v5018 = vpop.f32.mrb[0].mxu0
      %v5019 = vadd.f32 0.0, %v5018
      %v5020 = vpop.f32.mrb[0].mxu0
      %5021 = vmatprep.mubr.bf16.mxu0 0
      %5022 = vmatmul.mubr.bf16.gmra.mrb[0].mxu0 %v4958
      %v5023 = vpop.f32.mrb[0].mxu0
      %v5024 = vadd.f32 0.0, %v5023
      %v5025 = vpop.f32.mrb[0].mxu0
      %v5026 = vpop.f32.mrb[0].mxu0
      %v5027 = vadd.f32 0.0, %v5026
      %v5028 = vpop.f32.mrb[0].mxu0
      %5029 = vmatprep.mubr.bf16.mxu0 0
      %5030 = vmatmul.mubr.bf16.gmra.mrb[0].mxu0 %v4961
      %v5031 = vpop.f32.mrb[0].mxu0
      %v5032 = vadd.f32 0.0, %v5031
      %v5033 = vpop.f32.mrb[0].mxu0
      %v5034 = vpop.f32.mrb[0].mxu0
      %v5035 = vadd.f32 0.0, %v5034
      %v5036 = vpop.f32.mrb[0].mxu0
      %5037 = vmatprep.mubr.bf16.mxu0 0
      %5038 = vmatmul.mubr.bf16.gmra.mrb[0].mxu0 %v4964
      %v5039 = vpop.f32.mrb[0].mxu0
      %v5040 = vadd.f32 0.0, %v5039
      %v5041 = vpop.f32.mrb[0].mxu0
      %v5042 = vpop.f32.mrb[0].mxu0
      %v5043 = vadd.f32 0.0, %v5042
      %v5044 = vpop.f32.mrb[0].mxu0
      %5045 = vmatprep.mubr.bf16.mxu0 0
      %5046 = vmatmul.mubr.bf16.gmra.mrb[0].mxu0 %v4967
      %v5047 = vpop.f32.mrb[0].mxu0
      %v5048 = vadd.f32 0.0, %v5047
      %v5049 = vpop.f32.mrb[0].mxu0
      %v5050 = vpop.f32.mrb[0].mxu0
      %v5051 = vadd.f32 0.0, %v5050
      %v5052 = vpop.f32.mrb[0].mxu0
      %5053 = vmatprep.mubr.bf16.mxu0 0
      %5054 = vmatmul.mubr.bf16.gmra.mrb[0].mxu0 %v4970
      %v5055 = vpop.f32.mrb[0].mxu0
      %v5056 = vadd.f32 0.0, %v5055
      %v5057 = vpop.f32.mrb[0].mxu0
      %v5058 = vpop.f32.mrb[0].mxu0
      %v5059 = vadd.f32 0.0, %v5058
      %v5060 = vpop.f32.mrb[0].mxu0
      %5061 = vmatprep.mubr.bf16.mxu0 0
      %5062 = vmatmul.mubr.bf16.gmra.mrb[0].mxu0 %v4973
      %v5063 = vpop.f32.mrb[0].mxu0
      %v5064 = vadd.f32 0.0, %v5063
      %v5065 = vpop.f32.mrb[0].mxu0
      %v5066 = vpop.f32.mrb[0].mxu0
      %v5067 = vadd.f32 0.0, %v5066
      %v5068 = vpop.f32.mrb[0].mxu0
      %5069 = vmatprep.mubr.bf16.mxu0 0
      %5070 = vmatmul.mubr.bf16.gmra.mrb[0].mxu0 %v4976
      %v5071 = vpop.f32.mrb[0].mxu0
      %v5072 = vadd.f32 0.0, %v5071
      %v5073 = vpop.f32.mrb[0].mxu0
      %v5074 = vpop.f32.mrb[0].mxu0
      %v5075 = vadd.f32 0.0, %v5074
      %v5076 = vpop.f32.mrb[0].mxu0
      %5077 = vdwg.mxu0
      %v5078 = vadd.f32 %v4696, %v5016
      %v5079 = vadd.f32 %v4697, %v5019
      %v5080 = vadd.f32 %v4698, %v5024
      %v5081 = vadd.f32 %v4699, %v5027
      %v5082 = vadd.f32 %v4700, %v5032
      %v5083 = vadd.f32 %v4701, %v5035
      %v5084 = vadd.f32 %v4702, %v5040
      %v5085 = vadd.f32 %v4703, %v5043
      %v5086 = vadd.f32 %v4704, %v5048
      %v5087 = vadd.f32 %v4705, %v5051
      %v5088 = vadd.f32 %v4706, %v5056
      %v5089 = vadd.f32 %v4707, %v5059
      %v5090 = vadd.f32 %v4708, %v5064
      %v5091 = vadd.f32 %v4709, %v5067
      %v5092 = vadd.f32 %v4710, %v5072
      %v5093 = vadd.f32 %v4711, %v5075
      %v5094 = vld [vmem:[%s4513] sm:$0xe]
      %v5095 = vld [vmem:[%s4513 + $0xc] sm:$0xe]
      %v5096 = vld [vmem:[%s4513 + $0x18] sm:$0xe]
      %v5097 = vld [vmem:[%s4513 + $0x24] sm:$0xe]
      %v5098 = vld [vmem:[%s4513 + $0x30] sm:$0xe]
      %v5099 = vld [vmem:[%s4513 + $0x3c] sm:$0xe]
      %v5100 = vld [vmem:[%s4513 + $0x48] sm:$0xe]
      %v5101 = vld [vmem:[%s4513 + $0x54] sm:$0xe]
      %v5126 = vrot.slane %v5094, 5
      %v5127 = vrot.slane %v5126, 4
      %v5128 = vrot.slane %v4713, 5
      %v5129 = vsel %vm952, %v5127, %v5128
      %v5130 = vrot.slane %v5128, 4
      %v5131 = vrot.slane %v4714, 5
      %v5132 = vsel %vm952, %v5130, %v5131
      %v5133 = vrot.slane %v5095, 5
      %v5134 = vrot.slane %v5133, 4
      %v5135 = vrot.slane %v4716, 5
      %v5136 = vsel %vm952, %v5134, %v5135
      %v5137 = vrot.slane %v5135, 4
      %v5138 = vrot.slane %v4717, 5
      %v5139 = vsel %vm952, %v5137, %v5138
      %v5140 = vrot.slane %v5096, 5
      %v5141 = vrot.slane %v5140, 4
      %v5142 = vrot.slane %v4719, 5
      %v5143 = vsel %vm952, %v5141, %v5142
      %v5144 = vrot.slane %v5142, 4
      %v5145 = vrot.slane %v4720, 5
      %v5146 = vsel %vm952, %v5144, %v5145
      %v5147 = vrot.slane %v5097, 5
      %v5148 = vrot.slane %v5147, 4
      %v5149 = vrot.slane %v4722, 5
      %v5150 = vsel %vm952, %v5148, %v5149
      %v5151 = vrot.slane %v5149, 4
      %v5152 = vrot.slane %v4723, 5
      %v5153 = vsel %vm952, %v5151, %v5152
      %v5154 = vrot.slane %v5098, 5
      %v5155 = vrot.slane %v5154, 4
      %v5156 = vrot.slane %v4725, 5
      %v5157 = vsel %vm952, %v5155, %v5156
      %v5158 = vrot.slane %v5156, 4
      %v5159 = vrot.slane %v4726, 5
      %v5160 = vsel %vm952, %v5158, %v5159
      %v5161 = vrot.slane %v5099, 5
      %v5162 = vrot.slane %v5161, 4
      %v5163 = vrot.slane %v4728, 5
      %v5164 = vsel %vm952, %v5162, %v5163
      %v5165 = vrot.slane %v5163, 4
      %v5166 = vrot.slane %v4729, 5
      %v5167 = vsel %vm952, %v5165, %v5166
      %v5168 = vrot.slane %v5100, 5
      %v5169 = vrot.slane %v5168, 4
      %v5170 = vrot.slane %v4731, 5
      %v5171 = vsel %vm952, %v5169, %v5170
      %v5172 = vrot.slane %v5170, 4
      %v5173 = vrot.slane %v4732, 5
      %v5174 = vsel %vm952, %v5172, %v5173
      %v5175 = vrot.slane %v5101, 5
      %v5176 = vrot.slane %v5175, 4
      %v5177 = vrot.slane %v4734, 5
      %v5178 = vsel %vm952, %v5176, %v5177
      %v5179 = vrot.slane %v5177, 4
      %v5180 = vrot.slane %v4735, 5
      %v5181 = vsel %vm952, %v5179, %v5180
      %s5182 = scalar_lea.vmem %s3, 16
      %v5183 = vld [vmem:[%s5182] sm:$0x3]
      %v5184 = vunpack.c.l.b16 %v5129
      %v5185 = vunpack.c.l.b16 %v5132
      %v5186 = vunpack.c.l.b16 %v5136
      %v5187 = vunpack.c.l.b16 %v5139
      %v5188 = vunpack.c.l.b16 %v5143
      %v5189 = vunpack.c.l.b16 %v5146
      %v5190 = vunpack.c.l.b16 %v5150
      %v5191 = vunpack.c.l.b16 %v5153
      %v5192 = vunpack.c.l.b16 %v5157
      %v5193 = vunpack.c.l.b16 %v5160
      %v5194 = vunpack.c.l.b16 %v5164
      %v5195 = vunpack.c.l.b16 %v5167
      %v5196 = vunpack.c.l.b16 %v5171
      %v5197 = vunpack.c.l.b16 %v5174
      %v5198 = vunpack.c.l.b16 %v5178
      %v5199 = vunpack.c.l.b16 %v5181
      %v5200 = vpack.c.b16 %v5185, %v5184
      %v5201 = vpack.c.b16 %v5187, %v5186
      %v5202 = vpack.c.b16 %v5189, %v5188
      %v5203 = vpack.c.b16 %v5191, %v5190
      %v5204 = vpack.c.b16 %v5193, %v5192
      %v5205 = vpack.c.b16 %v5195, %v5194
      %v5206 = vpack.c.b16 %v5197, %v5196
      %v5207 = vpack.c.b16 %v5199, %v5198
      %v5209 = vsel %vm636, %v5200, 0
      %v5212 = vsel %vm636, %v5201, 0
      %v5215 = vsel %vm636, %v5202, 0
      %v5218 = vsel %vm636, %v5203, 0
      %v5221 = vsel %vm636, %v5204, 0
      %v5224 = vsel %vm636, %v5205, 0
      %v5227 = vsel %vm636, %v5206, 0
      %v5230 = vsel %vm636, %v5207, 0
      %v5233 = vsel %vm661, %v5183, 0
      %5235 = vmatprep.subr.bf16.mxu0 0
      %5236 = vmatpush1.bf16.msra.mxu0 %v5233
      %5237 = vmatprep.subr.bf16.mxu0 0
      %5238 = vmatpush1.bf16.msra.mxu0 0
      %5239 = vmatprep.subr.bf16.mxu0 0
      %5240 = vmatpush1.bf16.msra.mxu0 0
      %5241 = vmatprep.subr.bf16.mxu0 0
      %5242 = vmatpush1.bf16.msra.mxu0 0
      %5243 = vmatprep.subr.bf16.mxu0 0
      %5244 = vmatpush1.bf16.msra.mxu0 0
      %5245 = vmatprep.subr.bf16.mxu0 0
      %5246 = vmatpush1.bf16.msra.mxu0 0
      %5247 = vmatprep.subr.bf16.mxu0 0
      %5248 = vmatpush1.bf16.msra.mxu0 0
      %5249 = vmatprep.subr.bf16.mxu0 0
      %5250 = vmatpush1.bf16.msra.mxu0 0
      %5251 = vmatprep.subr.bf16.mxu0 0
      %5252 = vmatpush1.bf16.msra.mxu0 0
      %5253 = vmatprep.subr.bf16.mxu0 0
      %5254 = vmatpush1.bf16.msra.mxu0 0
      %5255 = vmatprep.subr.bf16.mxu0 0
      %5256 = vmatpush1.bf16.msra.mxu0 0
      %5257 = vmatprep.subr.bf16.mxu0 0
      %5258 = vmatpush1.bf16.msra.mxu0 0
      %5259 = vmatprep.subr.bf16.mxu0 0
      %5260 = vmatpush1.bf16.msra.mxu0 0
      %5261 = vmatprep.subr.bf16.mxu0 0
      %5262 = vmatpush1.bf16.msra.mxu0 0
      %5263 = vmatprep.subr.bf16.mxu0 0
      %5264 = vmatpush1.bf16.msra.mxu0 0
      %5265 = vmatprep.subr.bf16.mxu0 0
      %5266 = vmatpush1.bf16.msra.mxu0 0
      %5267 = vmatprep.mubr.bf16.mxu0 0
      %5268 = vmatmul.mubr.bf16.gmra.mrb[0].mxu0 %v5209
      %v5269 = vpop.f32.mrb[0].mxu0
      %v5270 = vadd.f32 0.0, %v5269
      %v5271 = vpop.f32.mrb[0].mxu0
      %v5272 = vpop.f32.mrb[0].mxu0
      %v5273 = vadd.f32 0.0, %v5272
      %v5274 = vpop.f32.mrb[0].mxu0
      %5275 = vmatprep.mubr.bf16.mxu0 0
      %5276 = vmatmul.mubr.bf16.gmra.mrb[0].mxu0 %v5212
      %v5277 = vpop.f32.mrb[0].mxu0
      %v5278 = vadd.f32 0.0, %v5277
      %v5279 = vpop.f32.mrb[0].mxu0
      %v5280 = vpop.f32.mrb[0].mxu0
      %v5281 = vadd.f32 0.0, %v5280
      %v5282 = vpop.f32.mrb[0].mxu0
      %5283 = vmatprep.mubr.bf16.mxu0 0
      %5284 = vmatmul.mubr.bf16.gmra.mrb[0].mxu0 %v5215
      %v5285 = vpop.f32.mrb[0].mxu0
      %v5286 = vadd.f32 0.0, %v5285
      %v5287 = vpop.f32.mrb[0].mxu0
      %v5288 = vpop.f32.mrb[0].mxu0
      %v5289 = vadd.f32 0.0, %v5288
      %v5290 = vpop.f32.mrb[0].mxu0
      %5291 = vmatprep.mubr.bf16.mxu0 0
      %5292 = vmatmul.mubr.bf16.gmra.mrb[0].mxu0 %v5218
      %v5293 = vpop.f32.mrb[0].mxu0
      %v5294 = vadd.f32 0.0, %v5293
      %v5295 = vpop.f32.mrb[0].mxu0
      %v5296 = vpop.f32.mrb[0].mxu0
      %v5297 = vadd.f32 0.0, %v5296
      %v5298 = vpop.f32.mrb[0].mxu0
      %5299 = vmatprep.mubr.bf16.mxu0 0
      %5300 = vmatmul.mubr.bf16.gmra.mrb[0].mxu0 %v5221
      %v5301 = vpop.f32.mrb[0].mxu0
      %v5302 = vadd.f32 0.0, %v5301
      %v5303 = vpop.f32.mrb[0].mxu0
      %v5304 = vpop.f32.mrb[0].mxu0
      %v5305 = vadd.f32 0.0, %v5304
      %v5306 = vpop.f32.mrb[0].mxu0
      %5307 = vmatprep.mubr.bf16.mxu0 0
      %5308 = vmatmul.mubr.bf16.gmra.mrb[0].mxu0 %v5224
      %v5309 = vpop.f32.mrb[0].mxu0
      %v5310 = vadd.f32 0.0, %v5309
      %v5311 = vpop.f32.mrb[0].mxu0
      %v5312 = vpop.f32.mrb[0].mxu0
      %v5313 = vadd.f32 0.0, %v5312
      %v5314 = vpop.f32.mrb[0].mxu0
      %5315 = vmatprep.mubr.bf16.mxu0 0
      %5316 = vmatmul.mubr.bf16.gmra.mrb[0].mxu0 %v5227
      %v5317 = vpop.f32.mrb[0].mxu0
      %v5318 = vadd.f32 0.0, %v5317
      %v5319 = vpop.f32.mrb[0].mxu0
      %v5320 = vpop.f32.mrb[0].mxu0
      %v5321 = vadd.f32 0.0, %v5320
      %v5322 = vpop.f32.mrb[0].mxu0
      %5323 = vmatprep.mubr.bf16.mxu0 0
      %5324 = vmatmul.mubr.bf16.gmra.mrb[0].mxu0 %v5230
      %v5325 = vpop.f32.mrb[0].mxu0
      %v5326 = vadd.f32 0.0, %v5325
      %v5327 = vpop.f32.mrb[0].mxu0
      %v5328 = vpop.f32.mrb[0].mxu0
      %v5329 = vadd.f32 0.0, %v5328
      %v5330 = vpop.f32.mrb[0].mxu0
      %5331 = vdwg.mxu0
      %v5332 = vadd.f32 %v5078, %v5270
      %v5333 = vadd.f32 %v5079, %v5273
      %v5334 = vadd.f32 %v5080, %v5278
      %v5335 = vadd.f32 %v5081, %v5281
      %v5336 = vadd.f32 %v5082, %v5286
      %v5337 = vadd.f32 %v5083, %v5289
      %v5338 = vadd.f32 %v5084, %v5294
      %v5339 = vadd.f32 %v5085, %v5297
      %v5340 = vadd.f32 %v5086, %v5302
      %v5341 = vadd.f32 %v5087, %v5305
      %v5342 = vadd.f32 %v5088, %v5310
      %v5343 = vadd.f32 %v5089, %v5313
      %v5344 = vadd.f32 %v5090, %v5318
      %v5345 = vadd.f32 %v5091, %v5321
      %v5346 = vadd.f32 %v5092, %v5326
      %v5347 = vadd.f32 %v5093, %v5329
      %v5348 = vld [vmem:[%s4] sm:$0x1]
      %v5350 = vlaneseq
      %v5351 = vshrl.u32 %v5350, 7
      %v5352 = vsub.s32 0, %v5351
      %v5353 = vrot.slane %v5348, %v5352
      %v5355 = vadd.f32 %v5332, %v5353
      %v5356 = vadd.f32 %v5333, %v5353
      %v5357 = vadd.f32 %v5334, %v5353
      %v5358 = vadd.f32 %v5335, %v5353
      %v5359 = vadd.f32 %v5336, %v5353
      %v5360 = vadd.f32 %v5337, %v5353
      %v5361 = vadd.f32 %v5338, %v5353
      %v5362 = vadd.f32 %v5339, %v5353
      %v5363 = vadd.f32 %v5340, %v5353
      %v5364 = vadd.f32 %v5341, %v5353
      %v5365 = vadd.f32 %v5342, %v5353
      %v5366 = vadd.f32 %v5343, %v5353
      %v5367 = vadd.f32 %v5344, %v5353
      %v5368 = vadd.f32 %v5345, %v5353
      %v5369 = vadd.f32 %v5346, %v5353
      %v5370 = vadd.f32 %v5347, %v5353
      %v5371 = vsel %vm636, %v5355, 0.0
      %v5372 = vsel %vm636, %v5356, 0.0
      %v5373 = vadd.f32 %v5371, %v5372
      %v5374 = vsel %vm636, %v5357, 0.0
      %v5375 = vadd.f32 %v5373, %v5374
      %v5376 = vsel %vm636, %v5358, 0.0
      %v5377 = vadd.f32 %v5375, %v5376
      %v5378 = vsel %vm636, %v5359, 0.0
      %v5379 = vadd.f32 %v5377, %v5378
      %v5380 = vsel %vm636, %v5360, 0.0
      %v5381 = vadd.f32 %v5379, %v5380
      %v5382 = vsel %vm636, %v5361, 0.0
      %v5383 = vadd.f32 %v5381, %v5382
      %v5384 = vsel %vm636, %v5362, 0.0
      %v5385 = vadd.f32 %v5383, %v5384
      %v5386 = vsel %vm636, %v5363, 0.0
      %v5387 = vadd.f32 %v5385, %v5386
      %v5388 = vsel %vm636, %v5364, 0.0
      %v5389 = vadd.f32 %v5387, %v5388
      %v5390 = vsel %vm636, %v5365, 0.0
      %v5391 = vadd.f32 %v5389, %v5390
      %v5392 = vsel %vm636, %v5366, 0.0
      %v5393 = vadd.f32 %v5391, %v5392
      %v5394 = vsel %vm636, %v5367, 0.0
      %v5395 = vadd.f32 %v5393, %v5394
      %v5396 = vsel %vm636, %v5368, 0.0
      %v5397 = vadd.f32 %v5395, %v5396
      %v5398 = vsel %vm636, %v5369, 0.0
      %v5399 = vadd.f32 %v5397, %v5398
      %v5400 = vsel %vm636, %v5370, 0.0
      %v5401 = vadd.f32 %v5399, %v5400
      %v5402 = vrot.slane %v5401, 4
      %v5403 = vadd.f32 %v5401, %v5402
      %v5404 = vrot.slane %v5403, 2
      %v5405 = vadd.f32 %v5403, %v5404
      %v5406 = vrot.slane %v5405, 1
      %v5407 = vadd.f32 %v5405, %v5406
      %vm5408 = vcmask 24576
      %5409 = vst.msk [vmem:[%s381] sm:$0x1] %vm5408, %v5407
      %v5410 = vmul.f32 %v5355, %v5355
      %v5411 = vmul.f32 %v5356, %v5356
      %v5412 = vmul.f32 %v5357, %v5357
      %v5413 = vmul.f32 %v5358, %v5358
      %v5414 = vmul.f32 %v5359, %v5359
      %v5415 = vmul.f32 %v5360, %v5360
      %v5416 = vmul.f32 %v5361, %v5361
      %v5417 = vmul.f32 %v5362, %v5362
      %v5418 = vmul.f32 %v5363, %v5363
      %v5419 = vmul.f32 %v5364, %v5364
      %v5420 = vmul.f32 %v5365, %v5365
      %v5421 = vmul.f32 %v5366, %v5366
      %v5422 = vmul.f32 %v5367, %v5367
      %v5423 = vmul.f32 %v5368, %v5368
      %v5424 = vmul.f32 %v5369, %v5369
      %v5425 = vmul.f32 %v5370, %v5370
      %v5426 = vsel %vm636, %v5410, 0.0
      %v5427 = vsel %vm636, %v5411, 0.0
      %v5428 = vadd.f32 %v5426, %v5427
      %v5429 = vsel %vm636, %v5412, 0.0
      %v5430 = vadd.f32 %v5428, %v5429
      %v5431 = vsel %vm636, %v5413, 0.0
      %v5432 = vadd.f32 %v5430, %v5431
      %v5433 = vsel %vm636, %v5414, 0.0
      %v5434 = vadd.f32 %v5432, %v5433
      %v5435 = vsel %vm636, %v5415, 0.0
      %v5436 = vadd.f32 %v5434, %v5435
      %v5437 = vsel %vm636, %v5416, 0.0
      %v5438 = vadd.f32 %v5436, %v5437
      %v5439 = vsel %vm636, %v5417, 0.0
      %v5440 = vadd.f32 %v5438, %v5439
      %v5441 = vsel %vm636, %v5418, 0.0
      %v5442 = vadd.f32 %v5440, %v5441
      %v5443 = vsel %vm636, %v5419, 0.0
      %v5444 = vadd.f32 %v5442, %v5443
      %v5445 = vsel %vm636, %v5420, 0.0
      %v5446 = vadd.f32 %v5444, %v5445
      %v5447 = vsel %vm636, %v5421, 0.0
      %v5448 = vadd.f32 %v5446, %v5447
      %v5449 = vsel %vm636, %v5422, 0.0
      %v5450 = vadd.f32 %v5448, %v5449
      %v5451 = vsel %vm636, %v5423, 0.0
      %v5452 = vadd.f32 %v5450, %v5451
      %v5453 = vsel %vm636, %v5424, 0.0
      %v5454 = vadd.f32 %v5452, %v5453
      %v5455 = vsel %vm636, %v5425, 0.0
      %v5456 = vadd.f32 %v5454, %v5455
      %v5457 = vrot.slane %v5456, 4
      %v5458 = vadd.f32 %v5456, %v5457
      %v5459 = vrot.slane %v5458, 2
      %v5460 = vadd.f32 %v5458, %v5459
      %v5461 = vrot.slane %v5460, 1
      %v5462 = vadd.f32 %v5460, %v5461
      %5463 = vst.msk [vmem:[%s388] sm:$0x1] %vm5408, %v5462
      %5464 = vst.msk [vmem:[%s373] sm:$0xff] %vm636, %v5355
      %5465 = vst.msk [vmem:[%s373 + $0x8] sm:$0xff] %vm636, %v5356
      %5466 = vst.msk [vmem:[%s373 + $0x10] sm:$0xff] %vm636, %v5357
      %5467 = vst.msk [vmem:[%s373 + $0x18] sm:$0xff] %vm636, %v5358
      %5468 = vst.msk [vmem:[%s373 + $0x20] sm:$0xff] %vm636, %v5359
      %5469 = vst.msk [vmem:[%s373 + $0x28] sm:$0xff] %vm636, %v5360
      %5470 = vst.msk [vmem:[%s373 + $0x30] sm:$0xff] %vm636, %v5361
      %5471 = vst.msk [vmem:[%s373 + $0x38] sm:$0xff] %vm636, %v5362
      %5472 = vst.msk [vmem:[%s373 + $0x40] sm:$0xff] %vm636, %v5363
      %5473 = vst.msk [vmem:[%s373 + $0x48] sm:$0xff] %vm636, %v5364
      %5474 = vst.msk [vmem:[%s373 + $0x50] sm:$0xff] %vm636, %v5365
      %5475 = vst.msk [vmem:[%s373 + $0x58] sm:$0xff] %vm636, %v5366
      %5476 = vst.msk [vmem:[%s373 + $0x60] sm:$0xff] %vm636, %v5367
      %5477 = vst.msk [vmem:[%s373 + $0x68] sm:$0xff] %vm636, %v5368
      %5478 = vst.msk [vmem:[%s373 + $0x70] sm:$0xff] %vm636, %v5369
      %5479 = vst.msk [vmem:[%s373 + $0x78] sm:$0xff] %vm636, %v5370
      %s5480 = smul.u32 8, %s24
      %p5481 = scmp.lt.s32.totalorder %s23, 1
      %s5482 = scalar_select %p5481, %s23, 1
      %p5483 = scmp.lt.s32.totalorder %s5480, 15
      %s5484 = scalar_select %p5483, %s5480, 15
      %s5485 = smul.addr %s5484, 2
      %s5486 = smul.addr %s5482, 32
      %s5487 = sadd.s32 %s5485, %s5486
      %s5488 = smul.addr %s5487, 8
      %s5489 = scalar_lea.vmem %s5, %s5488
      %p5490 = scmp.lt.s32.totalorder %s23, 1
      %s5491 = scalar_select %p5490, %s23, 1
      %p5492 = scmp.lt.s32.totalorder %s24, 1
      %s5493 = scalar_select %p5492, %s24, 1
      %s5494 = smul.addr %s5491, 2
      %s5495 = sadd.s32 %s5493, %s5494
      %s5496 = scalar_lea.vmem %s6, %s5495
      %p5497 = scmp.lt.s32.totalorder %s23, 1
      %s5498 = scalar_select %p5497, %s23, 1
      %p5499 = scmp.lt.s32.totalorder %s24, 1
      %s5500 = scalar_select %p5499, %s24, 1
      %s5501 = smul.addr %s5498, 2
      %s5502 = sadd.s32 %s5500, %s5501
      %s5503 = scalar_lea.vmem %s7, %s5502
      // Predicated region
      $region41: #{decoder_block_forward.6} parent=39 // pred_check
        %p5504 = pneg %p170
      $region42: #{decoder_block_forward.6} parent=39 // pred_check_branch
        %5506 = sbr.rel (%p5504) target = $region44
      $region43: #{decoder_block_forward.6} parent=39 // pred_region
        %s5507 = smul.u32 8, %s24
      $region44: #{decoder_block_forward.6} parent=39 // pred_fallthru
        _
      // Predicated region
      $region45: #{decoder_block_forward.6} parent=39 // pred_check
        %p5508 = pneg %p198
      $region46: #{decoder_block_forward.6} parent=39 // pred_check_branch
        %5510 = sbr.rel (%p5508) target = $region48
      $region47: #{decoder_block_forward.6} parent=39 // pred_region
        _
      $region48: #{decoder_block_forward.6} parent=39 // pred_fallthru
        _
      // Predicated region
      $region49: #{decoder_block_forward.6} parent=39 // pred_check
        %p5511 = pneg %p226
      $region50: #{decoder_block_forward.6} parent=39 // pred_check_branch
        %5513 = sbr.rel (%p5511) target = $region52
      $region51: #{decoder_block_forward.6} parent=39 // pred_region
        _
      $region52: #{decoder_block_forward.6} parent=39 // pred_fallthru
        _
    $region40: #{decoder_block_forward.6} parent=5 // pred_fallthru
      _
    %p5514 = scmp.le.s32.totalorder 2, %s14
    // Predicated region
    $region53: #{decoder_block_forward.6} parent=5 // pred_check
      %p5515 = pneg %p5514
    $region54: #{decoder_block_forward.6} parent=5 // pred_check_branch
      %5517 = sbr.rel (%p5515) target = $region56
    $region55: #{decoder_block_forward.6} parent=5 // pred_region
      %s5518 = ssub.s32 %s14, 2
      // Predicated region
      $region57: #{decoder_block_forward.6} parent=55 // pred_check
        %p5519 = pneg %p176
      $region58: #{decoder_block_forward.6} parent=55 // pred_check_branch
        %5521 = sbr.rel (%p5519) target = $region60
      $region59: #{decoder_block_forward.6} parent=55 // pred_region
        %s5522 = smul.u32 8, %s26
        %p5523 = scmp.lt.s32.totalorder %s25, 1
        %s5524 = scalar_select %p5523, %s25, 1
        %p5525 = scmp.lt.s32.totalorder %s5522, 15
        %s5526 = scalar_select %p5525, %s5522, 15
        %s5527 = smul.addr %s5526, 2
        %s5528 = smul.addr %s5524, 32
        %s5529 = sadd.s32 %s5527, %s5528
        %s5530 = smul.addr %s5529, 8
        %s5531 = scalar_lea.vmem %s5, %s5530
      $region60: #{decoder_block_forward.6} parent=55 // pred_fallthru
        _
      // Predicated region
      $region61: #{decoder_block_forward.6} parent=55 // pred_check
        %p5532 = pneg %p204
      $region62: #{decoder_block_forward.6} parent=55 // pred_check_branch
        %5534 = sbr.rel (%p5532) target = $region64
      $region63: #{decoder_block_forward.6} parent=55 // pred_region
        %p5535 = scmp.lt.s32.totalorder %s25, 1
        %s5536 = scalar_select %p5535, %s25, 1
        %p5537 = scmp.lt.s32.totalorder %s26, 1
        %s5538 = scalar_select %p5537, %s26, 1
        %s5539 = smul.addr %s5536, 2
        %s5540 = sadd.s32 %s5538, %s5539
        %s5541 = scalar_lea.vmem %s6, %s5540
      $region64: #{decoder_block_forward.6} parent=55 // pred_fallthru
        _
      // Predicated region
      $region65: #{decoder_block_forward.6} parent=55 // pred_check
        %p5542 = pneg %p232
      $region66: #{decoder_block_forward.6} parent=55 // pred_check_branch
        %5544 = sbr.rel (%p5542) target = $region68
      $region67: #{decoder_block_forward.6} parent=55 // pred_region
        %p5545 = scmp.lt.s32.totalorder %s25, 1
        %s5546 = scalar_select %p5545, %s25, 1
        %p5547 = scmp.lt.s32.totalorder %s26, 1
        %s5548 = scalar_select %p5547, %s26, 1
        %s5549 = smul.addr %s5546, 2
        %s5550 = sadd.s32 %s5548, %s5549
        %s5551 = scalar_lea.vmem %s7, %s5550
      $region68: #{decoder_block_forward.6} parent=55 // pred_fallthru
        _
    $region56: #{decoder_block_forward.6} parent=5 // pred_fallthru
      _
  $region6: #{decoder_block_forward.6} parent=0 // loop_footer
    %s18 = sadd.s32 1, %s14
  $region7: #{decoder_block_forward.6} parent=0 // loop_footer_branch
    %13 = sbr.rel target = $region3
  $region8: #{decoder_block_forward.6} parent=0 // loop_exit
    _

</llo_original>
